<compile_context>
chip_gen: v7x
topology: tpu7x:2x2x1
jax: 0.10.0
libtpu: 0.0.40
codegen_flags: <defaults>
</compile_context>

<pallas_src>
import functools

import jax
import jax.numpy as jnp
from jax import lax
from jax.experimental import pallas as pl
from jax.experimental.pallas import tpu as pltpu


# ----------------------------------------------------------------------------
# Helpers: pad / pack PyTorch-layout LSTM weights for lane-aligned gates
# ----------------------------------------------------------------------------
def _round_up(x, m):
    return (x + m - 1) // m * m


def _pack_gate_weights(w, fin_pad, h_pad):
    """w: (4H, F_in) PyTorch layout -> (F_in_pad, 4*H_pad).

    Each gate block g occupies columns [g*h_pad, g*h_pad + H); padding columns
    (and rows) are zero so padded lanes of h/c stay exactly zero.
    """
    four_h, fin = w.shape
    h = four_h // 4
    wt = jnp.transpose(w).reshape(fin, 4, h)                       # (F_in, 4, H)
    wt = jnp.pad(wt, ((0, fin_pad - fin), (0, 0), (0, h_pad - h)))
    return wt.reshape(fin_pad, 4 * h_pad)


def _pack_gate_bias(b_ih, b_hh, h_pad):
    four_h = b_ih.shape[0]
    h = four_h // 4
    b = (b_ih + b_hh).astype(jnp.float32).reshape(4, h)
    b = jnp.pad(b, ((0, 0), (0, h_pad - h)))
    return b.reshape(1, 4 * h_pad)


# ----------------------------------------------------------------------------
# Fused encoder+decoder kernel (single invocation, interleaved recurrences)
# ----------------------------------------------------------------------------
def _fused_autoencoder_kernel(
    x_ref,            # (T*Bp, Ip)    bf16  time-major, flattened, padded input
    enc_wih_ref,      # (Ip, 4*Hp)    bf16
    enc_whh_ref,      # (Hp, 4*Hp)    bf16
    enc_b_ref,        # (1, 4*Hp)     f32
    dec_wih_ref,      # (Hp, 4*Ip)    bf16
    dec_whh_ref,      # (Ip, 4*Ip)    bf16
    dec_b_ref,        # (1, 4*Ip)     f32
    out_ref,          # (T, Bp, Ip)   f32   decoder hidden states
    enc_gx_scr,       # (T, Bp, 4*Hp) f32   hoisted encoder input gates
    *, seq_len, batch_pad, h_pad, i_pad,
):
    T, Bp, Hp, Ip = seq_len, batch_pad, h_pad, i_pad
    unroll = T <= 32   # small T: straight-line code so the scheduler can
                       # overlap dec(t) with enc(t+1)

    def lstm_cell(gates, c, width):
        # gate slices are lane-aligned (width is a multiple of 128) -> VPU/EUP only
        i_g = jax.nn.sigmoid(gates[:, 0 * width:1 * width])
        f_g = jax.nn.sigmoid(gates[:, 1 * width:2 * width])
        g_g = jnp.tanh(gates[:, 2 * width:3 * width])
        o_g = jax.nn.sigmoid(gates[:, 3 * width:4 * width])
        c_new = f_g * c + i_g * g_g
        h_new = o_g * jnp.tanh(c_new)
        return h_new, c_new

    # ---- encoder input projection, all timesteps at once (one big matmul) ----
    enc_gx = jnp.dot(x_ref[...], enc_wih_ref[...],
                     preferred_element_type=jnp.float32)            # (T*Bp, 4Hp)
    enc_gx_scr[...] = (enc_gx + enc_b_ref[...]).reshape(T, Bp, 4 * Hp)

    dec_bias = dec_b_ref[...]                                       # (1, 4Ip)

    # ---- interleaved encoder/decoder recurrence ------------------------------
    # Per step, the only ops on the serial path are small (Bp, *) @ (*, 4*)
    # matmuls plus the gate nonlinearities; enc(t+1) is independent of dec(t),
    # so the two chains overlap once the loop is unrolled.
    def step(t, carry):
        eh, ec, dh, dc = carry

        # encoder step t (input gates precomputed)
        e_gates = enc_gx_scr[t] + jnp.dot(
            eh.astype(jnp.bfloat16), enc_whh_ref[...],
            preferred_element_type=jnp.float32)
        eh, ec = lstm_cell(e_gates, ec, Hp)

        # decoder step t: input is the fresh encoder hidden state (fusion —
        # encoder outputs never round-trip through VMEM/HBM).
        d_in = jnp.dot(eh.astype(jnp.bfloat16), dec_wih_ref[...],
                       preferred_element_type=jnp.float32)
        d_rec = jnp.dot(dh.astype(jnp.bfloat16), dec_whh_ref[...],
                        preferred_element_type=jnp.float32)
        d_gates = d_in + d_rec + dec_bias
        dh, dc = lstm_cell(d_gates, dc, Ip)

        out_ref[t] = dh.astype(out_ref.dtype)
        return eh, ec, dh, dc

    carry0 = (jnp.zeros((Bp, Hp), jnp.float32),
              jnp.zeros((Bp, Hp), jnp.float32),
              jnp.zeros((Bp, Ip), jnp.float32),
              jnp.zeros((Bp, Ip), jnp.float32))
    lax.fori_loop(0, T, step, carry0, unroll=unroll)


# ----------------------------------------------------------------------------
# LSTMAutoencoder forward (batch_first, like the PyTorch module)
# ----------------------------------------------------------------------------
def lstm_autoencoder_forward(x_bti, params):
    """x_bti: (B, T, input_size) float32 -> (B, T, input_size) float32."""
    B, T, I = x_bti.shape
    H = params["enc_w_hh"].shape[1]

    Bp = _round_up(max(B, 8), 8)      # fill sublanes
    Hp = _round_up(H, 128)            # lane-aligned encoder gate blocks
    Ip = _round_up(I, 128)            # lane-aligned decoder gate blocks / output

    # Pack weights (bf16 for the MXU; f32 accumulate inside the kernel).
    enc_wih = _pack_gate_weights(params["enc_w_ih"], Ip, Hp).astype(jnp.bfloat16)
    enc_whh = _pack_gate_weights(params["enc_w_hh"], Hp, Hp).astype(jnp.bfloat16)
    enc_b = _pack_gate_bias(params["enc_b_ih"], params["enc_b_hh"], Hp)
    dec_wih = _pack_gate_weights(params["dec_w_ih"], Hp, Ip).astype(jnp.bfloat16)
    dec_whh = _pack_gate_weights(params["dec_w_hh"], Ip, Ip).astype(jnp.bfloat16)
    dec_b = _pack_gate_bias(params["dec_b_ih"], params["dec_b_hh"], Ip)

    # (B,T,I) -> time-major, pad batch/features, flatten to (T*Bp, Ip), bf16.
    x_tbi = jnp.transpose(x_bti.astype(jnp.float32), (1, 0, 2))
    x_pad = jnp.pad(x_tbi, ((0, 0), (0, Bp - B), (0, Ip - I))).astype(jnp.bfloat16)
    x_flat = x_pad.reshape(T * Bp, Ip)

    kernel = functools.partial(
        _fused_autoencoder_kernel,
        seq_len=T, batch_pad=Bp, h_pad=Hp, i_pad=Ip)

    out = pl.pallas_call(
        kernel,
        out_shape=jax.ShapeDtypeStruct((T, Bp, Ip), jnp.float32),
        grid_spec=pltpu.PrefetchScalarGridSpec(
            num_scalar_prefetch=0,
            grid=(1,),
            in_specs=[
                pl.BlockSpec((T * Bp, Ip), lambda i: (0, 0)),
                pl.BlockSpec((Ip, 4 * Hp), lambda i: (0, 0)),
                pl.BlockSpec((Hp, 4 * Hp), lambda i: (0, 0)),
                pl.BlockSpec((1, 4 * Hp), lambda i: (0, 0)),
                pl.BlockSpec((Hp, 4 * Ip), lambda i: (0, 0)),
                pl.BlockSpec((Ip, 4 * Ip), lambda i: (0, 0)),
                pl.BlockSpec((1, 4 * Ip), lambda i: (0, 0)),
            ],
            out_specs=pl.BlockSpec((T, Bp, Ip), lambda i: (0, 0, 0)),
            scratch_shapes=[
                pltpu.VMEM((T, Bp, 4 * Hp), jnp.float32),   # enc input gates
            ],
        ),
        compiler_params=pltpu.CompilerParams(
            dimension_semantics=("arbitrary",),
        ),
    )(x_flat, enc_wih, enc_whh, enc_b, dec_wih, dec_whh, dec_b)

    # Strip padding, back to batch_first.
    return jnp.transpose(out[:, :B, :I], (1, 0, 2))


# ----------------------------------------------------------------------------
# Pure-JAX f32 reference (correctness sanity check)
# ----------------------------------------------------------------------------
def _lstm_layer_ref(x_tbi, w_ih, w_hh, b_ih, b_hh):
    T, B, _ = x_tbi.shape
    H = w_hh.shape[1]
    wih_t, whh_t = w_ih.T, w_hh.T
    bias = b_ih + b_hh

    def step(carry, x_t):
        h, c = carry
        g = x_t @ wih_t + h @ whh_t + bias
        i = jax.nn.sigmoid(g[:, 0 * H:1 * H])
        f = jax.nn.sigmoid(g[:, 1 * H:2 * H])
        gg = jnp.tanh(g[:, 2 * H:3 * H])
        o = jax.nn.sigmoid(g[:, 3 * H:4 * H])
        c_new = f * c + i * gg
        h_new = o * jnp.tanh(c_new)
        return (h_new, c_new), h_new

    init = (jnp.zeros((B, H), jnp.float32), jnp.zeros((B, H), jnp.float32))
    _, ys = lax.scan(step, init, x_tbi)
    return ys


def _autoencoder_ref(x_bti, params):
    x_tbi = jnp.transpose(x_bti, (1, 0, 2))
    enc = _lstm_layer_ref(x_tbi, params["enc_w_ih"], params["enc_w_hh"],
                          params["enc_b_ih"], params["enc_b_hh"])
    dec = _lstm_layer_ref(enc, params["dec_w_ih"], params["dec_w_hh"],
                          params["dec_b_ih"], params["dec_b_hh"])
    return jnp.transpose(dec, (1, 0, 2))


# ----------------------------------------------------------------------------
# Parameter init (mimics nn.LSTM uniform(-1/sqrt(H), 1/sqrt(H)))
# ----------------------------------------------------------------------------
def init_params(key, input_size, hidden_size):
    ks = jax.random.split(key, 8)

    def u(k, shape, fan):
        bound = 1.0 / jnp.sqrt(fan)
        return jax.random.uniform(k, shape, jnp.float32, -bound, bound)

    H, I = hidden_size, input_size
    return {
        # encoder: nn.LSTM(input_size, hidden_size)
        "enc_w_ih": u(ks[0], (4 * H, I), H),
        "enc_w_hh": u(ks[1], (4 * H, H), H),
        "enc_b_ih": u(ks[2], (4 * H,), H),
        "enc_b_hh": u(ks[3], (4 * H,), H),
        # decoder: nn.LSTM(hidden_size, input_size)
        "dec_w_ih": u(ks[4], (4 * I, H), I),
        "dec_w_hh": u(ks[5], (4 * I, I), I),
        "dec_b_ih": u(ks[6], (4 * I,), I),
        "dec_b_hh": u(ks[7], (4 * I,), I),
    }


if __name__ == "__main__":
    B, T = 2, 8            # batch, sequence length
    INPUT_SIZE = 16
    HIDDEN_SIZE = 32

    key = jax.random.PRNGKey(0)
    k_x, k_p = jax.random.split(key)
    x = jax.random.normal(k_x, (B, T, INPUT_SIZE), jnp.float32)
    params = init_params(k_p, INPUT_SIZE, HIDDEN_SIZE)

    fwd = jax.jit(lstm_autoencoder_forward)
    out = jax.block_until_ready(fwd(x, params))

    ref = jax.block_until_ready(_autoencoder_ref(x, params))
    assert out.shape == (B, T, INPUT_SIZE)
    # bf16 MXU inputs (f32 accumulate) vs f32 reference: relaxed tolerance.
    assert jnp.allclose(out, ref, atol=5e-2, rtol=5e-2), "mismatch vs JAX reference"

    print("KERNEL_OK")
</pallas_src>

<mosaic_0001>
module attributes {stable_mosaic.version = 11 : i64} {
  func.func @_fused_autoencoder_kernel(%arg0: i32, %arg1: memref<64x128xbf16, #tpu.memory_space<vmem>>, %arg2: memref<128x512xbf16, #tpu.memory_space<vmem>>, %arg3: memref<128x512xbf16, #tpu.memory_space<vmem>>, %arg4: memref<1x512xf32, #tpu.memory_space<vmem>>, %arg5: memref<128x512xbf16, #tpu.memory_space<vmem>>, %arg6: memref<128x512xbf16, #tpu.memory_space<vmem>>, %arg7: memref<1x512xf32, #tpu.memory_space<vmem>>, %arg8: memref<8x8x128xf32, #tpu.memory_space<vmem>>, %arg9: memref<8x8x512xf32, #tpu.memory_space<vmem>>) attributes {dimension_semantics = [#tpu.dimension_semantics<arbitrary>], iteration_bounds = array<i64: 1>, scalar_prefetch = 0 : i64, scratch_operands = 1 : i64, tpu.core_type = #tpu.core_type<tc>, window_params = [{pipeline_mode = #tpu.pipeline_mode<synchronous>, transform_indices = @transform_0, window_bounds = array<i64: 64, 128>}, {pipeline_mode = #tpu.pipeline_mode<synchronous>, transform_indices = @transform_1, window_bounds = array<i64: 128, 512>}, {pipeline_mode = #tpu.pipeline_mode<synchronous>, transform_indices = @transform_2, window_bounds = array<i64: 128, 512>}, {pipeline_mode = #tpu.pipeline_mode<synchronous>, transform_indices = @transform_3, window_bounds = array<i64: 1, 512>}, {pipeline_mode = #tpu.pipeline_mode<synchronous>, transform_indices = @transform_4, window_bounds = array<i64: 128, 512>}, {pipeline_mode = #tpu.pipeline_mode<synchronous>, transform_indices = @transform_5, window_bounds = array<i64: 128, 512>}, {pipeline_mode = #tpu.pipeline_mode<synchronous>, transform_indices = @transform_6, window_bounds = array<i64: 1, 512>}, {pipeline_mode = #tpu.pipeline_mode<synchronous>, transform_indices = @transform_7, window_bounds = array<i64: 8, 8, 128>}]} {
    %c0 = arith.constant 0 : index
    %c0_0 = arith.constant 0 : index
    %0 = vector.load %arg1[%c0, %c0_0] : memref<64x128xbf16, #tpu.memory_space<vmem>>, vector<64x128xbf16>
    %c0_1 = arith.constant 0 : index
    %c0_2 = arith.constant 0 : index
    %1 = vector.load %arg2[%c0_1, %c0_2] : memref<128x512xbf16, #tpu.memory_space<vmem>>, vector<128x512xbf16>
    %cst = arith.constant dense<0.000000e+00> : vector<64x512xf32>
    %2 = tpu.matmul %0, %1, %cst {dimension_numbers = #tpu.dot_dimension_numbers<[1], [0], [0], [1], [0, 0, 1, 1], [], []>} : vector<64x128xbf16>, vector<128x512xbf16>, vector<64x512xf32> -> vector<64x512xf32>
    %c0_3 = arith.constant 0 : index
    %c0_4 = arith.constant 0 : index
    %3 = vector.load %arg4[%c0_3, %c0_4] : memref<1x512xf32, #tpu.memory_space<vmem>>, vector<1x512xf32>
    %4 = vector.broadcast %3 : vector<1x512xf32> to vector<64x512xf32>
    %5 = arith.addf %2, %4 : vector<64x512xf32>
    %6 = vector.shape_cast %5 : vector<64x512xf32> to vector<8x8x512xf32>
    %c0_5 = arith.constant 0 : index
    %c0_6 = arith.constant 0 : index
    %c0_7 = arith.constant 0 : index
    %7 = vector.load %arg9[%c0_5, %c0_6, %c0_7] : memref<8x8x512xf32, #tpu.memory_space<vmem>>, vector<8x8x512xf32>
    tpu.vector_store %arg9[%c0_5, %c0_6, %c0_7], %6 {strides = array<i32>} : memref<8x8x512xf32, #tpu.memory_space<vmem>>, vector<8x8x512xf32>,
    %c0_8 = arith.constant 0 : index
    %c0_9 = arith.constant 0 : index
    %8 = vector.load %arg7[%c0_8, %c0_9] : memref<1x512xf32, #tpu.memory_space<vmem>>, vector<1x512xf32>
    %cst_10 = arith.constant 0.000000e+00 : f32
    %9 = vector.broadcast %cst_10 : f32 to vector<8x128xf32>
    %cst_11 = arith.constant 0.000000e+00 : f32
    %10 = vector.broadcast %cst_11 : f32 to vector<8x128xf32>
    %cst_12 = arith.constant 0.000000e+00 : f32
    %11 = vector.broadcast %cst_12 : f32 to vector<8x128xf32>
    %cst_13 = arith.constant 0.000000e+00 : f32
    %12 = vector.broadcast %cst_13 : f32 to vector<8x128xf32>
    %c0_i32 = arith.constant 0 : i32
    %13 = arith.index_cast %c0_i32 : i32 to index
    %c0_14 = arith.constant 0 : index
    %c0_15 = arith.constant 0 : index
    %14 = vector.load %arg9[%13, %c0_14, %c0_15] : memref<8x8x512xf32, #tpu.memory_space<vmem>>, vector<1x8x512xf32>
    %15 = vector.shape_cast %14 : vector<1x8x512xf32> to vector<8x512xf32>
    %16 = arith.truncf %9 : vector<8x128xf32> to vector<8x128xbf16>
    %c0_16 = arith.constant 0 : index
    %c0_17 = arith.constant 0 : index
    %17 = vector.load %arg3[%c0_16, %c0_17] : memref<128x512xbf16, #tpu.memory_space<vmem>>, vector<128x512xbf16>
    %cst_18 = arith.constant dense<0.000000e+00> : vector<8x512xf32>
    %18 = tpu.matmul %16, %17, %cst_18 {dimension_numbers = #tpu.dot_dimension_numbers<[1], [0], [0], [1], [0, 0, 1, 1], [], []>} : vector<8x128xbf16>, vector<128x512xbf16>, vector<8x512xf32> -> vector<8x512xf32>
    %19 = arith.addf %15, %18 : vector<8x512xf32>
    %20 = vector.extract_strided_slice %19 {offsets = [0, 0], sizes = [8, 128], strides = [1, 1]} : vector<8x512xf32> to vector<8x128xf32>
    %21 = arith.negf %20 : vector<8x128xf32>
    %22 = math.exp %21 : vector<8x128xf32>
    %cst_19 = arith.constant 1.000000e+00 : f32
    %23 = vector.broadcast %cst_19 : f32 to vector<8x128xf32>
    %24 = arith.addf %23, %22 : vector<8x128xf32>
    %25 = arith.divf %23, %24 : vector<8x128xf32>
    %26 = vector.extract_strided_slice %19 {offsets = [0, 128], sizes = [8, 128], strides = [1, 1]} : vector<8x512xf32> to vector<8x128xf32>
    %27 = arith.negf %26 : vector<8x128xf32>
    %28 = math.exp %27 : vector<8x128xf32>
    %cst_20 = arith.constant 1.000000e+00 : f32
    %29 = vector.broadcast %cst_20 : f32 to vector<8x128xf32>
    %30 = arith.addf %29, %28 : vector<8x128xf32>
    %31 = arith.divf %29, %30 : vector<8x128xf32>
    %32 = vector.extract_strided_slice %19 {offsets = [0, 256], sizes = [8, 128], strides = [1, 1]} : vector<8x512xf32> to vector<8x128xf32>
    %33 = math.tanh %32 : vector<8x128xf32>
    %34 = vector.extract_strided_slice %19 {offsets = [0, 384], sizes = [8, 128], strides = [1, 1]} : vector<8x512xf32> to vector<8x128xf32>
    %35 = arith.negf %34 : vector<8x128xf32>
    %36 = math.exp %35 : vector<8x128xf32>
    %cst_21 = arith.constant 1.000000e+00 : f32
    %37 = vector.broadcast %cst_21 : f32 to vector<8x128xf32>
    %38 = arith.addf %37, %36 : vector<8x128xf32>
    %39 = arith.divf %37, %38 : vector<8x128xf32>
    %40 = arith.mulf %31, %10 : vector<8x128xf32>
    %41 = arith.mulf %25, %33 : vector<8x128xf32>
    %42 = arith.addf %40, %41 : vector<8x128xf32>
    %43 = math.tanh %42 : vector<8x128xf32>
    %44 = arith.mulf %39, %43 : vector<8x128xf32>
    %45 = arith.truncf %44 : vector<8x128xf32> to vector<8x128xbf16>
    %c0_22 = arith.constant 0 : index
    %c0_23 = arith.constant 0 : index
    %46 = vector.load %arg5[%c0_22, %c0_23] : memref<128x512xbf16, #tpu.memory_space<vmem>>, vector<128x512xbf16>
    %cst_24 = arith.constant dense<0.000000e+00> : vector<8x512xf32>
    %47 = tpu.matmul %45, %46, %cst_24 {dimension_numbers = #tpu.dot_dimension_numbers<[1], [0], [0], [1], [0, 0, 1, 1], [], []>} : vector<8x128xbf16>, vector<128x512xbf16>, vector<8x512xf32> -> vector<8x512xf32>
    %48 = arith.truncf %11 : vector<8x128xf32> to vector<8x128xbf16>
    %c0_25 = arith.constant 0 : index
    %c0_26 = arith.constant 0 : index
    %49 = vector.load %arg6[%c0_25, %c0_26] : memref<128x512xbf16, #tpu.memory_space<vmem>>, vector<128x512xbf16>
    %cst_27 = arith.constant dense<0.000000e+00> : vector<8x512xf32>
    %50 = tpu.matmul %48, %49, %cst_27 {dimension_numbers = #tpu.dot_dimension_numbers<[1], [0], [0], [1], [0, 0, 1, 1], [], []>} : vector<8x128xbf16>, vector<128x512xbf16>, vector<8x512xf32> -> vector<8x512xf32>
    %51 = arith.addf %47, %50 : vector<8x512xf32>
    %52 = vector.broadcast %8 : vector<1x512xf32> to vector<8x512xf32>
    %53 = arith.addf %51, %52 : vector<8x512xf32>
    %54 = vector.extract_strided_slice %53 {offsets = [0, 0], sizes = [8, 128], strides = [1, 1]} : vector<8x512xf32> to vector<8x128xf32>
    %55 = arith.negf %54 : vector<8x128xf32>
    %56 = math.exp %55 : vector<8x128xf32>
    %cst_28 = arith.constant 1.000000e+00 : f32
    %57 = vector.broadcast %cst_28 : f32 to vector<8x128xf32>
    %58 = arith.addf %57, %56 : vector<8x128xf32>
    %59 = arith.divf %57, %58 : vector<8x128xf32>
    %60 = vector.extract_strided_slice %53 {offsets = [0, 128], sizes = [8, 128], strides = [1, 1]} : vector<8x512xf32> to vector<8x128xf32>
    %61 = arith.negf %60 : vector<8x128xf32>
    %62 = math.exp %61 : vector<8x128xf32>
    %cst_29 = arith.constant 1.000000e+00 : f32
    %63 = vector.broadcast %cst_29 : f32 to vector<8x128xf32>
    %64 = arith.addf %63, %62 : vector<8x128xf32>
    %65 = arith.divf %63, %64 : vector<8x128xf32>
    %66 = vector.extract_strided_slice %53 {offsets = [0, 256], sizes = [8, 128], strides = [1, 1]} : vector<8x512xf32> to vector<8x128xf32>
    %67 = math.tanh %66 : vector<8x128xf32>
    %68 = vector.extract_strided_slice %53 {offsets = [0, 384], sizes = [8, 128], strides = [1, 1]} : vector<8x512xf32> to vector<8x128xf32>
    %69 = arith.negf %68 : vector<8x128xf32>
    %70 = math.exp %69 : vector<8x128xf32>
    %cst_30 = arith.constant 1.000000e+00 : f32
    %71 = vector.broadcast %cst_30 : f32 to vector<8x128xf32>
    %72 = arith.addf %71, %70 : vector<8x128xf32>
    %73 = arith.divf %71, %72 : vector<8x128xf32>
    %74 = arith.mulf %65, %12 : vector<8x128xf32>
    %75 = arith.mulf %59, %67 : vector<8x128xf32>
    %76 = arith.addf %74, %75 : vector<8x128xf32>
    %77 = math.tanh %76 : vector<8x128xf32>
    %78 = arith.mulf %73, %77 : vector<8x128xf32>
    %79 = arith.index_cast %c0_i32 : i32 to index
    %c0_31 = arith.constant 0 : index
    %c0_32 = arith.constant 0 : index
    %80 = vector.load %arg8[%79, %c0_31, %c0_32] : memref<8x8x128xf32, #tpu.memory_space<vmem>>, vector<1x8x128xf32>
    %81 = vector.shape_cast %80 : vector<1x8x128xf32> to vector<8x128xf32>
    %82 = vector.shape_cast %78 : vector<8x128xf32> to vector<1x8x128xf32>
    tpu.vector_store %arg8[%79, %c0_31, %c0_32], %82 {strides = array<i32>} : memref<8x8x128xf32, #tpu.memory_space<vmem>>, vector<1x8x128xf32>,
    %c1_i32 = arith.constant 1 : i32
    %83 = arith.index_cast %c1_i32 : i32 to index
    %c0_33 = arith.constant 0 : index
    %c0_34 = arith.constant 0 : index
    %84 = vector.load %arg9[%83, %c0_33, %c0_34] : memref<8x8x512xf32, #tpu.memory_space<vmem>>, vector<1x8x512xf32>
    %85 = vector.shape_cast %84 : vector<1x8x512xf32> to vector<8x512xf32>
    %86 = arith.truncf %44 : vector<8x128xf32> to vector<8x128xbf16>
    %c0_35 = arith.constant 0 : index
    %c0_36 = arith.constant 0 : index
    %87 = vector.load %arg3[%c0_35, %c0_36] : memref<128x512xbf16, #tpu.memory_space<vmem>>, vector<128x512xbf16>
    %cst_37 = arith.constant dense<0.000000e+00> : vector<8x512xf32>
    %88 = tpu.matmul %86, %87, %cst_37 {dimension_numbers = #tpu.dot_dimension_numbers<[1], [0], [0], [1], [0, 0, 1, 1], [], []>} : vector<8x128xbf16>, vector<128x512xbf16>, vector<8x512xf32> -> vector<8x512xf32>
    %89 = arith.addf %85, %88 : vector<8x512xf32>
    %90 = vector.extract_strided_slice %89 {offsets = [0, 0], sizes = [8, 128], strides = [1, 1]} : vector<8x512xf32> to vector<8x128xf32>
    %91 = arith.negf %90 : vector<8x128xf32>
    %92 = math.exp %91 : vector<8x128xf32>
    %cst_38 = arith.constant 1.000000e+00 : f32
    %93 = vector.broadcast %cst_38 : f32 to vector<8x128xf32>
    %94 = arith.addf %93, %92 : vector<8x128xf32>
    %95 = arith.divf %93, %94 : vector<8x128xf32>
    %96 = vector.extract_strided_slice %89 {offsets = [0, 128], sizes = [8, 128], strides = [1, 1]} : vector<8x512xf32> to vector<8x128xf32>
    %97 = arith.negf %96 : vector<8x128xf32>
    %98 = math.exp %97 : vector<8x128xf32>
    %cst_39 = arith.constant 1.000000e+00 : f32
    %99 = vector.broadcast %cst_39 : f32 to vector<8x128xf32>
    %100 = arith.addf %99, %98 : vector<8x128xf32>
    %101 = arith.divf %99, %100 : vector<8x128xf32>
    %102 = vector.extract_strided_slice %89 {offsets = [0, 256], sizes = [8, 128], strides = [1, 1]} : vector<8x512xf32> to vector<8x128xf32>
    %103 = math.tanh %102 : vector<8x128xf32>
    %104 = vector.extract_strided_slice %89 {offsets = [0, 384], sizes = [8, 128], strides = [1, 1]} : vector<8x512xf32> to vector<8x128xf32>
    %105 = arith.negf %104 : vector<8x128xf32>
    %106 = math.exp %105 : vector<8x128xf32>
    %cst_40 = arith.constant 1.000000e+00 : f32
    %107 = vector.broadcast %cst_40 : f32 to vector<8x128xf32>
    %108 = arith.addf %107, %106 : vector<8x128xf32>
    %109 = arith.divf %107, %108 : vector<8x128xf32>
    %110 = arith.mulf %101, %42 : vector<8x128xf32>
    %111 = arith.mulf %95, %103 : vector<8x128xf32>
    %112 = arith.addf %110, %111 : vector<8x128xf32>
    %113 = math.tanh %112 : vector<8x128xf32>
    %114 = arith.mulf %109, %113 : vector<8x128xf32>
    %115 = arith.truncf %114 : vector<8x128xf32> to vector<8x128xbf16>
    %c0_41 = arith.constant 0 : index
    %c0_42 = arith.constant 0 : index
    %116 = vector.load %arg5[%c0_41, %c0_42] : memref<128x512xbf16, #tpu.memory_space<vmem>>, vector<128x512xbf16>
    %cst_43 = arith.constant dense<0.000000e+00> : vector<8x512xf32>
    %117 = tpu.matmul %115, %116, %cst_43 {dimension_numbers = #tpu.dot_dimension_numbers<[1], [0], [0], [1], [0, 0, 1, 1], [], []>} : vector<8x128xbf16>, vector<128x512xbf16>, vector<8x512xf32> -> vector<8x512xf32>
    %118 = arith.truncf %78 : vector<8x128xf32> to vector<8x128xbf16>
    %c0_44 = arith.constant 0 : index
    %c0_45 = arith.constant 0 : index
    %119 = vector.load %arg6[%c0_44, %c0_45] : memref<128x512xbf16, #tpu.memory_space<vmem>>, vector<128x512xbf16>
    %cst_46 = arith.constant dense<0.000000e+00> : vector<8x512xf32>
    %120 = tpu.matmul %118, %119, %cst_46 {dimension_numbers = #tpu.dot_dimension_numbers<[1], [0], [0], [1], [0, 0, 1, 1], [], []>} : vector<8x128xbf16>, vector<128x512xbf16>, vector<8x512xf32> -> vector<8x512xf32>
    %121 = arith.addf %117, %120 : vector<8x512xf32>
    %122 = vector.broadcast %8 : vector<1x512xf32> to vector<8x512xf32>
    %123 = arith.addf %121, %122 : vector<8x512xf32>
    %124 = vector.extract_strided_slice %123 {offsets = [0, 0], sizes = [8, 128], strides = [1, 1]} : vector<8x512xf32> to vector<8x128xf32>
    %125 = arith.negf %124 : vector<8x128xf32>
    %126 = math.exp %125 : vector<8x128xf32>
    %cst_47 = arith.constant 1.000000e+00 : f32
    %127 = vector.broadcast %cst_47 : f32 to vector<8x128xf32>
    %128 = arith.addf %127, %126 : vector<8x128xf32>
    %129 = arith.divf %127, %128 : vector<8x128xf32>
    %130 = vector.extract_strided_slice %123 {offsets = [0, 128], sizes = [8, 128], strides = [1, 1]} : vector<8x512xf32> to vector<8x128xf32>
    %131 = arith.negf %130 : vector<8x128xf32>
    %132 = math.exp %131 : vector<8x128xf32>
    %cst_48 = arith.constant 1.000000e+00 : f32
    %133 = vector.broadcast %cst_48 : f32 to vector<8x128xf32>
    %134 = arith.addf %133, %132 : vector<8x128xf32>
    %135 = arith.divf %133, %134 : vector<8x128xf32>
    %136 = vector.extract_strided_slice %123 {offsets = [0, 256], sizes = [8, 128], strides = [1, 1]} : vector<8x512xf32> to vector<8x128xf32>
    %137 = math.tanh %136 : vector<8x128xf32>
    %138 = vector.extract_strided_slice %123 {offsets = [0, 384], sizes = [8, 128], strides = [1, 1]} : vector<8x512xf32> to vector<8x128xf32>
    %139 = arith.negf %138 : vector<8x128xf32>
    %140 = math.exp %139 : vector<8x128xf32>
    %cst_49 = arith.constant 1.000000e+00 : f32
    %141 = vector.broadcast %cst_49 : f32 to vector<8x128xf32>
    %142 = arith.addf %141, %140 : vector<8x128xf32>
    %143 = arith.divf %141, %142 : vector<8x128xf32>
    %144 = arith.mulf %135, %76 : vector<8x128xf32>
    %145 = arith.mulf %129, %137 : vector<8x128xf32>
    %146 = arith.addf %144, %145 : vector<8x128xf32>
    %147 = math.tanh %146 : vector<8x128xf32>
    %148 = arith.mulf %143, %147 : vector<8x128xf32>
    %149 = arith.index_cast %c1_i32 : i32 to index
    %c0_50 = arith.constant 0 : index
    %c0_51 = arith.constant 0 : index
    %150 = vector.load %arg8[%149, %c0_50, %c0_51] : memref<8x8x128xf32, #tpu.memory_space<vmem>>, vector<1x8x128xf32>
    %151 = vector.shape_cast %150 : vector<1x8x128xf32> to vector<8x128xf32>
    %152 = vector.shape_cast %148 : vector<8x128xf32> to vector<1x8x128xf32>
    tpu.vector_store %arg8[%149, %c0_50, %c0_51], %152 {strides = array<i32>} : memref<8x8x128xf32, #tpu.memory_space<vmem>>, vector<1x8x128xf32>,
    %c2_i32 = arith.constant 2 : i32
    %153 = arith.index_cast %c2_i32 : i32 to index
    %c0_52 = arith.constant 0 : index
    %c0_53 = arith.constant 0 : index
    %154 = vector.load %arg9[%153, %c0_52, %c0_53] : memref<8x8x512xf32, #tpu.memory_space<vmem>>, vector<1x8x512xf32>
    %155 = vector.shape_cast %154 : vector<1x8x512xf32> to vector<8x512xf32>
    %156 = arith.truncf %114 : vector<8x128xf32> to vector<8x128xbf16>
    %c0_54 = arith.constant 0 : index
    %c0_55 = arith.constant 0 : index
    %157 = vector.load %arg3[%c0_54, %c0_55] : memref<128x512xbf16, #tpu.memory_space<vmem>>, vector<128x512xbf16>
    %cst_56 = arith.constant dense<0.000000e+00> : vector<8x512xf32>
    %158 = tpu.matmul %156, %157, %cst_56 {dimension_numbers = #tpu.dot_dimension_numbers<[1], [0], [0], [1], [0, 0, 1, 1], [], []>} : vector<8x128xbf16>, vector<128x512xbf16>, vector<8x512xf32> -> vector<8x512xf32>
    %159 = arith.addf %155, %158 : vector<8x512xf32>
    %160 = vector.extract_strided_slice %159 {offsets = [0, 0], sizes = [8, 128], strides = [1, 1]} : vector<8x512xf32> to vector<8x128xf32>
    %161 = arith.negf %160 : vector<8x128xf32>
    %162 = math.exp %161 : vector<8x128xf32>
    %cst_57 = arith.constant 1.000000e+00 : f32
    %163 = vector.broadcast %cst_57 : f32 to vector<8x128xf32>
    %164 = arith.addf %163, %162 : vector<8x128xf32>
    %165 = arith.divf %163, %164 : vector<8x128xf32>
    %166 = vector.extract_strided_slice %159 {offsets = [0, 128], sizes = [8, 128], strides = [1, 1]} : vector<8x512xf32> to vector<8x128xf32>
    %167 = arith.negf %166 : vector<8x128xf32>
    %168 = math.exp %167 : vector<8x128xf32>
    %cst_58 = arith.constant 1.000000e+00 : f32
    %169 = vector.broadcast %cst_58 : f32 to vector<8x128xf32>
    %170 = arith.addf %169, %168 : vector<8x128xf32>
    %171 = arith.divf %169, %170 : vector<8x128xf32>
    %172 = vector.extract_strided_slice %159 {offsets = [0, 256], sizes = [8, 128], strides = [1, 1]} : vector<8x512xf32> to vector<8x128xf32>
    %173 = math.tanh %172 : vector<8x128xf32>
    %174 = vector.extract_strided_slice %159 {offsets = [0, 384], sizes = [8, 128], strides = [1, 1]} : vector<8x512xf32> to vector<8x128xf32>
    %175 = arith.negf %174 : vector<8x128xf32>
    %176 = math.exp %175 : vector<8x128xf32>
    %cst_59 = arith.constant 1.000000e+00 : f32
    %177 = vector.broadcast %cst_59 : f32 to vector<8x128xf32>
    %178 = arith.addf %177, %176 : vector<8x128xf32>
    %179 = arith.divf %177, %178 : vector<8x128xf32>
    %180 = arith.mulf %171, %112 : vector<8x128xf32>
    %181 = arith.mulf %165, %173 : vector<8x128xf32>
    %182 = arith.addf %180, %181 : vector<8x128xf32>
    %183 = math.tanh %182 : vector<8x128xf32>
    %184 = arith.mulf %179, %183 : vector<8x128xf32>
    %185 = arith.truncf %184 : vector<8x128xf32> to vector<8x128xbf16>
    %c0_60 = arith.constant 0 : index
    %c0_61 = arith.constant 0 : index
    %186 = vector.load %arg5[%c0_60, %c0_61] : memref<128x512xbf16, #tpu.memory_space<vmem>>, vector<128x512xbf16>
    %cst_62 = arith.constant dense<0.000000e+00> : vector<8x512xf32>
    %187 = tpu.matmul %185, %186, %cst_62 {dimension_numbers = #tpu.dot_dimension_numbers<[1], [0], [0], [1], [0, 0, 1, 1], [], []>} : vector<8x128xbf16>, vector<128x512xbf16>, vector<8x512xf32> -> vector<8x512xf32>
    %188 = arith.truncf %148 : vector<8x128xf32> to vector<8x128xbf16>
    %c0_63 = arith.constant 0 : index
    %c0_64 = arith.constant 0 : index
    %189 = vector.load %arg6[%c0_63, %c0_64] : memref<128x512xbf16, #tpu.memory_space<vmem>>, vector<128x512xbf16>
    %cst_65 = arith.constant dense<0.000000e+00> : vector<8x512xf32>
    %190 = tpu.matmul %188, %189, %cst_65 {dimension_numbers = #tpu.dot_dimension_numbers<[1], [0], [0], [1], [0, 0, 1, 1], [], []>} : vector<8x128xbf16>, vector<128x512xbf16>, vector<8x512xf32> -> vector<8x512xf32>
    %191 = arith.addf %187, %190 : vector<8x512xf32>
    %192 = vector.broadcast %8 : vector<1x512xf32> to vector<8x512xf32>
    %193 = arith.addf %191, %192 : vector<8x512xf32>
    %194 = vector.extract_strided_slice %193 {offsets = [0, 0], sizes = [8, 128], strides = [1, 1]} : vector<8x512xf32> to vector<8x128xf32>
    %195 = arith.negf %194 : vector<8x128xf32>
    %196 = math.exp %195 : vector<8x128xf32>
    %cst_66 = arith.constant 1.000000e+00 : f32
    %197 = vector.broadcast %cst_66 : f32 to vector<8x128xf32>
    %198 = arith.addf %197, %196 : vector<8x128xf32>
    %199 = arith.divf %197, %198 : vector<8x128xf32>
    %200 = vector.extract_strided_slice %193 {offsets = [0, 128], sizes = [8, 128], strides = [1, 1]} : vector<8x512xf32> to vector<8x128xf32>
    %201 = arith.negf %200 : vector<8x128xf32>
    %202 = math.exp %201 : vector<8x128xf32>
    %cst_67 = arith.constant 1.000000e+00 : f32
    %203 = vector.broadcast %cst_67 : f32 to vector<8x128xf32>
    %204 = arith.addf %203, %202 : vector<8x128xf32>
    %205 = arith.divf %203, %204 : vector<8x128xf32>
    %206 = vector.extract_strided_slice %193 {offsets = [0, 256], sizes = [8, 128], strides = [1, 1]} : vector<8x512xf32> to vector<8x128xf32>
    %207 = math.tanh %206 : vector<8x128xf32>
    %208 = vector.extract_strided_slice %193 {offsets = [0, 384], sizes = [8, 128], strides = [1, 1]} : vector<8x512xf32> to vector<8x128xf32>
    %209 = arith.negf %208 : vector<8x128xf32>
    %210 = math.exp %209 : vector<8x128xf32>
    %cst_68 = arith.constant 1.000000e+00 : f32
    %211 = vector.broadcast %cst_68 : f32 to vector<8x128xf32>
    %212 = arith.addf %211, %210 : vector<8x128xf32>
    %213 = arith.divf %211, %212 : vector<8x128xf32>
    %214 = arith.mulf %205, %146 : vector<8x128xf32>
    %215 = arith.mulf %199, %207 : vector<8x128xf32>
    %216 = arith.addf %214, %215 : vector<8x128xf32>
    %217 = math.tanh %216 : vector<8x128xf32>
    %218 = arith.mulf %213, %217 : vector<8x128xf32>
    %219 = arith.index_cast %c2_i32 : i32 to index
    %c0_69 = arith.constant 0 : index
    %c0_70 = arith.constant 0 : index
    %220 = vector.load %arg8[%219, %c0_69, %c0_70] : memref<8x8x128xf32, #tpu.memory_space<vmem>>, vector<1x8x128xf32>
    %221 = vector.shape_cast %220 : vector<1x8x128xf32> to vector<8x128xf32>
    %222 = vector.shape_cast %218 : vector<8x128xf32> to vector<1x8x128xf32>
    tpu.vector_store %arg8[%219, %c0_69, %c0_70], %222 {strides = array<i32>} : memref<8x8x128xf32, #tpu.memory_space<vmem>>, vector<1x8x128xf32>,
    %c3_i32 = arith.constant 3 : i32
    %223 = arith.index_cast %c3_i32 : i32 to index
    %c0_71 = arith.constant 0 : index
    %c0_72 = arith.constant 0 : index
    %224 = vector.load %arg9[%223, %c0_71, %c0_72] : memref<8x8x512xf32, #tpu.memory_space<vmem>>, vector<1x8x512xf32>
    %225 = vector.shape_cast %224 : vector<1x8x512xf32> to vector<8x512xf32>
    %226 = arith.truncf %184 : vector<8x128xf32> to vector<8x128xbf16>
    %c0_73 = arith.constant 0 : index
    %c0_74 = arith.constant 0 : index
    %227 = vector.load %arg3[%c0_73, %c0_74] : memref<128x512xbf16, #tpu.memory_space<vmem>>, vector<128x512xbf16>
    %cst_75 = arith.constant dense<0.000000e+00> : vector<8x512xf32>
    %228 = tpu.matmul %226, %227, %cst_75 {dimension_numbers = #tpu.dot_dimension_numbers<[1], [0], [0], [1], [0, 0, 1, 1], [], []>} : vector<8x128xbf16>, vector<128x512xbf16>, vector<8x512xf32> -> vector<8x512xf32>
    %229 = arith.addf %225, %228 : vector<8x512xf32>
    %230 = vector.extract_strided_slice %229 {offsets = [0, 0], sizes = [8, 128], strides = [1, 1]} : vector<8x512xf32> to vector<8x128xf32>
    %231 = arith.negf %230 : vector<8x128xf32>
    %232 = math.exp %231 : vector<8x128xf32>
    %cst_76 = arith.constant 1.000000e+00 : f32
    %233 = vector.broadcast %cst_76 : f32 to vector<8x128xf32>
    %234 = arith.addf %233, %232 : vector<8x128xf32>
    %235 = arith.divf %233, %234 : vector<8x128xf32>
    %236 = vector.extract_strided_slice %229 {offsets = [0, 128], sizes = [8, 128], strides = [1, 1]} : vector<8x512xf32> to vector<8x128xf32>
    %237 = arith.negf %236 : vector<8x128xf32>
    %238 = math.exp %237 : vector<8x128xf32>
    %cst_77 = arith.constant 1.000000e+00 : f32
    %239 = vector.broadcast %cst_77 : f32 to vector<8x128xf32>
    %240 = arith.addf %239, %238 : vector<8x128xf32>
    %241 = arith.divf %239, %240 : vector<8x128xf32>
    %242 = vector.extract_strided_slice %229 {offsets = [0, 256], sizes = [8, 128], strides = [1, 1]} : vector<8x512xf32> to vector<8x128xf32>
    %243 = math.tanh %242 : vector<8x128xf32>
    %244 = vector.extract_strided_slice %229 {offsets = [0, 384], sizes = [8, 128], strides = [1, 1]} : vector<8x512xf32> to vector<8x128xf32>
    %245 = arith.negf %244 : vector<8x128xf32>
    %246 = math.exp %245 : vector<8x128xf32>
    %cst_78 = arith.constant 1.000000e+00 : f32
    %247 = vector.broadcast %cst_78 : f32 to vector<8x128xf32>
    %248 = arith.addf %247, %246 : vector<8x128xf32>
    %249 = arith.divf %247, %248 : vector<8x128xf32>
    %250 = arith.mulf %241, %182 : vector<8x128xf32>
    %251 = arith.mulf %235, %243 : vector<8x128xf32>
    %252 = arith.addf %250, %251 : vector<8x128xf32>
    %253 = math.tanh %252 : vector<8x128xf32>
    %254 = arith.mulf %249, %253 : vector<8x128xf32>
    %255 = arith.truncf %254 : vector<8x128xf32> to vector<8x128xbf16>
    %c0_79 = arith.constant 0 : index
    %c0_80 = arith.constant 0 : index
    %256 = vector.load %arg5[%c0_79, %c0_80] : memref<128x512xbf16, #tpu.memory_space<vmem>>, vector<128x512xbf16>
    %cst_81 = arith.constant dense<0.000000e+00> : vector<8x512xf32>
    %257 = tpu.matmul %255, %256, %cst_81 {dimension_numbers = #tpu.dot_dimension_numbers<[1], [0], [0], [1], [0, 0, 1, 1], [], []>} : vector<8x128xbf16>, vector<128x512xbf16>, vector<8x512xf32> -> vector<8x512xf32>
    %258 = arith.truncf %218 : vector<8x128xf32> to vector<8x128xbf16>
    %c0_82 = arith.constant 0 : index
    %c0_83 = arith.constant 0 : index
    %259 = vector.load %arg6[%c0_82, %c0_83] : memref<128x512xbf16, #tpu.memory_space<vmem>>, vector<128x512xbf16>
    %cst_84 = arith.constant dense<0.000000e+00> : vector<8x512xf32>
    %260 = tpu.matmul %258, %259, %cst_84 {dimension_numbers = #tpu.dot_dimension_numbers<[1], [0], [0], [1], [0, 0, 1, 1], [], []>} : vector<8x128xbf16>, vector<128x512xbf16>, vector<8x512xf32> -> vector<8x512xf32>
    %261 = arith.addf %257, %260 : vector<8x512xf32>
    %262 = vector.broadcast %8 : vector<1x512xf32> to vector<8x512xf32>
    %263 = arith.addf %261, %262 : vector<8x512xf32>
    %264 = vector.extract_strided_slice %263 {offsets = [0, 0], sizes = [8, 128], strides = [1, 1]} : vector<8x512xf32> to vector<8x128xf32>
    %265 = arith.negf %264 : vector<8x128xf32>
    %266 = math.exp %265 : vector<8x128xf32>
    %cst_85 = arith.constant 1.000000e+00 : f32
    %267 = vector.broadcast %cst_85 : f32 to vector<8x128xf32>
    %268 = arith.addf %267, %266 : vector<8x128xf32>
    %269 = arith.divf %267, %268 : vector<8x128xf32>
    %270 = vector.extract_strided_slice %263 {offsets = [0, 128], sizes = [8, 128], strides = [1, 1]} : vector<8x512xf32> to vector<8x128xf32>
    %271 = arith.negf %270 : vector<8x128xf32>
    %272 = math.exp %271 : vector<8x128xf32>
    %cst_86 = arith.constant 1.000000e+00 : f32
    %273 = vector.broadcast %cst_86 : f32 to vector<8x128xf32>
    %274 = arith.addf %273, %272 : vector<8x128xf32>
    %275 = arith.divf %273, %274 : vector<8x128xf32>
    %276 = vector.extract_strided_slice %263 {offsets = [0, 256], sizes = [8, 128], strides = [1, 1]} : vector<8x512xf32> to vector<8x128xf32>
    %277 = math.tanh %276 : vector<8x128xf32>
    %278 = vector.extract_strided_slice %263 {offsets = [0, 384], sizes = [8, 128], strides = [1, 1]} : vector<8x512xf32> to vector<8x128xf32>
    %279 = arith.negf %278 : vector<8x128xf32>
    %280 = math.exp %279 : vector<8x128xf32>
    %cst_87 = arith.constant 1.000000e+00 : f32
    %281 = vector.broadcast %cst_87 : f32 to vector<8x128xf32>
    %282 = arith.addf %281, %280 : vector<8x128xf32>
    %283 = arith.divf %281, %282 : vector<8x128xf32>
    %284 = arith.mulf %275, %216 : vector<8x128xf32>
    %285 = arith.mulf %269, %277 : vector<8x128xf32>
    %286 = arith.addf %284, %285 : vector<8x128xf32>
    %287 = math.tanh %286 : vector<8x128xf32>
    %288 = arith.mulf %283, %287 : vector<8x128xf32>
    %289 = arith.index_cast %c3_i32 : i32 to index
    %c0_88 = arith.constant 0 : index
    %c0_89 = arith.constant 0 : index
    %290 = vector.load %arg8[%289, %c0_88, %c0_89] : memref<8x8x128xf32, #tpu.memory_space<vmem>>, vector<1x8x128xf32>
    %291 = vector.shape_cast %290 : vector<1x8x128xf32> to vector<8x128xf32>
    %292 = vector.shape_cast %288 : vector<8x128xf32> to vector<1x8x128xf32>
    tpu.vector_store %arg8[%289, %c0_88, %c0_89], %292 {strides = array<i32>} : memref<8x8x128xf32, #tpu.memory_space<vmem>>, vector<1x8x128xf32>,
    %c4_i32 = arith.constant 4 : i32
    %293 = arith.index_cast %c4_i32 : i32 to index
    %c0_90 = arith.constant 0 : index
    %c0_91 = arith.constant 0 : index
    %294 = vector.load %arg9[%293, %c0_90, %c0_91] : memref<8x8x512xf32, #tpu.memory_space<vmem>>, vector<1x8x512xf32>
    %295 = vector.shape_cast %294 : vector<1x8x512xf32> to vector<8x512xf32>
    %296 = arith.truncf %254 : vector<8x128xf32> to vector<8x128xbf16>
    %c0_92 = arith.constant 0 : index
    %c0_93 = arith.constant 0 : index
    %297 = vector.load %arg3[%c0_92, %c0_93] : memref<128x512xbf16, #tpu.memory_space<vmem>>, vector<128x512xbf16>
    %cst_94 = arith.constant dense<0.000000e+00> : vector<8x512xf32>
    %298 = tpu.matmul %296, %297, %cst_94 {dimension_numbers = #tpu.dot_dimension_numbers<[1], [0], [0], [1], [0, 0, 1, 1], [], []>} : vector<8x128xbf16>, vector<128x512xbf16>, vector<8x512xf32> -> vector<8x512xf32>
    %299 = arith.addf %295, %298 : vector<8x512xf32>
    %300 = vector.extract_strided_slice %299 {offsets = [0, 0], sizes = [8, 128], strides = [1, 1]} : vector<8x512xf32> to vector<8x128xf32>
    %301 = arith.negf %300 : vector<8x128xf32>
    %302 = math.exp %301 : vector<8x128xf32>
    %cst_95 = arith.constant 1.000000e+00 : f32
    %303 = vector.broadcast %cst_95 : f32 to vector<8x128xf32>
    %304 = arith.addf %303, %302 : vector<8x128xf32>
    %305 = arith.divf %303, %304 : vector<8x128xf32>
    %306 = vector.extract_strided_slice %299 {offsets = [0, 128], sizes = [8, 128], strides = [1, 1]} : vector<8x512xf32> to vector<8x128xf32>
    %307 = arith.negf %306 : vector<8x128xf32>
    %308 = math.exp %307 : vector<8x128xf32>
    %cst_96 = arith.constant 1.000000e+00 : f32
    %309 = vector.broadcast %cst_96 : f32 to vector<8x128xf32>
    %310 = arith.addf %309, %308 : vector<8x128xf32>
    %311 = arith.divf %309, %310 : vector<8x128xf32>
    %312 = vector.extract_strided_slice %299 {offsets = [0, 256], sizes = [8, 128], strides = [1, 1]} : vector<8x512xf32> to vector<8x128xf32>
    %313 = math.tanh %312 : vector<8x128xf32>
    %314 = vector.extract_strided_slice %299 {offsets = [0, 384], sizes = [8, 128], strides = [1, 1]} : vector<8x512xf32> to vector<8x128xf32>
    %315 = arith.negf %314 : vector<8x128xf32>
    %316 = math.exp %315 : vector<8x128xf32>
    %cst_97 = arith.constant 1.000000e+00 : f32
    %317 = vector.broadcast %cst_97 : f32 to vector<8x128xf32>
    %318 = arith.addf %317, %316 : vector<8x128xf32>
    %319 = arith.divf %317, %318 : vector<8x128xf32>
    %320 = arith.mulf %311, %252 : vector<8x128xf32>
    %321 = arith.mulf %305, %313 : vector<8x128xf32>
    %322 = arith.addf %320, %321 : vector<8x128xf32>
    %323 = math.tanh %322 : vector<8x128xf32>
    %324 = arith.mulf %319, %323 : vector<8x128xf32>
    %325 = arith.truncf %324 : vector<8x128xf32> to vector<8x128xbf16>
    %c0_98 = arith.constant 0 : index
    %c0_99 = arith.constant 0 : index
    %326 = vector.load %arg5[%c0_98, %c0_99] : memref<128x512xbf16, #tpu.memory_space<vmem>>, vector<128x512xbf16>
    %cst_100 = arith.constant dense<0.000000e+00> : vector<8x512xf32>
    %327 = tpu.matmul %325, %326, %cst_100 {dimension_numbers = #tpu.dot_dimension_numbers<[1], [0], [0], [1], [0, 0, 1, 1], [], []>} : vector<8x128xbf16>, vector<128x512xbf16>, vector<8x512xf32> -> vector<8x512xf32>
    %328 = arith.truncf %288 : vector<8x128xf32> to vector<8x128xbf16>
    %c0_101 = arith.constant 0 : index
    %c0_102 = arith.constant 0 : index
    %329 = vector.load %arg6[%c0_101, %c0_102] : memref<128x512xbf16, #tpu.memory_space<vmem>>, vector<128x512xbf16>
    %cst_103 = arith.constant dense<0.000000e+00> : vector<8x512xf32>
    %330 = tpu.matmul %328, %329, %cst_103 {dimension_numbers = #tpu.dot_dimension_numbers<[1], [0], [0], [1], [0, 0, 1, 1], [], []>} : vector<8x128xbf16>, vector<128x512xbf16>, vector<8x512xf32> -> vector<8x512xf32>
    %331 = arith.addf %327, %330 : vector<8x512xf32>
    %332 = vector.broadcast %8 : vector<1x512xf32> to vector<8x512xf32>
    %333 = arith.addf %331, %332 : vector<8x512xf32>
    %334 = vector.extract_strided_slice %333 {offsets = [0, 0], sizes = [8, 128], strides = [1, 1]} : vector<8x512xf32> to vector<8x128xf32>
    %335 = arith.negf %334 : vector<8x128xf32>
    %336 = math.exp %335 : vector<8x128xf32>
    %cst_104 = arith.constant 1.000000e+00 : f32
    %337 = vector.broadcast %cst_104 : f32 to vector<8x128xf32>
    %338 = arith.addf %337, %336 : vector<8x128xf32>
    %339 = arith.divf %337, %338 : vector<8x128xf32>
    %340 = vector.extract_strided_slice %333 {offsets = [0, 128], sizes = [8, 128], strides = [1, 1]} : vector<8x512xf32> to vector<8x128xf32>
    %341 = arith.negf %340 : vector<8x128xf32>
    %342 = math.exp %341 : vector<8x128xf32>
    %cst_105 = arith.constant 1.000000e+00 : f32
    %343 = vector.broadcast %cst_105 : f32 to vector<8x128xf32>
    %344 = arith.addf %343, %342 : vector<8x128xf32>
    %345 = arith.divf %343, %344 : vector<8x128xf32>
    %346 = vector.extract_strided_slice %333 {offsets = [0, 256], sizes = [8, 128], strides = [1, 1]} : vector<8x512xf32> to vector<8x128xf32>
    %347 = math.tanh %346 : vector<8x128xf32>
    %348 = vector.extract_strided_slice %333 {offsets = [0, 384], sizes = [8, 128], strides = [1, 1]} : vector<8x512xf32> to vector<8x128xf32>
    %349 = arith.negf %348 : vector<8x128xf32>
    %350 = math.exp %349 : vector<8x128xf32>
    %cst_106 = arith.constant 1.000000e+00 : f32
    %351 = vector.broadcast %cst_106 : f32 to vector<8x128xf32>
    %352 = arith.addf %351, %350 : vector<8x128xf32>
    %353 = arith.divf %351, %352 : vector<8x128xf32>
    %354 = arith.mulf %345, %286 : vector<8x128xf32>
    %355 = arith.mulf %339, %347 : vector<8x128xf32>
    %356 = arith.addf %354, %355 : vector<8x128xf32>
    %357 = math.tanh %356 : vector<8x128xf32>
    %358 = arith.mulf %353, %357 : vector<8x128xf32>
    %359 = arith.index_cast %c4_i32 : i32 to index
    %c0_107 = arith.constant 0 : index
    %c0_108 = arith.constant 0 : index
    %360 = vector.load %arg8[%359, %c0_107, %c0_108] : memref<8x8x128xf32, #tpu.memory_space<vmem>>, vector<1x8x128xf32>
    %361 = vector.shape_cast %360 : vector<1x8x128xf32> to vector<8x128xf32>
    %362 = vector.shape_cast %358 : vector<8x128xf32> to vector<1x8x128xf32>
    tpu.vector_store %arg8[%359, %c0_107, %c0_108], %362 {strides = array<i32>} : memref<8x8x128xf32, #tpu.memory_space<vmem>>, vector<1x8x128xf32>,
    %c5_i32 = arith.constant 5 : i32
    %363 = arith.index_cast %c5_i32 : i32 to index
    %c0_109 = arith.constant 0 : index
    %c0_110 = arith.constant 0 : index
    %364 = vector.load %arg9[%363, %c0_109, %c0_110] : memref<8x8x512xf32, #tpu.memory_space<vmem>>, vector<1x8x512xf32>
    %365 = vector.shape_cast %364 : vector<1x8x512xf32> to vector<8x512xf32>
    %366 = arith.truncf %324 : vector<8x128xf32> to vector<8x128xbf16>
    %c0_111 = arith.constant 0 : index
    %c0_112 = arith.constant 0 : index
    %367 = vector.load %arg3[%c0_111, %c0_112] : memref<128x512xbf16, #tpu.memory_space<vmem>>, vector<128x512xbf16>
    %cst_113 = arith.constant dense<0.000000e+00> : vector<8x512xf32>
    %368 = tpu.matmul %366, %367, %cst_113 {dimension_numbers = #tpu.dot_dimension_numbers<[1], [0], [0], [1], [0, 0, 1, 1], [], []>} : vector<8x128xbf16>, vector<128x512xbf16>, vector<8x512xf32> -> vector<8x512xf32>
    %369 = arith.addf %365, %368 : vector<8x512xf32>
    %370 = vector.extract_strided_slice %369 {offsets = [0, 0], sizes = [8, 128], strides = [1, 1]} : vector<8x512xf32> to vector<8x128xf32>
    %371 = arith.negf %370 : vector<8x128xf32>
    %372 = math.exp %371 : vector<8x128xf32>
    %cst_114 = arith.constant 1.000000e+00 : f32
    %373 = vector.broadcast %cst_114 : f32 to vector<8x128xf32>
    %374 = arith.addf %373, %372 : vector<8x128xf32>
    %375 = arith.divf %373, %374 : vector<8x128xf32>
    %376 = vector.extract_strided_slice %369 {offsets = [0, 128], sizes = [8, 128], strides = [1, 1]} : vector<8x512xf32> to vector<8x128xf32>
    %377 = arith.negf %376 : vector<8x128xf32>
    %378 = math.exp %377 : vector<8x128xf32>
    %cst_115 = arith.constant 1.000000e+00 : f32
    %379 = vector.broadcast %cst_115 : f32 to vector<8x128xf32>
    %380 = arith.addf %379, %378 : vector<8x128xf32>
    %381 = arith.divf %379, %380 : vector<8x128xf32>
    %382 = vector.extract_strided_slice %369 {offsets = [0, 256], sizes = [8, 128], strides = [1, 1]} : vector<8x512xf32> to vector<8x128xf32>
    %383 = math.tanh %382 : vector<8x128xf32>
    %384 = vector.extract_strided_slice %369 {offsets = [0, 384], sizes = [8, 128], strides = [1, 1]} : vector<8x512xf32> to vector<8x128xf32>
    %385 = arith.negf %384 : vector<8x128xf32>
    %386 = math.exp %385 : vector<8x128xf32>
    %cst_116 = arith.constant 1.000000e+00 : f32
    %387 = vector.broadcast %cst_116 : f32 to vector<8x128xf32>
    %388 = arith.addf %387, %386 : vector<8x128xf32>
    %389 = arith.divf %387, %388 : vector<8x128xf32>
    %390 = arith.mulf %381, %322 : vector<8x128xf32>
    %391 = arith.mulf %375, %383 : vector<8x128xf32>
    %392 = arith.addf %390, %391 : vector<8x128xf32>
    %393 = math.tanh %392 : vector<8x128xf32>
    %394 = arith.mulf %389, %393 : vector<8x128xf32>
    %395 = arith.truncf %394 : vector<8x128xf32> to vector<8x128xbf16>
    %c0_117 = arith.constant 0 : index
    %c0_118 = arith.constant 0 : index
    %396 = vector.load %arg5[%c0_117, %c0_118] : memref<128x512xbf16, #tpu.memory_space<vmem>>, vector<128x512xbf16>
    %cst_119 = arith.constant dense<0.000000e+00> : vector<8x512xf32>
    %397 = tpu.matmul %395, %396, %cst_119 {dimension_numbers = #tpu.dot_dimension_numbers<[1], [0], [0], [1], [0, 0, 1, 1], [], []>} : vector<8x128xbf16>, vector<128x512xbf16>, vector<8x512xf32> -> vector<8x512xf32>
    %398 = arith.truncf %358 : vector<8x128xf32> to vector<8x128xbf16>
    %c0_120 = arith.constant 0 : index
    %c0_121 = arith.constant 0 : index
    %399 = vector.load %arg6[%c0_120, %c0_121] : memref<128x512xbf16, #tpu.memory_space<vmem>>, vector<128x512xbf16>
    %cst_122 = arith.constant dense<0.000000e+00> : vector<8x512xf32>
    %400 = tpu.matmul %398, %399, %cst_122 {dimension_numbers = #tpu.dot_dimension_numbers<[1], [0], [0], [1], [0, 0, 1, 1], [], []>} : vector<8x128xbf16>, vector<128x512xbf16>, vector<8x512xf32> -> vector<8x512xf32>
    %401 = arith.addf %397, %400 : vector<8x512xf32>
    %402 = vector.broadcast %8 : vector<1x512xf32> to vector<8x512xf32>
    %403 = arith.addf %401, %402 : vector<8x512xf32>
    %404 = vector.extract_strided_slice %403 {offsets = [0, 0], sizes = [8, 128], strides = [1, 1]} : vector<8x512xf32> to vector<8x128xf32>
    %405 = arith.negf %404 : vector<8x128xf32>
    %406 = math.exp %405 : vector<8x128xf32>
    %cst_123 = arith.constant 1.000000e+00 : f32
    %407 = vector.broadcast %cst_123 : f32 to vector<8x128xf32>
    %408 = arith.addf %407, %406 : vector<8x128xf32>
    %409 = arith.divf %407, %408 : vector<8x128xf32>
    %410 = vector.extract_strided_slice %403 {offsets = [0, 128], sizes = [8, 128], strides = [1, 1]} : vector<8x512xf32> to vector<8x128xf32>
    %411 = arith.negf %410 : vector<8x128xf32>
    %412 = math.exp %411 : vector<8x128xf32>
    %cst_124 = arith.constant 1.000000e+00 : f32
    %413 = vector.broadcast %cst_124 : f32 to vector<8x128xf32>
    %414 = arith.addf %413, %412 : vector<8x128xf32>
    %415 = arith.divf %413, %414 : vector<8x128xf32>
    %416 = vector.extract_strided_slice %403 {offsets = [0, 256], sizes = [8, 128], strides = [1, 1]} : vector<8x512xf32> to vector<8x128xf32>
    %417 = math.tanh %416 : vector<8x128xf32>
    %418 = vector.extract_strided_slice %403 {offsets = [0, 384], sizes = [8, 128], strides = [1, 1]} : vector<8x512xf32> to vector<8x128xf32>
    %419 = arith.negf %418 : vector<8x128xf32>
    %420 = math.exp %419 : vector<8x128xf32>
    %cst_125 = arith.constant 1.000000e+00 : f32
    %421 = vector.broadcast %cst_125 : f32 to vector<8x128xf32>
    %422 = arith.addf %421, %420 : vector<8x128xf32>
    %423 = arith.divf %421, %422 : vector<8x128xf32>
    %424 = arith.mulf %415, %356 : vector<8x128xf32>
    %425 = arith.mulf %409, %417 : vector<8x128xf32>
    %426 = arith.addf %424, %425 : vector<8x128xf32>
    %427 = math.tanh %426 : vector<8x128xf32>
    %428 = arith.mulf %423, %427 : vector<8x128xf32>
    %429 = arith.index_cast %c5_i32 : i32 to index
    %c0_126 = arith.constant 0 : index
    %c0_127 = arith.constant 0 : index
    %430 = vector.load %arg8[%429, %c0_126, %c0_127] : memref<8x8x128xf32, #tpu.memory_space<vmem>>, vector<1x8x128xf32>
    %431 = vector.shape_cast %430 : vector<1x8x128xf32> to vector<8x128xf32>
    %432 = vector.shape_cast %428 : vector<8x128xf32> to vector<1x8x128xf32>
    tpu.vector_store %arg8[%429, %c0_126, %c0_127], %432 {strides = array<i32>} : memref<8x8x128xf32, #tpu.memory_space<vmem>>, vector<1x8x128xf32>,
    %c6_i32 = arith.constant 6 : i32
    %433 = arith.index_cast %c6_i32 : i32 to index
    %c0_128 = arith.constant 0 : index
    %c0_129 = arith.constant 0 : index
    %434 = vector.load %arg9[%433, %c0_128, %c0_129] : memref<8x8x512xf32, #tpu.memory_space<vmem>>, vector<1x8x512xf32>
    %435 = vector.shape_cast %434 : vector<1x8x512xf32> to vector<8x512xf32>
    %436 = arith.truncf %394 : vector<8x128xf32> to vector<8x128xbf16>
    %c0_130 = arith.constant 0 : index
    %c0_131 = arith.constant 0 : index
    %437 = vector.load %arg3[%c0_130, %c0_131] : memref<128x512xbf16, #tpu.memory_space<vmem>>, vector<128x512xbf16>
    %cst_132 = arith.constant dense<0.000000e+00> : vector<8x512xf32>
    %438 = tpu.matmul %436, %437, %cst_132 {dimension_numbers = #tpu.dot_dimension_numbers<[1], [0], [0], [1], [0, 0, 1, 1], [], []>} : vector<8x128xbf16>, vector<128x512xbf16>, vector<8x512xf32> -> vector<8x512xf32>
    %439 = arith.addf %435, %438 : vector<8x512xf32>
    %440 = vector.extract_strided_slice %439 {offsets = [0, 0], sizes = [8, 128], strides = [1, 1]} : vector<8x512xf32> to vector<8x128xf32>
    %441 = arith.negf %440 : vector<8x128xf32>
    %442 = math.exp %441 : vector<8x128xf32>
    %cst_133 = arith.constant 1.000000e+00 : f32
    %443 = vector.broadcast %cst_133 : f32 to vector<8x128xf32>
    %444 = arith.addf %443, %442 : vector<8x128xf32>
    %445 = arith.divf %443, %444 : vector<8x128xf32>
    %446 = vector.extract_strided_slice %439 {offsets = [0, 128], sizes = [8, 128], strides = [1, 1]} : vector<8x512xf32> to vector<8x128xf32>
    %447 = arith.negf %446 : vector<8x128xf32>
    %448 = math.exp %447 : vector<8x128xf32>
    %cst_134 = arith.constant 1.000000e+00 : f32
    %449 = vector.broadcast %cst_134 : f32 to vector<8x128xf32>
    %450 = arith.addf %449, %448 : vector<8x128xf32>
    %451 = arith.divf %449, %450 : vector<8x128xf32>
    %452 = vector.extract_strided_slice %439 {offsets = [0, 256], sizes = [8, 128], strides = [1, 1]} : vector<8x512xf32> to vector<8x128xf32>
    %453 = math.tanh %452 : vector<8x128xf32>
    %454 = vector.extract_strided_slice %439 {offsets = [0, 384], sizes = [8, 128], strides = [1, 1]} : vector<8x512xf32> to vector<8x128xf32>
    %455 = arith.negf %454 : vector<8x128xf32>
    %456 = math.exp %455 : vector<8x128xf32>
    %cst_135 = arith.constant 1.000000e+00 : f32
    %457 = vector.broadcast %cst_135 : f32 to vector<8x128xf32>
    %458 = arith.addf %457, %456 : vector<8x128xf32>
    %459 = arith.divf %457, %458 : vector<8x128xf32>
    %460 = arith.mulf %451, %392 : vector<8x128xf32>
    %461 = arith.mulf %445, %453 : vector<8x128xf32>
    %462 = arith.addf %460, %461 : vector<8x128xf32>
    %463 = math.tanh %462 : vector<8x128xf32>
    %464 = arith.mulf %459, %463 : vector<8x128xf32>
    %465 = arith.truncf %464 : vector<8x128xf32> to vector<8x128xbf16>
    %c0_136 = arith.constant 0 : index
    %c0_137 = arith.constant 0 : index
    %466 = vector.load %arg5[%c0_136, %c0_137] : memref<128x512xbf16, #tpu.memory_space<vmem>>, vector<128x512xbf16>
    %cst_138 = arith.constant dense<0.000000e+00> : vector<8x512xf32>
    %467 = tpu.matmul %465, %466, %cst_138 {dimension_numbers = #tpu.dot_dimension_numbers<[1], [0], [0], [1], [0, 0, 1, 1], [], []>} : vector<8x128xbf16>, vector<128x512xbf16>, vector<8x512xf32> -> vector<8x512xf32>
    %468 = arith.truncf %428 : vector<8x128xf32> to vector<8x128xbf16>
    %c0_139 = arith.constant 0 : index
    %c0_140 = arith.constant 0 : index
    %469 = vector.load %arg6[%c0_139, %c0_140] : memref<128x512xbf16, #tpu.memory_space<vmem>>, vector<128x512xbf16>
    %cst_141 = arith.constant dense<0.000000e+00> : vector<8x512xf32>
    %470 = tpu.matmul %468, %469, %cst_141 {dimension_numbers = #tpu.dot_dimension_numbers<[1], [0], [0], [1], [0, 0, 1, 1], [], []>} : vector<8x128xbf16>, vector<128x512xbf16>, vector<8x512xf32> -> vector<8x512xf32>
    %471 = arith.addf %467, %470 : vector<8x512xf32>
    %472 = vector.broadcast %8 : vector<1x512xf32> to vector<8x512xf32>
    %473 = arith.addf %471, %472 : vector<8x512xf32>
    %474 = vector.extract_strided_slice %473 {offsets = [0, 0], sizes = [8, 128], strides = [1, 1]} : vector<8x512xf32> to vector<8x128xf32>
    %475 = arith.negf %474 : vector<8x128xf32>
    %476 = math.exp %475 : vector<8x128xf32>
    %cst_142 = arith.constant 1.000000e+00 : f32
    %477 = vector.broadcast %cst_142 : f32 to vector<8x128xf32>
    %478 = arith.addf %477, %476 : vector<8x128xf32>
    %479 = arith.divf %477, %478 : vector<8x128xf32>
    %480 = vector.extract_strided_slice %473 {offsets = [0, 128], sizes = [8, 128], strides = [1, 1]} : vector<8x512xf32> to vector<8x128xf32>
    %481 = arith.negf %480 : vector<8x128xf32>
    %482 = math.exp %481 : vector<8x128xf32>
    %cst_143 = arith.constant 1.000000e+00 : f32
    %483 = vector.broadcast %cst_143 : f32 to vector<8x128xf32>
    %484 = arith.addf %483, %482 : vector<8x128xf32>
    %485 = arith.divf %483, %484 : vector<8x128xf32>
    %486 = vector.extract_strided_slice %473 {offsets = [0, 256], sizes = [8, 128], strides = [1, 1]} : vector<8x512xf32> to vector<8x128xf32>
    %487 = math.tanh %486 : vector<8x128xf32>
    %488 = vector.extract_strided_slice %473 {offsets = [0, 384], sizes = [8, 128], strides = [1, 1]} : vector<8x512xf32> to vector<8x128xf32>
    %489 = arith.negf %488 : vector<8x128xf32>
    %490 = math.exp %489 : vector<8x128xf32>
    %cst_144 = arith.constant 1.000000e+00 : f32
    %491 = vector.broadcast %cst_144 : f32 to vector<8x128xf32>
    %492 = arith.addf %491, %490 : vector<8x128xf32>
    %493 = arith.divf %491, %492 : vector<8x128xf32>
    %494 = arith.mulf %485, %426 : vector<8x128xf32>
    %495 = arith.mulf %479, %487 : vector<8x128xf32>
    %496 = arith.addf %494, %495 : vector<8x128xf32>
    %497 = math.tanh %496 : vector<8x128xf32>
    %498 = arith.mulf %493, %497 : vector<8x128xf32>
    %499 = arith.index_cast %c6_i32 : i32 to index
    %c0_145 = arith.constant 0 : index
    %c0_146 = arith.constant 0 : index
    %500 = vector.load %arg8[%499, %c0_145, %c0_146] : memref<8x8x128xf32, #tpu.memory_space<vmem>>, vector<1x8x128xf32>
    %501 = vector.shape_cast %500 : vector<1x8x128xf32> to vector<8x128xf32>
    %502 = vector.shape_cast %498 : vector<8x128xf32> to vector<1x8x128xf32>
    tpu.vector_store %arg8[%499, %c0_145, %c0_146], %502 {strides = array<i32>} : memref<8x8x128xf32, #tpu.memory_space<vmem>>, vector<1x8x128xf32>,
    %c7_i32 = arith.constant 7 : i32
    %503 = arith.index_cast %c7_i32 : i32 to index
    %c0_147 = arith.constant 0 : index
    %c0_148 = arith.constant 0 : index
    %504 = vector.load %arg9[%503, %c0_147, %c0_148] : memref<8x8x512xf32, #tpu.memory_space<vmem>>, vector<1x8x512xf32>
    %505 = vector.shape_cast %504 : vector<1x8x512xf32> to vector<8x512xf32>
    %506 = arith.truncf %464 : vector<8x128xf32> to vector<8x128xbf16>
    %c0_149 = arith.constant 0 : index
    %c0_150 = arith.constant 0 : index
    %507 = vector.load %arg3[%c0_149, %c0_150] : memref<128x512xbf16, #tpu.memory_space<vmem>>, vector<128x512xbf16>
    %cst_151 = arith.constant dense<0.000000e+00> : vector<8x512xf32>
    %508 = tpu.matmul %506, %507, %cst_151 {dimension_numbers = #tpu.dot_dimension_numbers<[1], [0], [0], [1], [0, 0, 1, 1], [], []>} : vector<8x128xbf16>, vector<128x512xbf16>, vector<8x512xf32> -> vector<8x512xf32>
    %509 = arith.addf %505, %508 : vector<8x512xf32>
    %510 = vector.extract_strided_slice %509 {offsets = [0, 0], sizes = [8, 128], strides = [1, 1]} : vector<8x512xf32> to vector<8x128xf32>
    %511 = arith.negf %510 : vector<8x128xf32>
    %512 = math.exp %511 : vector<8x128xf32>
    %cst_152 = arith.constant 1.000000e+00 : f32
    %513 = vector.broadcast %cst_152 : f32 to vector<8x128xf32>
    %514 = arith.addf %513, %512 : vector<8x128xf32>
    %515 = arith.divf %513, %514 : vector<8x128xf32>
    %516 = vector.extract_strided_slice %509 {offsets = [0, 128], sizes = [8, 128], strides = [1, 1]} : vector<8x512xf32> to vector<8x128xf32>
    %517 = arith.negf %516 : vector<8x128xf32>
    %518 = math.exp %517 : vector<8x128xf32>
    %cst_153 = arith.constant 1.000000e+00 : f32
    %519 = vector.broadcast %cst_153 : f32 to vector<8x128xf32>
    %520 = arith.addf %519, %518 : vector<8x128xf32>
    %521 = arith.divf %519, %520 : vector<8x128xf32>
    %522 = vector.extract_strided_slice %509 {offsets = [0, 256], sizes = [8, 128], strides = [1, 1]} : vector<8x512xf32> to vector<8x128xf32>
    %523 = math.tanh %522 : vector<8x128xf32>
    %524 = vector.extract_strided_slice %509 {offsets = [0, 384], sizes = [8, 128], strides = [1, 1]} : vector<8x512xf32> to vector<8x128xf32>
    %525 = arith.negf %524 : vector<8x128xf32>
    %526 = math.exp %525 : vector<8x128xf32>
    %cst_154 = arith.constant 1.000000e+00 : f32
    %527 = vector.broadcast %cst_154 : f32 to vector<8x128xf32>
    %528 = arith.addf %527, %526 : vector<8x128xf32>
    %529 = arith.divf %527, %528 : vector<8x128xf32>
    %530 = arith.mulf %521, %462 : vector<8x128xf32>
    %531 = arith.mulf %515, %523 : vector<8x128xf32>
    %532 = arith.addf %530, %531 : vector<8x128xf32>
    %533 = math.tanh %532 : vector<8x128xf32>
    %534 = arith.mulf %529, %533 : vector<8x128xf32>
    %535 = arith.truncf %534 : vector<8x128xf32> to vector<8x128xbf16>
    %c0_155 = arith.constant 0 : index
    %c0_156 = arith.constant 0 : index
    %536 = vector.load %arg5[%c0_155, %c0_156] : memref<128x512xbf16, #tpu.memory_space<vmem>>, vector<128x512xbf16>
    %cst_157 = arith.constant dense<0.000000e+00> : vector<8x512xf32>
    %537 = tpu.matmul %535, %536, %cst_157 {dimension_numbers = #tpu.dot_dimension_numbers<[1], [0], [0], [1], [0, 0, 1, 1], [], []>} : vector<8x128xbf16>, vector<128x512xbf16>, vector<8x512xf32> -> vector<8x512xf32>
    %538 = arith.truncf %498 : vector<8x128xf32> to vector<8x128xbf16>
    %c0_158 = arith.constant 0 : index
    %c0_159 = arith.constant 0 : index
    %539 = vector.load %arg6[%c0_158, %c0_159] : memref<128x512xbf16, #tpu.memory_space<vmem>>, vector<128x512xbf16>
    %cst_160 = arith.constant dense<0.000000e+00> : vector<8x512xf32>
    %540 = tpu.matmul %538, %539, %cst_160 {dimension_numbers = #tpu.dot_dimension_numbers<[1], [0], [0], [1], [0, 0, 1, 1], [], []>} : vector<8x128xbf16>, vector<128x512xbf16>, vector<8x512xf32> -> vector<8x512xf32>
    %541 = arith.addf %537, %540 : vector<8x512xf32>
    %542 = vector.broadcast %8 : vector<1x512xf32> to vector<8x512xf32>
    %543 = arith.addf %541, %542 : vector<8x512xf32>
    %544 = vector.extract_strided_slice %543 {offsets = [0, 0], sizes = [8, 128], strides = [1, 1]} : vector<8x512xf32> to vector<8x128xf32>
    %545 = arith.negf %544 : vector<8x128xf32>
    %546 = math.exp %545 : vector<8x128xf32>
    %cst_161 = arith.constant 1.000000e+00 : f32
    %547 = vector.broadcast %cst_161 : f32 to vector<8x128xf32>
    %548 = arith.addf %547, %546 : vector<8x128xf32>
    %549 = arith.divf %547, %548 : vector<8x128xf32>
    %550 = vector.extract_strided_slice %543 {offsets = [0, 128], sizes = [8, 128], strides = [1, 1]} : vector<8x512xf32> to vector<8x128xf32>
    %551 = arith.negf %550 : vector<8x128xf32>
    %552 = math.exp %551 : vector<8x128xf32>
    %cst_162 = arith.constant 1.000000e+00 : f32
    %553 = vector.broadcast %cst_162 : f32 to vector<8x128xf32>
    %554 = arith.addf %553, %552 : vector<8x128xf32>
    %555 = arith.divf %553, %554 : vector<8x128xf32>
    %556 = vector.extract_strided_slice %543 {offsets = [0, 256], sizes = [8, 128], strides = [1, 1]} : vector<8x512xf32> to vector<8x128xf32>
    %557 = math.tanh %556 : vector<8x128xf32>
    %558 = vector.extract_strided_slice %543 {offsets = [0, 384], sizes = [8, 128], strides = [1, 1]} : vector<8x512xf32> to vector<8x128xf32>
    %559 = arith.negf %558 : vector<8x128xf32>
    %560 = math.exp %559 : vector<8x128xf32>
    %cst_163 = arith.constant 1.000000e+00 : f32
    %561 = vector.broadcast %cst_163 : f32 to vector<8x128xf32>
    %562 = arith.addf %561, %560 : vector<8x128xf32>
    %563 = arith.divf %561, %562 : vector<8x128xf32>
    %564 = arith.mulf %555, %496 : vector<8x128xf32>
    %565 = arith.mulf %549, %557 : vector<8x128xf32>
    %566 = arith.addf %564, %565 : vector<8x128xf32>
    %567 = math.tanh %566 : vector<8x128xf32>
    %568 = arith.mulf %563, %567 : vector<8x128xf32>
    %569 = arith.index_cast %c7_i32 : i32 to index
    %c0_164 = arith.constant 0 : index
    %c0_165 = arith.constant 0 : index
    %570 = vector.load %arg8[%569, %c0_164, %c0_165] : memref<8x8x128xf32, #tpu.memory_space<vmem>>, vector<1x8x128xf32>
    %571 = vector.shape_cast %570 : vector<1x8x128xf32> to vector<8x128xf32>
    %572 = vector.shape_cast %568 : vector<8x128xf32> to vector<1x8x128xf32>
    tpu.vector_store %arg8[%569, %c0_164, %c0_165], %572 {strides = array<i32>} : memref<8x8x128xf32, #tpu.memory_space<vmem>>, vector<1x8x128xf32>,
    %c8_i32 = arith.constant 8 : i32
    return
  }
  func.func @transform_0(%arg0: i32) -> (i32, i32) {
    %c0_i32 = arith.constant 0 : i32
    %c0_i32_0 = arith.constant 0 : i32
    %c0_i32_1 = arith.constant 0 : i32
    return %c0_i32, %c0_i32_0 : i32, i32
  }
  func.func @transform_1(%arg0: i32) -> (i32, i32) {
    %c0_i32 = arith.constant 0 : i32
    %c0_i32_0 = arith.constant 0 : i32
    %c0_i32_1 = arith.constant 0 : i32
    return %c0_i32, %c0_i32_0 : i32, i32
  }
  func.func @transform_2(%arg0: i32) -> (i32, i32) {
    %c0_i32 = arith.constant 0 : i32
    %c0_i32_0 = arith.constant 0 : i32
    %c0_i32_1 = arith.constant 0 : i32
    return %c0_i32, %c0_i32_0 : i32, i32
  }
  func.func @transform_3(%arg0: i32) -> (i32, i32) {
    %c0_i32 = arith.constant 0 : i32
    %c0_i32_0 = arith.constant 0 : i32
    %c0_i32_1 = arith.constant 0 : i32
    return %c0_i32, %c0_i32_0 : i32, i32
  }
  func.func @transform_4(%arg0: i32) -> (i32, i32) {
    %c0_i32 = arith.constant 0 : i32
    %c0_i32_0 = arith.constant 0 : i32
    %c0_i32_1 = arith.constant 0 : i32
    return %c0_i32, %c0_i32_0 : i32, i32
  }
  func.func @transform_5(%arg0: i32) -> (i32, i32) {
    %c0_i32 = arith.constant 0 : i32
    %c0_i32_0 = arith.constant 0 : i32
    %c0_i32_1 = arith.constant 0 : i32
    return %c0_i32, %c0_i32_0 : i32, i32
  }
  func.func @transform_6(%arg0: i32) -> (i32, i32) {
    %c0_i32 = arith.constant 0 : i32
    %c0_i32_0 = arith.constant 0 : i32
    %c0_i32_1 = arith.constant 0 : i32
    return %c0_i32, %c0_i32_0 : i32, i32
  }
  func.func @transform_7(%arg0: i32) -> (i32, i32, i32) {
    %c0_i32 = arith.constant 0 : i32
    %c0_i32_0 = arith.constant 0 : i32
    %c0_i32_1 = arith.constant 0 : i32
    %c0_i32_2 = arith.constant 0 : i32
    return %c0_i32, %c0_i32_0, %c0_i32_1 : i32, i32, i32
  }
}

</mosaic_0001>

<llo_original>
// kernel: lstm_autoencoder_forward.1
$region0: #{lstm_autoencoder_forward.1}
  #allocation0 [shape = 'u32[]', space=smem, size = 0x4, offset = 0x4, fixed_abs, tag = 'smem constant byte address 0x4 - core index']
  #allocation1 [shape = 'u32[144,128]{1,0:T(1,128)}', space=vmem, size = 0x12000, scoped, tag = 'internal scratch']
  #allocation2 [shape = 'f32[8,8,512]{2,1,0:T(8,128)}', space=vmem, size = 0x20000, scoped, tag = 'scratch operand']
  %s0 = inlined_call_operand.vmem [shape: bf16[64,128], index: 0, kind: input, shape index: {}]
  %s1 = inlined_call_operand.vmem [shape: bf16[128,512], index: 1, kind: input, shape index: {}]
  %s2 = inlined_call_operand.vmem [shape: bf16[128,512], index: 2, kind: input, shape index: {}]
  %s3 = inlined_call_operand.vmem [shape: f32[1,512], index: 3, kind: input, shape index: {}]
  %s4 = inlined_call_operand.vmem [shape: bf16[128,512], index: 4, kind: input, shape index: {}]
  %s5 = inlined_call_operand.vmem [shape: bf16[128,512], index: 5, kind: input, shape index: {}]
  %s6 = inlined_call_operand.vmem [shape: f32[1,512], index: 6, kind: input, shape index: {}]
  %s7 = inlined_call_operand.vmem [shape: f32[8,8,128], index: 7, kind: output, shape index: {}]
  %s8 = sld [smem:[#allocation0]]
  $region38: #{lstm_autoencoder_forward.1} parent=0
    _
  %s10 = ssub.s32 1, %s8
  %s11 = scalar_select 0, %s10, %s8
  // Predicated region
  $region2: #{lstm_autoencoder_forward.1} parent=0 // pred_check
    _
  $region3: #{lstm_autoencoder_forward.1} parent=0 // pred_check_branch
    %13 = sbr.rel (0) target = $region5
  $region4: #{lstm_autoencoder_forward.1} parent=0 // pred_region
    _
  $region5: #{lstm_autoencoder_forward.1} parent=0 // pred_fallthru
    _
  // Predicated region
  $region6: #{lstm_autoencoder_forward.1} parent=0 // pred_check
    _
  $region7: #{lstm_autoencoder_forward.1} parent=0 // pred_check_branch
    %15 = sbr.rel (0) target = $region9
  $region8: #{lstm_autoencoder_forward.1} parent=0 // pred_region
    _
  $region9: #{lstm_autoencoder_forward.1} parent=0 // pred_fallthru
    _
  // Predicated region
  $region10: #{lstm_autoencoder_forward.1} parent=0 // pred_check
    _
  $region11: #{lstm_autoencoder_forward.1} parent=0 // pred_check_branch
    %17 = sbr.rel (0) target = $region13
  $region12: #{lstm_autoencoder_forward.1} parent=0 // pred_region
    _
  $region13: #{lstm_autoencoder_forward.1} parent=0 // pred_fallthru
    _
  // Predicated region
  $region14: #{lstm_autoencoder_forward.1} parent=0 // pred_check
    _
  $region15: #{lstm_autoencoder_forward.1} parent=0 // pred_check_branch
    %19 = sbr.rel (0) target = $region17
  $region16: #{lstm_autoencoder_forward.1} parent=0 // pred_region
    _
  $region17: #{lstm_autoencoder_forward.1} parent=0 // pred_fallthru
    _
  // Predicated region
  $region18: #{lstm_autoencoder_forward.1} parent=0 // pred_check
    _
  $region19: #{lstm_autoencoder_forward.1} parent=0 // pred_check_branch
    %21 = sbr.rel (0) target = $region21
  $region20: #{lstm_autoencoder_forward.1} parent=0 // pred_region
    _
  $region21: #{lstm_autoencoder_forward.1} parent=0 // pred_fallthru
    _
  // Predicated region
  $region22: #{lstm_autoencoder_forward.1} parent=0 // pred_check
    _
  $region23: #{lstm_autoencoder_forward.1} parent=0 // pred_check_branch
    %23 = sbr.rel (0) target = $region25
  $region24: #{lstm_autoencoder_forward.1} parent=0 // pred_region
    _
  $region25: #{lstm_autoencoder_forward.1} parent=0 // pred_fallthru
    _
  // Predicated region
  $region26: #{lstm_autoencoder_forward.1} parent=0 // pred_check
    _
  $region27: #{lstm_autoencoder_forward.1} parent=0 // pred_check_branch
    %25 = sbr.rel (0) target = $region29
  $region28: #{lstm_autoencoder_forward.1} parent=0 // pred_region
    _
  $region29: #{lstm_autoencoder_forward.1} parent=0 // pred_fallthru
    _
  %v27 = vld [vmem:[%s0] sm:$0xf]
  %v28 = vld [vmem:[%s0 + $0x4] sm:$0xf]
  %v29 = vld [vmem:[%s0 + $0x8] sm:$0xf]
  %v30 = vld [vmem:[%s0 + $0xc] sm:$0xf]
  %v31 = vld [vmem:[%s0 + $0x10] sm:$0xf]
  %v32 = vld [vmem:[%s0 + $0x14] sm:$0xf]
  %v33 = vld [vmem:[%s0 + $0x18] sm:$0xf]
  %v34 = vld [vmem:[%s0 + $0x1c] sm:$0xf]
  %v35 = vld [vmem:[%s1] sm:$0xff]
  %v36 = vld [vmem:[%s1 + $0x8] sm:$0xff]
  %v37 = vld [vmem:[%s1 + $0x10] sm:$0xff]
  %v38 = vld [vmem:[%s1 + $0x18] sm:$0xff]
  %v39 = vld [vmem:[%s1 + $0x20] sm:$0xff]
  %v40 = vld [vmem:[%s1 + $0x28] sm:$0xff]
  %v41 = vld [vmem:[%s1 + $0x30] sm:$0xff]
  %v42 = vld [vmem:[%s1 + $0x38] sm:$0xff]
  %v43 = vld [vmem:[%s1 + $0x40] sm:$0xff]
  %v44 = vld [vmem:[%s1 + $0x48] sm:$0xff]
  %v45 = vld [vmem:[%s1 + $0x50] sm:$0xff]
  %v46 = vld [vmem:[%s1 + $0x58] sm:$0xff]
  %v47 = vld [vmem:[%s1 + $0x60] sm:$0xff]
  %v48 = vld [vmem:[%s1 + $0x68] sm:$0xff]
  %v49 = vld [vmem:[%s1 + $0x70] sm:$0xff]
  %v50 = vld [vmem:[%s1 + $0x78] sm:$0xff]
  %v51 = vld [vmem:[%s1 + $0x80] sm:$0xff]
  %v52 = vld [vmem:[%s1 + $0x88] sm:$0xff]
  %v53 = vld [vmem:[%s1 + $0x90] sm:$0xff]
  %v54 = vld [vmem:[%s1 + $0x98] sm:$0xff]
  %v55 = vld [vmem:[%s1 + $0xa0] sm:$0xff]
  %v56 = vld [vmem:[%s1 + $0xa8] sm:$0xff]
  %v57 = vld [vmem:[%s1 + $0xb0] sm:$0xff]
  %v58 = vld [vmem:[%s1 + $0xb8] sm:$0xff]
  %v59 = vld [vmem:[%s1 + $0xc0] sm:$0xff]
  %v60 = vld [vmem:[%s1 + $0xc8] sm:$0xff]
  %v61 = vld [vmem:[%s1 + $0xd0] sm:$0xff]
  %v62 = vld [vmem:[%s1 + $0xd8] sm:$0xff]
  %v63 = vld [vmem:[%s1 + $0xe0] sm:$0xff]
  %v64 = vld [vmem:[%s1 + $0xe8] sm:$0xff]
  %v65 = vld [vmem:[%s1 + $0xf0] sm:$0xff]
  %v66 = vld [vmem:[%s1 + $0xf8] sm:$0xff]
  %v67 = vld [vmem:[%s3] sm:$0xf]
  %v69 = vlaneseq
  %v70 = vshrl.u32 %v69, 7
  %v71 = vsub.s32 0, %v70
  %v72 = vrot.slane %v67, %v71
  %v73 = vlaneseq
  %v74 = vshrl.u32 %v73, 7
  %v75 = vsub.s32 1, %v74
  %v76 = vrot.slane %v67, %v75
  %v77 = vlaneseq
  %v78 = vshrl.u32 %v77, 7
  %v79 = vsub.s32 2, %v78
  %v80 = vrot.slane %v67, %v79
  %v81 = vlaneseq
  %v82 = vshrl.u32 %v81, 7
  %v83 = vsub.s32 3, %v82
  %v84 = vrot.slane %v67, %v83
  %v97 = vunpack.c.l.b16 %v27
  %v98 = vunpack.c.l.b16 %v28
  %v99 = vunpack.c.l.b16 %v29
  %v100 = vunpack.c.l.b16 %v30
  %v101 = vunpack.c.l.b16 %v31
  %v102 = vunpack.c.l.b16 %v32
  %v103 = vunpack.c.l.b16 %v33
  %v104 = vunpack.c.l.b16 %v34
  %v105 = vpack.c.b16 %v98, %v97
  %v106 = vpack.c.b16 %v100, %v99
  %v107 = vpack.c.b16 %v102, %v101
  %v108 = vpack.c.b16 %v104, %v103
  %v145 = vunpack.c.l.b16 %v35
  %v146 = vunpack.c.h.b16 %v35
  %v147 = vunpack.c.l.b16 %v36
  %v148 = vunpack.c.h.b16 %v36
  %v149 = vunpack.c.l.b16 %v37
  %v150 = vunpack.c.h.b16 %v37
  %v151 = vunpack.c.l.b16 %v38
  %v152 = vunpack.c.h.b16 %v38
  %v153 = vunpack.c.l.b16 %v39
  %v154 = vunpack.c.h.b16 %v39
  %v155 = vunpack.c.l.b16 %v40
  %v156 = vunpack.c.h.b16 %v40
  %v157 = vunpack.c.l.b16 %v41
  %v158 = vunpack.c.h.b16 %v41
  %v159 = vunpack.c.l.b16 %v42
  %v160 = vunpack.c.h.b16 %v42
  %v161 = vunpack.c.l.b16 %v43
  %v162 = vunpack.c.h.b16 %v43
  %v163 = vunpack.c.l.b16 %v44
  %v164 = vunpack.c.h.b16 %v44
  %v165 = vunpack.c.l.b16 %v45
  %v166 = vunpack.c.h.b16 %v45
  %v167 = vunpack.c.l.b16 %v46
  %v168 = vunpack.c.h.b16 %v46
  %v169 = vunpack.c.l.b16 %v47
  %v170 = vunpack.c.h.b16 %v47
  %v171 = vunpack.c.l.b16 %v48
  %v172 = vunpack.c.h.b16 %v48
  %v173 = vunpack.c.l.b16 %v49
  %v174 = vunpack.c.h.b16 %v49
  %v175 = vunpack.c.l.b16 %v50
  %v176 = vunpack.c.h.b16 %v50
  %v177 = vunpack.c.l.b16 %v51
  %v178 = vunpack.c.h.b16 %v51
  %v179 = vunpack.c.l.b16 %v52
  %v180 = vunpack.c.h.b16 %v52
  %v181 = vunpack.c.l.b16 %v53
  %v182 = vunpack.c.h.b16 %v53
  %v183 = vunpack.c.l.b16 %v54
  %v184 = vunpack.c.h.b16 %v54
  %v185 = vunpack.c.l.b16 %v55
  %v186 = vunpack.c.h.b16 %v55
  %v187 = vunpack.c.l.b16 %v56
  %v188 = vunpack.c.h.b16 %v56
  %v189 = vunpack.c.l.b16 %v57
  %v190 = vunpack.c.h.b16 %v57
  %v191 = vunpack.c.l.b16 %v58
  %v192 = vunpack.c.h.b16 %v58
  %v193 = vunpack.c.l.b16 %v59
  %v194 = vunpack.c.h.b16 %v59
  %v195 = vunpack.c.l.b16 %v60
  %v196 = vunpack.c.h.b16 %v60
  %v197 = vunpack.c.l.b16 %v61
  %v198 = vunpack.c.h.b16 %v61
  %v199 = vunpack.c.l.b16 %v62
  %v200 = vunpack.c.h.b16 %v62
  %v201 = vunpack.c.l.b16 %v63
  %v202 = vunpack.c.h.b16 %v63
  %v203 = vunpack.c.l.b16 %v64
  %v204 = vunpack.c.h.b16 %v64
  %v205 = vunpack.c.l.b16 %v65
  %v206 = vunpack.c.h.b16 %v65
  %v207 = vunpack.c.l.b16 %v66
  %v208 = vunpack.c.h.b16 %v66
  %v209 = vpack.c.b16 %v149, %v145
  %v210 = vpack.c.b16 %v150, %v146
  %v211 = vpack.c.b16 %v151, %v147
  %v212 = vpack.c.b16 %v152, %v148
  %v213 = vpack.c.b16 %v157, %v153
  %v214 = vpack.c.b16 %v158, %v154
  %v215 = vpack.c.b16 %v159, %v155
  %v216 = vpack.c.b16 %v160, %v156
  %v217 = vpack.c.b16 %v165, %v161
  %v218 = vpack.c.b16 %v166, %v162
  %v219 = vpack.c.b16 %v167, %v163
  %v220 = vpack.c.b16 %v168, %v164
  %v221 = vpack.c.b16 %v173, %v169
  %v222 = vpack.c.b16 %v174, %v170
  %v223 = vpack.c.b16 %v175, %v171
  %v224 = vpack.c.b16 %v176, %v172
  %v225 = vpack.c.b16 %v181, %v177
  %v226 = vpack.c.b16 %v182, %v178
  %v227 = vpack.c.b16 %v183, %v179
  %v228 = vpack.c.b16 %v184, %v180
  %v229 = vpack.c.b16 %v189, %v185
  %v230 = vpack.c.b16 %v190, %v186
  %v231 = vpack.c.b16 %v191, %v187
  %v232 = vpack.c.b16 %v192, %v188
  %v233 = vpack.c.b16 %v197, %v193
  %v234 = vpack.c.b16 %v198, %v194
  %v235 = vpack.c.b16 %v199, %v195
  %v236 = vpack.c.b16 %v200, %v196
  %v237 = vpack.c.b16 %v205, %v201
  %v238 = vpack.c.b16 %v206, %v202
  %v239 = vpack.c.b16 %v207, %v203
  %v240 = vpack.c.b16 %v208, %v204
  %273 = vmatprep.subr.bf16.mxu0 %v210
  %274 = vmatpush1.bf16.msra.mxu0 %v209
  %275 = vmatprep.subr.bf16.mxu0 %v214
  %276 = vmatpush1.bf16.msra.mxu0 %v213
  %277 = vmatprep.subr.bf16.mxu0 %v218
  %278 = vmatpush1.bf16.msra.mxu0 %v217
  %279 = vmatprep.subr.bf16.mxu0 %v222
  %280 = vmatpush1.bf16.msra.mxu0 %v221
  %281 = vmatprep.subr.bf16.mxu0 %v226
  %282 = vmatpush1.bf16.msra.mxu0 %v225
  %283 = vmatprep.subr.bf16.mxu0 %v230
  %284 = vmatpush1.bf16.msra.mxu0 %v229
  %285 = vmatprep.subr.bf16.mxu0 %v234
  %286 = vmatpush1.bf16.msra.mxu0 %v233
  %287 = vmatprep.subr.bf16.mxu0 %v238
  %288 = vmatpush1.bf16.msra.mxu0 %v237
  %289 = vmatprep.subr.bf16.mxu0 0
  %290 = vmatpush1.bf16.msra.mxu0 0
  %291 = vmatprep.subr.bf16.mxu0 0
  %292 = vmatpush1.bf16.msra.mxu0 0
  %293 = vmatprep.subr.bf16.mxu0 0
  %294 = vmatpush1.bf16.msra.mxu0 0
  %295 = vmatprep.subr.bf16.mxu0 0
  %296 = vmatpush1.bf16.msra.mxu0 0
  %297 = vmatprep.subr.bf16.mxu0 0
  %298 = vmatpush1.bf16.msra.mxu0 0
  %299 = vmatprep.subr.bf16.mxu0 0
  %300 = vmatpush1.bf16.msra.mxu0 0
  %301 = vmatprep.subr.bf16.mxu0 0
  %302 = vmatpush1.bf16.msra.mxu0 0
  %303 = vmatprep.subr.bf16.mxu0 0
  %304 = vmatpush1.bf16.msra.mxu0 0
  %305 = vmatprep.mubr.bf16.mxu0 0
  %306 = vmatmul.mubr.bf16.gmra.mrb[0].mxu0 %v105
  %v307 = vpop.f32.mrb[0].mxu0
  %v308 = vadd.f32 %v72, %v307
  %v309 = vpop.f32.mrb[0].mxu0
  %v310 = vadd.f32 %v76, %v309
  %v311 = vpop.f32.mrb[0].mxu0
  %v312 = vadd.f32 %v72, %v311
  %v313 = vpop.f32.mrb[0].mxu0
  %v314 = vadd.f32 %v76, %v313
  %315 = vmatprep.mubr.bf16.mxu0 0
  %316 = vmatmul.mubr.bf16.gmra.mrb[0].mxu0 %v106
  %v317 = vpop.f32.mrb[0].mxu0
  %v318 = vadd.f32 %v72, %v317
  %v319 = vpop.f32.mrb[0].mxu0
  %v320 = vadd.f32 %v76, %v319
  %v321 = vpop.f32.mrb[0].mxu0
  %v322 = vadd.f32 %v72, %v321
  %v323 = vpop.f32.mrb[0].mxu0
  %v324 = vadd.f32 %v76, %v323
  %325 = vmatprep.mubr.bf16.mxu0 0
  %326 = vmatmul.mubr.bf16.gmra.mrb[0].mxu0 %v107
  %v327 = vpop.f32.mrb[0].mxu0
  %v328 = vadd.f32 %v72, %v327
  %v329 = vpop.f32.mrb[0].mxu0
  %v330 = vadd.f32 %v76, %v329
  %v331 = vpop.f32.mrb[0].mxu0
  %v332 = vadd.f32 %v72, %v331
  %v333 = vpop.f32.mrb[0].mxu0
  %v334 = vadd.f32 %v76, %v333
  %335 = vmatprep.mubr.bf16.mxu0 0
  %336 = vmatmul.mubr.bf16.gmra.mrb[0].mxu0 %v108
  %v337 = vpop.f32.mrb[0].mxu0
  %v338 = vadd.f32 %v72, %v337
  %v339 = vpop.f32.mrb[0].mxu0
  %v340 = vadd.f32 %v76, %v339
  %v341 = vpop.f32.mrb[0].mxu0
  %v342 = vadd.f32 %v72, %v341
  %v343 = vpop.f32.mrb[0].mxu0
  %v344 = vadd.f32 %v76, %v343
  %345 = vdwg.mxu0
  %346 = vmatprep.subr.bf16.mxu0 %v212
  %347 = vmatpush1.bf16.msra.mxu0 %v211
  %348 = vmatprep.subr.bf16.mxu0 %v216
  %349 = vmatpush1.bf16.msra.mxu0 %v215
  %350 = vmatprep.subr.bf16.mxu0 %v220
  %351 = vmatpush1.bf16.msra.mxu0 %v219
  %352 = vmatprep.subr.bf16.mxu0 %v224
  %353 = vmatpush1.bf16.msra.mxu0 %v223
  %354 = vmatprep.subr.bf16.mxu0 %v228
  %355 = vmatpush1.bf16.msra.mxu0 %v227
  %356 = vmatprep.subr.bf16.mxu0 %v232
  %357 = vmatpush1.bf16.msra.mxu0 %v231
  %358 = vmatprep.subr.bf16.mxu0 %v236
  %359 = vmatpush1.bf16.msra.mxu0 %v235
  %360 = vmatprep.subr.bf16.mxu0 %v240
  %361 = vmatpush1.bf16.msra.mxu0 %v239
  %362 = vmatprep.subr.bf16.mxu0 0
  %363 = vmatpush1.bf16.msra.mxu0 0
  %364 = vmatprep.subr.bf16.mxu0 0
  %365 = vmatpush1.bf16.msra.mxu0 0
  %366 = vmatprep.subr.bf16.mxu0 0
  %367 = vmatpush1.bf16.msra.mxu0 0
  %368 = vmatprep.subr.bf16.mxu0 0
  %369 = vmatpush1.bf16.msra.mxu0 0
  %370 = vmatprep.subr.bf16.mxu0 0
  %371 = vmatpush1.bf16.msra.mxu0 0
  %372 = vmatprep.subr.bf16.mxu0 0
  %373 = vmatpush1.bf16.msra.mxu0 0
  %374 = vmatprep.subr.bf16.mxu0 0
  %375 = vmatpush1.bf16.msra.mxu0 0
  %376 = vmatprep.subr.bf16.mxu0 0
  %377 = vmatpush1.bf16.msra.mxu0 0
  %378 = vmatprep.mubr.bf16.mxu0 0
  %379 = vmatmul.mubr.bf16.gmra.mrb[0].mxu0 %v105
  %v380 = vpop.f32.mrb[0].mxu0
  %v381 = vadd.f32 %v80, %v380
  %v382 = vpop.f32.mrb[0].mxu0
  %v383 = vadd.f32 %v84, %v382
  %v384 = vpop.f32.mrb[0].mxu0
  %v385 = vadd.f32 %v80, %v384
  %v386 = vpop.f32.mrb[0].mxu0
  %v387 = vadd.f32 %v84, %v386
  %388 = vmatprep.mubr.bf16.mxu0 0
  %389 = vmatmul.mubr.bf16.gmra.mrb[0].mxu0 %v106
  %v390 = vpop.f32.mrb[0].mxu0
  %v391 = vadd.f32 %v80, %v390
  %v392 = vpop.f32.mrb[0].mxu0
  %v393 = vadd.f32 %v84, %v392
  %v394 = vpop.f32.mrb[0].mxu0
  %v395 = vadd.f32 %v80, %v394
  %v396 = vpop.f32.mrb[0].mxu0
  %v397 = vadd.f32 %v84, %v396
  %398 = vmatprep.mubr.bf16.mxu0 0
  %399 = vmatmul.mubr.bf16.gmra.mrb[0].mxu0 %v107
  %v400 = vpop.f32.mrb[0].mxu0
  %v401 = vadd.f32 %v80, %v400
  %v402 = vpop.f32.mrb[0].mxu0
  %v403 = vadd.f32 %v84, %v402
  %v404 = vpop.f32.mrb[0].mxu0
  %v405 = vadd.f32 %v80, %v404
  %v406 = vpop.f32.mrb[0].mxu0
  %v407 = vadd.f32 %v84, %v406
  %408 = vmatprep.mubr.bf16.mxu0 0
  %409 = vmatmul.mubr.bf16.gmra.mrb[0].mxu0 %v108
  %v410 = vpop.f32.mrb[0].mxu0
  %v411 = vadd.f32 %v80, %v410
  %v412 = vpop.f32.mrb[0].mxu0
  %v413 = vadd.f32 %v84, %v412
  %v414 = vpop.f32.mrb[0].mxu0
  %v415 = vadd.f32 %v80, %v414
  %v416 = vpop.f32.mrb[0].mxu0
  %v417 = vadd.f32 %v84, %v416
  %418 = vdwg.mxu0
  %419 = vst [vmem:[#allocation2] sm:$0xff] %v308
  %420 = vst [vmem:[#allocation2 + $0x8] sm:$0xff] %v310
  %421 = vst [vmem:[#allocation2 + $0x10] sm:$0xff] %v381
  %422 = vst [vmem:[#allocation2 + $0x18] sm:$0xff] %v383
  %423 = vst [vmem:[#allocation2 + $0x20] sm:$0xff] %v312
  %424 = vst [vmem:[#allocation2 + $0x28] sm:$0xff] %v314
  %425 = vst [vmem:[#allocation2 + $0x30] sm:$0xff] %v385
  %426 = vst [vmem:[#allocation2 + $0x38] sm:$0xff] %v387
  %427 = vst [vmem:[#allocation2 + $0x40] sm:$0xff] %v318
  %428 = vst [vmem:[#allocation2 + $0x48] sm:$0xff] %v320
  %429 = vst [vmem:[#allocation2 + $0x50] sm:$0xff] %v391
  %430 = vst [vmem:[#allocation2 + $0x58] sm:$0xff] %v393
  %431 = vst [vmem:[#allocation2 + $0x60] sm:$0xff] %v322
  %432 = vst [vmem:[#allocation2 + $0x68] sm:$0xff] %v324
  %433 = vst [vmem:[#allocation2 + $0x70] sm:$0xff] %v395
  %434 = vst [vmem:[#allocation2 + $0x78] sm:$0xff] %v397
  %435 = vst [vmem:[#allocation2 + $0x80] sm:$0xff] %v328
  %436 = vst [vmem:[#allocation2 + $0x88] sm:$0xff] %v330
  %437 = vst [vmem:[#allocation2 + $0x90] sm:$0xff] %v401
  %438 = vst [vmem:[#allocation2 + $0x98] sm:$0xff] %v403
  %439 = vst [vmem:[#allocation2 + $0xa0] sm:$0xff] %v332
  %440 = vst [vmem:[#allocation2 + $0xa8] sm:$0xff] %v334
  %441 = vst [vmem:[#allocation2 + $0xb0] sm:$0xff] %v405
  %442 = vst [vmem:[#allocation2 + $0xb8] sm:$0xff] %v407
  %443 = vst [vmem:[#allocation2 + $0xc0] sm:$0xff] %v338
  %444 = vst [vmem:[#allocation2 + $0xc8] sm:$0xff] %v340
  %445 = vst [vmem:[#allocation2 + $0xd0] sm:$0xff] %v411
  %446 = vst [vmem:[#allocation2 + $0xd8] sm:$0xff] %v413
  %447 = vst [vmem:[#allocation2 + $0xe0] sm:$0xff] %v342
  %448 = vst [vmem:[#allocation2 + $0xe8] sm:$0xff] %v344
  %449 = vst [vmem:[#allocation2 + $0xf0] sm:$0xff] %v415
  %450 = vst [vmem:[#allocation2 + $0xf8] sm:$0xff] %v417
  %v451 = vld [vmem:[%s6] sm:$0xf]
  %v452 = vld [vmem:[#allocation2] sm:$0xff]
  %v453 = vld [vmem:[#allocation2 + $0x8] sm:$0xff]
  %v454 = vld [vmem:[#allocation2 + $0x10] sm:$0xff]
  %v455 = vld [vmem:[#allocation2 + $0x18] sm:$0xff]
  %v456 = vld [vmem:[%s2] sm:$0xff]
  %v457 = vld [vmem:[%s2 + $0x8] sm:$0xff]
  %v458 = vld [vmem:[%s2 + $0x10] sm:$0xff]
  %v459 = vld [vmem:[%s2 + $0x18] sm:$0xff]
  %v460 = vld [vmem:[%s2 + $0x20] sm:$0xff]
  %v461 = vld [vmem:[%s2 + $0x28] sm:$0xff]
  %v462 = vld [vmem:[%s2 + $0x30] sm:$0xff]
  %v463 = vld [vmem:[%s2 + $0x38] sm:$0xff]
  %v464 = vld [vmem:[%s2 + $0x40] sm:$0xff]
  %v465 = vld [vmem:[%s2 + $0x48] sm:$0xff]
  %v466 = vld [vmem:[%s2 + $0x50] sm:$0xff]
  %v467 = vld [vmem:[%s2 + $0x58] sm:$0xff]
  %v468 = vld [vmem:[%s2 + $0x60] sm:$0xff]
  %v469 = vld [vmem:[%s2 + $0x68] sm:$0xff]
  %v470 = vld [vmem:[%s2 + $0x70] sm:$0xff]
  %v471 = vld [vmem:[%s2 + $0x78] sm:$0xff]
  %v472 = vld [vmem:[%s2 + $0x80] sm:$0xff]
  %v473 = vld [vmem:[%s2 + $0x88] sm:$0xff]
  %v474 = vld [vmem:[%s2 + $0x90] sm:$0xff]
  %v475 = vld [vmem:[%s2 + $0x98] sm:$0xff]
  %v476 = vld [vmem:[%s2 + $0xa0] sm:$0xff]
  %v477 = vld [vmem:[%s2 + $0xa8] sm:$0xff]
  %v478 = vld [vmem:[%s2 + $0xb0] sm:$0xff]
  %v479 = vld [vmem:[%s2 + $0xb8] sm:$0xff]
  %v480 = vld [vmem:[%s2 + $0xc0] sm:$0xff]
  %v481 = vld [vmem:[%s2 + $0xc8] sm:$0xff]
  %v482 = vld [vmem:[%s2 + $0xd0] sm:$0xff]
  %v483 = vld [vmem:[%s2 + $0xd8] sm:$0xff]
  %v484 = vld [vmem:[%s2 + $0xe0] sm:$0xff]
  %v485 = vld [vmem:[%s2 + $0xe8] sm:$0xff]
  %v486 = vld [vmem:[%s2 + $0xf0] sm:$0xff]
  %v487 = vld [vmem:[%s2 + $0xf8] sm:$0xff]
  %v520 = vunpack.c.l.b16 %v456
  %v521 = vunpack.c.h.b16 %v456
  %v522 = vunpack.c.l.b16 %v457
  %v523 = vunpack.c.h.b16 %v457
  %v524 = vunpack.c.l.b16 %v458
  %v525 = vunpack.c.h.b16 %v458
  %v526 = vunpack.c.l.b16 %v459
  %v527 = vunpack.c.h.b16 %v459
  %v528 = vunpack.c.l.b16 %v460
  %v529 = vunpack.c.h.b16 %v460
  %v530 = vunpack.c.l.b16 %v461
  %v531 = vunpack.c.h.b16 %v461
  %v532 = vunpack.c.l.b16 %v462
  %v533 = vunpack.c.h.b16 %v462
  %v534 = vunpack.c.l.b16 %v463
  %v535 = vunpack.c.h.b16 %v463
  %v536 = vunpack.c.l.b16 %v464
  %v537 = vunpack.c.h.b16 %v464
  %v538 = vunpack.c.l.b16 %v465
  %v539 = vunpack.c.h.b16 %v465
  %v540 = vunpack.c.l.b16 %v466
  %v541 = vunpack.c.h.b16 %v466
  %v542 = vunpack.c.l.b16 %v467
  %v543 = vunpack.c.h.b16 %v467
  %v544 = vunpack.c.l.b16 %v468
  %v545 = vunpack.c.h.b16 %v468
  %v546 = vunpack.c.l.b16 %v469
  %v547 = vunpack.c.h.b16 %v469
  %v548 = vunpack.c.l.b16 %v470
  %v549 = vunpack.c.h.b16 %v470
  %v550 = vunpack.c.l.b16 %v471
  %v551 = vunpack.c.h.b16 %v471
  %v552 = vunpack.c.l.b16 %v472
  %v553 = vunpack.c.h.b16 %v472
  %v554 = vunpack.c.l.b16 %v473
  %v555 = vunpack.c.h.b16 %v473
  %v556 = vunpack.c.l.b16 %v474
  %v557 = vunpack.c.h.b16 %v474
  %v558 = vunpack.c.l.b16 %v475
  %v559 = vunpack.c.h.b16 %v475
  %v560 = vunpack.c.l.b16 %v476
  %v561 = vunpack.c.h.b16 %v476
  %v562 = vunpack.c.l.b16 %v477
  %v563 = vunpack.c.h.b16 %v477
  %v564 = vunpack.c.l.b16 %v478
  %v565 = vunpack.c.h.b16 %v478
  %v566 = vunpack.c.l.b16 %v479
  %v567 = vunpack.c.h.b16 %v479
  %v568 = vunpack.c.l.b16 %v480
  %v569 = vunpack.c.h.b16 %v480
  %v570 = vunpack.c.l.b16 %v481
  %v571 = vunpack.c.h.b16 %v481
  %v572 = vunpack.c.l.b16 %v482
  %v573 = vunpack.c.h.b16 %v482
  %v574 = vunpack.c.l.b16 %v483
  %v575 = vunpack.c.h.b16 %v483
  %v576 = vunpack.c.l.b16 %v484
  %v577 = vunpack.c.h.b16 %v484
  %v578 = vunpack.c.l.b16 %v485
  %v579 = vunpack.c.h.b16 %v485
  %v580 = vunpack.c.l.b16 %v486
  %v581 = vunpack.c.h.b16 %v486
  %v582 = vunpack.c.l.b16 %v487
  %v583 = vunpack.c.h.b16 %v487
  %v584 = vpack.c.b16 %v524, %v520
  %v585 = vpack.c.b16 %v525, %v521
  %v586 = vpack.c.b16 %v526, %v522
  %v587 = vpack.c.b16 %v527, %v523
  %v588 = vpack.c.b16 %v532, %v528
  %v589 = vpack.c.b16 %v533, %v529
  %v590 = vpack.c.b16 %v534, %v530
  %v591 = vpack.c.b16 %v535, %v531
  %v592 = vpack.c.b16 %v540, %v536
  %v593 = vpack.c.b16 %v541, %v537
  %v594 = vpack.c.b16 %v542, %v538
  %v595 = vpack.c.b16 %v543, %v539
  %v596 = vpack.c.b16 %v548, %v544
  %v597 = vpack.c.b16 %v549, %v545
  %v598 = vpack.c.b16 %v550, %v546
  %v599 = vpack.c.b16 %v551, %v547
  %v600 = vpack.c.b16 %v556, %v552
  %v601 = vpack.c.b16 %v557, %v553
  %v602 = vpack.c.b16 %v558, %v554
  %v603 = vpack.c.b16 %v559, %v555
  %v604 = vpack.c.b16 %v564, %v560
  %v605 = vpack.c.b16 %v565, %v561
  %v606 = vpack.c.b16 %v566, %v562
  %v607 = vpack.c.b16 %v567, %v563
  %v608 = vpack.c.b16 %v572, %v568
  %v609 = vpack.c.b16 %v573, %v569
  %v610 = vpack.c.b16 %v574, %v570
  %v611 = vpack.c.b16 %v575, %v571
  %v612 = vpack.c.b16 %v580, %v576
  %v613 = vpack.c.b16 %v581, %v577
  %v614 = vpack.c.b16 %v582, %v578
  %v615 = vpack.c.b16 %v583, %v579
  %648 = vmatprep.subr.bf16.mxu0 %v585
  %649 = vmatpush1.bf16.msra.mxu0 %v584
  %650 = vmatprep.subr.bf16.mxu0 %v589
  %651 = vmatpush1.bf16.msra.mxu0 %v588
  %652 = vmatprep.subr.bf16.mxu0 %v593
  %653 = vmatpush1.bf16.msra.mxu0 %v592
  %654 = vmatprep.subr.bf16.mxu0 %v597
  %655 = vmatpush1.bf16.msra.mxu0 %v596
  %656 = vmatprep.subr.bf16.mxu0 %v601
  %657 = vmatpush1.bf16.msra.mxu0 %v600
  %658 = vmatprep.subr.bf16.mxu0 %v605
  %659 = vmatpush1.bf16.msra.mxu0 %v604
  %660 = vmatprep.subr.bf16.mxu0 %v609
  %661 = vmatpush1.bf16.msra.mxu0 %v608
  %662 = vmatprep.subr.bf16.mxu0 %v613
  %663 = vmatpush1.bf16.msra.mxu0 %v612
  %664 = vmatprep.subr.bf16.mxu0 0
  %665 = vmatpush1.bf16.msra.mxu0 0
  %666 = vmatprep.subr.bf16.mxu0 0
  %667 = vmatpush1.bf16.msra.mxu0 0
  %668 = vmatprep.subr.bf16.mxu0 0
  %669 = vmatpush1.bf16.msra.mxu0 0
  %670 = vmatprep.subr.bf16.mxu0 0
  %671 = vmatpush1.bf16.msra.mxu0 0
  %672 = vmatprep.subr.bf16.mxu0 0
  %673 = vmatpush1.bf16.msra.mxu0 0
  %674 = vmatprep.subr.bf16.mxu0 0
  %675 = vmatpush1.bf16.msra.mxu0 0
  %676 = vmatprep.subr.bf16.mxu0 0
  %677 = vmatpush1.bf16.msra.mxu0 0
  %678 = vmatprep.subr.bf16.mxu0 0
  %679 = vmatpush1.bf16.msra.mxu0 0
  %680 = vmatprep.mubr.bf16.mxu0 0
  %681 = vmatmul.mubr.bf16.gmra.mrb[0].mxu0 0
  %v682 = vpop.f32.mrb[0].mxu0
  %v683 = vadd.f32 0.0, %v682
  %v684 = vpop.f32.mrb[0].mxu0
  %v685 = vadd.f32 0.0, %v684
  %v686 = vpop.f32.mrb[0].mxu0
  %v687 = vpop.f32.mrb[0].mxu0
  %688 = vdwg.mxu0
  %689 = vmatprep.subr.bf16.mxu0 %v587
  %690 = vmatpush1.bf16.msra.mxu0 %v586
  %691 = vmatprep.subr.bf16.mxu0 %v591
  %692 = vmatpush1.bf16.msra.mxu0 %v590
  %693 = vmatprep.subr.bf16.mxu0 %v595
  %694 = vmatpush1.bf16.msra.mxu0 %v594
  %695 = vmatprep.subr.bf16.mxu0 %v599
  %696 = vmatpush1.bf16.msra.mxu0 %v598
  %697 = vmatprep.subr.bf16.mxu0 %v603
  %698 = vmatpush1.bf16.msra.mxu0 %v602
  %699 = vmatprep.subr.bf16.mxu0 %v607
  %700 = vmatpush1.bf16.msra.mxu0 %v606
  %701 = vmatprep.subr.bf16.mxu0 %v611
  %702 = vmatpush1.bf16.msra.mxu0 %v610
  %703 = vmatprep.subr.bf16.mxu0 %v615
  %704 = vmatpush1.bf16.msra.mxu0 %v614
  %705 = vmatprep.subr.bf16.mxu0 0
  %706 = vmatpush1.bf16.msra.mxu0 0
  %707 = vmatprep.subr.bf16.mxu0 0
  %708 = vmatpush1.bf16.msra.mxu0 0
  %709 = vmatprep.subr.bf16.mxu0 0
  %710 = vmatpush1.bf16.msra.mxu0 0
  %711 = vmatprep.subr.bf16.mxu0 0
  %712 = vmatpush1.bf16.msra.mxu0 0
  %713 = vmatprep.subr.bf16.mxu0 0
  %714 = vmatpush1.bf16.msra.mxu0 0
  %715 = vmatprep.subr.bf16.mxu0 0
  %716 = vmatpush1.bf16.msra.mxu0 0
  %717 = vmatprep.subr.bf16.mxu0 0
  %718 = vmatpush1.bf16.msra.mxu0 0
  %719 = vmatprep.subr.bf16.mxu0 0
  %720 = vmatpush1.bf16.msra.mxu0 0
  %721 = vmatprep.mubr.bf16.mxu0 0
  %722 = vmatmul.mubr.bf16.gmra.mrb[0].mxu0 0
  %v723 = vpop.f32.mrb[0].mxu0
  %v724 = vadd.f32 0.0, %v723
  %v725 = vpop.f32.mrb[0].mxu0
  %v726 = vadd.f32 0.0, %v725
  %v727 = vpop.f32.mrb[0].mxu0
  %v728 = vpop.f32.mrb[0].mxu0
  %729 = vdwg.mxu0
  %v730 = vadd.f32 %v452, %v683
  %v731 = vadd.f32 %v453, %v685
  %v732 = vadd.f32 %v454, %v724
  %v733 = vadd.f32 %v455, %v726
  %v734 = vxor.u32 %v730, 2147483648
  %v735 = vmul.f32 %v734, 1.442695
  %v736 = vpow.pop %v735
  %v737 = vadd.f32 %v736, 1.0
  %v738 = vrcp.pop %v737
  %v739 = vmul.f32 1.0, %v738
  %v740 = vxor.u32 %v731, 2147483648
  %v741 = vmul.f32 %v740, 1.442695
  %v742 = vpow.pop %v741
  %v743 = vadd.f32 %v742, 1.0
  %v744 = vrcp.pop %v743
  %v745 = vmul.f32 1.0, %v744
  %v746 = vtanh.pop %v732
  %v747 = vxor.u32 %v733, 2147483648
  %v748 = vmul.f32 %v747, 1.442695
  %v749 = vpow.pop %v748
  %v750 = vadd.f32 %v749, 1.0
  %v751 = vrcp.pop %v750
  %v752 = vmul.f32 1.0, %v751
  %v753 = vmul.f32 %v745, 0.0
  %v754 = vmul.f32 %v739, %v746
  %v755 = vadd.f32 %v753, %v754
  %v756 = vtanh.pop %v755
  %v757 = vmul.f32 %v752, %v756
  %v758 = vpack.c.bf16 %v757, %v757
  %v759 = vld [vmem:[%s4] sm:$0xff]
  %v760 = vld [vmem:[%s4 + $0x8] sm:$0xff]
  %v761 = vld [vmem:[%s4 + $0x10] sm:$0xff]
  %v762 = vld [vmem:[%s4 + $0x18] sm:$0xff]
  %v763 = vld [vmem:[%s4 + $0x20] sm:$0xff]
  %v764 = vld [vmem:[%s4 + $0x28] sm:$0xff]
  %v765 = vld [vmem:[%s4 + $0x30] sm:$0xff]
  %v766 = vld [vmem:[%s4 + $0x38] sm:$0xff]
  %v767 = vld [vmem:[%s4 + $0x40] sm:$0xff]
  %v768 = vld [vmem:[%s4 + $0x48] sm:$0xff]
  %v769 = vld [vmem:[%s4 + $0x50] sm:$0xff]
  %v770 = vld [vmem:[%s4 + $0x58] sm:$0xff]
  %v771 = vld [vmem:[%s4 + $0x60] sm:$0xff]
  %v772 = vld [vmem:[%s4 + $0x68] sm:$0xff]
  %v773 = vld [vmem:[%s4 + $0x70] sm:$0xff]
  %v774 = vld [vmem:[%s4 + $0x78] sm:$0xff]
  %v775 = vld [vmem:[%s4 + $0x80] sm:$0xff]
  %v776 = vld [vmem:[%s4 + $0x88] sm:$0xff]
  %v777 = vld [vmem:[%s4 + $0x90] sm:$0xff]
  %v778 = vld [vmem:[%s4 + $0x98] sm:$0xff]
  %v779 = vld [vmem:[%s4 + $0xa0] sm:$0xff]
  %v780 = vld [vmem:[%s4 + $0xa8] sm:$0xff]
  %v781 = vld [vmem:[%s4 + $0xb0] sm:$0xff]
  %v782 = vld [vmem:[%s4 + $0xb8] sm:$0xff]
  %v783 = vld [vmem:[%s4 + $0xc0] sm:$0xff]
  %v784 = vld [vmem:[%s4 + $0xc8] sm:$0xff]
  %v785 = vld [vmem:[%s4 + $0xd0] sm:$0xff]
  %v786 = vld [vmem:[%s4 + $0xd8] sm:$0xff]
  %v787 = vld [vmem:[%s4 + $0xe0] sm:$0xff]
  %v788 = vld [vmem:[%s4 + $0xe8] sm:$0xff]
  %v789 = vld [vmem:[%s4 + $0xf0] sm:$0xff]
  %v790 = vld [vmem:[%s4 + $0xf8] sm:$0xff]
  %v791 = vld [vmem:[%s5] sm:$0xff]
  %v792 = vld [vmem:[%s5 + $0x8] sm:$0xff]
  %v793 = vld [vmem:[%s5 + $0x10] sm:$0xff]
  %v794 = vld [vmem:[%s5 + $0x18] sm:$0xff]
  %v795 = vld [vmem:[%s5 + $0x20] sm:$0xff]
  %v796 = vld [vmem:[%s5 + $0x28] sm:$0xff]
  %v797 = vld [vmem:[%s5 + $0x30] sm:$0xff]
  %v798 = vld [vmem:[%s5 + $0x38] sm:$0xff]
  %v799 = vld [vmem:[%s5 + $0x40] sm:$0xff]
  %v800 = vld [vmem:[%s5 + $0x48] sm:$0xff]
  %v801 = vld [vmem:[%s5 + $0x50] sm:$0xff]
  %v802 = vld [vmem:[%s5 + $0x58] sm:$0xff]
  %v803 = vld [vmem:[%s5 + $0x60] sm:$0xff]
  %v804 = vld [vmem:[%s5 + $0x68] sm:$0xff]
  %v805 = vld [vmem:[%s5 + $0x70] sm:$0xff]
  %v806 = vld [vmem:[%s5 + $0x78] sm:$0xff]
  %v807 = vld [vmem:[%s5 + $0x80] sm:$0xff]
  %v808 = vld [vmem:[%s5 + $0x88] sm:$0xff]
  %v809 = vld [vmem:[%s5 + $0x90] sm:$0xff]
  %v810 = vld [vmem:[%s5 + $0x98] sm:$0xff]
  %v811 = vld [vmem:[%s5 + $0xa0] sm:$0xff]
  %v812 = vld [vmem:[%s5 + $0xa8] sm:$0xff]
  %v813 = vld [vmem:[%s5 + $0xb0] sm:$0xff]
  %v814 = vld [vmem:[%s5 + $0xb8] sm:$0xff]
  %v815 = vld [vmem:[%s5 + $0xc0] sm:$0xff]
  %v816 = vld [vmem:[%s5 + $0xc8] sm:$0xff]
  %v817 = vld [vmem:[%s5 + $0xd0] sm:$0xff]
  %v818 = vld [vmem:[%s5 + $0xd8] sm:$0xff]
  %v819 = vld [vmem:[%s5 + $0xe0] sm:$0xff]
  %v820 = vld [vmem:[%s5 + $0xe8] sm:$0xff]
  %v821 = vld [vmem:[%s5 + $0xf0] sm:$0xff]
  %v822 = vld [vmem:[%s5 + $0xf8] sm:$0xff]
  %v855 = vunpack.c.l.b16 %v791
  %v856 = vunpack.c.h.b16 %v791
  %v857 = vunpack.c.l.b16 %v792
  %v858 = vunpack.c.h.b16 %v792
  %v859 = vunpack.c.l.b16 %v793
  %v860 = vunpack.c.h.b16 %v793
  %v861 = vunpack.c.l.b16 %v794
  %v862 = vunpack.c.h.b16 %v794
  %v863 = vunpack.c.l.b16 %v795
  %v864 = vunpack.c.h.b16 %v795
  %v865 = vunpack.c.l.b16 %v796
  %v866 = vunpack.c.h.b16 %v796
  %v867 = vunpack.c.l.b16 %v797
  %v868 = vunpack.c.h.b16 %v797
  %v869 = vunpack.c.l.b16 %v798
  %v870 = vunpack.c.h.b16 %v798
  %v871 = vunpack.c.l.b16 %v799
  %v872 = vunpack.c.h.b16 %v799
  %v873 = vunpack.c.l.b16 %v800
  %v874 = vunpack.c.h.b16 %v800
  %v875 = vunpack.c.l.b16 %v801
  %v876 = vunpack.c.h.b16 %v801
  %v877 = vunpack.c.l.b16 %v802
  %v878 = vunpack.c.h.b16 %v802
  %v879 = vunpack.c.l.b16 %v803
  %v880 = vunpack.c.h.b16 %v803
  %v881 = vunpack.c.l.b16 %v804
  %v882 = vunpack.c.h.b16 %v804
  %v883 = vunpack.c.l.b16 %v805
  %v884 = vunpack.c.h.b16 %v805
  %v885 = vunpack.c.l.b16 %v806
  %v886 = vunpack.c.h.b16 %v806
  %v887 = vunpack.c.l.b16 %v807
  %v888 = vunpack.c.h.b16 %v807
  %v889 = vunpack.c.l.b16 %v808
  %v890 = vunpack.c.h.b16 %v808
  %v891 = vunpack.c.l.b16 %v809
  %v892 = vunpack.c.h.b16 %v809
  %v893 = vunpack.c.l.b16 %v810
  %v894 = vunpack.c.h.b16 %v810
  %v895 = vunpack.c.l.b16 %v811
  %v896 = vunpack.c.h.b16 %v811
  %v897 = vunpack.c.l.b16 %v812
  %v898 = vunpack.c.h.b16 %v812
  %v899 = vunpack.c.l.b16 %v813
  %v900 = vunpack.c.h.b16 %v813
  %v901 = vunpack.c.l.b16 %v814
  %v902 = vunpack.c.h.b16 %v814
  %v903 = vunpack.c.l.b16 %v815
  %v904 = vunpack.c.h.b16 %v815
  %v905 = vunpack.c.l.b16 %v816
  %v906 = vunpack.c.h.b16 %v816
  %v907 = vunpack.c.l.b16 %v817
  %v908 = vunpack.c.h.b16 %v817
  %v909 = vunpack.c.l.b16 %v818
  %v910 = vunpack.c.h.b16 %v818
  %v911 = vunpack.c.l.b16 %v819
  %v912 = vunpack.c.h.b16 %v819
  %v913 = vunpack.c.l.b16 %v820
  %v914 = vunpack.c.h.b16 %v820
  %v915 = vunpack.c.l.b16 %v821
  %v916 = vunpack.c.h.b16 %v821
  %v917 = vunpack.c.l.b16 %v822
  %v918 = vunpack.c.h.b16 %v822
  %v919 = vpack.c.b16 %v859, %v855
  %v920 = vpack.c.b16 %v860, %v856
  %v921 = vpack.c.b16 %v861, %v857
  %v922 = vpack.c.b16 %v862, %v858
  %v923 = vpack.c.b16 %v867, %v863
  %v924 = vpack.c.b16 %v868, %v864
  %v925 = vpack.c.b16 %v869, %v865
  %v926 = vpack.c.b16 %v870, %v866
  %v927 = vpack.c.b16 %v875, %v871
  %v928 = vpack.c.b16 %v876, %v872
  %v929 = vpack.c.b16 %v877, %v873
  %v930 = vpack.c.b16 %v878, %v874
  %v931 = vpack.c.b16 %v883, %v879
  %v932 = vpack.c.b16 %v884, %v880
  %v933 = vpack.c.b16 %v885, %v881
  %v934 = vpack.c.b16 %v886, %v882
  %v935 = vpack.c.b16 %v891, %v887
  %v936 = vpack.c.b16 %v892, %v888
  %v937 = vpack.c.b16 %v893, %v889
  %v938 = vpack.c.b16 %v894, %v890
  %v939 = vpack.c.b16 %v899, %v895
  %v940 = vpack.c.b16 %v900, %v896
  %v941 = vpack.c.b16 %v901, %v897
  %v942 = vpack.c.b16 %v902, %v898
  %v943 = vpack.c.b16 %v907, %v903
  %v944 = vpack.c.b16 %v908, %v904
  %v945 = vpack.c.b16 %v909, %v905
  %v946 = vpack.c.b16 %v910, %v906
  %v947 = vpack.c.b16 %v915, %v911
  %v948 = vpack.c.b16 %v916, %v912
  %v949 = vpack.c.b16 %v917, %v913
  %v950 = vpack.c.b16 %v918, %v914
  %983 = vmatprep.subr.bf16.mxu0 %v920
  %984 = vmatpush1.bf16.msra.mxu0 %v919
  %985 = vmatprep.subr.bf16.mxu0 %v924
  %986 = vmatpush1.bf16.msra.mxu0 %v923
  %987 = vmatprep.subr.bf16.mxu0 %v928
  %988 = vmatpush1.bf16.msra.mxu0 %v927
  %989 = vmatprep.subr.bf16.mxu0 %v932
  %990 = vmatpush1.bf16.msra.mxu0 %v931
  %991 = vmatprep.subr.bf16.mxu0 %v936
  %992 = vmatpush1.bf16.msra.mxu0 %v935
  %993 = vmatprep.subr.bf16.mxu0 %v940
  %994 = vmatpush1.bf16.msra.mxu0 %v939
  %995 = vmatprep.subr.bf16.mxu0 %v944
  %996 = vmatpush1.bf16.msra.mxu0 %v943
  %997 = vmatprep.subr.bf16.mxu0 %v948
  %998 = vmatpush1.bf16.msra.mxu0 %v947
  %999 = vmatprep.subr.bf16.mxu0 0
  %1000 = vmatpush1.bf16.msra.mxu0 0
  %1001 = vmatprep.subr.bf16.mxu0 0
  %1002 = vmatpush1.bf16.msra.mxu0 0
  %1003 = vmatprep.subr.bf16.mxu0 0
  %1004 = vmatpush1.bf16.msra.mxu0 0
  %1005 = vmatprep.subr.bf16.mxu0 0
  %1006 = vmatpush1.bf16.msra.mxu0 0
  %1007 = vmatprep.subr.bf16.mxu0 0
  %1008 = vmatpush1.bf16.msra.mxu0 0
  %1009 = vmatprep.subr.bf16.mxu0 0
  %1010 = vmatpush1.bf16.msra.mxu0 0
  %1011 = vmatprep.subr.bf16.mxu0 0
  %1012 = vmatpush1.bf16.msra.mxu0 0
  %1013 = vmatprep.subr.bf16.mxu0 0
  %1014 = vmatpush1.bf16.msra.mxu0 0
  %1015 = vmatprep.mubr.bf16.mxu0 0
  %1016 = vmatmul.mubr.bf16.gmra.mrb[0].mxu0 0
  %v1017 = vpop.f32.mrb[0].mxu0
  %v1018 = vadd.f32 0.0, %v1017
  %v1019 = vpop.f32.mrb[0].mxu0
  %v1020 = vadd.f32 0.0, %v1019
  %v1021 = vpop.f32.mrb[0].mxu0
  %v1022 = vpop.f32.mrb[0].mxu0
  %1023 = vdwg.mxu0
  %1024 = vmatprep.subr.bf16.mxu0 %v922
  %1025 = vmatpush1.bf16.msra.mxu0 %v921
  %1026 = vmatprep.subr.bf16.mxu0 %v926
  %1027 = vmatpush1.bf16.msra.mxu0 %v925
  %1028 = vmatprep.subr.bf16.mxu0 %v930
  %1029 = vmatpush1.bf16.msra.mxu0 %v929
  %1030 = vmatprep.subr.bf16.mxu0 %v934
  %1031 = vmatpush1.bf16.msra.mxu0 %v933
  %1032 = vmatprep.subr.bf16.mxu0 %v938
  %1033 = vmatpush1.bf16.msra.mxu0 %v937
  %1034 = vmatprep.subr.bf16.mxu0 %v942
  %1035 = vmatpush1.bf16.msra.mxu0 %v941
  %1036 = vmatprep.subr.bf16.mxu0 %v946
  %1037 = vmatpush1.bf16.msra.mxu0 %v945
  %1038 = vmatprep.subr.bf16.mxu0 %v950
  %1039 = vmatpush1.bf16.msra.mxu0 %v949
  %1040 = vmatprep.subr.bf16.mxu0 0
  %1041 = vmatpush1.bf16.msra.mxu0 0
  %1042 = vmatprep.subr.bf16.mxu0 0
  %1043 = vmatpush1.bf16.msra.mxu0 0
  %1044 = vmatprep.subr.bf16.mxu0 0
  %1045 = vmatpush1.bf16.msra.mxu0 0
  %1046 = vmatprep.subr.bf16.mxu0 0
  %1047 = vmatpush1.bf16.msra.mxu0 0
  %1048 = vmatprep.subr.bf16.mxu0 0
  %1049 = vmatpush1.bf16.msra.mxu0 0
  %1050 = vmatprep.subr.bf16.mxu0 0
  %1051 = vmatpush1.bf16.msra.mxu0 0
  %1052 = vmatprep.subr.bf16.mxu0 0
  %1053 = vmatpush1.bf16.msra.mxu0 0
  %1054 = vmatprep.subr.bf16.mxu0 0
  %1055 = vmatpush1.bf16.msra.mxu0 0
  %1056 = vmatprep.mubr.bf16.mxu0 0
  %1057 = vmatmul.mubr.bf16.gmra.mrb[0].mxu0 0
  %v1058 = vpop.f32.mrb[0].mxu0
  %v1059 = vadd.f32 0.0, %v1058
  %v1060 = vpop.f32.mrb[0].mxu0
  %v1061 = vadd.f32 0.0, %v1060
  %v1062 = vpop.f32.mrb[0].mxu0
  %v1063 = vpop.f32.mrb[0].mxu0
  %1064 = vdwg.mxu0
  %v1097 = vunpack.c.l.b16 %v759
  %v1098 = vunpack.c.h.b16 %v759
  %v1099 = vunpack.c.l.b16 %v760
  %v1100 = vunpack.c.h.b16 %v760
  %v1101 = vunpack.c.l.b16 %v761
  %v1102 = vunpack.c.h.b16 %v761
  %v1103 = vunpack.c.l.b16 %v762
  %v1104 = vunpack.c.h.b16 %v762
  %v1105 = vunpack.c.l.b16 %v763
  %v1106 = vunpack.c.h.b16 %v763
  %v1107 = vunpack.c.l.b16 %v764
  %v1108 = vunpack.c.h.b16 %v764
  %v1109 = vunpack.c.l.b16 %v765
  %v1110 = vunpack.c.h.b16 %v765
  %v1111 = vunpack.c.l.b16 %v766
  %v1112 = vunpack.c.h.b16 %v766
  %v1113 = vunpack.c.l.b16 %v767
  %v1114 = vunpack.c.h.b16 %v767
  %v1115 = vunpack.c.l.b16 %v768
  %v1116 = vunpack.c.h.b16 %v768
  %v1117 = vunpack.c.l.b16 %v769
  %v1118 = vunpack.c.h.b16 %v769
  %v1119 = vunpack.c.l.b16 %v770
  %v1120 = vunpack.c.h.b16 %v770
  %v1121 = vunpack.c.l.b16 %v771
  %v1122 = vunpack.c.h.b16 %v771
  %v1123 = vunpack.c.l.b16 %v772
  %v1124 = vunpack.c.h.b16 %v772
  %v1125 = vunpack.c.l.b16 %v773
  %v1126 = vunpack.c.h.b16 %v773
  %v1127 = vunpack.c.l.b16 %v774
  %v1128 = vunpack.c.h.b16 %v774
  %v1129 = vunpack.c.l.b16 %v775
  %v1130 = vunpack.c.h.b16 %v775
  %v1131 = vunpack.c.l.b16 %v776
  %v1132 = vunpack.c.h.b16 %v776
  %v1133 = vunpack.c.l.b16 %v777
  %v1134 = vunpack.c.h.b16 %v777
  %v1135 = vunpack.c.l.b16 %v778
  %v1136 = vunpack.c.h.b16 %v778
  %v1137 = vunpack.c.l.b16 %v779
  %v1138 = vunpack.c.h.b16 %v779
  %v1139 = vunpack.c.l.b16 %v780
  %v1140 = vunpack.c.h.b16 %v780
  %v1141 = vunpack.c.l.b16 %v781
  %v1142 = vunpack.c.h.b16 %v781
  %v1143 = vunpack.c.l.b16 %v782
  %v1144 = vunpack.c.h.b16 %v782
  %v1145 = vunpack.c.l.b16 %v783
  %v1146 = vunpack.c.h.b16 %v783
  %v1147 = vunpack.c.l.b16 %v784
  %v1148 = vunpack.c.h.b16 %v784
  %v1149 = vunpack.c.l.b16 %v785
  %v1150 = vunpack.c.h.b16 %v785
  %v1151 = vunpack.c.l.b16 %v786
  %v1152 = vunpack.c.h.b16 %v786
  %v1153 = vunpack.c.l.b16 %v787
  %v1154 = vunpack.c.h.b16 %v787
  %v1155 = vunpack.c.l.b16 %v788
  %v1156 = vunpack.c.h.b16 %v788
  %v1157 = vunpack.c.l.b16 %v789
  %v1158 = vunpack.c.h.b16 %v789
  %v1159 = vunpack.c.l.b16 %v790
  %v1160 = vunpack.c.h.b16 %v790
  %v1161 = vpack.c.b16 %v1101, %v1097
  %v1162 = vpack.c.b16 %v1102, %v1098
  %v1163 = vpack.c.b16 %v1103, %v1099
  %v1164 = vpack.c.b16 %v1104, %v1100
  %v1165 = vpack.c.b16 %v1109, %v1105
  %v1166 = vpack.c.b16 %v1110, %v1106
  %v1167 = vpack.c.b16 %v1111, %v1107
  %v1168 = vpack.c.b16 %v1112, %v1108
  %v1169 = vpack.c.b16 %v1117, %v1113
  %v1170 = vpack.c.b16 %v1118, %v1114
  %v1171 = vpack.c.b16 %v1119, %v1115
  %v1172 = vpack.c.b16 %v1120, %v1116
  %v1173 = vpack.c.b16 %v1125, %v1121
  %v1174 = vpack.c.b16 %v1126, %v1122
  %v1175 = vpack.c.b16 %v1127, %v1123
  %v1176 = vpack.c.b16 %v1128, %v1124
  %v1177 = vpack.c.b16 %v1133, %v1129
  %v1178 = vpack.c.b16 %v1134, %v1130
  %v1179 = vpack.c.b16 %v1135, %v1131
  %v1180 = vpack.c.b16 %v1136, %v1132
  %v1181 = vpack.c.b16 %v1141, %v1137
  %v1182 = vpack.c.b16 %v1142, %v1138
  %v1183 = vpack.c.b16 %v1143, %v1139
  %v1184 = vpack.c.b16 %v1144, %v1140
  %v1185 = vpack.c.b16 %v1149, %v1145
  %v1186 = vpack.c.b16 %v1150, %v1146
  %v1187 = vpack.c.b16 %v1151, %v1147
  %v1188 = vpack.c.b16 %v1152, %v1148
  %v1189 = vpack.c.b16 %v1157, %v1153
  %v1190 = vpack.c.b16 %v1158, %v1154
  %v1191 = vpack.c.b16 %v1159, %v1155
  %v1192 = vpack.c.b16 %v1160, %v1156
  %1225 = vmatprep.subr.bf16.mxu0 %v1162
  %1226 = vmatpush1.bf16.msra.mxu0 %v1161
  %1227 = vmatprep.subr.bf16.mxu0 %v1166
  %1228 = vmatpush1.bf16.msra.mxu0 %v1165
  %1229 = vmatprep.subr.bf16.mxu0 %v1170
  %1230 = vmatpush1.bf16.msra.mxu0 %v1169
  %1231 = vmatprep.subr.bf16.mxu0 %v1174
  %1232 = vmatpush1.bf16.msra.mxu0 %v1173
  %1233 = vmatprep.subr.bf16.mxu0 %v1178
  %1234 = vmatpush1.bf16.msra.mxu0 %v1177
  %1235 = vmatprep.subr.bf16.mxu0 %v1182
  %1236 = vmatpush1.bf16.msra.mxu0 %v1181
  %1237 = vmatprep.subr.bf16.mxu0 %v1186
  %1238 = vmatpush1.bf16.msra.mxu0 %v1185
  %1239 = vmatprep.subr.bf16.mxu0 %v1190
  %1240 = vmatpush1.bf16.msra.mxu0 %v1189
  %1241 = vmatprep.subr.bf16.mxu0 0
  %1242 = vmatpush1.bf16.msra.mxu0 0
  %1243 = vmatprep.subr.bf16.mxu0 0
  %1244 = vmatpush1.bf16.msra.mxu0 0
  %1245 = vmatprep.subr.bf16.mxu0 0
  %1246 = vmatpush1.bf16.msra.mxu0 0
  %1247 = vmatprep.subr.bf16.mxu0 0
  %1248 = vmatpush1.bf16.msra.mxu0 0
  %1249 = vmatprep.subr.bf16.mxu0 0
  %1250 = vmatpush1.bf16.msra.mxu0 0
  %1251 = vmatprep.subr.bf16.mxu0 0
  %1252 = vmatpush1.bf16.msra.mxu0 0
  %1253 = vmatprep.subr.bf16.mxu0 0
  %1254 = vmatpush1.bf16.msra.mxu0 0
  %1255 = vmatprep.subr.bf16.mxu0 0
  %1256 = vmatpush1.bf16.msra.mxu0 0
  %1257 = vmatprep.mubr.bf16.mxu0 0
  %1258 = vmatmul.mubr.bf16.gmra.mrb[0].mxu0 %v758
  %v1259 = vpop.f32.mrb[0].mxu0
  %v1260 = vadd.f32 %v1018, %v1259
  %v1261 = vpop.f32.mrb[0].mxu0
  %v1262 = vadd.f32 %v1020, %v1261
  %v1263 = vpop.f32.mrb[0].mxu0
  %v1264 = vpop.f32.mrb[0].mxu0
  %1265 = vdwg.mxu0
  %1266 = vmatprep.subr.bf16.mxu0 %v1164
  %1267 = vmatpush1.bf16.msra.mxu0 %v1163
  %1268 = vmatprep.subr.bf16.mxu0 %v1168
  %1269 = vmatpush1.bf16.msra.mxu0 %v1167
  %1270 = vmatprep.subr.bf16.mxu0 %v1172
  %1271 = vmatpush1.bf16.msra.mxu0 %v1171
  %1272 = vmatprep.subr.bf16.mxu0 %v1176
  %1273 = vmatpush1.bf16.msra.mxu0 %v1175
  %1274 = vmatprep.subr.bf16.mxu0 %v1180
  %1275 = vmatpush1.bf16.msra.mxu0 %v1179
  %1276 = vmatprep.subr.bf16.mxu0 %v1184
  %1277 = vmatpush1.bf16.msra.mxu0 %v1183
  %1278 = vmatprep.subr.bf16.mxu0 %v1188
  %1279 = vmatpush1.bf16.msra.mxu0 %v1187
  %1280 = vmatprep.subr.bf16.mxu0 %v1192
  %1281 = vmatpush1.bf16.msra.mxu0 %v1191
  %1282 = vmatprep.subr.bf16.mxu0 0
  %1283 = vmatpush1.bf16.msra.mxu0 0
  %1284 = vmatprep.subr.bf16.mxu0 0
  %1285 = vmatpush1.bf16.msra.mxu0 0
  %1286 = vmatprep.subr.bf16.mxu0 0
  %1287 = vmatpush1.bf16.msra.mxu0 0
  %1288 = vmatprep.subr.bf16.mxu0 0
  %1289 = vmatpush1.bf16.msra.mxu0 0
  %1290 = vmatprep.subr.bf16.mxu0 0
  %1291 = vmatpush1.bf16.msra.mxu0 0
  %1292 = vmatprep.subr.bf16.mxu0 0
  %1293 = vmatpush1.bf16.msra.mxu0 0
  %1294 = vmatprep.subr.bf16.mxu0 0
  %1295 = vmatpush1.bf16.msra.mxu0 0
  %1296 = vmatprep.subr.bf16.mxu0 0
  %1297 = vmatpush1.bf16.msra.mxu0 0
  %1298 = vmatprep.mubr.bf16.mxu0 0
  %1299 = vmatmul.mubr.bf16.gmra.mrb[0].mxu0 %v758
  %v1300 = vpop.f32.mrb[0].mxu0
  %v1301 = vadd.f32 %v1059, %v1300
  %v1302 = vpop.f32.mrb[0].mxu0
  %v1303 = vadd.f32 %v1061, %v1302
  %v1304 = vpop.f32.mrb[0].mxu0
  %v1305 = vpop.f32.mrb[0].mxu0
  %1306 = vdwg.mxu0
  %v1308 = vlaneseq
  %v1309 = vshrl.u32 %v1308, 7
  %v1310 = vsub.s32 0, %v1309
  %v1311 = vrot.slane %v451, %v1310
  %v1312 = vlaneseq
  %v1313 = vshrl.u32 %v1312, 7
  %v1314 = vsub.s32 1, %v1313
  %v1315 = vrot.slane %v451, %v1314
  %v1316 = vlaneseq
  %v1317 = vshrl.u32 %v1316, 7
  %v1318 = vsub.s32 2, %v1317
  %v1319 = vrot.slane %v451, %v1318
  %v1320 = vlaneseq
  %v1321 = vshrl.u32 %v1320, 7
  %v1322 = vsub.s32 3, %v1321
  %v1323 = vrot.slane %v451, %v1322
  %v1328 = vadd.f32 %v1260, %v1311
  %v1329 = vadd.f32 %v1262, %v1315
  %v1330 = vadd.f32 %v1301, %v1319
  %v1331 = vadd.f32 %v1303, %v1323
  %v1332 = vxor.u32 %v1328, 2147483648
  %v1333 = vmul.f32 %v1332, 1.442695
  %v1334 = vpow.pop %v1333
  %v1335 = vadd.f32 %v1334, 1.0
  %v1336 = vrcp.pop %v1335
  %v1337 = vmul.f32 1.0, %v1336
  %v1338 = vxor.u32 %v1329, 2147483648
  %v1339 = vmul.f32 %v1338, 1.442695
  %v1340 = vpow.pop %v1339
  %v1341 = vadd.f32 %v1340, 1.0
  %v1342 = vrcp.pop %v1341
  %v1343 = vmul.f32 1.0, %v1342
  %v1344 = vtanh.pop %v1330
  %v1345 = vxor.u32 %v1331, 2147483648
  %v1346 = vmul.f32 %v1345, 1.442695
  %v1347 = vpow.pop %v1346
  %v1348 = vadd.f32 %v1347, 1.0
  %v1349 = vrcp.pop %v1348
  %v1350 = vmul.f32 1.0, %v1349
  %v1351 = vmul.f32 %v1343, 0.0
  %v1352 = vmul.f32 %v1337, %v1344
  %v1353 = vadd.f32 %v1351, %v1352
  %v1354 = vtanh.pop %v1353
  %v1355 = vmul.f32 %v1350, %v1354
  %1356 = vst [vmem:[%s7] sm:$0xff] %v1355
  %s1357 = scalar_lea.vmem [#allocation2], 32
  %v1358 = vld [vmem:[%s1357] sm:$0xff]
  %v1359 = vld [vmem:[%s1357 + $0x8] sm:$0xff]
  %v1360 = vld [vmem:[%s1357 + $0x10] sm:$0xff]
  %v1361 = vld [vmem:[%s1357 + $0x18] sm:$0xff]
  %v1362 = vld [vmem:[%s2] sm:$0xff]
  %v1363 = vld [vmem:[%s2 + $0x8] sm:$0xff]
  %v1364 = vld [vmem:[%s2 + $0x10] sm:$0xff]
  %v1365 = vld [vmem:[%s2 + $0x18] sm:$0xff]
  %v1366 = vld [vmem:[%s2 + $0x20] sm:$0xff]
  %v1367 = vld [vmem:[%s2 + $0x28] sm:$0xff]
  %v1368 = vld [vmem:[%s2 + $0x30] sm:$0xff]
  %v1369 = vld [vmem:[%s2 + $0x38] sm:$0xff]
  %v1370 = vld [vmem:[%s2 + $0x40] sm:$0xff]
  %v1371 = vld [vmem:[%s2 + $0x48] sm:$0xff]
  %v1372 = vld [vmem:[%s2 + $0x50] sm:$0xff]
  %v1373 = vld [vmem:[%s2 + $0x58] sm:$0xff]
  %v1374 = vld [vmem:[%s2 + $0x60] sm:$0xff]
  %v1375 = vld [vmem:[%s2 + $0x68] sm:$0xff]
  %v1376 = vld [vmem:[%s2 + $0x70] sm:$0xff]
  %v1377 = vld [vmem:[%s2 + $0x78] sm:$0xff]
  %v1378 = vld [vmem:[%s2 + $0x80] sm:$0xff]
  %v1379 = vld [vmem:[%s2 + $0x88] sm:$0xff]
  %v1380 = vld [vmem:[%s2 + $0x90] sm:$0xff]
  %v1381 = vld [vmem:[%s2 + $0x98] sm:$0xff]
  %v1382 = vld [vmem:[%s2 + $0xa0] sm:$0xff]
  %v1383 = vld [vmem:[%s2 + $0xa8] sm:$0xff]
  %v1384 = vld [vmem:[%s2 + $0xb0] sm:$0xff]
  %v1385 = vld [vmem:[%s2 + $0xb8] sm:$0xff]
  %v1386 = vld [vmem:[%s2 + $0xc0] sm:$0xff]
  %v1387 = vld [vmem:[%s2 + $0xc8] sm:$0xff]
  %v1388 = vld [vmem:[%s2 + $0xd0] sm:$0xff]
  %v1389 = vld [vmem:[%s2 + $0xd8] sm:$0xff]
  %v1390 = vld [vmem:[%s2 + $0xe0] sm:$0xff]
  %v1391 = vld [vmem:[%s2 + $0xe8] sm:$0xff]
  %v1392 = vld [vmem:[%s2 + $0xf0] sm:$0xff]
  %v1393 = vld [vmem:[%s2 + $0xf8] sm:$0xff]
  %v1426 = vunpack.c.l.b16 %v1362
  %v1427 = vunpack.c.h.b16 %v1362
  %v1428 = vunpack.c.l.b16 %v1363
  %v1429 = vunpack.c.h.b16 %v1363
  %v1430 = vunpack.c.l.b16 %v1364
  %v1431 = vunpack.c.h.b16 %v1364
  %v1432 = vunpack.c.l.b16 %v1365
  %v1433 = vunpack.c.h.b16 %v1365
  %v1434 = vunpack.c.l.b16 %v1366
  %v1435 = vunpack.c.h.b16 %v1366
  %v1436 = vunpack.c.l.b16 %v1367
  %v1437 = vunpack.c.h.b16 %v1367
  %v1438 = vunpack.c.l.b16 %v1368
  %v1439 = vunpack.c.h.b16 %v1368
  %v1440 = vunpack.c.l.b16 %v1369
  %v1441 = vunpack.c.h.b16 %v1369
  %v1442 = vunpack.c.l.b16 %v1370
  %v1443 = vunpack.c.h.b16 %v1370
  %v1444 = vunpack.c.l.b16 %v1371
  %v1445 = vunpack.c.h.b16 %v1371
  %v1446 = vunpack.c.l.b16 %v1372
  %v1447 = vunpack.c.h.b16 %v1372
  %v1448 = vunpack.c.l.b16 %v1373
  %v1449 = vunpack.c.h.b16 %v1373
  %v1450 = vunpack.c.l.b16 %v1374
  %v1451 = vunpack.c.h.b16 %v1374
  %v1452 = vunpack.c.l.b16 %v1375
  %v1453 = vunpack.c.h.b16 %v1375
  %v1454 = vunpack.c.l.b16 %v1376
  %v1455 = vunpack.c.h.b16 %v1376
  %v1456 = vunpack.c.l.b16 %v1377
  %v1457 = vunpack.c.h.b16 %v1377
  %v1458 = vunpack.c.l.b16 %v1378
  %v1459 = vunpack.c.h.b16 %v1378
  %v1460 = vunpack.c.l.b16 %v1379
  %v1461 = vunpack.c.h.b16 %v1379
  %v1462 = vunpack.c.l.b16 %v1380
  %v1463 = vunpack.c.h.b16 %v1380
  %v1464 = vunpack.c.l.b16 %v1381
  %v1465 = vunpack.c.h.b16 %v1381
  %v1466 = vunpack.c.l.b16 %v1382
  %v1467 = vunpack.c.h.b16 %v1382
  %v1468 = vunpack.c.l.b16 %v1383
  %v1469 = vunpack.c.h.b16 %v1383
  %v1470 = vunpack.c.l.b16 %v1384
  %v1471 = vunpack.c.h.b16 %v1384
  %v1472 = vunpack.c.l.b16 %v1385
  %v1473 = vunpack.c.h.b16 %v1385
  %v1474 = vunpack.c.l.b16 %v1386
  %v1475 = vunpack.c.h.b16 %v1386
  %v1476 = vunpack.c.l.b16 %v1387
  %v1477 = vunpack.c.h.b16 %v1387
  %v1478 = vunpack.c.l.b16 %v1388
  %v1479 = vunpack.c.h.b16 %v1388
  %v1480 = vunpack.c.l.b16 %v1389
  %v1481 = vunpack.c.h.b16 %v1389
  %v1482 = vunpack.c.l.b16 %v1390
  %v1483 = vunpack.c.h.b16 %v1390
  %v1484 = vunpack.c.l.b16 %v1391
  %v1485 = vunpack.c.h.b16 %v1391
  %v1486 = vunpack.c.l.b16 %v1392
  %v1487 = vunpack.c.h.b16 %v1392
  %v1488 = vunpack.c.l.b16 %v1393
  %v1489 = vunpack.c.h.b16 %v1393
  %v1490 = vpack.c.b16 %v1430, %v1426
  %v1491 = vpack.c.b16 %v1431, %v1427
  %v1492 = vpack.c.b16 %v1432, %v1428
  %v1493 = vpack.c.b16 %v1433, %v1429
  %v1494 = vpack.c.b16 %v1438, %v1434
  %v1495 = vpack.c.b16 %v1439, %v1435
  %v1496 = vpack.c.b16 %v1440, %v1436
  %v1497 = vpack.c.b16 %v1441, %v1437
  %v1498 = vpack.c.b16 %v1446, %v1442
  %v1499 = vpack.c.b16 %v1447, %v1443
  %v1500 = vpack.c.b16 %v1448, %v1444
  %v1501 = vpack.c.b16 %v1449, %v1445
  %v1502 = vpack.c.b16 %v1454, %v1450
  %v1503 = vpack.c.b16 %v1455, %v1451
  %v1504 = vpack.c.b16 %v1456, %v1452
  %v1505 = vpack.c.b16 %v1457, %v1453
  %v1506 = vpack.c.b16 %v1462, %v1458
  %v1507 = vpack.c.b16 %v1463, %v1459
  %v1508 = vpack.c.b16 %v1464, %v1460
  %v1509 = vpack.c.b16 %v1465, %v1461
  %v1510 = vpack.c.b16 %v1470, %v1466
  %v1511 = vpack.c.b16 %v1471, %v1467
  %v1512 = vpack.c.b16 %v1472, %v1468
  %v1513 = vpack.c.b16 %v1473, %v1469
  %v1514 = vpack.c.b16 %v1478, %v1474
  %v1515 = vpack.c.b16 %v1479, %v1475
  %v1516 = vpack.c.b16 %v1480, %v1476
  %v1517 = vpack.c.b16 %v1481, %v1477
  %v1518 = vpack.c.b16 %v1486, %v1482
  %v1519 = vpack.c.b16 %v1487, %v1483
  %v1520 = vpack.c.b16 %v1488, %v1484
  %v1521 = vpack.c.b16 %v1489, %v1485
  %1554 = vmatprep.subr.bf16.mxu0 %v1491
  %1555 = vmatpush1.bf16.msra.mxu0 %v1490
  %1556 = vmatprep.subr.bf16.mxu0 %v1495
  %1557 = vmatpush1.bf16.msra.mxu0 %v1494
  %1558 = vmatprep.subr.bf16.mxu0 %v1499
  %1559 = vmatpush1.bf16.msra.mxu0 %v1498
  %1560 = vmatprep.subr.bf16.mxu0 %v1503
  %1561 = vmatpush1.bf16.msra.mxu0 %v1502
  %1562 = vmatprep.subr.bf16.mxu0 %v1507
  %1563 = vmatpush1.bf16.msra.mxu0 %v1506
  %1564 = vmatprep.subr.bf16.mxu0 %v1511
  %1565 = vmatpush1.bf16.msra.mxu0 %v1510
  %1566 = vmatprep.subr.bf16.mxu0 %v1515
  %1567 = vmatpush1.bf16.msra.mxu0 %v1514
  %1568 = vmatprep.subr.bf16.mxu0 %v1519
  %1569 = vmatpush1.bf16.msra.mxu0 %v1518
  %1570 = vmatprep.subr.bf16.mxu0 0
  %1571 = vmatpush1.bf16.msra.mxu0 0
  %1572 = vmatprep.subr.bf16.mxu0 0
  %1573 = vmatpush1.bf16.msra.mxu0 0
  %1574 = vmatprep.subr.bf16.mxu0 0
  %1575 = vmatpush1.bf16.msra.mxu0 0
  %1576 = vmatprep.subr.bf16.mxu0 0
  %1577 = vmatpush1.bf16.msra.mxu0 0
  %1578 = vmatprep.subr.bf16.mxu0 0
  %1579 = vmatpush1.bf16.msra.mxu0 0
  %1580 = vmatprep.subr.bf16.mxu0 0
  %1581 = vmatpush1.bf16.msra.mxu0 0
  %1582 = vmatprep.subr.bf16.mxu0 0
  %1583 = vmatpush1.bf16.msra.mxu0 0
  %1584 = vmatprep.subr.bf16.mxu0 0
  %1585 = vmatpush1.bf16.msra.mxu0 0
  %1586 = vmatprep.mubr.bf16.mxu0 0
  %1587 = vmatmul.mubr.bf16.gmra.mrb[0].mxu0 %v758
  %v1588 = vpop.f32.mrb[0].mxu0
  %v1589 = vadd.f32 0.0, %v1588
  %v1590 = vpop.f32.mrb[0].mxu0
  %v1591 = vadd.f32 0.0, %v1590
  %v1592 = vpop.f32.mrb[0].mxu0
  %v1593 = vpop.f32.mrb[0].mxu0
  %1594 = vdwg.mxu0
  %1595 = vmatprep.subr.bf16.mxu0 %v1493
  %1596 = vmatpush1.bf16.msra.mxu0 %v1492
  %1597 = vmatprep.subr.bf16.mxu0 %v1497
  %1598 = vmatpush1.bf16.msra.mxu0 %v1496
  %1599 = vmatprep.subr.bf16.mxu0 %v1501
  %1600 = vmatpush1.bf16.msra.mxu0 %v1500
  %1601 = vmatprep.subr.bf16.mxu0 %v1505
  %1602 = vmatpush1.bf16.msra.mxu0 %v1504
  %1603 = vmatprep.subr.bf16.mxu0 %v1509
  %1604 = vmatpush1.bf16.msra.mxu0 %v1508
  %1605 = vmatprep.subr.bf16.mxu0 %v1513
  %1606 = vmatpush1.bf16.msra.mxu0 %v1512
  %1607 = vmatprep.subr.bf16.mxu0 %v1517
  %1608 = vmatpush1.bf16.msra.mxu0 %v1516
  %1609 = vmatprep.subr.bf16.mxu0 %v1521
  %1610 = vmatpush1.bf16.msra.mxu0 %v1520
  %1611 = vmatprep.subr.bf16.mxu0 0
  %1612 = vmatpush1.bf16.msra.mxu0 0
  %1613 = vmatprep.subr.bf16.mxu0 0
  %1614 = vmatpush1.bf16.msra.mxu0 0
  %1615 = vmatprep.subr.bf16.mxu0 0
  %1616 = vmatpush1.bf16.msra.mxu0 0
  %1617 = vmatprep.subr.bf16.mxu0 0
  %1618 = vmatpush1.bf16.msra.mxu0 0
  %1619 = vmatprep.subr.bf16.mxu0 0
  %1620 = vmatpush1.bf16.msra.mxu0 0
  %1621 = vmatprep.subr.bf16.mxu0 0
  %1622 = vmatpush1.bf16.msra.mxu0 0
  %1623 = vmatprep.subr.bf16.mxu0 0
  %1624 = vmatpush1.bf16.msra.mxu0 0
  %1625 = vmatprep.subr.bf16.mxu0 0
  %1626 = vmatpush1.bf16.msra.mxu0 0
  %1627 = vmatprep.mubr.bf16.mxu0 0
  %1628 = vmatmul.mubr.bf16.gmra.mrb[0].mxu0 %v758
  %v1629 = vpop.f32.mrb[0].mxu0
  %v1630 = vadd.f32 0.0, %v1629
  %v1631 = vpop.f32.mrb[0].mxu0
  %v1632 = vadd.f32 0.0, %v1631
  %v1633 = vpop.f32.mrb[0].mxu0
  %v1634 = vpop.f32.mrb[0].mxu0
  %1635 = vdwg.mxu0
  %v1636 = vadd.f32 %v1358, %v1589
  %v1637 = vadd.f32 %v1359, %v1591
  %v1638 = vadd.f32 %v1360, %v1630
  %v1639 = vadd.f32 %v1361, %v1632
  %v1640 = vxor.u32 %v1636, 2147483648
  %v1641 = vmul.f32 %v1640, 1.442695
  %v1642 = vpow.pop %v1641
  %v1643 = vadd.f32 %v1642, 1.0
  %v1644 = vrcp.pop %v1643
  %v1645 = vmul.f32 1.0, %v1644
  %v1646 = vxor.u32 %v1637, 2147483648
  %v1647 = vmul.f32 %v1646, 1.442695
  %v1648 = vpow.pop %v1647
  %v1649 = vadd.f32 %v1648, 1.0
  %v1650 = vrcp.pop %v1649
  %v1651 = vmul.f32 1.0, %v1650
  %v1652 = vtanh.pop %v1638
  %v1653 = vxor.u32 %v1639, 2147483648
  %v1654 = vmul.f32 %v1653, 1.442695
  %v1655 = vpow.pop %v1654
  %v1656 = vadd.f32 %v1655, 1.0
  %v1657 = vrcp.pop %v1656
  %v1658 = vmul.f32 1.0, %v1657
  %v1659 = vmul.f32 %v1651, %v755
  %v1660 = vmul.f32 %v1645, %v1652
  %v1661 = vadd.f32 %v1659, %v1660
  %v1662 = vtanh.pop %v1661
  %v1663 = vmul.f32 %v1658, %v1662
  %v1664 = vpack.c.bf16 %v1663, %v1663
  %v1665 = vld [vmem:[%s4] sm:$0xff]
  %v1666 = vld [vmem:[%s4 + $0x8] sm:$0xff]
  %v1667 = vld [vmem:[%s4 + $0x10] sm:$0xff]
  %v1668 = vld [vmem:[%s4 + $0x18] sm:$0xff]
  %v1669 = vld [vmem:[%s4 + $0x20] sm:$0xff]
  %v1670 = vld [vmem:[%s4 + $0x28] sm:$0xff]
  %v1671 = vld [vmem:[%s4 + $0x30] sm:$0xff]
  %v1672 = vld [vmem:[%s4 + $0x38] sm:$0xff]
  %v1673 = vld [vmem:[%s4 + $0x40] sm:$0xff]
  %v1674 = vld [vmem:[%s4 + $0x48] sm:$0xff]
  %v1675 = vld [vmem:[%s4 + $0x50] sm:$0xff]
  %v1676 = vld [vmem:[%s4 + $0x58] sm:$0xff]
  %v1677 = vld [vmem:[%s4 + $0x60] sm:$0xff]
  %v1678 = vld [vmem:[%s4 + $0x68] sm:$0xff]
  %v1679 = vld [vmem:[%s4 + $0x70] sm:$0xff]
  %v1680 = vld [vmem:[%s4 + $0x78] sm:$0xff]
  %v1681 = vld [vmem:[%s4 + $0x80] sm:$0xff]
  %v1682 = vld [vmem:[%s4 + $0x88] sm:$0xff]
  %v1683 = vld [vmem:[%s4 + $0x90] sm:$0xff]
  %v1684 = vld [vmem:[%s4 + $0x98] sm:$0xff]
  %v1685 = vld [vmem:[%s4 + $0xa0] sm:$0xff]
  %v1686 = vld [vmem:[%s4 + $0xa8] sm:$0xff]
  %v1687 = vld [vmem:[%s4 + $0xb0] sm:$0xff]
  %v1688 = vld [vmem:[%s4 + $0xb8] sm:$0xff]
  %v1689 = vld [vmem:[%s4 + $0xc0] sm:$0xff]
  %v1690 = vld [vmem:[%s4 + $0xc8] sm:$0xff]
  %v1691 = vld [vmem:[%s4 + $0xd0] sm:$0xff]
  %v1692 = vld [vmem:[%s4 + $0xd8] sm:$0xff]
  %v1693 = vld [vmem:[%s4 + $0xe0] sm:$0xff]
  %v1694 = vld [vmem:[%s4 + $0xe8] sm:$0xff]
  %v1695 = vld [vmem:[%s4 + $0xf0] sm:$0xff]
  %v1696 = vld [vmem:[%s4 + $0xf8] sm:$0xff]
  %v1697 = vpack.c.bf16 %v1355, %v1355
  %v1698 = vld [vmem:[%s5] sm:$0xff]
  %v1699 = vld [vmem:[%s5 + $0x8] sm:$0xff]
  %v1700 = vld [vmem:[%s5 + $0x10] sm:$0xff]
  %v1701 = vld [vmem:[%s5 + $0x18] sm:$0xff]
  %v1702 = vld [vmem:[%s5 + $0x20] sm:$0xff]
  %v1703 = vld [vmem:[%s5 + $0x28] sm:$0xff]
  %v1704 = vld [vmem:[%s5 + $0x30] sm:$0xff]
  %v1705 = vld [vmem:[%s5 + $0x38] sm:$0xff]
  %v1706 = vld [vmem:[%s5 + $0x40] sm:$0xff]
  %v1707 = vld [vmem:[%s5 + $0x48] sm:$0xff]
  %v1708 = vld [vmem:[%s5 + $0x50] sm:$0xff]
  %v1709 = vld [vmem:[%s5 + $0x58] sm:$0xff]
  %v1710 = vld [vmem:[%s5 + $0x60] sm:$0xff]
  %v1711 = vld [vmem:[%s5 + $0x68] sm:$0xff]
  %v1712 = vld [vmem:[%s5 + $0x70] sm:$0xff]
  %v1713 = vld [vmem:[%s5 + $0x78] sm:$0xff]
  %v1714 = vld [vmem:[%s5 + $0x80] sm:$0xff]
  %v1715 = vld [vmem:[%s5 + $0x88] sm:$0xff]
  %v1716 = vld [vmem:[%s5 + $0x90] sm:$0xff]
  %v1717 = vld [vmem:[%s5 + $0x98] sm:$0xff]
  %v1718 = vld [vmem:[%s5 + $0xa0] sm:$0xff]
  %v1719 = vld [vmem:[%s5 + $0xa8] sm:$0xff]
  %v1720 = vld [vmem:[%s5 + $0xb0] sm:$0xff]
  %v1721 = vld [vmem:[%s5 + $0xb8] sm:$0xff]
  %v1722 = vld [vmem:[%s5 + $0xc0] sm:$0xff]
  %v1723 = vld [vmem:[%s5 + $0xc8] sm:$0xff]
  %v1724 = vld [vmem:[%s5 + $0xd0] sm:$0xff]
  %v1725 = vld [vmem:[%s5 + $0xd8] sm:$0xff]
  %v1726 = vld [vmem:[%s5 + $0xe0] sm:$0xff]
  %v1727 = vld [vmem:[%s5 + $0xe8] sm:$0xff]
  %v1728 = vld [vmem:[%s5 + $0xf0] sm:$0xff]
  %v1729 = vld [vmem:[%s5 + $0xf8] sm:$0xff]
  %v1762 = vunpack.c.l.b16 %v1698
  %v1763 = vunpack.c.h.b16 %v1698
  %v1764 = vunpack.c.l.b16 %v1699
  %v1765 = vunpack.c.h.b16 %v1699
  %v1766 = vunpack.c.l.b16 %v1700
  %v1767 = vunpack.c.h.b16 %v1700
  %v1768 = vunpack.c.l.b16 %v1701
  %v1769 = vunpack.c.h.b16 %v1701
  %v1770 = vunpack.c.l.b16 %v1702
  %v1771 = vunpack.c.h.b16 %v1702
  %v1772 = vunpack.c.l.b16 %v1703
  %v1773 = vunpack.c.h.b16 %v1703
  %v1774 = vunpack.c.l.b16 %v1704
  %v1775 = vunpack.c.h.b16 %v1704
  %v1776 = vunpack.c.l.b16 %v1705
  %v1777 = vunpack.c.h.b16 %v1705
  %v1778 = vunpack.c.l.b16 %v1706
  %v1779 = vunpack.c.h.b16 %v1706
  %v1780 = vunpack.c.l.b16 %v1707
  %v1781 = vunpack.c.h.b16 %v1707
  %v1782 = vunpack.c.l.b16 %v1708
  %v1783 = vunpack.c.h.b16 %v1708
  %v1784 = vunpack.c.l.b16 %v1709
  %v1785 = vunpack.c.h.b16 %v1709
  %v1786 = vunpack.c.l.b16 %v1710
  %v1787 = vunpack.c.h.b16 %v1710
  %v1788 = vunpack.c.l.b16 %v1711
  %v1789 = vunpack.c.h.b16 %v1711
  %v1790 = vunpack.c.l.b16 %v1712
  %v1791 = vunpack.c.h.b16 %v1712
  %v1792 = vunpack.c.l.b16 %v1713
  %v1793 = vunpack.c.h.b16 %v1713
  %v1794 = vunpack.c.l.b16 %v1714
  %v1795 = vunpack.c.h.b16 %v1714
  %v1796 = vunpack.c.l.b16 %v1715
  %v1797 = vunpack.c.h.b16 %v1715
  %v1798 = vunpack.c.l.b16 %v1716
  %v1799 = vunpack.c.h.b16 %v1716
  %v1800 = vunpack.c.l.b16 %v1717
  %v1801 = vunpack.c.h.b16 %v1717
  %v1802 = vunpack.c.l.b16 %v1718
  %v1803 = vunpack.c.h.b16 %v1718
  %v1804 = vunpack.c.l.b16 %v1719
  %v1805 = vunpack.c.h.b16 %v1719
  %v1806 = vunpack.c.l.b16 %v1720
  %v1807 = vunpack.c.h.b16 %v1720
  %v1808 = vunpack.c.l.b16 %v1721
  %v1809 = vunpack.c.h.b16 %v1721
  %v1810 = vunpack.c.l.b16 %v1722
  %v1811 = vunpack.c.h.b16 %v1722
  %v1812 = vunpack.c.l.b16 %v1723
  %v1813 = vunpack.c.h.b16 %v1723
  %v1814 = vunpack.c.l.b16 %v1724
  %v1815 = vunpack.c.h.b16 %v1724
  %v1816 = vunpack.c.l.b16 %v1725
  %v1817 = vunpack.c.h.b16 %v1725
  %v1818 = vunpack.c.l.b16 %v1726
  %v1819 = vunpack.c.h.b16 %v1726
  %v1820 = vunpack.c.l.b16 %v1727
  %v1821 = vunpack.c.h.b16 %v1727
  %v1822 = vunpack.c.l.b16 %v1728
  %v1823 = vunpack.c.h.b16 %v1728
  %v1824 = vunpack.c.l.b16 %v1729
  %v1825 = vunpack.c.h.b16 %v1729
  %v1826 = vpack.c.b16 %v1766, %v1762
  %v1827 = vpack.c.b16 %v1767, %v1763
  %v1828 = vpack.c.b16 %v1768, %v1764
  %v1829 = vpack.c.b16 %v1769, %v1765
  %v1830 = vpack.c.b16 %v1774, %v1770
  %v1831 = vpack.c.b16 %v1775, %v1771
  %v1832 = vpack.c.b16 %v1776, %v1772
  %v1833 = vpack.c.b16 %v1777, %v1773
  %v1834 = vpack.c.b16 %v1782, %v1778
  %v1835 = vpack.c.b16 %v1783, %v1779
  %v1836 = vpack.c.b16 %v1784, %v1780
  %v1837 = vpack.c.b16 %v1785, %v1781
  %v1838 = vpack.c.b16 %v1790, %v1786
  %v1839 = vpack.c.b16 %v1791, %v1787
  %v1840 = vpack.c.b16 %v1792, %v1788
  %v1841 = vpack.c.b16 %v1793, %v1789
  %v1842 = vpack.c.b16 %v1798, %v1794
  %v1843 = vpack.c.b16 %v1799, %v1795
  %v1844 = vpack.c.b16 %v1800, %v1796
  %v1845 = vpack.c.b16 %v1801, %v1797
  %v1846 = vpack.c.b16 %v1806, %v1802
  %v1847 = vpack.c.b16 %v1807, %v1803
  %v1848 = vpack.c.b16 %v1808, %v1804
  %v1849 = vpack.c.b16 %v1809, %v1805
  %v1850 = vpack.c.b16 %v1814, %v1810
  %v1851 = vpack.c.b16 %v1815, %v1811
  %v1852 = vpack.c.b16 %v1816, %v1812
  %v1853 = vpack.c.b16 %v1817, %v1813
  %v1854 = vpack.c.b16 %v1822, %v1818
  %v1855 = vpack.c.b16 %v1823, %v1819
  %v1856 = vpack.c.b16 %v1824, %v1820
  %v1857 = vpack.c.b16 %v1825, %v1821
  %1890 = vmatprep.subr.bf16.mxu0 %v1827
  %1891 = vmatpush1.bf16.msra.mxu0 %v1826
  %1892 = vmatprep.subr.bf16.mxu0 %v1831
  %1893 = vmatpush1.bf16.msra.mxu0 %v1830
  %1894 = vmatprep.subr.bf16.mxu0 %v1835
  %1895 = vmatpush1.bf16.msra.mxu0 %v1834
  %1896 = vmatprep.subr.bf16.mxu0 %v1839
  %1897 = vmatpush1.bf16.msra.mxu0 %v1838
  %1898 = vmatprep.subr.bf16.mxu0 %v1843
  %1899 = vmatpush1.bf16.msra.mxu0 %v1842
  %1900 = vmatprep.subr.bf16.mxu0 %v1847
  %1901 = vmatpush1.bf16.msra.mxu0 %v1846
  %1902 = vmatprep.subr.bf16.mxu0 %v1851
  %1903 = vmatpush1.bf16.msra.mxu0 %v1850
  %1904 = vmatprep.subr.bf16.mxu0 %v1855
  %1905 = vmatpush1.bf16.msra.mxu0 %v1854
  %1906 = vmatprep.subr.bf16.mxu0 0
  %1907 = vmatpush1.bf16.msra.mxu0 0
  %1908 = vmatprep.subr.bf16.mxu0 0
  %1909 = vmatpush1.bf16.msra.mxu0 0
  %1910 = vmatprep.subr.bf16.mxu0 0
  %1911 = vmatpush1.bf16.msra.mxu0 0
  %1912 = vmatprep.subr.bf16.mxu0 0
  %1913 = vmatpush1.bf16.msra.mxu0 0
  %1914 = vmatprep.subr.bf16.mxu0 0
  %1915 = vmatpush1.bf16.msra.mxu0 0
  %1916 = vmatprep.subr.bf16.mxu0 0
  %1917 = vmatpush1.bf16.msra.mxu0 0
  %1918 = vmatprep.subr.bf16.mxu0 0
  %1919 = vmatpush1.bf16.msra.mxu0 0
  %1920 = vmatprep.subr.bf16.mxu0 0
  %1921 = vmatpush1.bf16.msra.mxu0 0
  %1922 = vmatprep.mubr.bf16.mxu0 0
  %1923 = vmatmul.mubr.bf16.gmra.mrb[0].mxu0 %v1697
  %v1924 = vpop.f32.mrb[0].mxu0
  %v1925 = vadd.f32 0.0, %v1924
  %v1926 = vpop.f32.mrb[0].mxu0
  %v1927 = vadd.f32 0.0, %v1926
  %v1928 = vpop.f32.mrb[0].mxu0
  %v1929 = vpop.f32.mrb[0].mxu0
  %1930 = vdwg.mxu0
  %1931 = vmatprep.subr.bf16.mxu0 %v1829
  %1932 = vmatpush1.bf16.msra.mxu0 %v1828
  %1933 = vmatprep.subr.bf16.mxu0 %v1833
  %1934 = vmatpush1.bf16.msra.mxu0 %v1832
  %1935 = vmatprep.subr.bf16.mxu0 %v1837
  %1936 = vmatpush1.bf16.msra.mxu0 %v1836
  %1937 = vmatprep.subr.bf16.mxu0 %v1841
  %1938 = vmatpush1.bf16.msra.mxu0 %v1840
  %1939 = vmatprep.subr.bf16.mxu0 %v1845
  %1940 = vmatpush1.bf16.msra.mxu0 %v1844
  %1941 = vmatprep.subr.bf16.mxu0 %v1849
  %1942 = vmatpush1.bf16.msra.mxu0 %v1848
  %1943 = vmatprep.subr.bf16.mxu0 %v1853
  %1944 = vmatpush1.bf16.msra.mxu0 %v1852
  %1945 = vmatprep.subr.bf16.mxu0 %v1857
  %1946 = vmatpush1.bf16.msra.mxu0 %v1856
  %1947 = vmatprep.subr.bf16.mxu0 0
  %1948 = vmatpush1.bf16.msra.mxu0 0
  %1949 = vmatprep.subr.bf16.mxu0 0
  %1950 = vmatpush1.bf16.msra.mxu0 0
  %1951 = vmatprep.subr.bf16.mxu0 0
  %1952 = vmatpush1.bf16.msra.mxu0 0
  %1953 = vmatprep.subr.bf16.mxu0 0
  %1954 = vmatpush1.bf16.msra.mxu0 0
  %1955 = vmatprep.subr.bf16.mxu0 0
  %1956 = vmatpush1.bf16.msra.mxu0 0
  %1957 = vmatprep.subr.bf16.mxu0 0
  %1958 = vmatpush1.bf16.msra.mxu0 0
  %1959 = vmatprep.subr.bf16.mxu0 0
  %1960 = vmatpush1.bf16.msra.mxu0 0
  %1961 = vmatprep.subr.bf16.mxu0 0
  %1962 = vmatpush1.bf16.msra.mxu0 0
  %1963 = vmatprep.mubr.bf16.mxu0 0
  %1964 = vmatmul.mubr.bf16.gmra.mrb[0].mxu0 %v1697
  %v1965 = vpop.f32.mrb[0].mxu0
  %v1966 = vadd.f32 0.0, %v1965
  %v1967 = vpop.f32.mrb[0].mxu0
  %v1968 = vadd.f32 0.0, %v1967
  %v1969 = vpop.f32.mrb[0].mxu0
  %v1970 = vpop.f32.mrb[0].mxu0
  %1971 = vdwg.mxu0
  %v2004 = vunpack.c.l.b16 %v1665
  %v2005 = vunpack.c.h.b16 %v1665
  %v2006 = vunpack.c.l.b16 %v1666
  %v2007 = vunpack.c.h.b16 %v1666
  %v2008 = vunpack.c.l.b16 %v1667
  %v2009 = vunpack.c.h.b16 %v1667
  %v2010 = vunpack.c.l.b16 %v1668
  %v2011 = vunpack.c.h.b16 %v1668
  %v2012 = vunpack.c.l.b16 %v1669
  %v2013 = vunpack.c.h.b16 %v1669
  %v2014 = vunpack.c.l.b16 %v1670
  %v2015 = vunpack.c.h.b16 %v1670
  %v2016 = vunpack.c.l.b16 %v1671
  %v2017 = vunpack.c.h.b16 %v1671
  %v2018 = vunpack.c.l.b16 %v1672
  %v2019 = vunpack.c.h.b16 %v1672
  %v2020 = vunpack.c.l.b16 %v1673
  %v2021 = vunpack.c.h.b16 %v1673
  %v2022 = vunpack.c.l.b16 %v1674
  %v2023 = vunpack.c.h.b16 %v1674
  %v2024 = vunpack.c.l.b16 %v1675
  %v2025 = vunpack.c.h.b16 %v1675
  %v2026 = vunpack.c.l.b16 %v1676
  %v2027 = vunpack.c.h.b16 %v1676
  %v2028 = vunpack.c.l.b16 %v1677
  %v2029 = vunpack.c.h.b16 %v1677
  %v2030 = vunpack.c.l.b16 %v1678
  %v2031 = vunpack.c.h.b16 %v1678
  %v2032 = vunpack.c.l.b16 %v1679
  %v2033 = vunpack.c.h.b16 %v1679
  %v2034 = vunpack.c.l.b16 %v1680
  %v2035 = vunpack.c.h.b16 %v1680
  %v2036 = vunpack.c.l.b16 %v1681
  %v2037 = vunpack.c.h.b16 %v1681
  %v2038 = vunpack.c.l.b16 %v1682
  %v2039 = vunpack.c.h.b16 %v1682
  %v2040 = vunpack.c.l.b16 %v1683
  %v2041 = vunpack.c.h.b16 %v1683
  %v2042 = vunpack.c.l.b16 %v1684
  %v2043 = vunpack.c.h.b16 %v1684
  %v2044 = vunpack.c.l.b16 %v1685
  %v2045 = vunpack.c.h.b16 %v1685
  %v2046 = vunpack.c.l.b16 %v1686
  %v2047 = vunpack.c.h.b16 %v1686
  %v2048 = vunpack.c.l.b16 %v1687
  %v2049 = vunpack.c.h.b16 %v1687
  %v2050 = vunpack.c.l.b16 %v1688
  %v2051 = vunpack.c.h.b16 %v1688
  %v2052 = vunpack.c.l.b16 %v1689
  %v2053 = vunpack.c.h.b16 %v1689
  %v2054 = vunpack.c.l.b16 %v1690
  %v2055 = vunpack.c.h.b16 %v1690
  %v2056 = vunpack.c.l.b16 %v1691
  %v2057 = vunpack.c.h.b16 %v1691
  %v2058 = vunpack.c.l.b16 %v1692
  %v2059 = vunpack.c.h.b16 %v1692
  %v2060 = vunpack.c.l.b16 %v1693
  %v2061 = vunpack.c.h.b16 %v1693
  %v2062 = vunpack.c.l.b16 %v1694
  %v2063 = vunpack.c.h.b16 %v1694
  %v2064 = vunpack.c.l.b16 %v1695
  %v2065 = vunpack.c.h.b16 %v1695
  %v2066 = vunpack.c.l.b16 %v1696
  %v2067 = vunpack.c.h.b16 %v1696
  %v2068 = vpack.c.b16 %v2008, %v2004
  %v2069 = vpack.c.b16 %v2009, %v2005
  %v2070 = vpack.c.b16 %v2010, %v2006
  %v2071 = vpack.c.b16 %v2011, %v2007
  %v2072 = vpack.c.b16 %v2016, %v2012
  %v2073 = vpack.c.b16 %v2017, %v2013
  %v2074 = vpack.c.b16 %v2018, %v2014
  %v2075 = vpack.c.b16 %v2019, %v2015
  %v2076 = vpack.c.b16 %v2024, %v2020
  %v2077 = vpack.c.b16 %v2025, %v2021
  %v2078 = vpack.c.b16 %v2026, %v2022
  %v2079 = vpack.c.b16 %v2027, %v2023
  %v2080 = vpack.c.b16 %v2032, %v2028
  %v2081 = vpack.c.b16 %v2033, %v2029
  %v2082 = vpack.c.b16 %v2034, %v2030
  %v2083 = vpack.c.b16 %v2035, %v2031
  %v2084 = vpack.c.b16 %v2040, %v2036
  %v2085 = vpack.c.b16 %v2041, %v2037
  %v2086 = vpack.c.b16 %v2042, %v2038
  %v2087 = vpack.c.b16 %v2043, %v2039
  %v2088 = vpack.c.b16 %v2048, %v2044
  %v2089 = vpack.c.b16 %v2049, %v2045
  %v2090 = vpack.c.b16 %v2050, %v2046
  %v2091 = vpack.c.b16 %v2051, %v2047
  %v2092 = vpack.c.b16 %v2056, %v2052
  %v2093 = vpack.c.b16 %v2057, %v2053
  %v2094 = vpack.c.b16 %v2058, %v2054
  %v2095 = vpack.c.b16 %v2059, %v2055
  %v2096 = vpack.c.b16 %v2064, %v2060
  %v2097 = vpack.c.b16 %v2065, %v2061
  %v2098 = vpack.c.b16 %v2066, %v2062
  %v2099 = vpack.c.b16 %v2067, %v2063
  %2132 = vmatprep.subr.bf16.mxu0 %v2069
  %2133 = vmatpush1.bf16.msra.mxu0 %v2068
  %2134 = vmatprep.subr.bf16.mxu0 %v2073
  %2135 = vmatpush1.bf16.msra.mxu0 %v2072
  %2136 = vmatprep.subr.bf16.mxu0 %v2077
  %2137 = vmatpush1.bf16.msra.mxu0 %v2076
  %2138 = vmatprep.subr.bf16.mxu0 %v2081
  %2139 = vmatpush1.bf16.msra.mxu0 %v2080
  %2140 = vmatprep.subr.bf16.mxu0 %v2085
  %2141 = vmatpush1.bf16.msra.mxu0 %v2084
  %2142 = vmatprep.subr.bf16.mxu0 %v2089
  %2143 = vmatpush1.bf16.msra.mxu0 %v2088
  %2144 = vmatprep.subr.bf16.mxu0 %v2093
  %2145 = vmatpush1.bf16.msra.mxu0 %v2092
  %2146 = vmatprep.subr.bf16.mxu0 %v2097
  %2147 = vmatpush1.bf16.msra.mxu0 %v2096
  %2148 = vmatprep.subr.bf16.mxu0 0
  %2149 = vmatpush1.bf16.msra.mxu0 0
  %2150 = vmatprep.subr.bf16.mxu0 0
  %2151 = vmatpush1.bf16.msra.mxu0 0
  %2152 = vmatprep.subr.bf16.mxu0 0
  %2153 = vmatpush1.bf16.msra.mxu0 0
  %2154 = vmatprep.subr.bf16.mxu0 0
  %2155 = vmatpush1.bf16.msra.mxu0 0
  %2156 = vmatprep.subr.bf16.mxu0 0
  %2157 = vmatpush1.bf16.msra.mxu0 0
  %2158 = vmatprep.subr.bf16.mxu0 0
  %2159 = vmatpush1.bf16.msra.mxu0 0
  %2160 = vmatprep.subr.bf16.mxu0 0
  %2161 = vmatpush1.bf16.msra.mxu0 0
  %2162 = vmatprep.subr.bf16.mxu0 0
  %2163 = vmatpush1.bf16.msra.mxu0 0
  %2164 = vmatprep.mubr.bf16.mxu0 0
  %2165 = vmatmul.mubr.bf16.gmra.mrb[0].mxu0 %v1664
  %v2166 = vpop.f32.mrb[0].mxu0
  %v2167 = vadd.f32 %v1925, %v2166
  %v2168 = vpop.f32.mrb[0].mxu0
  %v2169 = vadd.f32 %v1927, %v2168
  %v2170 = vpop.f32.mrb[0].mxu0
  %v2171 = vpop.f32.mrb[0].mxu0
  %2172 = vdwg.mxu0
  %2173 = vmatprep.subr.bf16.mxu0 %v2071
  %2174 = vmatpush1.bf16.msra.mxu0 %v2070
  %2175 = vmatprep.subr.bf16.mxu0 %v2075
  %2176 = vmatpush1.bf16.msra.mxu0 %v2074
  %2177 = vmatprep.subr.bf16.mxu0 %v2079
  %2178 = vmatpush1.bf16.msra.mxu0 %v2078
  %2179 = vmatprep.subr.bf16.mxu0 %v2083
  %2180 = vmatpush1.bf16.msra.mxu0 %v2082
  %2181 = vmatprep.subr.bf16.mxu0 %v2087
  %2182 = vmatpush1.bf16.msra.mxu0 %v2086
  %2183 = vmatprep.subr.bf16.mxu0 %v2091
  %2184 = vmatpush1.bf16.msra.mxu0 %v2090
  %2185 = vmatprep.subr.bf16.mxu0 %v2095
  %2186 = vmatpush1.bf16.msra.mxu0 %v2094
  %2187 = vmatprep.subr.bf16.mxu0 %v2099
  %2188 = vmatpush1.bf16.msra.mxu0 %v2098
  %2189 = vmatprep.subr.bf16.mxu0 0
  %2190 = vmatpush1.bf16.msra.mxu0 0
  %2191 = vmatprep.subr.bf16.mxu0 0
  %2192 = vmatpush1.bf16.msra.mxu0 0
  %2193 = vmatprep.subr.bf16.mxu0 0
  %2194 = vmatpush1.bf16.msra.mxu0 0
  %2195 = vmatprep.subr.bf16.mxu0 0
  %2196 = vmatpush1.bf16.msra.mxu0 0
  %2197 = vmatprep.subr.bf16.mxu0 0
  %2198 = vmatpush1.bf16.msra.mxu0 0
  %2199 = vmatprep.subr.bf16.mxu0 0
  %2200 = vmatpush1.bf16.msra.mxu0 0
  %2201 = vmatprep.subr.bf16.mxu0 0
  %2202 = vmatpush1.bf16.msra.mxu0 0
  %2203 = vmatprep.subr.bf16.mxu0 0
  %2204 = vmatpush1.bf16.msra.mxu0 0
  %2205 = vmatprep.mubr.bf16.mxu0 0
  %2206 = vmatmul.mubr.bf16.gmra.mrb[0].mxu0 %v1664
  %v2207 = vpop.f32.mrb[0].mxu0
  %v2208 = vadd.f32 %v1966, %v2207
  %v2209 = vpop.f32.mrb[0].mxu0
  %v2210 = vadd.f32 %v1968, %v2209
  %v2211 = vpop.f32.mrb[0].mxu0
  %v2212 = vpop.f32.mrb[0].mxu0
  %2213 = vdwg.mxu0
  %v2214 = vadd.f32 %v2167, %v1311
  %v2215 = vadd.f32 %v2169, %v1315
  %v2216 = vadd.f32 %v2208, %v1319
  %v2217 = vadd.f32 %v2210, %v1323
  %v2218 = vxor.u32 %v2214, 2147483648
  %v2219 = vmul.f32 %v2218, 1.442695
  %v2220 = vpow.pop %v2219
  %v2221 = vadd.f32 %v2220, 1.0
  %v2222 = vrcp.pop %v2221
  %v2223 = vmul.f32 1.0, %v2222
  %v2224 = vxor.u32 %v2215, 2147483648
  %v2225 = vmul.f32 %v2224, 1.442695
  %v2226 = vpow.pop %v2225
  %v2227 = vadd.f32 %v2226, 1.0
  %v2228 = vrcp.pop %v2227
  %v2229 = vmul.f32 1.0, %v2228
  %v2230 = vtanh.pop %v2216
  %v2231 = vxor.u32 %v2217, 2147483648
  %v2232 = vmul.f32 %v2231, 1.442695
  %v2233 = vpow.pop %v2232
  %v2234 = vadd.f32 %v2233, 1.0
  %v2235 = vrcp.pop %v2234
  %v2236 = vmul.f32 1.0, %v2235
  %v2237 = vmul.f32 %v2229, %v1353
  %v2238 = vmul.f32 %v2223, %v2230
  %v2239 = vadd.f32 %v2237, %v2238
  %v2240 = vtanh.pop %v2239
  %v2241 = vmul.f32 %v2236, %v2240
  %s2242 = scalar_lea.vmem %s7, 8
  %2243 = vst [vmem:[%s2242] sm:$0xff] %v2241
  %s2244 = scalar_lea.vmem [#allocation2], 64
  %v2245 = vld [vmem:[%s2244] sm:$0xff]
  %v2246 = vld [vmem:[%s2244 + $0x8] sm:$0xff]
  %v2247 = vld [vmem:[%s2244 + $0x10] sm:$0xff]
  %v2248 = vld [vmem:[%s2244 + $0x18] sm:$0xff]
  %v2249 = vld [vmem:[%s2] sm:$0xff]
  %v2250 = vld [vmem:[%s2 + $0x8] sm:$0xff]
  %v2251 = vld [vmem:[%s2 + $0x10] sm:$0xff]
  %v2252 = vld [vmem:[%s2 + $0x18] sm:$0xff]
  %v2253 = vld [vmem:[%s2 + $0x20] sm:$0xff]
  %v2254 = vld [vmem:[%s2 + $0x28] sm:$0xff]
  %v2255 = vld [vmem:[%s2 + $0x30] sm:$0xff]
  %v2256 = vld [vmem:[%s2 + $0x38] sm:$0xff]
  %v2257 = vld [vmem:[%s2 + $0x40] sm:$0xff]
  %v2258 = vld [vmem:[%s2 + $0x48] sm:$0xff]
  %v2259 = vld [vmem:[%s2 + $0x50] sm:$0xff]
  %v2260 = vld [vmem:[%s2 + $0x58] sm:$0xff]
  %v2261 = vld [vmem:[%s2 + $0x60] sm:$0xff]
  %v2262 = vld [vmem:[%s2 + $0x68] sm:$0xff]
  %v2263 = vld [vmem:[%s2 + $0x70] sm:$0xff]
  %v2264 = vld [vmem:[%s2 + $0x78] sm:$0xff]
  %v2265 = vld [vmem:[%s2 + $0x80] sm:$0xff]
  %v2266 = vld [vmem:[%s2 + $0x88] sm:$0xff]
  %v2267 = vld [vmem:[%s2 + $0x90] sm:$0xff]
  %v2268 = vld [vmem:[%s2 + $0x98] sm:$0xff]
  %v2269 = vld [vmem:[%s2 + $0xa0] sm:$0xff]
  %v2270 = vld [vmem:[%s2 + $0xa8] sm:$0xff]
  %v2271 = vld [vmem:[%s2 + $0xb0] sm:$0xff]
  %v2272 = vld [vmem:[%s2 + $0xb8] sm:$0xff]
  %v2273 = vld [vmem:[%s2 + $0xc0] sm:$0xff]
  %v2274 = vld [vmem:[%s2 + $0xc8] sm:$0xff]
  %v2275 = vld [vmem:[%s2 + $0xd0] sm:$0xff]
  %v2276 = vld [vmem:[%s2 + $0xd8] sm:$0xff]
  %v2277 = vld [vmem:[%s2 + $0xe0] sm:$0xff]
  %v2278 = vld [vmem:[%s2 + $0xe8] sm:$0xff]
  %v2279 = vld [vmem:[%s2 + $0xf0] sm:$0xff]
  %v2280 = vld [vmem:[%s2 + $0xf8] sm:$0xff]
  %v2313 = vunpack.c.l.b16 %v2249
  %v2314 = vunpack.c.h.b16 %v2249
  %v2315 = vunpack.c.l.b16 %v2250
  %v2316 = vunpack.c.h.b16 %v2250
  %v2317 = vunpack.c.l.b16 %v2251
  %v2318 = vunpack.c.h.b16 %v2251
  %v2319 = vunpack.c.l.b16 %v2252
  %v2320 = vunpack.c.h.b16 %v2252
  %v2321 = vunpack.c.l.b16 %v2253
  %v2322 = vunpack.c.h.b16 %v2253
  %v2323 = vunpack.c.l.b16 %v2254
  %v2324 = vunpack.c.h.b16 %v2254
  %v2325 = vunpack.c.l.b16 %v2255
  %v2326 = vunpack.c.h.b16 %v2255
  %v2327 = vunpack.c.l.b16 %v2256
  %v2328 = vunpack.c.h.b16 %v2256
  %v2329 = vunpack.c.l.b16 %v2257
  %v2330 = vunpack.c.h.b16 %v2257
  %v2331 = vunpack.c.l.b16 %v2258
  %v2332 = vunpack.c.h.b16 %v2258
  %v2333 = vunpack.c.l.b16 %v2259
  %v2334 = vunpack.c.h.b16 %v2259
  %v2335 = vunpack.c.l.b16 %v2260
  %v2336 = vunpack.c.h.b16 %v2260
  %v2337 = vunpack.c.l.b16 %v2261
  %v2338 = vunpack.c.h.b16 %v2261
  %v2339 = vunpack.c.l.b16 %v2262
  %v2340 = vunpack.c.h.b16 %v2262
  %v2341 = vunpack.c.l.b16 %v2263
  %v2342 = vunpack.c.h.b16 %v2263
  %v2343 = vunpack.c.l.b16 %v2264
  %v2344 = vunpack.c.h.b16 %v2264
  %v2345 = vunpack.c.l.b16 %v2265
  %v2346 = vunpack.c.h.b16 %v2265
  %v2347 = vunpack.c.l.b16 %v2266
  %v2348 = vunpack.c.h.b16 %v2266
  %v2349 = vunpack.c.l.b16 %v2267
  %v2350 = vunpack.c.h.b16 %v2267
  %v2351 = vunpack.c.l.b16 %v2268
  %v2352 = vunpack.c.h.b16 %v2268
  %v2353 = vunpack.c.l.b16 %v2269
  %v2354 = vunpack.c.h.b16 %v2269
  %v2355 = vunpack.c.l.b16 %v2270
  %v2356 = vunpack.c.h.b16 %v2270
  %v2357 = vunpack.c.l.b16 %v2271
  %v2358 = vunpack.c.h.b16 %v2271
  %v2359 = vunpack.c.l.b16 %v2272
  %v2360 = vunpack.c.h.b16 %v2272
  %v2361 = vunpack.c.l.b16 %v2273
  %v2362 = vunpack.c.h.b16 %v2273
  %v2363 = vunpack.c.l.b16 %v2274
  %v2364 = vunpack.c.h.b16 %v2274
  %v2365 = vunpack.c.l.b16 %v2275
  %v2366 = vunpack.c.h.b16 %v2275
  %v2367 = vunpack.c.l.b16 %v2276
  %v2368 = vunpack.c.h.b16 %v2276
  %v2369 = vunpack.c.l.b16 %v2277
  %v2370 = vunpack.c.h.b16 %v2277
  %v2371 = vunpack.c.l.b16 %v2278
  %v2372 = vunpack.c.h.b16 %v2278
  %v2373 = vunpack.c.l.b16 %v2279
  %v2374 = vunpack.c.h.b16 %v2279
  %v2375 = vunpack.c.l.b16 %v2280
  %v2376 = vunpack.c.h.b16 %v2280
  %v2377 = vpack.c.b16 %v2317, %v2313
  %v2378 = vpack.c.b16 %v2318, %v2314
  %v2379 = vpack.c.b16 %v2319, %v2315
  %v2380 = vpack.c.b16 %v2320, %v2316
  %v2381 = vpack.c.b16 %v2325, %v2321
  %v2382 = vpack.c.b16 %v2326, %v2322
  %v2383 = vpack.c.b16 %v2327, %v2323
  %v2384 = vpack.c.b16 %v2328, %v2324
  %v2385 = vpack.c.b16 %v2333, %v2329
  %v2386 = vpack.c.b16 %v2334, %v2330
  %v2387 = vpack.c.b16 %v2335, %v2331
  %v2388 = vpack.c.b16 %v2336, %v2332
  %v2389 = vpack.c.b16 %v2341, %v2337
  %v2390 = vpack.c.b16 %v2342, %v2338
  %v2391 = vpack.c.b16 %v2343, %v2339
  %v2392 = vpack.c.b16 %v2344, %v2340
  %v2393 = vpack.c.b16 %v2349, %v2345
  %v2394 = vpack.c.b16 %v2350, %v2346
  %v2395 = vpack.c.b16 %v2351, %v2347
  %v2396 = vpack.c.b16 %v2352, %v2348
  %v2397 = vpack.c.b16 %v2357, %v2353
  %v2398 = vpack.c.b16 %v2358, %v2354
  %v2399 = vpack.c.b16 %v2359, %v2355
  %v2400 = vpack.c.b16 %v2360, %v2356
  %v2401 = vpack.c.b16 %v2365, %v2361
  %v2402 = vpack.c.b16 %v2366, %v2362
  %v2403 = vpack.c.b16 %v2367, %v2363
  %v2404 = vpack.c.b16 %v2368, %v2364
  %v2405 = vpack.c.b16 %v2373, %v2369
  %v2406 = vpack.c.b16 %v2374, %v2370
  %v2407 = vpack.c.b16 %v2375, %v2371
  %v2408 = vpack.c.b16 %v2376, %v2372
  %2441 = vmatprep.subr.bf16.mxu0 %v2378
  %2442 = vmatpush1.bf16.msra.mxu0 %v2377
  %2443 = vmatprep.subr.bf16.mxu0 %v2382
  %2444 = vmatpush1.bf16.msra.mxu0 %v2381
  %2445 = vmatprep.subr.bf16.mxu0 %v2386
  %2446 = vmatpush1.bf16.msra.mxu0 %v2385
  %2447 = vmatprep.subr.bf16.mxu0 %v2390
  %2448 = vmatpush1.bf16.msra.mxu0 %v2389
  %2449 = vmatprep.subr.bf16.mxu0 %v2394
  %2450 = vmatpush1.bf16.msra.mxu0 %v2393
  %2451 = vmatprep.subr.bf16.mxu0 %v2398
  %2452 = vmatpush1.bf16.msra.mxu0 %v2397
  %2453 = vmatprep.subr.bf16.mxu0 %v2402
  %2454 = vmatpush1.bf16.msra.mxu0 %v2401
  %2455 = vmatprep.subr.bf16.mxu0 %v2406
  %2456 = vmatpush1.bf16.msra.mxu0 %v2405
  %2457 = vmatprep.subr.bf16.mxu0 0
  %2458 = vmatpush1.bf16.msra.mxu0 0
  %2459 = vmatprep.subr.bf16.mxu0 0
  %2460 = vmatpush1.bf16.msra.mxu0 0
  %2461 = vmatprep.subr.bf16.mxu0 0
  %2462 = vmatpush1.bf16.msra.mxu0 0
  %2463 = vmatprep.subr.bf16.mxu0 0
  %2464 = vmatpush1.bf16.msra.mxu0 0
  %2465 = vmatprep.subr.bf16.mxu0 0
  %2466 = vmatpush1.bf16.msra.mxu0 0
  %2467 = vmatprep.subr.bf16.mxu0 0
  %2468 = vmatpush1.bf16.msra.mxu0 0
  %2469 = vmatprep.subr.bf16.mxu0 0
  %2470 = vmatpush1.bf16.msra.mxu0 0
  %2471 = vmatprep.subr.bf16.mxu0 0
  %2472 = vmatpush1.bf16.msra.mxu0 0
  %2473 = vmatprep.mubr.bf16.mxu0 0
  %2474 = vmatmul.mubr.bf16.gmra.mrb[0].mxu0 %v1664
  %v2475 = vpop.f32.mrb[0].mxu0
  %v2476 = vadd.f32 0.0, %v2475
  %v2477 = vpop.f32.mrb[0].mxu0
  %v2478 = vadd.f32 0.0, %v2477
  %v2479 = vpop.f32.mrb[0].mxu0
  %v2480 = vpop.f32.mrb[0].mxu0
  %2481 = vdwg.mxu0
  %2482 = vmatprep.subr.bf16.mxu0 %v2380
  %2483 = vmatpush1.bf16.msra.mxu0 %v2379
  %2484 = vmatprep.subr.bf16.mxu0 %v2384
  %2485 = vmatpush1.bf16.msra.mxu0 %v2383
  %2486 = vmatprep.subr.bf16.mxu0 %v2388
  %2487 = vmatpush1.bf16.msra.mxu0 %v2387
  %2488 = vmatprep.subr.bf16.mxu0 %v2392
  %2489 = vmatpush1.bf16.msra.mxu0 %v2391
  %2490 = vmatprep.subr.bf16.mxu0 %v2396
  %2491 = vmatpush1.bf16.msra.mxu0 %v2395
  %2492 = vmatprep.subr.bf16.mxu0 %v2400
  %2493 = vmatpush1.bf16.msra.mxu0 %v2399
  %2494 = vmatprep.subr.bf16.mxu0 %v2404
  %2495 = vmatpush1.bf16.msra.mxu0 %v2403
  %2496 = vmatprep.subr.bf16.mxu0 %v2408
  %2497 = vmatpush1.bf16.msra.mxu0 %v2407
  %2498 = vmatprep.subr.bf16.mxu0 0
  %2499 = vmatpush1.bf16.msra.mxu0 0
  %2500 = vmatprep.subr.bf16.mxu0 0
  %2501 = vmatpush1.bf16.msra.mxu0 0
  %2502 = vmatprep.subr.bf16.mxu0 0
  %2503 = vmatpush1.bf16.msra.mxu0 0
  %2504 = vmatprep.subr.bf16.mxu0 0
  %2505 = vmatpush1.bf16.msra.mxu0 0
  %2506 = vmatprep.subr.bf16.mxu0 0
  %2507 = vmatpush1.bf16.msra.mxu0 0
  %2508 = vmatprep.subr.bf16.mxu0 0
  %2509 = vmatpush1.bf16.msra.mxu0 0
  %2510 = vmatprep.subr.bf16.mxu0 0
  %2511 = vmatpush1.bf16.msra.mxu0 0
  %2512 = vmatprep.subr.bf16.mxu0 0
  %2513 = vmatpush1.bf16.msra.mxu0 0
  %2514 = vmatprep.mubr.bf16.mxu0 0
  %2515 = vmatmul.mubr.bf16.gmra.mrb[0].mxu0 %v1664
  %v2516 = vpop.f32.mrb[0].mxu0
  %v2517 = vadd.f32 0.0, %v2516
  %v2518 = vpop.f32.mrb[0].mxu0
  %v2519 = vadd.f32 0.0, %v2518
  %v2520 = vpop.f32.mrb[0].mxu0
  %v2521 = vpop.f32.mrb[0].mxu0
  %2522 = vdwg.mxu0
  %v2523 = vadd.f32 %v2245, %v2476
  %v2524 = vadd.f32 %v2246, %v2478
  %v2525 = vadd.f32 %v2247, %v2517
  %v2526 = vadd.f32 %v2248, %v2519
  %v2527 = vxor.u32 %v2523, 2147483648
  %v2528 = vmul.f32 %v2527, 1.442695
  %v2529 = vpow.pop %v2528
  %v2530 = vadd.f32 %v2529, 1.0
  %v2531 = vrcp.pop %v2530
  %v2532 = vmul.f32 1.0, %v2531
  %v2533 = vxor.u32 %v2524, 2147483648
  %v2534 = vmul.f32 %v2533, 1.442695
  %v2535 = vpow.pop %v2534
  %v2536 = vadd.f32 %v2535, 1.0
  %v2537 = vrcp.pop %v2536
  %v2538 = vmul.f32 1.0, %v2537
  %v2539 = vtanh.pop %v2525
  %v2540 = vxor.u32 %v2526, 2147483648
  %v2541 = vmul.f32 %v2540, 1.442695
  %v2542 = vpow.pop %v2541
  %v2543 = vadd.f32 %v2542, 1.0
  %v2544 = vrcp.pop %v2543
  %v2545 = vmul.f32 1.0, %v2544
  %v2546 = vmul.f32 %v2538, %v1661
  %v2547 = vmul.f32 %v2532, %v2539
  %v2548 = vadd.f32 %v2546, %v2547
  %v2549 = vtanh.pop %v2548
  %v2550 = vmul.f32 %v2545, %v2549
  %v2551 = vpack.c.bf16 %v2550, %v2550
  %v2552 = vld [vmem:[%s4] sm:$0xff]
  %v2553 = vld [vmem:[%s4 + $0x8] sm:$0xff]
  %v2554 = vld [vmem:[%s4 + $0x10] sm:$0xff]
  %v2555 = vld [vmem:[%s4 + $0x18] sm:$0xff]
  %v2556 = vld [vmem:[%s4 + $0x20] sm:$0xff]
  %v2557 = vld [vmem:[%s4 + $0x28] sm:$0xff]
  %v2558 = vld [vmem:[%s4 + $0x30] sm:$0xff]
  %v2559 = vld [vmem:[%s4 + $0x38] sm:$0xff]
  %v2560 = vld [vmem:[%s4 + $0x40] sm:$0xff]
  %v2561 = vld [vmem:[%s4 + $0x48] sm:$0xff]
  %v2562 = vld [vmem:[%s4 + $0x50] sm:$0xff]
  %v2563 = vld [vmem:[%s4 + $0x58] sm:$0xff]
  %v2564 = vld [vmem:[%s4 + $0x60] sm:$0xff]
  %v2565 = vld [vmem:[%s4 + $0x68] sm:$0xff]
  %v2566 = vld [vmem:[%s4 + $0x70] sm:$0xff]
  %v2567 = vld [vmem:[%s4 + $0x78] sm:$0xff]
  %v2568 = vld [vmem:[%s4 + $0x80] sm:$0xff]
  %v2569 = vld [vmem:[%s4 + $0x88] sm:$0xff]
  %v2570 = vld [vmem:[%s4 + $0x90] sm:$0xff]
  %v2571 = vld [vmem:[%s4 + $0x98] sm:$0xff]
  %v2572 = vld [vmem:[%s4 + $0xa0] sm:$0xff]
  %v2573 = vld [vmem:[%s4 + $0xa8] sm:$0xff]
  %v2574 = vld [vmem:[%s4 + $0xb0] sm:$0xff]
  %v2575 = vld [vmem:[%s4 + $0xb8] sm:$0xff]
  %v2576 = vld [vmem:[%s4 + $0xc0] sm:$0xff]
  %v2577 = vld [vmem:[%s4 + $0xc8] sm:$0xff]
  %v2578 = vld [vmem:[%s4 + $0xd0] sm:$0xff]
  %v2579 = vld [vmem:[%s4 + $0xd8] sm:$0xff]
  %v2580 = vld [vmem:[%s4 + $0xe0] sm:$0xff]
  %v2581 = vld [vmem:[%s4 + $0xe8] sm:$0xff]
  %v2582 = vld [vmem:[%s4 + $0xf0] sm:$0xff]
  %v2583 = vld [vmem:[%s4 + $0xf8] sm:$0xff]
  %v2584 = vpack.c.bf16 %v2241, %v2241
  %v2585 = vld [vmem:[%s5] sm:$0xff]
  %v2586 = vld [vmem:[%s5 + $0x8] sm:$0xff]
  %v2587 = vld [vmem:[%s5 + $0x10] sm:$0xff]
  %v2588 = vld [vmem:[%s5 + $0x18] sm:$0xff]
  %v2589 = vld [vmem:[%s5 + $0x20] sm:$0xff]
  %v2590 = vld [vmem:[%s5 + $0x28] sm:$0xff]
  %v2591 = vld [vmem:[%s5 + $0x30] sm:$0xff]
  %v2592 = vld [vmem:[%s5 + $0x38] sm:$0xff]
  %v2593 = vld [vmem:[%s5 + $0x40] sm:$0xff]
  %v2594 = vld [vmem:[%s5 + $0x48] sm:$0xff]
  %v2595 = vld [vmem:[%s5 + $0x50] sm:$0xff]
  %v2596 = vld [vmem:[%s5 + $0x58] sm:$0xff]
  %v2597 = vld [vmem:[%s5 + $0x60] sm:$0xff]
  %v2598 = vld [vmem:[%s5 + $0x68] sm:$0xff]
  %v2599 = vld [vmem:[%s5 + $0x70] sm:$0xff]
  %v2600 = vld [vmem:[%s5 + $0x78] sm:$0xff]
  %v2601 = vld [vmem:[%s5 + $0x80] sm:$0xff]
  %v2602 = vld [vmem:[%s5 + $0x88] sm:$0xff]
  %v2603 = vld [vmem:[%s5 + $0x90] sm:$0xff]
  %v2604 = vld [vmem:[%s5 + $0x98] sm:$0xff]
  %v2605 = vld [vmem:[%s5 + $0xa0] sm:$0xff]
  %v2606 = vld [vmem:[%s5 + $0xa8] sm:$0xff]
  %v2607 = vld [vmem:[%s5 + $0xb0] sm:$0xff]
  %v2608 = vld [vmem:[%s5 + $0xb8] sm:$0xff]
  %v2609 = vld [vmem:[%s5 + $0xc0] sm:$0xff]
  %v2610 = vld [vmem:[%s5 + $0xc8] sm:$0xff]
  %v2611 = vld [vmem:[%s5 + $0xd0] sm:$0xff]
  %v2612 = vld [vmem:[%s5 + $0xd8] sm:$0xff]
  %v2613 = vld [vmem:[%s5 + $0xe0] sm:$0xff]
  %v2614 = vld [vmem:[%s5 + $0xe8] sm:$0xff]
  %v2615 = vld [vmem:[%s5 + $0xf0] sm:$0xff]
  %v2616 = vld [vmem:[%s5 + $0xf8] sm:$0xff]
  %v2649 = vunpack.c.l.b16 %v2585
  %v2650 = vunpack.c.h.b16 %v2585
  %v2651 = vunpack.c.l.b16 %v2586
  %v2652 = vunpack.c.h.b16 %v2586
  %v2653 = vunpack.c.l.b16 %v2587
  %v2654 = vunpack.c.h.b16 %v2587
  %v2655 = vunpack.c.l.b16 %v2588
  %v2656 = vunpack.c.h.b16 %v2588
  %v2657 = vunpack.c.l.b16 %v2589
  %v2658 = vunpack.c.h.b16 %v2589
  %v2659 = vunpack.c.l.b16 %v2590
  %v2660 = vunpack.c.h.b16 %v2590
  %v2661 = vunpack.c.l.b16 %v2591
  %v2662 = vunpack.c.h.b16 %v2591
  %v2663 = vunpack.c.l.b16 %v2592
  %v2664 = vunpack.c.h.b16 %v2592
  %v2665 = vunpack.c.l.b16 %v2593
  %v2666 = vunpack.c.h.b16 %v2593
  %v2667 = vunpack.c.l.b16 %v2594
  %v2668 = vunpack.c.h.b16 %v2594
  %v2669 = vunpack.c.l.b16 %v2595
  %v2670 = vunpack.c.h.b16 %v2595
  %v2671 = vunpack.c.l.b16 %v2596
  %v2672 = vunpack.c.h.b16 %v2596
  %v2673 = vunpack.c.l.b16 %v2597
  %v2674 = vunpack.c.h.b16 %v2597
  %v2675 = vunpack.c.l.b16 %v2598
  %v2676 = vunpack.c.h.b16 %v2598
  %v2677 = vunpack.c.l.b16 %v2599
  %v2678 = vunpack.c.h.b16 %v2599
  %v2679 = vunpack.c.l.b16 %v2600
  %v2680 = vunpack.c.h.b16 %v2600
  %v2681 = vunpack.c.l.b16 %v2601
  %v2682 = vunpack.c.h.b16 %v2601
  %v2683 = vunpack.c.l.b16 %v2602
  %v2684 = vunpack.c.h.b16 %v2602
  %v2685 = vunpack.c.l.b16 %v2603
  %v2686 = vunpack.c.h.b16 %v2603
  %v2687 = vunpack.c.l.b16 %v2604
  %v2688 = vunpack.c.h.b16 %v2604
  %v2689 = vunpack.c.l.b16 %v2605
  %v2690 = vunpack.c.h.b16 %v2605
  %v2691 = vunpack.c.l.b16 %v2606
  %v2692 = vunpack.c.h.b16 %v2606
  %v2693 = vunpack.c.l.b16 %v2607
  %v2694 = vunpack.c.h.b16 %v2607
  %v2695 = vunpack.c.l.b16 %v2608
  %v2696 = vunpack.c.h.b16 %v2608
  %v2697 = vunpack.c.l.b16 %v2609
  %v2698 = vunpack.c.h.b16 %v2609
  %v2699 = vunpack.c.l.b16 %v2610
  %v2700 = vunpack.c.h.b16 %v2610
  %v2701 = vunpack.c.l.b16 %v2611
  %v2702 = vunpack.c.h.b16 %v2611
  %v2703 = vunpack.c.l.b16 %v2612
  %v2704 = vunpack.c.h.b16 %v2612
  %v2705 = vunpack.c.l.b16 %v2613
  %v2706 = vunpack.c.h.b16 %v2613
  %v2707 = vunpack.c.l.b16 %v2614
  %v2708 = vunpack.c.h.b16 %v2614
  %v2709 = vunpack.c.l.b16 %v2615
  %v2710 = vunpack.c.h.b16 %v2615
  %v2711 = vunpack.c.l.b16 %v2616
  %v2712 = vunpack.c.h.b16 %v2616
  %v2713 = vpack.c.b16 %v2653, %v2649
  %v2714 = vpack.c.b16 %v2654, %v2650
  %v2715 = vpack.c.b16 %v2655, %v2651
  %v2716 = vpack.c.b16 %v2656, %v2652
  %v2717 = vpack.c.b16 %v2661, %v2657
  %v2718 = vpack.c.b16 %v2662, %v2658
  %v2719 = vpack.c.b16 %v2663, %v2659
  %v2720 = vpack.c.b16 %v2664, %v2660
  %v2721 = vpack.c.b16 %v2669, %v2665
  %v2722 = vpack.c.b16 %v2670, %v2666
  %v2723 = vpack.c.b16 %v2671, %v2667
  %v2724 = vpack.c.b16 %v2672, %v2668
  %v2725 = vpack.c.b16 %v2677, %v2673
  %v2726 = vpack.c.b16 %v2678, %v2674
  %v2727 = vpack.c.b16 %v2679, %v2675
  %v2728 = vpack.c.b16 %v2680, %v2676
  %v2729 = vpack.c.b16 %v2685, %v2681
  %v2730 = vpack.c.b16 %v2686, %v2682
  %v2731 = vpack.c.b16 %v2687, %v2683
  %v2732 = vpack.c.b16 %v2688, %v2684
  %v2733 = vpack.c.b16 %v2693, %v2689
  %v2734 = vpack.c.b16 %v2694, %v2690
  %v2735 = vpack.c.b16 %v2695, %v2691
  %v2736 = vpack.c.b16 %v2696, %v2692
  %v2737 = vpack.c.b16 %v2701, %v2697
  %v2738 = vpack.c.b16 %v2702, %v2698
  %v2739 = vpack.c.b16 %v2703, %v2699
  %v2740 = vpack.c.b16 %v2704, %v2700
  %v2741 = vpack.c.b16 %v2709, %v2705
  %v2742 = vpack.c.b16 %v2710, %v2706
  %v2743 = vpack.c.b16 %v2711, %v2707
  %v2744 = vpack.c.b16 %v2712, %v2708
  %2777 = vmatprep.subr.bf16.mxu0 %v2714
  %2778 = vmatpush1.bf16.msra.mxu0 %v2713
  %2779 = vmatprep.subr.bf16.mxu0 %v2718
  %2780 = vmatpush1.bf16.msra.mxu0 %v2717
  %2781 = vmatprep.subr.bf16.mxu0 %v2722
  %2782 = vmatpush1.bf16.msra.mxu0 %v2721
  %2783 = vmatprep.subr.bf16.mxu0 %v2726
  %2784 = vmatpush1.bf16.msra.mxu0 %v2725
  %2785 = vmatprep.subr.bf16.mxu0 %v2730
  %2786 = vmatpush1.bf16.msra.mxu0 %v2729
  %2787 = vmatprep.subr.bf16.mxu0 %v2734
  %2788 = vmatpush1.bf16.msra.mxu0 %v2733
  %2789 = vmatprep.subr.bf16.mxu0 %v2738
  %2790 = vmatpush1.bf16.msra.mxu0 %v2737
  %2791 = vmatprep.subr.bf16.mxu0 %v2742
  %2792 = vmatpush1.bf16.msra.mxu0 %v2741
  %2793 = vmatprep.subr.bf16.mxu0 0
  %2794 = vmatpush1.bf16.msra.mxu0 0
  %2795 = vmatprep.subr.bf16.mxu0 0
  %2796 = vmatpush1.bf16.msra.mxu0 0
  %2797 = vmatprep.subr.bf16.mxu0 0
  %2798 = vmatpush1.bf16.msra.mxu0 0
  %2799 = vmatprep.subr.bf16.mxu0 0
  %2800 = vmatpush1.bf16.msra.mxu0 0
  %2801 = vmatprep.subr.bf16.mxu0 0
  %2802 = vmatpush1.bf16.msra.mxu0 0
  %2803 = vmatprep.subr.bf16.mxu0 0
  %2804 = vmatpush1.bf16.msra.mxu0 0
  %2805 = vmatprep.subr.bf16.mxu0 0
  %2806 = vmatpush1.bf16.msra.mxu0 0
  %2807 = vmatprep.subr.bf16.mxu0 0
  %2808 = vmatpush1.bf16.msra.mxu0 0
  %2809 = vmatprep.mubr.bf16.mxu0 0
  %2810 = vmatmul.mubr.bf16.gmra.mrb[0].mxu0 %v2584
  %v2811 = vpop.f32.mrb[0].mxu0
  %v2812 = vadd.f32 0.0, %v2811
  %v2813 = vpop.f32.mrb[0].mxu0
  %v2814 = vadd.f32 0.0, %v2813
  %v2815 = vpop.f32.mrb[0].mxu0
  %v2816 = vpop.f32.mrb[0].mxu0
  %2817 = vdwg.mxu0
  %2818 = vmatprep.subr.bf16.mxu0 %v2716
  %2819 = vmatpush1.bf16.msra.mxu0 %v2715
  %2820 = vmatprep.subr.bf16.mxu0 %v2720
  %2821 = vmatpush1.bf16.msra.mxu0 %v2719
  %2822 = vmatprep.subr.bf16.mxu0 %v2724
  %2823 = vmatpush1.bf16.msra.mxu0 %v2723
  %2824 = vmatprep.subr.bf16.mxu0 %v2728
  %2825 = vmatpush1.bf16.msra.mxu0 %v2727
  %2826 = vmatprep.subr.bf16.mxu0 %v2732
  %2827 = vmatpush1.bf16.msra.mxu0 %v2731
  %2828 = vmatprep.subr.bf16.mxu0 %v2736
  %2829 = vmatpush1.bf16.msra.mxu0 %v2735
  %2830 = vmatprep.subr.bf16.mxu0 %v2740
  %2831 = vmatpush1.bf16.msra.mxu0 %v2739
  %2832 = vmatprep.subr.bf16.mxu0 %v2744
  %2833 = vmatpush1.bf16.msra.mxu0 %v2743
  %2834 = vmatprep.subr.bf16.mxu0 0
  %2835 = vmatpush1.bf16.msra.mxu0 0
  %2836 = vmatprep.subr.bf16.mxu0 0
  %2837 = vmatpush1.bf16.msra.mxu0 0
  %2838 = vmatprep.subr.bf16.mxu0 0
  %2839 = vmatpush1.bf16.msra.mxu0 0
  %2840 = vmatprep.subr.bf16.mxu0 0
  %2841 = vmatpush1.bf16.msra.mxu0 0
  %2842 = vmatprep.subr.bf16.mxu0 0
  %2843 = vmatpush1.bf16.msra.mxu0 0
  %2844 = vmatprep.subr.bf16.mxu0 0
  %2845 = vmatpush1.bf16.msra.mxu0 0
  %2846 = vmatprep.subr.bf16.mxu0 0
  %2847 = vmatpush1.bf16.msra.mxu0 0
  %2848 = vmatprep.subr.bf16.mxu0 0
  %2849 = vmatpush1.bf16.msra.mxu0 0
  %2850 = vmatprep.mubr.bf16.mxu0 0
  %2851 = vmatmul.mubr.bf16.gmra.mrb[0].mxu0 %v2584
  %v2852 = vpop.f32.mrb[0].mxu0
  %v2853 = vadd.f32 0.0, %v2852
  %v2854 = vpop.f32.mrb[0].mxu0
  %v2855 = vadd.f32 0.0, %v2854
  %v2856 = vpop.f32.mrb[0].mxu0
  %v2857 = vpop.f32.mrb[0].mxu0
  %2858 = vdwg.mxu0
  %v2891 = vunpack.c.l.b16 %v2552
  %v2892 = vunpack.c.h.b16 %v2552
  %v2893 = vunpack.c.l.b16 %v2553
  %v2894 = vunpack.c.h.b16 %v2553
  %v2895 = vunpack.c.l.b16 %v2554
  %v2896 = vunpack.c.h.b16 %v2554
  %v2897 = vunpack.c.l.b16 %v2555
  %v2898 = vunpack.c.h.b16 %v2555
  %v2899 = vunpack.c.l.b16 %v2556
  %v2900 = vunpack.c.h.b16 %v2556
  %v2901 = vunpack.c.l.b16 %v2557
  %v2902 = vunpack.c.h.b16 %v2557
  %v2903 = vunpack.c.l.b16 %v2558
  %v2904 = vunpack.c.h.b16 %v2558
  %v2905 = vunpack.c.l.b16 %v2559
  %v2906 = vunpack.c.h.b16 %v2559
  %v2907 = vunpack.c.l.b16 %v2560
  %v2908 = vunpack.c.h.b16 %v2560
  %v2909 = vunpack.c.l.b16 %v2561
  %v2910 = vunpack.c.h.b16 %v2561
  %v2911 = vunpack.c.l.b16 %v2562
  %v2912 = vunpack.c.h.b16 %v2562
  %v2913 = vunpack.c.l.b16 %v2563
  %v2914 = vunpack.c.h.b16 %v2563
  %v2915 = vunpack.c.l.b16 %v2564
  %v2916 = vunpack.c.h.b16 %v2564
  %v2917 = vunpack.c.l.b16 %v2565
  %v2918 = vunpack.c.h.b16 %v2565
  %v2919 = vunpack.c.l.b16 %v2566
  %v2920 = vunpack.c.h.b16 %v2566
  %v2921 = vunpack.c.l.b16 %v2567
  %v2922 = vunpack.c.h.b16 %v2567
  %v2923 = vunpack.c.l.b16 %v2568
  %v2924 = vunpack.c.h.b16 %v2568
  %v2925 = vunpack.c.l.b16 %v2569
  %v2926 = vunpack.c.h.b16 %v2569
  %v2927 = vunpack.c.l.b16 %v2570
  %v2928 = vunpack.c.h.b16 %v2570
  %v2929 = vunpack.c.l.b16 %v2571
  %v2930 = vunpack.c.h.b16 %v2571
  %v2931 = vunpack.c.l.b16 %v2572
  %v2932 = vunpack.c.h.b16 %v2572
  %v2933 = vunpack.c.l.b16 %v2573
  %v2934 = vunpack.c.h.b16 %v2573
  %v2935 = vunpack.c.l.b16 %v2574
  %v2936 = vunpack.c.h.b16 %v2574
  %v2937 = vunpack.c.l.b16 %v2575
  %v2938 = vunpack.c.h.b16 %v2575
  %v2939 = vunpack.c.l.b16 %v2576
  %v2940 = vunpack.c.h.b16 %v2576
  %v2941 = vunpack.c.l.b16 %v2577
  %v2942 = vunpack.c.h.b16 %v2577
  %v2943 = vunpack.c.l.b16 %v2578
  %v2944 = vunpack.c.h.b16 %v2578
  %v2945 = vunpack.c.l.b16 %v2579
  %v2946 = vunpack.c.h.b16 %v2579
  %v2947 = vunpack.c.l.b16 %v2580
  %v2948 = vunpack.c.h.b16 %v2580
  %v2949 = vunpack.c.l.b16 %v2581
  %v2950 = vunpack.c.h.b16 %v2581
  %v2951 = vunpack.c.l.b16 %v2582
  %v2952 = vunpack.c.h.b16 %v2582
  %v2953 = vunpack.c.l.b16 %v2583
  %v2954 = vunpack.c.h.b16 %v2583
  %v2955 = vpack.c.b16 %v2895, %v2891
  %v2956 = vpack.c.b16 %v2896, %v2892
  %v2957 = vpack.c.b16 %v2897, %v2893
  %v2958 = vpack.c.b16 %v2898, %v2894
  %v2959 = vpack.c.b16 %v2903, %v2899
  %v2960 = vpack.c.b16 %v2904, %v2900
  %v2961 = vpack.c.b16 %v2905, %v2901
  %v2962 = vpack.c.b16 %v2906, %v2902
  %v2963 = vpack.c.b16 %v2911, %v2907
  %v2964 = vpack.c.b16 %v2912, %v2908
  %v2965 = vpack.c.b16 %v2913, %v2909
  %v2966 = vpack.c.b16 %v2914, %v2910
  %v2967 = vpack.c.b16 %v2919, %v2915
  %v2968 = vpack.c.b16 %v2920, %v2916
  %v2969 = vpack.c.b16 %v2921, %v2917
  %v2970 = vpack.c.b16 %v2922, %v2918
  %v2971 = vpack.c.b16 %v2927, %v2923
  %v2972 = vpack.c.b16 %v2928, %v2924
  %v2973 = vpack.c.b16 %v2929, %v2925
  %v2974 = vpack.c.b16 %v2930, %v2926
  %v2975 = vpack.c.b16 %v2935, %v2931
  %v2976 = vpack.c.b16 %v2936, %v2932
  %v2977 = vpack.c.b16 %v2937, %v2933
  %v2978 = vpack.c.b16 %v2938, %v2934
  %v2979 = vpack.c.b16 %v2943, %v2939
  %v2980 = vpack.c.b16 %v2944, %v2940
  %v2981 = vpack.c.b16 %v2945, %v2941
  %v2982 = vpack.c.b16 %v2946, %v2942
  %v2983 = vpack.c.b16 %v2951, %v2947
  %v2984 = vpack.c.b16 %v2952, %v2948
  %v2985 = vpack.c.b16 %v2953, %v2949
  %v2986 = vpack.c.b16 %v2954, %v2950
  %3019 = vmatprep.subr.bf16.mxu0 %v2956
  %3020 = vmatpush1.bf16.msra.mxu0 %v2955
  %3021 = vmatprep.subr.bf16.mxu0 %v2960
  %3022 = vmatpush1.bf16.msra.mxu0 %v2959
  %3023 = vmatprep.subr.bf16.mxu0 %v2964
  %3024 = vmatpush1.bf16.msra.mxu0 %v2963
  %3025 = vmatprep.subr.bf16.mxu0 %v2968
  %3026 = vmatpush1.bf16.msra.mxu0 %v2967
  %3027 = vmatprep.subr.bf16.mxu0 %v2972
  %3028 = vmatpush1.bf16.msra.mxu0 %v2971
  %3029 = vmatprep.subr.bf16.mxu0 %v2976
  %3030 = vmatpush1.bf16.msra.mxu0 %v2975
  %3031 = vmatprep.subr.bf16.mxu0 %v2980
  %3032 = vmatpush1.bf16.msra.mxu0 %v2979
  %3033 = vmatprep.subr.bf16.mxu0 %v2984
  %3034 = vmatpush1.bf16.msra.mxu0 %v2983
  %3035 = vmatprep.subr.bf16.mxu0 0
  %3036 = vmatpush1.bf16.msra.mxu0 0
  %3037 = vmatprep.subr.bf16.mxu0 0
  %3038 = vmatpush1.bf16.msra.mxu0 0
  %3039 = vmatprep.subr.bf16.mxu0 0
  %3040 = vmatpush1.bf16.msra.mxu0 0
  %3041 = vmatprep.subr.bf16.mxu0 0
  %3042 = vmatpush1.bf16.msra.mxu0 0
  %3043 = vmatprep.subr.bf16.mxu0 0
  %3044 = vmatpush1.bf16.msra.mxu0 0
  %3045 = vmatprep.subr.bf16.mxu0 0
  %3046 = vmatpush1.bf16.msra.mxu0 0
  %3047 = vmatprep.subr.bf16.mxu0 0
  %3048 = vmatpush1.bf16.msra.mxu0 0
  %3049 = vmatprep.subr.bf16.mxu0 0
  %3050 = vmatpush1.bf16.msra.mxu0 0
  %3051 = vmatprep.mubr.bf16.mxu0 0
  %3052 = vmatmul.mubr.bf16.gmra.mrb[0].mxu0 %v2551
  %v3053 = vpop.f32.mrb[0].mxu0
  %v3054 = vadd.f32 %v2812, %v3053
  %v3055 = vpop.f32.mrb[0].mxu0
  %v3056 = vadd.f32 %v2814, %v3055
  %v3057 = vpop.f32.mrb[0].mxu0
  %v3058 = vpop.f32.mrb[0].mxu0
  %3059 = vdwg.mxu0
  %3060 = vmatprep.subr.bf16.mxu0 %v2958
  %3061 = vmatpush1.bf16.msra.mxu0 %v2957
  %3062 = vmatprep.subr.bf16.mxu0 %v2962
  %3063 = vmatpush1.bf16.msra.mxu0 %v2961
  %3064 = vmatprep.subr.bf16.mxu0 %v2966
  %3065 = vmatpush1.bf16.msra.mxu0 %v2965
  %3066 = vmatprep.subr.bf16.mxu0 %v2970
  %3067 = vmatpush1.bf16.msra.mxu0 %v2969
  %3068 = vmatprep.subr.bf16.mxu0 %v2974
  %3069 = vmatpush1.bf16.msra.mxu0 %v2973
  %3070 = vmatprep.subr.bf16.mxu0 %v2978
  %3071 = vmatpush1.bf16.msra.mxu0 %v2977
  %3072 = vmatprep.subr.bf16.mxu0 %v2982
  %3073 = vmatpush1.bf16.msra.mxu0 %v2981
  %3074 = vmatprep.subr.bf16.mxu0 %v2986
  %3075 = vmatpush1.bf16.msra.mxu0 %v2985
  %3076 = vmatprep.subr.bf16.mxu0 0
  %3077 = vmatpush1.bf16.msra.mxu0 0
  %3078 = vmatprep.subr.bf16.mxu0 0
  %3079 = vmatpush1.bf16.msra.mxu0 0
  %3080 = vmatprep.subr.bf16.mxu0 0
  %3081 = vmatpush1.bf16.msra.mxu0 0
  %3082 = vmatprep.subr.bf16.mxu0 0
  %3083 = vmatpush1.bf16.msra.mxu0 0
  %3084 = vmatprep.subr.bf16.mxu0 0
  %3085 = vmatpush1.bf16.msra.mxu0 0
  %3086 = vmatprep.subr.bf16.mxu0 0
  %3087 = vmatpush1.bf16.msra.mxu0 0
  %3088 = vmatprep.subr.bf16.mxu0 0
  %3089 = vmatpush1.bf16.msra.mxu0 0
  %3090 = vmatprep.subr.bf16.mxu0 0
  %3091 = vmatpush1.bf16.msra.mxu0 0
  %3092 = vmatprep.mubr.bf16.mxu0 0
  %3093 = vmatmul.mubr.bf16.gmra.mrb[0].mxu0 %v2551
  %v3094 = vpop.f32.mrb[0].mxu0
  %v3095 = vadd.f32 %v2853, %v3094
  %v3096 = vpop.f32.mrb[0].mxu0
  %v3097 = vadd.f32 %v2855, %v3096
  %v3098 = vpop.f32.mrb[0].mxu0
  %v3099 = vpop.f32.mrb[0].mxu0
  %3100 = vdwg.mxu0
  %v3101 = vadd.f32 %v3054, %v1311
  %v3102 = vadd.f32 %v3056, %v1315
  %v3103 = vadd.f32 %v3095, %v1319
  %v3104 = vadd.f32 %v3097, %v1323
  %v3105 = vxor.u32 %v3101, 2147483648
  %v3106 = vmul.f32 %v3105, 1.442695
  %v3107 = vpow.pop %v3106
  %v3108 = vadd.f32 %v3107, 1.0
  %v3109 = vrcp.pop %v3108
  %v3110 = vmul.f32 1.0, %v3109
  %v3111 = vxor.u32 %v3102, 2147483648
  %v3112 = vmul.f32 %v3111, 1.442695
  %v3113 = vpow.pop %v3112
  %v3114 = vadd.f32 %v3113, 1.0
  %v3115 = vrcp.pop %v3114
  %v3116 = vmul.f32 1.0, %v3115
  %v3117 = vtanh.pop %v3103
  %v3118 = vxor.u32 %v3104, 2147483648
  %v3119 = vmul.f32 %v3118, 1.442695
  %v3120 = vpow.pop %v3119
  %v3121 = vadd.f32 %v3120, 1.0
  %v3122 = vrcp.pop %v3121
  %v3123 = vmul.f32 1.0, %v3122
  %v3124 = vmul.f32 %v3116, %v2239
  %v3125 = vmul.f32 %v3110, %v3117
  %v3126 = vadd.f32 %v3124, %v3125
  %v3127 = vtanh.pop %v3126
  %v3128 = vmul.f32 %v3123, %v3127
  %s3129 = scalar_lea.vmem %s7, 16
  %3130 = vst [vmem:[%s3129] sm:$0xff] %v3128
  %s3131 = scalar_lea.vmem [#allocation2], 96
  %v3132 = vld [vmem:[%s3131] sm:$0xff]
  %v3133 = vld [vmem:[%s3131 + $0x8] sm:$0xff]
  %v3134 = vld [vmem:[%s3131 + $0x10] sm:$0xff]
  %v3135 = vld [vmem:[%s3131 + $0x18] sm:$0xff]
  %v3136 = vld [vmem:[%s2] sm:$0xff]
  %v3137 = vld [vmem:[%s2 + $0x8] sm:$0xff]
  %v3138 = vld [vmem:[%s2 + $0x10] sm:$0xff]
  %v3139 = vld [vmem:[%s2 + $0x18] sm:$0xff]
  %v3140 = vld [vmem:[%s2 + $0x20] sm:$0xff]
  %v3141 = vld [vmem:[%s2 + $0x28] sm:$0xff]
  %v3142 = vld [vmem:[%s2 + $0x30] sm:$0xff]
  %v3143 = vld [vmem:[%s2 + $0x38] sm:$0xff]
  %v3144 = vld [vmem:[%s2 + $0x40] sm:$0xff]
  %v3145 = vld [vmem:[%s2 + $0x48] sm:$0xff]
  %v3146 = vld [vmem:[%s2 + $0x50] sm:$0xff]
  %v3147 = vld [vmem:[%s2 + $0x58] sm:$0xff]
  %v3148 = vld [vmem:[%s2 + $0x60] sm:$0xff]
  %v3149 = vld [vmem:[%s2 + $0x68] sm:$0xff]
  %v3150 = vld [vmem:[%s2 + $0x70] sm:$0xff]
  %v3151 = vld [vmem:[%s2 + $0x78] sm:$0xff]
  %v3152 = vld [vmem:[%s2 + $0x80] sm:$0xff]
  %v3153 = vld [vmem:[%s2 + $0x88] sm:$0xff]
  %v3154 = vld [vmem:[%s2 + $0x90] sm:$0xff]
  %v3155 = vld [vmem:[%s2 + $0x98] sm:$0xff]
  %v3156 = vld [vmem:[%s2 + $0xa0] sm:$0xff]
  %v3157 = vld [vmem:[%s2 + $0xa8] sm:$0xff]
  %v3158 = vld [vmem:[%s2 + $0xb0] sm:$0xff]
  %v3159 = vld [vmem:[%s2 + $0xb8] sm:$0xff]
  %v3160 = vld [vmem:[%s2 + $0xc0] sm:$0xff]
  %v3161 = vld [vmem:[%s2 + $0xc8] sm:$0xff]
  %v3162 = vld [vmem:[%s2 + $0xd0] sm:$0xff]
  %v3163 = vld [vmem:[%s2 + $0xd8] sm:$0xff]
  %v3164 = vld [vmem:[%s2 + $0xe0] sm:$0xff]
  %v3165 = vld [vmem:[%s2 + $0xe8] sm:$0xff]
  %v3166 = vld [vmem:[%s2 + $0xf0] sm:$0xff]
  %v3167 = vld [vmem:[%s2 + $0xf8] sm:$0xff]
  %v3200 = vunpack.c.l.b16 %v3136
  %v3201 = vunpack.c.h.b16 %v3136
  %v3202 = vunpack.c.l.b16 %v3137
  %v3203 = vunpack.c.h.b16 %v3137
  %v3204 = vunpack.c.l.b16 %v3138
  %v3205 = vunpack.c.h.b16 %v3138
  %v3206 = vunpack.c.l.b16 %v3139
  %v3207 = vunpack.c.h.b16 %v3139
  %v3208 = vunpack.c.l.b16 %v3140
  %v3209 = vunpack.c.h.b16 %v3140
  %v3210 = vunpack.c.l.b16 %v3141
  %v3211 = vunpack.c.h.b16 %v3141
  %v3212 = vunpack.c.l.b16 %v3142
  %v3213 = vunpack.c.h.b16 %v3142
  %v3214 = vunpack.c.l.b16 %v3143
  %v3215 = vunpack.c.h.b16 %v3143
  %v3216 = vunpack.c.l.b16 %v3144
  %v3217 = vunpack.c.h.b16 %v3144
  %v3218 = vunpack.c.l.b16 %v3145
  %v3219 = vunpack.c.h.b16 %v3145
  %v3220 = vunpack.c.l.b16 %v3146
  %v3221 = vunpack.c.h.b16 %v3146
  %v3222 = vunpack.c.l.b16 %v3147
  %v3223 = vunpack.c.h.b16 %v3147
  %v3224 = vunpack.c.l.b16 %v3148
  %v3225 = vunpack.c.h.b16 %v3148
  %v3226 = vunpack.c.l.b16 %v3149
  %v3227 = vunpack.c.h.b16 %v3149
  %v3228 = vunpack.c.l.b16 %v3150
  %v3229 = vunpack.c.h.b16 %v3150
  %v3230 = vunpack.c.l.b16 %v3151
  %v3231 = vunpack.c.h.b16 %v3151
  %v3232 = vunpack.c.l.b16 %v3152
  %v3233 = vunpack.c.h.b16 %v3152
  %v3234 = vunpack.c.l.b16 %v3153
  %v3235 = vunpack.c.h.b16 %v3153
  %v3236 = vunpack.c.l.b16 %v3154
  %v3237 = vunpack.c.h.b16 %v3154
  %v3238 = vunpack.c.l.b16 %v3155
  %v3239 = vunpack.c.h.b16 %v3155
  %v3240 = vunpack.c.l.b16 %v3156
  %v3241 = vunpack.c.h.b16 %v3156
  %v3242 = vunpack.c.l.b16 %v3157
  %v3243 = vunpack.c.h.b16 %v3157
  %v3244 = vunpack.c.l.b16 %v3158
  %v3245 = vunpack.c.h.b16 %v3158
  %v3246 = vunpack.c.l.b16 %v3159
  %v3247 = vunpack.c.h.b16 %v3159
  %v3248 = vunpack.c.l.b16 %v3160
  %v3249 = vunpack.c.h.b16 %v3160
  %v3250 = vunpack.c.l.b16 %v3161
  %v3251 = vunpack.c.h.b16 %v3161
  %v3252 = vunpack.c.l.b16 %v3162
  %v3253 = vunpack.c.h.b16 %v3162
  %v3254 = vunpack.c.l.b16 %v3163
  %v3255 = vunpack.c.h.b16 %v3163
  %v3256 = vunpack.c.l.b16 %v3164
  %v3257 = vunpack.c.h.b16 %v3164
  %v3258 = vunpack.c.l.b16 %v3165
  %v3259 = vunpack.c.h.b16 %v3165
  %v3260 = vunpack.c.l.b16 %v3166
  %v3261 = vunpack.c.h.b16 %v3166
  %v3262 = vunpack.c.l.b16 %v3167
  %v3263 = vunpack.c.h.b16 %v3167
  %v3264 = vpack.c.b16 %v3204, %v3200
  %v3265 = vpack.c.b16 %v3205, %v3201
  %v3266 = vpack.c.b16 %v3206, %v3202
  %v3267 = vpack.c.b16 %v3207, %v3203
  %v3268 = vpack.c.b16 %v3212, %v3208
  %v3269 = vpack.c.b16 %v3213, %v3209
  %v3270 = vpack.c.b16 %v3214, %v3210
  %v3271 = vpack.c.b16 %v3215, %v3211
  %v3272 = vpack.c.b16 %v3220, %v3216
  %v3273 = vpack.c.b16 %v3221, %v3217
  %v3274 = vpack.c.b16 %v3222, %v3218
  %v3275 = vpack.c.b16 %v3223, %v3219
  %v3276 = vpack.c.b16 %v3228, %v3224
  %v3277 = vpack.c.b16 %v3229, %v3225
  %v3278 = vpack.c.b16 %v3230, %v3226
  %v3279 = vpack.c.b16 %v3231, %v3227
  %v3280 = vpack.c.b16 %v3236, %v3232
  %v3281 = vpack.c.b16 %v3237, %v3233
  %v3282 = vpack.c.b16 %v3238, %v3234
  %v3283 = vpack.c.b16 %v3239, %v3235
  %v3284 = vpack.c.b16 %v3244, %v3240
  %v3285 = vpack.c.b16 %v3245, %v3241
  %v3286 = vpack.c.b16 %v3246, %v3242
  %v3287 = vpack.c.b16 %v3247, %v3243
  %v3288 = vpack.c.b16 %v3252, %v3248
  %v3289 = vpack.c.b16 %v3253, %v3249
  %v3290 = vpack.c.b16 %v3254, %v3250
  %v3291 = vpack.c.b16 %v3255, %v3251
  %v3292 = vpack.c.b16 %v3260, %v3256
  %v3293 = vpack.c.b16 %v3261, %v3257
  %v3294 = vpack.c.b16 %v3262, %v3258
  %v3295 = vpack.c.b16 %v3263, %v3259
  %3328 = vmatprep.subr.bf16.mxu0 %v3265
  %3329 = vmatpush1.bf16.msra.mxu0 %v3264
  %3330 = vmatprep.subr.bf16.mxu0 %v3269
  %3331 = vmatpush1.bf16.msra.mxu0 %v3268
  %3332 = vmatprep.subr.bf16.mxu0 %v3273
  %3333 = vmatpush1.bf16.msra.mxu0 %v3272
  %3334 = vmatprep.subr.bf16.mxu0 %v3277
  %3335 = vmatpush1.bf16.msra.mxu0 %v3276
  %3336 = vmatprep.subr.bf16.mxu0 %v3281
  %3337 = vmatpush1.bf16.msra.mxu0 %v3280
  %3338 = vmatprep.subr.bf16.mxu0 %v3285
  %3339 = vmatpush1.bf16.msra.mxu0 %v3284
  %3340 = vmatprep.subr.bf16.mxu0 %v3289
  %3341 = vmatpush1.bf16.msra.mxu0 %v3288
  %3342 = vmatprep.subr.bf16.mxu0 %v3293
  %3343 = vmatpush1.bf16.msra.mxu0 %v3292
  %3344 = vmatprep.subr.bf16.mxu0 0
  %3345 = vmatpush1.bf16.msra.mxu0 0
  %3346 = vmatprep.subr.bf16.mxu0 0
  %3347 = vmatpush1.bf16.msra.mxu0 0
  %3348 = vmatprep.subr.bf16.mxu0 0
  %3349 = vmatpush1.bf16.msra.mxu0 0
  %3350 = vmatprep.subr.bf16.mxu0 0
  %3351 = vmatpush1.bf16.msra.mxu0 0
  %3352 = vmatprep.subr.bf16.mxu0 0
  %3353 = vmatpush1.bf16.msra.mxu0 0
  %3354 = vmatprep.subr.bf16.mxu0 0
  %3355 = vmatpush1.bf16.msra.mxu0 0
  %3356 = vmatprep.subr.bf16.mxu0 0
  %3357 = vmatpush1.bf16.msra.mxu0 0
  %3358 = vmatprep.subr.bf16.mxu0 0
  %3359 = vmatpush1.bf16.msra.mxu0 0
  %3360 = vmatprep.mubr.bf16.mxu0 0
  %3361 = vmatmul.mubr.bf16.gmra.mrb[0].mxu0 %v2551
  %v3362 = vpop.f32.mrb[0].mxu0
  %v3363 = vadd.f32 0.0, %v3362
  %v3364 = vpop.f32.mrb[0].mxu0
  %v3365 = vadd.f32 0.0, %v3364
  %v3366 = vpop.f32.mrb[0].mxu0
  %v3367 = vpop.f32.mrb[0].mxu0
  %3368 = vdwg.mxu0
  %3369 = vmatprep.subr.bf16.mxu0 %v3267
  %3370 = vmatpush1.bf16.msra.mxu0 %v3266
  %3371 = vmatprep.subr.bf16.mxu0 %v3271
  %3372 = vmatpush1.bf16.msra.mxu0 %v3270
  %3373 = vmatprep.subr.bf16.mxu0 %v3275
  %3374 = vmatpush1.bf16.msra.mxu0 %v3274
  %3375 = vmatprep.subr.bf16.mxu0 %v3279
  %3376 = vmatpush1.bf16.msra.mxu0 %v3278
  %3377 = vmatprep.subr.bf16.mxu0 %v3283
  %3378 = vmatpush1.bf16.msra.mxu0 %v3282
  %3379 = vmatprep.subr.bf16.mxu0 %v3287
  %3380 = vmatpush1.bf16.msra.mxu0 %v3286
  %3381 = vmatprep.subr.bf16.mxu0 %v3291
  %3382 = vmatpush1.bf16.msra.mxu0 %v3290
  %3383 = vmatprep.subr.bf16.mxu0 %v3295
  %3384 = vmatpush1.bf16.msra.mxu0 %v3294
  %3385 = vmatprep.subr.bf16.mxu0 0
  %3386 = vmatpush1.bf16.msra.mxu0 0
  %3387 = vmatprep.subr.bf16.mxu0 0
  %3388 = vmatpush1.bf16.msra.mxu0 0
  %3389 = vmatprep.subr.bf16.mxu0 0
  %3390 = vmatpush1.bf16.msra.mxu0 0
  %3391 = vmatprep.subr.bf16.mxu0 0
  %3392 = vmatpush1.bf16.msra.mxu0 0
  %3393 = vmatprep.subr.bf16.mxu0 0
  %3394 = vmatpush1.bf16.msra.mxu0 0
  %3395 = vmatprep.subr.bf16.mxu0 0
  %3396 = vmatpush1.bf16.msra.mxu0 0
  %3397 = vmatprep.subr.bf16.mxu0 0
  %3398 = vmatpush1.bf16.msra.mxu0 0
  %3399 = vmatprep.subr.bf16.mxu0 0
  %3400 = vmatpush1.bf16.msra.mxu0 0
  %3401 = vmatprep.mubr.bf16.mxu0 0
  %3402 = vmatmul.mubr.bf16.gmra.mrb[0].mxu0 %v2551
  %v3403 = vpop.f32.mrb[0].mxu0
  %v3404 = vadd.f32 0.0, %v3403
  %v3405 = vpop.f32.mrb[0].mxu0
  %v3406 = vadd.f32 0.0, %v3405
  %v3407 = vpop.f32.mrb[0].mxu0
  %v3408 = vpop.f32.mrb[0].mxu0
  %3409 = vdwg.mxu0
  %v3410 = vadd.f32 %v3132, %v3363
  %v3411 = vadd.f32 %v3133, %v3365
  %v3412 = vadd.f32 %v3134, %v3404
  %v3413 = vadd.f32 %v3135, %v3406
  %v3414 = vxor.u32 %v3410, 2147483648
  %v3415 = vmul.f32 %v3414, 1.442695
  %v3416 = vpow.pop %v3415
  %v3417 = vadd.f32 %v3416, 1.0
  %v3418 = vrcp.pop %v3417
  %v3419 = vmul.f32 1.0, %v3418
  %v3420 = vxor.u32 %v3411, 2147483648
  %v3421 = vmul.f32 %v3420, 1.442695
  %v3422 = vpow.pop %v3421
  %v3423 = vadd.f32 %v3422, 1.0
  %v3424 = vrcp.pop %v3423
  %v3425 = vmul.f32 1.0, %v3424
  %v3426 = vtanh.pop %v3412
  %v3427 = vxor.u32 %v3413, 2147483648
  %v3428 = vmul.f32 %v3427, 1.442695
  %v3429 = vpow.pop %v3428
  %v3430 = vadd.f32 %v3429, 1.0
  %v3431 = vrcp.pop %v3430
  %v3432 = vmul.f32 1.0, %v3431
  %v3433 = vmul.f32 %v3425, %v2548
  %v3434 = vmul.f32 %v3419, %v3426
  %v3435 = vadd.f32 %v3433, %v3434
  %v3436 = vtanh.pop %v3435
  %v3437 = vmul.f32 %v3432, %v3436
  %v3438 = vpack.c.bf16 %v3437, %v3437
  %v3439 = vld [vmem:[%s4] sm:$0xff]
  %v3440 = vld [vmem:[%s4 + $0x8] sm:$0xff]
  %v3441 = vld [vmem:[%s4 + $0x10] sm:$0xff]
  %v3442 = vld [vmem:[%s4 + $0x18] sm:$0xff]
  %v3443 = vld [vmem:[%s4 + $0x20] sm:$0xff]
  %v3444 = vld [vmem:[%s4 + $0x28] sm:$0xff]
  %v3445 = vld [vmem:[%s4 + $0x30] sm:$0xff]
  %v3446 = vld [vmem:[%s4 + $0x38] sm:$0xff]
  %v3447 = vld [vmem:[%s4 + $0x40] sm:$0xff]
  %v3448 = vld [vmem:[%s4 + $0x48] sm:$0xff]
  %v3449 = vld [vmem:[%s4 + $0x50] sm:$0xff]
  %v3450 = vld [vmem:[%s4 + $0x58] sm:$0xff]
  %v3451 = vld [vmem:[%s4 + $0x60] sm:$0xff]
  %v3452 = vld [vmem:[%s4 + $0x68] sm:$0xff]
  %v3453 = vld [vmem:[%s4 + $0x70] sm:$0xff]
  %v3454 = vld [vmem:[%s4 + $0x78] sm:$0xff]
  %v3455 = vld [vmem:[%s4 + $0x80] sm:$0xff]
  %v3456 = vld [vmem:[%s4 + $0x88] sm:$0xff]
  %v3457 = vld [vmem:[%s4 + $0x90] sm:$0xff]
  %v3458 = vld [vmem:[%s4 + $0x98] sm:$0xff]
  %v3459 = vld [vmem:[%s4 + $0xa0] sm:$0xff]
  %v3460 = vld [vmem:[%s4 + $0xa8] sm:$0xff]
  %v3461 = vld [vmem:[%s4 + $0xb0] sm:$0xff]
  %v3462 = vld [vmem:[%s4 + $0xb8] sm:$0xff]
  %v3463 = vld [vmem:[%s4 + $0xc0] sm:$0xff]
  %v3464 = vld [vmem:[%s4 + $0xc8] sm:$0xff]
  %v3465 = vld [vmem:[%s4 + $0xd0] sm:$0xff]
  %v3466 = vld [vmem:[%s4 + $0xd8] sm:$0xff]
  %v3467 = vld [vmem:[%s4 + $0xe0] sm:$0xff]
  %v3468 = vld [vmem:[%s4 + $0xe8] sm:$0xff]
  %v3469 = vld [vmem:[%s4 + $0xf0] sm:$0xff]
  %v3470 = vld [vmem:[%s4 + $0xf8] sm:$0xff]
  %v3471 = vpack.c.bf16 %v3128, %v3128
  %v3472 = vld [vmem:[%s5] sm:$0xff]
  %v3473 = vld [vmem:[%s5 + $0x8] sm:$0xff]
  %v3474 = vld [vmem:[%s5 + $0x10] sm:$0xff]
  %v3475 = vld [vmem:[%s5 + $0x18] sm:$0xff]
  %v3476 = vld [vmem:[%s5 + $0x20] sm:$0xff]
  %v3477 = vld [vmem:[%s5 + $0x28] sm:$0xff]
  %v3478 = vld [vmem:[%s5 + $0x30] sm:$0xff]
  %v3479 = vld [vmem:[%s5 + $0x38] sm:$0xff]
  %v3480 = vld [vmem:[%s5 + $0x40] sm:$0xff]
  %v3481 = vld [vmem:[%s5 + $0x48] sm:$0xff]
  %v3482 = vld [vmem:[%s5 + $0x50] sm:$0xff]
  %v3483 = vld [vmem:[%s5 + $0x58] sm:$0xff]
  %v3484 = vld [vmem:[%s5 + $0x60] sm:$0xff]
  %v3485 = vld [vmem:[%s5 + $0x68] sm:$0xff]
  %v3486 = vld [vmem:[%s5 + $0x70] sm:$0xff]
  %v3487 = vld [vmem:[%s5 + $0x78] sm:$0xff]
  %v3488 = vld [vmem:[%s5 + $0x80] sm:$0xff]
  %v3489 = vld [vmem:[%s5 + $0x88] sm:$0xff]
  %v3490 = vld [vmem:[%s5 + $0x90] sm:$0xff]
  %v3491 = vld [vmem:[%s5 + $0x98] sm:$0xff]
  %v3492 = vld [vmem:[%s5 + $0xa0] sm:$0xff]
  %v3493 = vld [vmem:[%s5 + $0xa8] sm:$0xff]
  %v3494 = vld [vmem:[%s5 + $0xb0] sm:$0xff]
  %v3495 = vld [vmem:[%s5 + $0xb8] sm:$0xff]
  %v3496 = vld [vmem:[%s5 + $0xc0] sm:$0xff]
  %v3497 = vld [vmem:[%s5 + $0xc8] sm:$0xff]
  %v3498 = vld [vmem:[%s5 + $0xd0] sm:$0xff]
  %v3499 = vld [vmem:[%s5 + $0xd8] sm:$0xff]
  %v3500 = vld [vmem:[%s5 + $0xe0] sm:$0xff]
  %v3501 = vld [vmem:[%s5 + $0xe8] sm:$0xff]
  %v3502 = vld [vmem:[%s5 + $0xf0] sm:$0xff]
  %v3503 = vld [vmem:[%s5 + $0xf8] sm:$0xff]
  %v3536 = vunpack.c.l.b16 %v3472
  %v3537 = vunpack.c.h.b16 %v3472
  %v3538 = vunpack.c.l.b16 %v3473
  %v3539 = vunpack.c.h.b16 %v3473
  %v3540 = vunpack.c.l.b16 %v3474
  %v3541 = vunpack.c.h.b16 %v3474
  %v3542 = vunpack.c.l.b16 %v3475
  %v3543 = vunpack.c.h.b16 %v3475
  %v3544 = vunpack.c.l.b16 %v3476
  %v3545 = vunpack.c.h.b16 %v3476
  %v3546 = vunpack.c.l.b16 %v3477
  %v3547 = vunpack.c.h.b16 %v3477
  %v3548 = vunpack.c.l.b16 %v3478
  %v3549 = vunpack.c.h.b16 %v3478
  %v3550 = vunpack.c.l.b16 %v3479
  %v3551 = vunpack.c.h.b16 %v3479
  %v3552 = vunpack.c.l.b16 %v3480
  %v3553 = vunpack.c.h.b16 %v3480
  %v3554 = vunpack.c.l.b16 %v3481
  %v3555 = vunpack.c.h.b16 %v3481
  %v3556 = vunpack.c.l.b16 %v3482
  %v3557 = vunpack.c.h.b16 %v3482
  %v3558 = vunpack.c.l.b16 %v3483
  %v3559 = vunpack.c.h.b16 %v3483
  %v3560 = vunpack.c.l.b16 %v3484
  %v3561 = vunpack.c.h.b16 %v3484
  %v3562 = vunpack.c.l.b16 %v3485
  %v3563 = vunpack.c.h.b16 %v3485
  %v3564 = vunpack.c.l.b16 %v3486
  %v3565 = vunpack.c.h.b16 %v3486
  %v3566 = vunpack.c.l.b16 %v3487
  %v3567 = vunpack.c.h.b16 %v3487
  %v3568 = vunpack.c.l.b16 %v3488
  %v3569 = vunpack.c.h.b16 %v3488
  %v3570 = vunpack.c.l.b16 %v3489
  %v3571 = vunpack.c.h.b16 %v3489
  %v3572 = vunpack.c.l.b16 %v3490
  %v3573 = vunpack.c.h.b16 %v3490
  %v3574 = vunpack.c.l.b16 %v3491
  %v3575 = vunpack.c.h.b16 %v3491
  %v3576 = vunpack.c.l.b16 %v3492
  %v3577 = vunpack.c.h.b16 %v3492
  %v3578 = vunpack.c.l.b16 %v3493
  %v3579 = vunpack.c.h.b16 %v3493
  %v3580 = vunpack.c.l.b16 %v3494
  %v3581 = vunpack.c.h.b16 %v3494
  %v3582 = vunpack.c.l.b16 %v3495
  %v3583 = vunpack.c.h.b16 %v3495
  %v3584 = vunpack.c.l.b16 %v3496
  %v3585 = vunpack.c.h.b16 %v3496
  %v3586 = vunpack.c.l.b16 %v3497
  %v3587 = vunpack.c.h.b16 %v3497
  %v3588 = vunpack.c.l.b16 %v3498
  %v3589 = vunpack.c.h.b16 %v3498
  %v3590 = vunpack.c.l.b16 %v3499
  %v3591 = vunpack.c.h.b16 %v3499
  %v3592 = vunpack.c.l.b16 %v3500
  %v3593 = vunpack.c.h.b16 %v3500
  %v3594 = vunpack.c.l.b16 %v3501
  %v3595 = vunpack.c.h.b16 %v3501
  %v3596 = vunpack.c.l.b16 %v3502
  %v3597 = vunpack.c.h.b16 %v3502
  %v3598 = vunpack.c.l.b16 %v3503
  %v3599 = vunpack.c.h.b16 %v3503
  %v3600 = vpack.c.b16 %v3540, %v3536
  %v3601 = vpack.c.b16 %v3541, %v3537
  %v3602 = vpack.c.b16 %v3542, %v3538
  %v3603 = vpack.c.b16 %v3543, %v3539
  %v3604 = vpack.c.b16 %v3548, %v3544
  %v3605 = vpack.c.b16 %v3549, %v3545
  %v3606 = vpack.c.b16 %v3550, %v3546
  %v3607 = vpack.c.b16 %v3551, %v3547
  %v3608 = vpack.c.b16 %v3556, %v3552
  %v3609 = vpack.c.b16 %v3557, %v3553
  %v3610 = vpack.c.b16 %v3558, %v3554
  %v3611 = vpack.c.b16 %v3559, %v3555
  %v3612 = vpack.c.b16 %v3564, %v3560
  %v3613 = vpack.c.b16 %v3565, %v3561
  %v3614 = vpack.c.b16 %v3566, %v3562
  %v3615 = vpack.c.b16 %v3567, %v3563
  %v3616 = vpack.c.b16 %v3572, %v3568
  %v3617 = vpack.c.b16 %v3573, %v3569
  %v3618 = vpack.c.b16 %v3574, %v3570
  %v3619 = vpack.c.b16 %v3575, %v3571
  %v3620 = vpack.c.b16 %v3580, %v3576
  %v3621 = vpack.c.b16 %v3581, %v3577
  %v3622 = vpack.c.b16 %v3582, %v3578
  %v3623 = vpack.c.b16 %v3583, %v3579
  %v3624 = vpack.c.b16 %v3588, %v3584
  %v3625 = vpack.c.b16 %v3589, %v3585
  %v3626 = vpack.c.b16 %v3590, %v3586
  %v3627 = vpack.c.b16 %v3591, %v3587
  %v3628 = vpack.c.b16 %v3596, %v3592
  %v3629 = vpack.c.b16 %v3597, %v3593
  %v3630 = vpack.c.b16 %v3598, %v3594
  %v3631 = vpack.c.b16 %v3599, %v3595
  %3664 = vmatprep.subr.bf16.mxu0 %v3601
  %3665 = vmatpush1.bf16.msra.mxu0 %v3600
  %3666 = vmatprep.subr.bf16.mxu0 %v3605
  %3667 = vmatpush1.bf16.msra.mxu0 %v3604
  %3668 = vmatprep.subr.bf16.mxu0 %v3609
  %3669 = vmatpush1.bf16.msra.mxu0 %v3608
  %3670 = vmatprep.subr.bf16.mxu0 %v3613
  %3671 = vmatpush1.bf16.msra.mxu0 %v3612
  %3672 = vmatprep.subr.bf16.mxu0 %v3617
  %3673 = vmatpush1.bf16.msra.mxu0 %v3616
  %3674 = vmatprep.subr.bf16.mxu0 %v3621
  %3675 = vmatpush1.bf16.msra.mxu0 %v3620
  %3676 = vmatprep.subr.bf16.mxu0 %v3625
  %3677 = vmatpush1.bf16.msra.mxu0 %v3624
  %3678 = vmatprep.subr.bf16.mxu0 %v3629
  %3679 = vmatpush1.bf16.msra.mxu0 %v3628
  %3680 = vmatprep.subr.bf16.mxu0 0
  %3681 = vmatpush1.bf16.msra.mxu0 0
  %3682 = vmatprep.subr.bf16.mxu0 0
  %3683 = vmatpush1.bf16.msra.mxu0 0
  %3684 = vmatprep.subr.bf16.mxu0 0
  %3685 = vmatpush1.bf16.msra.mxu0 0
  %3686 = vmatprep.subr.bf16.mxu0 0
  %3687 = vmatpush1.bf16.msra.mxu0 0
  %3688 = vmatprep.subr.bf16.mxu0 0
  %3689 = vmatpush1.bf16.msra.mxu0 0
  %3690 = vmatprep.subr.bf16.mxu0 0
  %3691 = vmatpush1.bf16.msra.mxu0 0
  %3692 = vmatprep.subr.bf16.mxu0 0
  %3693 = vmatpush1.bf16.msra.mxu0 0
  %3694 = vmatprep.subr.bf16.mxu0 0
  %3695 = vmatpush1.bf16.msra.mxu0 0
  %3696 = vmatprep.mubr.bf16.mxu0 0
  %3697 = vmatmul.mubr.bf16.gmra.mrb[0].mxu0 %v3471
  %v3698 = vpop.f32.mrb[0].mxu0
  %v3699 = vadd.f32 0.0, %v3698
  %v3700 = vpop.f32.mrb[0].mxu0
  %v3701 = vadd.f32 0.0, %v3700
  %v3702 = vpop.f32.mrb[0].mxu0
  %v3703 = vpop.f32.mrb[0].mxu0
  %3704 = vdwg.mxu0
  %3705 = vmatprep.subr.bf16.mxu0 %v3603
  %3706 = vmatpush1.bf16.msra.mxu0 %v3602
  %3707 = vmatprep.subr.bf16.mxu0 %v3607
  %3708 = vmatpush1.bf16.msra.mxu0 %v3606
  %3709 = vmatprep.subr.bf16.mxu0 %v3611
  %3710 = vmatpush1.bf16.msra.mxu0 %v3610
  %3711 = vmatprep.subr.bf16.mxu0 %v3615
  %3712 = vmatpush1.bf16.msra.mxu0 %v3614
  %3713 = vmatprep.subr.bf16.mxu0 %v3619
  %3714 = vmatpush1.bf16.msra.mxu0 %v3618
  %3715 = vmatprep.subr.bf16.mxu0 %v3623
  %3716 = vmatpush1.bf16.msra.mxu0 %v3622
  %3717 = vmatprep.subr.bf16.mxu0 %v3627
  %3718 = vmatpush1.bf16.msra.mxu0 %v3626
  %3719 = vmatprep.subr.bf16.mxu0 %v3631
  %3720 = vmatpush1.bf16.msra.mxu0 %v3630
  %3721 = vmatprep.subr.bf16.mxu0 0
  %3722 = vmatpush1.bf16.msra.mxu0 0
  %3723 = vmatprep.subr.bf16.mxu0 0
  %3724 = vmatpush1.bf16.msra.mxu0 0
  %3725 = vmatprep.subr.bf16.mxu0 0
  %3726 = vmatpush1.bf16.msra.mxu0 0
  %3727 = vmatprep.subr.bf16.mxu0 0
  %3728 = vmatpush1.bf16.msra.mxu0 0
  %3729 = vmatprep.subr.bf16.mxu0 0
  %3730 = vmatpush1.bf16.msra.mxu0 0
  %3731 = vmatprep.subr.bf16.mxu0 0
  %3732 = vmatpush1.bf16.msra.mxu0 0
  %3733 = vmatprep.subr.bf16.mxu0 0
  %3734 = vmatpush1.bf16.msra.mxu0 0
  %3735 = vmatprep.subr.bf16.mxu0 0
  %3736 = vmatpush1.bf16.msra.mxu0 0
  %3737 = vmatprep.mubr.bf16.mxu0 0
  %3738 = vmatmul.mubr.bf16.gmra.mrb[0].mxu0 %v3471
  %v3739 = vpop.f32.mrb[0].mxu0
  %v3740 = vadd.f32 0.0, %v3739
  %v3741 = vpop.f32.mrb[0].mxu0
  %v3742 = vadd.f32 0.0, %v3741
  %v3743 = vpop.f32.mrb[0].mxu0
  %v3744 = vpop.f32.mrb[0].mxu0
  %3745 = vdwg.mxu0
  %v3778 = vunpack.c.l.b16 %v3439
  %v3779 = vunpack.c.h.b16 %v3439
  %v3780 = vunpack.c.l.b16 %v3440
  %v3781 = vunpack.c.h.b16 %v3440
  %v3782 = vunpack.c.l.b16 %v3441
  %v3783 = vunpack.c.h.b16 %v3441
  %v3784 = vunpack.c.l.b16 %v3442
  %v3785 = vunpack.c.h.b16 %v3442
  %v3786 = vunpack.c.l.b16 %v3443
  %v3787 = vunpack.c.h.b16 %v3443
  %v3788 = vunpack.c.l.b16 %v3444
  %v3789 = vunpack.c.h.b16 %v3444
  %v3790 = vunpack.c.l.b16 %v3445
  %v3791 = vunpack.c.h.b16 %v3445
  %v3792 = vunpack.c.l.b16 %v3446
  %v3793 = vunpack.c.h.b16 %v3446
  %v3794 = vunpack.c.l.b16 %v3447
  %v3795 = vunpack.c.h.b16 %v3447
  %v3796 = vunpack.c.l.b16 %v3448
  %v3797 = vunpack.c.h.b16 %v3448
  %v3798 = vunpack.c.l.b16 %v3449
  %v3799 = vunpack.c.h.b16 %v3449
  %v3800 = vunpack.c.l.b16 %v3450
  %v3801 = vunpack.c.h.b16 %v3450
  %v3802 = vunpack.c.l.b16 %v3451
  %v3803 = vunpack.c.h.b16 %v3451
  %v3804 = vunpack.c.l.b16 %v3452
  %v3805 = vunpack.c.h.b16 %v3452
  %v3806 = vunpack.c.l.b16 %v3453
  %v3807 = vunpack.c.h.b16 %v3453
  %v3808 = vunpack.c.l.b16 %v3454
  %v3809 = vunpack.c.h.b16 %v3454
  %v3810 = vunpack.c.l.b16 %v3455
  %v3811 = vunpack.c.h.b16 %v3455
  %v3812 = vunpack.c.l.b16 %v3456
  %v3813 = vunpack.c.h.b16 %v3456
  %v3814 = vunpack.c.l.b16 %v3457
  %v3815 = vunpack.c.h.b16 %v3457
  %v3816 = vunpack.c.l.b16 %v3458
  %v3817 = vunpack.c.h.b16 %v3458
  %v3818 = vunpack.c.l.b16 %v3459
  %v3819 = vunpack.c.h.b16 %v3459
  %v3820 = vunpack.c.l.b16 %v3460
  %v3821 = vunpack.c.h.b16 %v3460
  %v3822 = vunpack.c.l.b16 %v3461
  %v3823 = vunpack.c.h.b16 %v3461
  %v3824 = vunpack.c.l.b16 %v3462
  %v3825 = vunpack.c.h.b16 %v3462
  %v3826 = vunpack.c.l.b16 %v3463
  %v3827 = vunpack.c.h.b16 %v3463
  %v3828 = vunpack.c.l.b16 %v3464
  %v3829 = vunpack.c.h.b16 %v3464
  %v3830 = vunpack.c.l.b16 %v3465
  %v3831 = vunpack.c.h.b16 %v3465
  %v3832 = vunpack.c.l.b16 %v3466
  %v3833 = vunpack.c.h.b16 %v3466
  %v3834 = vunpack.c.l.b16 %v3467
  %v3835 = vunpack.c.h.b16 %v3467
  %v3836 = vunpack.c.l.b16 %v3468
  %v3837 = vunpack.c.h.b16 %v3468
  %v3838 = vunpack.c.l.b16 %v3469
  %v3839 = vunpack.c.h.b16 %v3469
  %v3840 = vunpack.c.l.b16 %v3470
  %v3841 = vunpack.c.h.b16 %v3470
  %v3842 = vpack.c.b16 %v3782, %v3778
  %v3843 = vpack.c.b16 %v3783, %v3779
  %v3844 = vpack.c.b16 %v3784, %v3780
  %v3845 = vpack.c.b16 %v3785, %v3781
  %v3846 = vpack.c.b16 %v3790, %v3786
  %v3847 = vpack.c.b16 %v3791, %v3787
  %v3848 = vpack.c.b16 %v3792, %v3788
  %v3849 = vpack.c.b16 %v3793, %v3789
  %v3850 = vpack.c.b16 %v3798, %v3794
  %v3851 = vpack.c.b16 %v3799, %v3795
  %v3852 = vpack.c.b16 %v3800, %v3796
  %v3853 = vpack.c.b16 %v3801, %v3797
  %v3854 = vpack.c.b16 %v3806, %v3802
  %v3855 = vpack.c.b16 %v3807, %v3803
  %v3856 = vpack.c.b16 %v3808, %v3804
  %v3857 = vpack.c.b16 %v3809, %v3805
  %v3858 = vpack.c.b16 %v3814, %v3810
  %v3859 = vpack.c.b16 %v3815, %v3811
  %v3860 = vpack.c.b16 %v3816, %v3812
  %v3861 = vpack.c.b16 %v3817, %v3813
  %v3862 = vpack.c.b16 %v3822, %v3818
  %v3863 = vpack.c.b16 %v3823, %v3819
  %v3864 = vpack.c.b16 %v3824, %v3820
  %v3865 = vpack.c.b16 %v3825, %v3821
  %v3866 = vpack.c.b16 %v3830, %v3826
  %v3867 = vpack.c.b16 %v3831, %v3827
  %v3868 = vpack.c.b16 %v3832, %v3828
  %v3869 = vpack.c.b16 %v3833, %v3829
  %v3870 = vpack.c.b16 %v3838, %v3834
  %v3871 = vpack.c.b16 %v3839, %v3835
  %v3872 = vpack.c.b16 %v3840, %v3836
  %v3873 = vpack.c.b16 %v3841, %v3837
  %3906 = vmatprep.subr.bf16.mxu0 %v3843
  %3907 = vmatpush1.bf16.msra.mxu0 %v3842
  %3908 = vmatprep.subr.bf16.mxu0 %v3847
  %3909 = vmatpush1.bf16.msra.mxu0 %v3846
  %3910 = vmatprep.subr.bf16.mxu0 %v3851
  %3911 = vmatpush1.bf16.msra.mxu0 %v3850
  %3912 = vmatprep.subr.bf16.mxu0 %v3855
  %3913 = vmatpush1.bf16.msra.mxu0 %v3854
  %3914 = vmatprep.subr.bf16.mxu0 %v3859
  %3915 = vmatpush1.bf16.msra.mxu0 %v3858
  %3916 = vmatprep.subr.bf16.mxu0 %v3863
  %3917 = vmatpush1.bf16.msra.mxu0 %v3862
  %3918 = vmatprep.subr.bf16.mxu0 %v3867
  %3919 = vmatpush1.bf16.msra.mxu0 %v3866
  %3920 = vmatprep.subr.bf16.mxu0 %v3871
  %3921 = vmatpush1.bf16.msra.mxu0 %v3870
  %3922 = vmatprep.subr.bf16.mxu0 0
  %3923 = vmatpush1.bf16.msra.mxu0 0
  %3924 = vmatprep.subr.bf16.mxu0 0
  %3925 = vmatpush1.bf16.msra.mxu0 0
  %3926 = vmatprep.subr.bf16.mxu0 0
  %3927 = vmatpush1.bf16.msra.mxu0 0
  %3928 = vmatprep.subr.bf16.mxu0 0
  %3929 = vmatpush1.bf16.msra.mxu0 0
  %3930 = vmatprep.subr.bf16.mxu0 0
  %3931 = vmatpush1.bf16.msra.mxu0 0
  %3932 = vmatprep.subr.bf16.mxu0 0
  %3933 = vmatpush1.bf16.msra.mxu0 0
  %3934 = vmatprep.subr.bf16.mxu0 0
  %3935 = vmatpush1.bf16.msra.mxu0 0
  %3936 = vmatprep.subr.bf16.mxu0 0
  %3937 = vmatpush1.bf16.msra.mxu0 0
  %3938 = vmatprep.mubr.bf16.mxu0 0
  %3939 = vmatmul.mubr.bf16.gmra.mrb[0].mxu0 %v3438
  %v3940 = vpop.f32.mrb[0].mxu0
  %v3941 = vadd.f32 %v3699, %v3940
  %v3942 = vpop.f32.mrb[0].mxu0
  %v3943 = vadd.f32 %v3701, %v3942
  %v3944 = vpop.f32.mrb[0].mxu0
  %v3945 = vpop.f32.mrb[0].mxu0
  %3946 = vdwg.mxu0
  %3947 = vmatprep.subr.bf16.mxu0 %v3845
  %3948 = vmatpush1.bf16.msra.mxu0 %v3844
  %3949 = vmatprep.subr.bf16.mxu0 %v3849
  %3950 = vmatpush1.bf16.msra.mxu0 %v3848
  %3951 = vmatprep.subr.bf16.mxu0 %v3853
  %3952 = vmatpush1.bf16.msra.mxu0 %v3852
  %3953 = vmatprep.subr.bf16.mxu0 %v3857
  %3954 = vmatpush1.bf16.msra.mxu0 %v3856
  %3955 = vmatprep.subr.bf16.mxu0 %v3861
  %3956 = vmatpush1.bf16.msra.mxu0 %v3860
  %3957 = vmatprep.subr.bf16.mxu0 %v3865
  %3958 = vmatpush1.bf16.msra.mxu0 %v3864
  %3959 = vmatprep.subr.bf16.mxu0 %v3869
  %3960 = vmatpush1.bf16.msra.mxu0 %v3868
  %3961 = vmatprep.subr.bf16.mxu0 %v3873
  %3962 = vmatpush1.bf16.msra.mxu0 %v3872
  %3963 = vmatprep.subr.bf16.mxu0 0
  %3964 = vmatpush1.bf16.msra.mxu0 0
  %3965 = vmatprep.subr.bf16.mxu0 0
  %3966 = vmatpush1.bf16.msra.mxu0 0
  %3967 = vmatprep.subr.bf16.mxu0 0
  %3968 = vmatpush1.bf16.msra.mxu0 0
  %3969 = vmatprep.subr.bf16.mxu0 0
  %3970 = vmatpush1.bf16.msra.mxu0 0
  %3971 = vmatprep.subr.bf16.mxu0 0
  %3972 = vmatpush1.bf16.msra.mxu0 0
  %3973 = vmatprep.subr.bf16.mxu0 0
  %3974 = vmatpush1.bf16.msra.mxu0 0
  %3975 = vmatprep.subr.bf16.mxu0 0
  %3976 = vmatpush1.bf16.msra.mxu0 0
  %3977 = vmatprep.subr.bf16.mxu0 0
  %3978 = vmatpush1.bf16.msra.mxu0 0
  %3979 = vmatprep.mubr.bf16.mxu0 0
  %3980 = vmatmul.mubr.bf16.gmra.mrb[0].mxu0 %v3438
  %v3981 = vpop.f32.mrb[0].mxu0
  %v3982 = vadd.f32 %v3740, %v3981
  %v3983 = vpop.f32.mrb[0].mxu0
  %v3984 = vadd.f32 %v3742, %v3983
  %v3985 = vpop.f32.mrb[0].mxu0
  %v3986 = vpop.f32.mrb[0].mxu0
  %3987 = vdwg.mxu0
  %v3988 = vadd.f32 %v3941, %v1311
  %v3989 = vadd.f32 %v3943, %v1315
  %v3990 = vadd.f32 %v3982, %v1319
  %v3991 = vadd.f32 %v3984, %v1323
  %v3992 = vxor.u32 %v3988, 2147483648
  %v3993 = vmul.f32 %v3992, 1.442695
  %v3994 = vpow.pop %v3993
  %v3995 = vadd.f32 %v3994, 1.0
  %v3996 = vrcp.pop %v3995
  %v3997 = vmul.f32 1.0, %v3996
  %v3998 = vxor.u32 %v3989, 2147483648
  %v3999 = vmul.f32 %v3998, 1.442695
  %v4000 = vpow.pop %v3999
  %v4001 = vadd.f32 %v4000, 1.0
  %v4002 = vrcp.pop %v4001
  %v4003 = vmul.f32 1.0, %v4002
  %v4004 = vtanh.pop %v3990
  %v4005 = vxor.u32 %v3991, 2147483648
  %v4006 = vmul.f32 %v4005, 1.442695
  %v4007 = vpow.pop %v4006
  %v4008 = vadd.f32 %v4007, 1.0
  %v4009 = vrcp.pop %v4008
  %v4010 = vmul.f32 1.0, %v4009
  %v4011 = vmul.f32 %v4003, %v3126
  %v4012 = vmul.f32 %v3997, %v4004
  %v4013 = vadd.f32 %v4011, %v4012
  %v4014 = vtanh.pop %v4013
  %v4015 = vmul.f32 %v4010, %v4014
  %s4016 = scalar_lea.vmem %s7, 24
  %4017 = vst [vmem:[%s4016] sm:$0xff] %v4015
  %s4018 = scalar_lea.vmem [#allocation2], 128
  %v4019 = vld [vmem:[%s4018] sm:$0xff]
  %v4020 = vld [vmem:[%s4018 + $0x8] sm:$0xff]
  %v4021 = vld [vmem:[%s4018 + $0x10] sm:$0xff]
  %v4022 = vld [vmem:[%s4018 + $0x18] sm:$0xff]
  %v4023 = vld [vmem:[%s2] sm:$0xff]
  %v4024 = vld [vmem:[%s2 + $0x8] sm:$0xff]
  %v4025 = vld [vmem:[%s2 + $0x10] sm:$0xff]
  %v4026 = vld [vmem:[%s2 + $0x18] sm:$0xff]
  %v4027 = vld [vmem:[%s2 + $0x20] sm:$0xff]
  %v4028 = vld [vmem:[%s2 + $0x28] sm:$0xff]
  %v4029 = vld [vmem:[%s2 + $0x30] sm:$0xff]
  %v4030 = vld [vmem:[%s2 + $0x38] sm:$0xff]
  %v4031 = vld [vmem:[%s2 + $0x40] sm:$0xff]
  %v4032 = vld [vmem:[%s2 + $0x48] sm:$0xff]
  %v4033 = vld [vmem:[%s2 + $0x50] sm:$0xff]
  %v4034 = vld [vmem:[%s2 + $0x58] sm:$0xff]
  %v4035 = vld [vmem:[%s2 + $0x60] sm:$0xff]
  %v4036 = vld [vmem:[%s2 + $0x68] sm:$0xff]
  %v4037 = vld [vmem:[%s2 + $0x70] sm:$0xff]
  %v4038 = vld [vmem:[%s2 + $0x78] sm:$0xff]
  %v4039 = vld [vmem:[%s2 + $0x80] sm:$0xff]
  %v4040 = vld [vmem:[%s2 + $0x88] sm:$0xff]
  %v4041 = vld [vmem:[%s2 + $0x90] sm:$0xff]
  %v4042 = vld [vmem:[%s2 + $0x98] sm:$0xff]
  %v4043 = vld [vmem:[%s2 + $0xa0] sm:$0xff]
  %v4044 = vld [vmem:[%s2 + $0xa8] sm:$0xff]
  %v4045 = vld [vmem:[%s2 + $0xb0] sm:$0xff]
  %v4046 = vld [vmem:[%s2 + $0xb8] sm:$0xff]
  %v4047 = vld [vmem:[%s2 + $0xc0] sm:$0xff]
  %v4048 = vld [vmem:[%s2 + $0xc8] sm:$0xff]
  %v4049 = vld [vmem:[%s2 + $0xd0] sm:$0xff]
  %v4050 = vld [vmem:[%s2 + $0xd8] sm:$0xff]
  %v4051 = vld [vmem:[%s2 + $0xe0] sm:$0xff]
  %v4052 = vld [vmem:[%s2 + $0xe8] sm:$0xff]
  %v4053 = vld [vmem:[%s2 + $0xf0] sm:$0xff]
  %v4054 = vld [vmem:[%s2 + $0xf8] sm:$0xff]
  %v4087 = vunpack.c.l.b16 %v4023
  %v4088 = vunpack.c.h.b16 %v4023
  %v4089 = vunpack.c.l.b16 %v4024
  %v4090 = vunpack.c.h.b16 %v4024
  %v4091 = vunpack.c.l.b16 %v4025
  %v4092 = vunpack.c.h.b16 %v4025
  %v4093 = vunpack.c.l.b16 %v4026
  %v4094 = vunpack.c.h.b16 %v4026
  %v4095 = vunpack.c.l.b16 %v4027
  %v4096 = vunpack.c.h.b16 %v4027
  %v4097 = vunpack.c.l.b16 %v4028
  %v4098 = vunpack.c.h.b16 %v4028
  %v4099 = vunpack.c.l.b16 %v4029
  %v4100 = vunpack.c.h.b16 %v4029
  %v4101 = vunpack.c.l.b16 %v4030
  %v4102 = vunpack.c.h.b16 %v4030
  %v4103 = vunpack.c.l.b16 %v4031
  %v4104 = vunpack.c.h.b16 %v4031
  %v4105 = vunpack.c.l.b16 %v4032
  %v4106 = vunpack.c.h.b16 %v4032
  %v4107 = vunpack.c.l.b16 %v4033
  %v4108 = vunpack.c.h.b16 %v4033
  %v4109 = vunpack.c.l.b16 %v4034
  %v4110 = vunpack.c.h.b16 %v4034
  %v4111 = vunpack.c.l.b16 %v4035
  %v4112 = vunpack.c.h.b16 %v4035
  %v4113 = vunpack.c.l.b16 %v4036
  %v4114 = vunpack.c.h.b16 %v4036
  %v4115 = vunpack.c.l.b16 %v4037
  %v4116 = vunpack.c.h.b16 %v4037
  %v4117 = vunpack.c.l.b16 %v4038
  %v4118 = vunpack.c.h.b16 %v4038
  %v4119 = vunpack.c.l.b16 %v4039
  %v4120 = vunpack.c.h.b16 %v4039
  %v4121 = vunpack.c.l.b16 %v4040
  %v4122 = vunpack.c.h.b16 %v4040
  %v4123 = vunpack.c.l.b16 %v4041
  %v4124 = vunpack.c.h.b16 %v4041
  %v4125 = vunpack.c.l.b16 %v4042
  %v4126 = vunpack.c.h.b16 %v4042
  %v4127 = vunpack.c.l.b16 %v4043
  %v4128 = vunpack.c.h.b16 %v4043
  %v4129 = vunpack.c.l.b16 %v4044
  %v4130 = vunpack.c.h.b16 %v4044
  %v4131 = vunpack.c.l.b16 %v4045
  %v4132 = vunpack.c.h.b16 %v4045
  %v4133 = vunpack.c.l.b16 %v4046
  %v4134 = vunpack.c.h.b16 %v4046
  %v4135 = vunpack.c.l.b16 %v4047
  %v4136 = vunpack.c.h.b16 %v4047
  %v4137 = vunpack.c.l.b16 %v4048
  %v4138 = vunpack.c.h.b16 %v4048
  %v4139 = vunpack.c.l.b16 %v4049
  %v4140 = vunpack.c.h.b16 %v4049
  %v4141 = vunpack.c.l.b16 %v4050
  %v4142 = vunpack.c.h.b16 %v4050
  %v4143 = vunpack.c.l.b16 %v4051
  %v4144 = vunpack.c.h.b16 %v4051
  %v4145 = vunpack.c.l.b16 %v4052
  %v4146 = vunpack.c.h.b16 %v4052
  %v4147 = vunpack.c.l.b16 %v4053
  %v4148 = vunpack.c.h.b16 %v4053
  %v4149 = vunpack.c.l.b16 %v4054
  %v4150 = vunpack.c.h.b16 %v4054
  %v4151 = vpack.c.b16 %v4091, %v4087
  %v4152 = vpack.c.b16 %v4092, %v4088
  %v4153 = vpack.c.b16 %v4093, %v4089
  %v4154 = vpack.c.b16 %v4094, %v4090
  %v4155 = vpack.c.b16 %v4099, %v4095
  %v4156 = vpack.c.b16 %v4100, %v4096
  %v4157 = vpack.c.b16 %v4101, %v4097
  %v4158 = vpack.c.b16 %v4102, %v4098
  %v4159 = vpack.c.b16 %v4107, %v4103
  %v4160 = vpack.c.b16 %v4108, %v4104
  %v4161 = vpack.c.b16 %v4109, %v4105
  %v4162 = vpack.c.b16 %v4110, %v4106
  %v4163 = vpack.c.b16 %v4115, %v4111
  %v4164 = vpack.c.b16 %v4116, %v4112
  %v4165 = vpack.c.b16 %v4117, %v4113
  %v4166 = vpack.c.b16 %v4118, %v4114
  %v4167 = vpack.c.b16 %v4123, %v4119
  %v4168 = vpack.c.b16 %v4124, %v4120
  %v4169 = vpack.c.b16 %v4125, %v4121
  %v4170 = vpack.c.b16 %v4126, %v4122
  %v4171 = vpack.c.b16 %v4131, %v4127
  %v4172 = vpack.c.b16 %v4132, %v4128
  %v4173 = vpack.c.b16 %v4133, %v4129
  %v4174 = vpack.c.b16 %v4134, %v4130
  %v4175 = vpack.c.b16 %v4139, %v4135
  %v4176 = vpack.c.b16 %v4140, %v4136
  %v4177 = vpack.c.b16 %v4141, %v4137
  %v4178 = vpack.c.b16 %v4142, %v4138
  %v4179 = vpack.c.b16 %v4147, %v4143
  %v4180 = vpack.c.b16 %v4148, %v4144
  %v4181 = vpack.c.b16 %v4149, %v4145
  %v4182 = vpack.c.b16 %v4150, %v4146
  %4215 = vmatprep.subr.bf16.mxu0 %v4152
  %4216 = vmatpush1.bf16.msra.mxu0 %v4151
  %4217 = vmatprep.subr.bf16.mxu0 %v4156
  %4218 = vmatpush1.bf16.msra.mxu0 %v4155
  %4219 = vmatprep.subr.bf16.mxu0 %v4160
  %4220 = vmatpush1.bf16.msra.mxu0 %v4159
  %4221 = vmatprep.subr.bf16.mxu0 %v4164
  %4222 = vmatpush1.bf16.msra.mxu0 %v4163
  %4223 = vmatprep.subr.bf16.mxu0 %v4168
  %4224 = vmatpush1.bf16.msra.mxu0 %v4167
  %4225 = vmatprep.subr.bf16.mxu0 %v4172
  %4226 = vmatpush1.bf16.msra.mxu0 %v4171
  %4227 = vmatprep.subr.bf16.mxu0 %v4176
  %4228 = vmatpush1.bf16.msra.mxu0 %v4175
  %4229 = vmatprep.subr.bf16.mxu0 %v4180
  %4230 = vmatpush1.bf16.msra.mxu0 %v4179
  %4231 = vmatprep.subr.bf16.mxu0 0
  %4232 = vmatpush1.bf16.msra.mxu0 0
  %4233 = vmatprep.subr.bf16.mxu0 0
  %4234 = vmatpush1.bf16.msra.mxu0 0
  %4235 = vmatprep.subr.bf16.mxu0 0
  %4236 = vmatpush1.bf16.msra.mxu0 0
  %4237 = vmatprep.subr.bf16.mxu0 0
  %4238 = vmatpush1.bf16.msra.mxu0 0
  %4239 = vmatprep.subr.bf16.mxu0 0
  %4240 = vmatpush1.bf16.msra.mxu0 0
  %4241 = vmatprep.subr.bf16.mxu0 0
  %4242 = vmatpush1.bf16.msra.mxu0 0
  %4243 = vmatprep.subr.bf16.mxu0 0
  %4244 = vmatpush1.bf16.msra.mxu0 0
  %4245 = vmatprep.subr.bf16.mxu0 0
  %4246 = vmatpush1.bf16.msra.mxu0 0
  %4247 = vmatprep.mubr.bf16.mxu0 0
  %4248 = vmatmul.mubr.bf16.gmra.mrb[0].mxu0 %v3438
  %v4249 = vpop.f32.mrb[0].mxu0
  %v4250 = vadd.f32 0.0, %v4249
  %v4251 = vpop.f32.mrb[0].mxu0
  %v4252 = vadd.f32 0.0, %v4251
  %v4253 = vpop.f32.mrb[0].mxu0
  %v4254 = vpop.f32.mrb[0].mxu0
  %4255 = vdwg.mxu0
  %4256 = vmatprep.subr.bf16.mxu0 %v4154
  %4257 = vmatpush1.bf16.msra.mxu0 %v4153
  %4258 = vmatprep.subr.bf16.mxu0 %v4158
  %4259 = vmatpush1.bf16.msra.mxu0 %v4157
  %4260 = vmatprep.subr.bf16.mxu0 %v4162
  %4261 = vmatpush1.bf16.msra.mxu0 %v4161
  %4262 = vmatprep.subr.bf16.mxu0 %v4166
  %4263 = vmatpush1.bf16.msra.mxu0 %v4165
  %4264 = vmatprep.subr.bf16.mxu0 %v4170
  %4265 = vmatpush1.bf16.msra.mxu0 %v4169
  %4266 = vmatprep.subr.bf16.mxu0 %v4174
  %4267 = vmatpush1.bf16.msra.mxu0 %v4173
  %4268 = vmatprep.subr.bf16.mxu0 %v4178
  %4269 = vmatpush1.bf16.msra.mxu0 %v4177
  %4270 = vmatprep.subr.bf16.mxu0 %v4182
  %4271 = vmatpush1.bf16.msra.mxu0 %v4181
  %4272 = vmatprep.subr.bf16.mxu0 0
  %4273 = vmatpush1.bf16.msra.mxu0 0
  %4274 = vmatprep.subr.bf16.mxu0 0
  %4275 = vmatpush1.bf16.msra.mxu0 0
  %4276 = vmatprep.subr.bf16.mxu0 0
  %4277 = vmatpush1.bf16.msra.mxu0 0
  %4278 = vmatprep.subr.bf16.mxu0 0
  %4279 = vmatpush1.bf16.msra.mxu0 0
  %4280 = vmatprep.subr.bf16.mxu0 0
  %4281 = vmatpush1.bf16.msra.mxu0 0
  %4282 = vmatprep.subr.bf16.mxu0 0
  %4283 = vmatpush1.bf16.msra.mxu0 0
  %4284 = vmatprep.subr.bf16.mxu0 0
  %4285 = vmatpush1.bf16.msra.mxu0 0
  %4286 = vmatprep.subr.bf16.mxu0 0
  %4287 = vmatpush1.bf16.msra.mxu0 0
  %4288 = vmatprep.mubr.bf16.mxu0 0
  %4289 = vmatmul.mubr.bf16.gmra.mrb[0].mxu0 %v3438
  %v4290 = vpop.f32.mrb[0].mxu0
  %v4291 = vadd.f32 0.0, %v4290
  %v4292 = vpop.f32.mrb[0].mxu0
  %v4293 = vadd.f32 0.0, %v4292
  %v4294 = vpop.f32.mrb[0].mxu0
  %v4295 = vpop.f32.mrb[0].mxu0
  %4296 = vdwg.mxu0
  %v4297 = vadd.f32 %v4019, %v4250
  %v4298 = vadd.f32 %v4020, %v4252
  %v4299 = vadd.f32 %v4021, %v4291
  %v4300 = vadd.f32 %v4022, %v4293
  %v4301 = vxor.u32 %v4297, 2147483648
  %v4302 = vmul.f32 %v4301, 1.442695
  %v4303 = vpow.pop %v4302
  %v4304 = vadd.f32 %v4303, 1.0
  %v4305 = vrcp.pop %v4304
  %v4306 = vmul.f32 1.0, %v4305
  %v4307 = vxor.u32 %v4298, 2147483648
  %v4308 = vmul.f32 %v4307, 1.442695
  %v4309 = vpow.pop %v4308
  %v4310 = vadd.f32 %v4309, 1.0
  %v4311 = vrcp.pop %v4310
  %v4312 = vmul.f32 1.0, %v4311
  %v4313 = vtanh.pop %v4299
  %v4314 = vxor.u32 %v4300, 2147483648
  %v4315 = vmul.f32 %v4314, 1.442695
  %v4316 = vpow.pop %v4315
  %v4317 = vadd.f32 %v4316, 1.0
  %v4318 = vrcp.pop %v4317
  %v4319 = vmul.f32 1.0, %v4318
  %v4320 = vmul.f32 %v4312, %v3435
  %v4321 = vmul.f32 %v4306, %v4313
  %v4322 = vadd.f32 %v4320, %v4321
  %v4323 = vtanh.pop %v4322
  %v4324 = vmul.f32 %v4319, %v4323
  %v4325 = vpack.c.bf16 %v4324, %v4324
  %v4326 = vld [vmem:[%s4] sm:$0xff]
  %v4327 = vld [vmem:[%s4 + $0x8] sm:$0xff]
  %v4328 = vld [vmem:[%s4 + $0x10] sm:$0xff]
  %v4329 = vld [vmem:[%s4 + $0x18] sm:$0xff]
  %v4330 = vld [vmem:[%s4 + $0x20] sm:$0xff]
  %v4331 = vld [vmem:[%s4 + $0x28] sm:$0xff]
  %v4332 = vld [vmem:[%s4 + $0x30] sm:$0xff]
  %v4333 = vld [vmem:[%s4 + $0x38] sm:$0xff]
  %v4334 = vld [vmem:[%s4 + $0x40] sm:$0xff]
  %v4335 = vld [vmem:[%s4 + $0x48] sm:$0xff]
  %v4336 = vld [vmem:[%s4 + $0x50] sm:$0xff]
  %v4337 = vld [vmem:[%s4 + $0x58] sm:$0xff]
  %v4338 = vld [vmem:[%s4 + $0x60] sm:$0xff]
  %v4339 = vld [vmem:[%s4 + $0x68] sm:$0xff]
  %v4340 = vld [vmem:[%s4 + $0x70] sm:$0xff]
  %v4341 = vld [vmem:[%s4 + $0x78] sm:$0xff]
  %v4342 = vld [vmem:[%s4 + $0x80] sm:$0xff]
  %v4343 = vld [vmem:[%s4 + $0x88] sm:$0xff]
  %v4344 = vld [vmem:[%s4 + $0x90] sm:$0xff]
  %v4345 = vld [vmem:[%s4 + $0x98] sm:$0xff]
  %v4346 = vld [vmem:[%s4 + $0xa0] sm:$0xff]
  %v4347 = vld [vmem:[%s4 + $0xa8] sm:$0xff]
  %v4348 = vld [vmem:[%s4 + $0xb0] sm:$0xff]
  %v4349 = vld [vmem:[%s4 + $0xb8] sm:$0xff]
  %v4350 = vld [vmem:[%s4 + $0xc0] sm:$0xff]
  %v4351 = vld [vmem:[%s4 + $0xc8] sm:$0xff]
  %v4352 = vld [vmem:[%s4 + $0xd0] sm:$0xff]
  %v4353 = vld [vmem:[%s4 + $0xd8] sm:$0xff]
  %v4354 = vld [vmem:[%s4 + $0xe0] sm:$0xff]
  %v4355 = vld [vmem:[%s4 + $0xe8] sm:$0xff]
  %v4356 = vld [vmem:[%s4 + $0xf0] sm:$0xff]
  %v4357 = vld [vmem:[%s4 + $0xf8] sm:$0xff]
  %v4358 = vpack.c.bf16 %v4015, %v4015
  %v4359 = vld [vmem:[%s5] sm:$0xff]
  %v4360 = vld [vmem:[%s5 + $0x8] sm:$0xff]
  %v4361 = vld [vmem:[%s5 + $0x10] sm:$0xff]
  %v4362 = vld [vmem:[%s5 + $0x18] sm:$0xff]
  %v4363 = vld [vmem:[%s5 + $0x20] sm:$0xff]
  %v4364 = vld [vmem:[%s5 + $0x28] sm:$0xff]
  %v4365 = vld [vmem:[%s5 + $0x30] sm:$0xff]
  %v4366 = vld [vmem:[%s5 + $0x38] sm:$0xff]
  %v4367 = vld [vmem:[%s5 + $0x40] sm:$0xff]
  %v4368 = vld [vmem:[%s5 + $0x48] sm:$0xff]
  %v4369 = vld [vmem:[%s5 + $0x50] sm:$0xff]
  %v4370 = vld [vmem:[%s5 + $0x58] sm:$0xff]
  %v4371 = vld [vmem:[%s5 + $0x60] sm:$0xff]
  %v4372 = vld [vmem:[%s5 + $0x68] sm:$0xff]
  %v4373 = vld [vmem:[%s5 + $0x70] sm:$0xff]
  %v4374 = vld [vmem:[%s5 + $0x78] sm:$0xff]
  %v4375 = vld [vmem:[%s5 + $0x80] sm:$0xff]
  %v4376 = vld [vmem:[%s5 + $0x88] sm:$0xff]
  %v4377 = vld [vmem:[%s5 + $0x90] sm:$0xff]
  %v4378 = vld [vmem:[%s5 + $0x98] sm:$0xff]
  %v4379 = vld [vmem:[%s5 + $0xa0] sm:$0xff]
  %v4380 = vld [vmem:[%s5 + $0xa8] sm:$0xff]
  %v4381 = vld [vmem:[%s5 + $0xb0] sm:$0xff]
  %v4382 = vld [vmem:[%s5 + $0xb8] sm:$0xff]
  %v4383 = vld [vmem:[%s5 + $0xc0] sm:$0xff]
  %v4384 = vld [vmem:[%s5 + $0xc8] sm:$0xff]
  %v4385 = vld [vmem:[%s5 + $0xd0] sm:$0xff]
  %v4386 = vld [vmem:[%s5 + $0xd8] sm:$0xff]
  %v4387 = vld [vmem:[%s5 + $0xe0] sm:$0xff]
  %v4388 = vld [vmem:[%s5 + $0xe8] sm:$0xff]
  %v4389 = vld [vmem:[%s5 + $0xf0] sm:$0xff]
  %v4390 = vld [vmem:[%s5 + $0xf8] sm:$0xff]
  %v4423 = vunpack.c.l.b16 %v4359
  %v4424 = vunpack.c.h.b16 %v4359
  %v4425 = vunpack.c.l.b16 %v4360
  %v4426 = vunpack.c.h.b16 %v4360
  %v4427 = vunpack.c.l.b16 %v4361
  %v4428 = vunpack.c.h.b16 %v4361
  %v4429 = vunpack.c.l.b16 %v4362
  %v4430 = vunpack.c.h.b16 %v4362
  %v4431 = vunpack.c.l.b16 %v4363
  %v4432 = vunpack.c.h.b16 %v4363
  %v4433 = vunpack.c.l.b16 %v4364
  %v4434 = vunpack.c.h.b16 %v4364
  %v4435 = vunpack.c.l.b16 %v4365
  %v4436 = vunpack.c.h.b16 %v4365
  %v4437 = vunpack.c.l.b16 %v4366
  %v4438 = vunpack.c.h.b16 %v4366
  %v4439 = vunpack.c.l.b16 %v4367
  %v4440 = vunpack.c.h.b16 %v4367
  %v4441 = vunpack.c.l.b16 %v4368
  %v4442 = vunpack.c.h.b16 %v4368
  %v4443 = vunpack.c.l.b16 %v4369
  %v4444 = vunpack.c.h.b16 %v4369
  %v4445 = vunpack.c.l.b16 %v4370
  %v4446 = vunpack.c.h.b16 %v4370
  %v4447 = vunpack.c.l.b16 %v4371
  %v4448 = vunpack.c.h.b16 %v4371
  %v4449 = vunpack.c.l.b16 %v4372
  %v4450 = vunpack.c.h.b16 %v4372
  %v4451 = vunpack.c.l.b16 %v4373
  %v4452 = vunpack.c.h.b16 %v4373
  %v4453 = vunpack.c.l.b16 %v4374
  %v4454 = vunpack.c.h.b16 %v4374
  %v4455 = vunpack.c.l.b16 %v4375
  %v4456 = vunpack.c.h.b16 %v4375
  %v4457 = vunpack.c.l.b16 %v4376
  %v4458 = vunpack.c.h.b16 %v4376
  %v4459 = vunpack.c.l.b16 %v4377
  %v4460 = vunpack.c.h.b16 %v4377
  %v4461 = vunpack.c.l.b16 %v4378
  %v4462 = vunpack.c.h.b16 %v4378
  %v4463 = vunpack.c.l.b16 %v4379
  %v4464 = vunpack.c.h.b16 %v4379
  %v4465 = vunpack.c.l.b16 %v4380
  %v4466 = vunpack.c.h.b16 %v4380
  %v4467 = vunpack.c.l.b16 %v4381
  %v4468 = vunpack.c.h.b16 %v4381
  %v4469 = vunpack.c.l.b16 %v4382
  %v4470 = vunpack.c.h.b16 %v4382
  %v4471 = vunpack.c.l.b16 %v4383
  %v4472 = vunpack.c.h.b16 %v4383
  %v4473 = vunpack.c.l.b16 %v4384
  %v4474 = vunpack.c.h.b16 %v4384
  %v4475 = vunpack.c.l.b16 %v4385
  %v4476 = vunpack.c.h.b16 %v4385
  %v4477 = vunpack.c.l.b16 %v4386
  %v4478 = vunpack.c.h.b16 %v4386
  %v4479 = vunpack.c.l.b16 %v4387
  %v4480 = vunpack.c.h.b16 %v4387
  %v4481 = vunpack.c.l.b16 %v4388
  %v4482 = vunpack.c.h.b16 %v4388
  %v4483 = vunpack.c.l.b16 %v4389
  %v4484 = vunpack.c.h.b16 %v4389
  %v4485 = vunpack.c.l.b16 %v4390
  %v4486 = vunpack.c.h.b16 %v4390
  %v4487 = vpack.c.b16 %v4427, %v4423
  %v4488 = vpack.c.b16 %v4428, %v4424
  %v4489 = vpack.c.b16 %v4429, %v4425
  %v4490 = vpack.c.b16 %v4430, %v4426
  %v4491 = vpack.c.b16 %v4435, %v4431
  %v4492 = vpack.c.b16 %v4436, %v4432
  %v4493 = vpack.c.b16 %v4437, %v4433
  %v4494 = vpack.c.b16 %v4438, %v4434
  %v4495 = vpack.c.b16 %v4443, %v4439
  %v4496 = vpack.c.b16 %v4444, %v4440
  %v4497 = vpack.c.b16 %v4445, %v4441
  %v4498 = vpack.c.b16 %v4446, %v4442
  %v4499 = vpack.c.b16 %v4451, %v4447
  %v4500 = vpack.c.b16 %v4452, %v4448
  %v4501 = vpack.c.b16 %v4453, %v4449
  %v4502 = vpack.c.b16 %v4454, %v4450
  %v4503 = vpack.c.b16 %v4459, %v4455
  %v4504 = vpack.c.b16 %v4460, %v4456
  %v4505 = vpack.c.b16 %v4461, %v4457
  %v4506 = vpack.c.b16 %v4462, %v4458
  %v4507 = vpack.c.b16 %v4467, %v4463
  %v4508 = vpack.c.b16 %v4468, %v4464
  %v4509 = vpack.c.b16 %v4469, %v4465
  %v4510 = vpack.c.b16 %v4470, %v4466
  %v4511 = vpack.c.b16 %v4475, %v4471
  %v4512 = vpack.c.b16 %v4476, %v4472
  %v4513 = vpack.c.b16 %v4477, %v4473
  %v4514 = vpack.c.b16 %v4478, %v4474
  %v4515 = vpack.c.b16 %v4483, %v4479
  %v4516 = vpack.c.b16 %v4484, %v4480
  %v4517 = vpack.c.b16 %v4485, %v4481
  %v4518 = vpack.c.b16 %v4486, %v4482
  %4551 = vmatprep.subr.bf16.mxu0 %v4488
  %4552 = vmatpush1.bf16.msra.mxu0 %v4487
  %4553 = vmatprep.subr.bf16.mxu0 %v4492
  %4554 = vmatpush1.bf16.msra.mxu0 %v4491
  %4555 = vmatprep.subr.bf16.mxu0 %v4496
  %4556 = vmatpush1.bf16.msra.mxu0 %v4495
  %4557 = vmatprep.subr.bf16.mxu0 %v4500
  %4558 = vmatpush1.bf16.msra.mxu0 %v4499
  %4559 = vmatprep.subr.bf16.mxu0 %v4504
  %4560 = vmatpush1.bf16.msra.mxu0 %v4503
  %4561 = vmatprep.subr.bf16.mxu0 %v4508
  %4562 = vmatpush1.bf16.msra.mxu0 %v4507
  %4563 = vmatprep.subr.bf16.mxu0 %v4512
  %4564 = vmatpush1.bf16.msra.mxu0 %v4511
  %4565 = vmatprep.subr.bf16.mxu0 %v4516
  %4566 = vmatpush1.bf16.msra.mxu0 %v4515
  %4567 = vmatprep.subr.bf16.mxu0 0
  %4568 = vmatpush1.bf16.msra.mxu0 0
  %4569 = vmatprep.subr.bf16.mxu0 0
  %4570 = vmatpush1.bf16.msra.mxu0 0
  %4571 = vmatprep.subr.bf16.mxu0 0
  %4572 = vmatpush1.bf16.msra.mxu0 0
  %4573 = vmatprep.subr.bf16.mxu0 0
  %4574 = vmatpush1.bf16.msra.mxu0 0
  %4575 = vmatprep.subr.bf16.mxu0 0
  %4576 = vmatpush1.bf16.msra.mxu0 0
  %4577 = vmatprep.subr.bf16.mxu0 0
  %4578 = vmatpush1.bf16.msra.mxu0 0
  %4579 = vmatprep.subr.bf16.mxu0 0
  %4580 = vmatpush1.bf16.msra.mxu0 0
  %4581 = vmatprep.subr.bf16.mxu0 0
  %4582 = vmatpush1.bf16.msra.mxu0 0
  %4583 = vmatprep.mubr.bf16.mxu0 0
  %4584 = vmatmul.mubr.bf16.gmra.mrb[0].mxu0 %v4358
  %v4585 = vpop.f32.mrb[0].mxu0
  %v4586 = vadd.f32 0.0, %v4585
  %v4587 = vpop.f32.mrb[0].mxu0
  %v4588 = vadd.f32 0.0, %v4587
  %v4589 = vpop.f32.mrb[0].mxu0
  %v4590 = vpop.f32.mrb[0].mxu0
  %4591 = vdwg.mxu0
  %4592 = vmatprep.subr.bf16.mxu0 %v4490
  %4593 = vmatpush1.bf16.msra.mxu0 %v4489
  %4594 = vmatprep.subr.bf16.mxu0 %v4494
  %4595 = vmatpush1.bf16.msra.mxu0 %v4493
  %4596 = vmatprep.subr.bf16.mxu0 %v4498
  %4597 = vmatpush1.bf16.msra.mxu0 %v4497
  %4598 = vmatprep.subr.bf16.mxu0 %v4502
  %4599 = vmatpush1.bf16.msra.mxu0 %v4501
  %4600 = vmatprep.subr.bf16.mxu0 %v4506
  %4601 = vmatpush1.bf16.msra.mxu0 %v4505
  %4602 = vmatprep.subr.bf16.mxu0 %v4510
  %4603 = vmatpush1.bf16.msra.mxu0 %v4509
  %4604 = vmatprep.subr.bf16.mxu0 %v4514
  %4605 = vmatpush1.bf16.msra.mxu0 %v4513
  %4606 = vmatprep.subr.bf16.mxu0 %v4518
  %4607 = vmatpush1.bf16.msra.mxu0 %v4517
  %4608 = vmatprep.subr.bf16.mxu0 0
  %4609 = vmatpush1.bf16.msra.mxu0 0
  %4610 = vmatprep.subr.bf16.mxu0 0
  %4611 = vmatpush1.bf16.msra.mxu0 0
  %4612 = vmatprep.subr.bf16.mxu0 0
  %4613 = vmatpush1.bf16.msra.mxu0 0
  %4614 = vmatprep.subr.bf16.mxu0 0
  %4615 = vmatpush1.bf16.msra.mxu0 0
  %4616 = vmatprep.subr.bf16.mxu0 0
  %4617 = vmatpush1.bf16.msra.mxu0 0
  %4618 = vmatprep.subr.bf16.mxu0 0
  %4619 = vmatpush1.bf16.msra.mxu0 0
  %4620 = vmatprep.subr.bf16.mxu0 0
  %4621 = vmatpush1.bf16.msra.mxu0 0
  %4622 = vmatprep.subr.bf16.mxu0 0
  %4623 = vmatpush1.bf16.msra.mxu0 0
  %4624 = vmatprep.mubr.bf16.mxu0 0
  %4625 = vmatmul.mubr.bf16.gmra.mrb[0].mxu0 %v4358
  %v4626 = vpop.f32.mrb[0].mxu0
  %v4627 = vadd.f32 0.0, %v4626
  %v4628 = vpop.f32.mrb[0].mxu0
  %v4629 = vadd.f32 0.0, %v4628
  %v4630 = vpop.f32.mrb[0].mxu0
  %v4631 = vpop.f32.mrb[0].mxu0
  %4632 = vdwg.mxu0
  %v4665 = vunpack.c.l.b16 %v4326
  %v4666 = vunpack.c.h.b16 %v4326
  %v4667 = vunpack.c.l.b16 %v4327
  %v4668 = vunpack.c.h.b16 %v4327
  %v4669 = vunpack.c.l.b16 %v4328
  %v4670 = vunpack.c.h.b16 %v4328
  %v4671 = vunpack.c.l.b16 %v4329
  %v4672 = vunpack.c.h.b16 %v4329
  %v4673 = vunpack.c.l.b16 %v4330
  %v4674 = vunpack.c.h.b16 %v4330
  %v4675 = vunpack.c.l.b16 %v4331
  %v4676 = vunpack.c.h.b16 %v4331
  %v4677 = vunpack.c.l.b16 %v4332
  %v4678 = vunpack.c.h.b16 %v4332
  %v4679 = vunpack.c.l.b16 %v4333
  %v4680 = vunpack.c.h.b16 %v4333
  %v4681 = vunpack.c.l.b16 %v4334
  %v4682 = vunpack.c.h.b16 %v4334
  %v4683 = vunpack.c.l.b16 %v4335
  %v4684 = vunpack.c.h.b16 %v4335
  %v4685 = vunpack.c.l.b16 %v4336
  %v4686 = vunpack.c.h.b16 %v4336
  %v4687 = vunpack.c.l.b16 %v4337
  %v4688 = vunpack.c.h.b16 %v4337
  %v4689 = vunpack.c.l.b16 %v4338
  %v4690 = vunpack.c.h.b16 %v4338
  %v4691 = vunpack.c.l.b16 %v4339
  %v4692 = vunpack.c.h.b16 %v4339
  %v4693 = vunpack.c.l.b16 %v4340
  %v4694 = vunpack.c.h.b16 %v4340
  %v4695 = vunpack.c.l.b16 %v4341
  %v4696 = vunpack.c.h.b16 %v4341
  %v4697 = vunpack.c.l.b16 %v4342
  %v4698 = vunpack.c.h.b16 %v4342
  %v4699 = vunpack.c.l.b16 %v4343
  %v4700 = vunpack.c.h.b16 %v4343
  %v4701 = vunpack.c.l.b16 %v4344
  %v4702 = vunpack.c.h.b16 %v4344
  %v4703 = vunpack.c.l.b16 %v4345
  %v4704 = vunpack.c.h.b16 %v4345
  %v4705 = vunpack.c.l.b16 %v4346
  %v4706 = vunpack.c.h.b16 %v4346
  %v4707 = vunpack.c.l.b16 %v4347
  %v4708 = vunpack.c.h.b16 %v4347
  %v4709 = vunpack.c.l.b16 %v4348
  %v4710 = vunpack.c.h.b16 %v4348
  %v4711 = vunpack.c.l.b16 %v4349
  %v4712 = vunpack.c.h.b16 %v4349
  %v4713 = vunpack.c.l.b16 %v4350
  %v4714 = vunpack.c.h.b16 %v4350
  %v4715 = vunpack.c.l.b16 %v4351
  %v4716 = vunpack.c.h.b16 %v4351
  %v4717 = vunpack.c.l.b16 %v4352
  %v4718 = vunpack.c.h.b16 %v4352
  %v4719 = vunpack.c.l.b16 %v4353
  %v4720 = vunpack.c.h.b16 %v4353
  %v4721 = vunpack.c.l.b16 %v4354
  %v4722 = vunpack.c.h.b16 %v4354
  %v4723 = vunpack.c.l.b16 %v4355
  %v4724 = vunpack.c.h.b16 %v4355
  %v4725 = vunpack.c.l.b16 %v4356
  %v4726 = vunpack.c.h.b16 %v4356
  %v4727 = vunpack.c.l.b16 %v4357
  %v4728 = vunpack.c.h.b16 %v4357
  %v4729 = vpack.c.b16 %v4669, %v4665
  %v4730 = vpack.c.b16 %v4670, %v4666
  %v4731 = vpack.c.b16 %v4671, %v4667
  %v4732 = vpack.c.b16 %v4672, %v4668
  %v4733 = vpack.c.b16 %v4677, %v4673
  %v4734 = vpack.c.b16 %v4678, %v4674
  %v4735 = vpack.c.b16 %v4679, %v4675
  %v4736 = vpack.c.b16 %v4680, %v4676
  %v4737 = vpack.c.b16 %v4685, %v4681
  %v4738 = vpack.c.b16 %v4686, %v4682
  %v4739 = vpack.c.b16 %v4687, %v4683
  %v4740 = vpack.c.b16 %v4688, %v4684
  %v4741 = vpack.c.b16 %v4693, %v4689
  %v4742 = vpack.c.b16 %v4694, %v4690
  %v4743 = vpack.c.b16 %v4695, %v4691
  %v4744 = vpack.c.b16 %v4696, %v4692
  %v4745 = vpack.c.b16 %v4701, %v4697
  %v4746 = vpack.c.b16 %v4702, %v4698
  %v4747 = vpack.c.b16 %v4703, %v4699
  %v4748 = vpack.c.b16 %v4704, %v4700
  %v4749 = vpack.c.b16 %v4709, %v4705
  %v4750 = vpack.c.b16 %v4710, %v4706
  %v4751 = vpack.c.b16 %v4711, %v4707
  %v4752 = vpack.c.b16 %v4712, %v4708
  %v4753 = vpack.c.b16 %v4717, %v4713
  %v4754 = vpack.c.b16 %v4718, %v4714
  %v4755 = vpack.c.b16 %v4719, %v4715
  %v4756 = vpack.c.b16 %v4720, %v4716
  %v4757 = vpack.c.b16 %v4725, %v4721
  %v4758 = vpack.c.b16 %v4726, %v4722
  %v4759 = vpack.c.b16 %v4727, %v4723
  %v4760 = vpack.c.b16 %v4728, %v4724
  %4793 = vmatprep.subr.bf16.mxu0 %v4730
  %4794 = vmatpush1.bf16.msra.mxu0 %v4729
  %4795 = vmatprep.subr.bf16.mxu0 %v4734
  %4796 = vmatpush1.bf16.msra.mxu0 %v4733
  %4797 = vmatprep.subr.bf16.mxu0 %v4738
  %4798 = vmatpush1.bf16.msra.mxu0 %v4737
  %4799 = vmatprep.subr.bf16.mxu0 %v4742
  %4800 = vmatpush1.bf16.msra.mxu0 %v4741
  %4801 = vmatprep.subr.bf16.mxu0 %v4746
  %4802 = vmatpush1.bf16.msra.mxu0 %v4745
  %4803 = vmatprep.subr.bf16.mxu0 %v4750
  %4804 = vmatpush1.bf16.msra.mxu0 %v4749
  %4805 = vmatprep.subr.bf16.mxu0 %v4754
  %4806 = vmatpush1.bf16.msra.mxu0 %v4753
  %4807 = vmatprep.subr.bf16.mxu0 %v4758
  %4808 = vmatpush1.bf16.msra.mxu0 %v4757
  %4809 = vmatprep.subr.bf16.mxu0 0
  %4810 = vmatpush1.bf16.msra.mxu0 0
  %4811 = vmatprep.subr.bf16.mxu0 0
  %4812 = vmatpush1.bf16.msra.mxu0 0
  %4813 = vmatprep.subr.bf16.mxu0 0
  %4814 = vmatpush1.bf16.msra.mxu0 0
  %4815 = vmatprep.subr.bf16.mxu0 0
  %4816 = vmatpush1.bf16.msra.mxu0 0
  %4817 = vmatprep.subr.bf16.mxu0 0
  %4818 = vmatpush1.bf16.msra.mxu0 0
  %4819 = vmatprep.subr.bf16.mxu0 0
  %4820 = vmatpush1.bf16.msra.mxu0 0
  %4821 = vmatprep.subr.bf16.mxu0 0
  %4822 = vmatpush1.bf16.msra.mxu0 0
  %4823 = vmatprep.subr.bf16.mxu0 0
  %4824 = vmatpush1.bf16.msra.mxu0 0
  %4825 = vmatprep.mubr.bf16.mxu0 0
  %4826 = vmatmul.mubr.bf16.gmra.mrb[0].mxu0 %v4325
  %v4827 = vpop.f32.mrb[0].mxu0
  %v4828 = vadd.f32 %v4586, %v4827
  %v4829 = vpop.f32.mrb[0].mxu0
  %v4830 = vadd.f32 %v4588, %v4829
  %v4831 = vpop.f32.mrb[0].mxu0
  %v4832 = vpop.f32.mrb[0].mxu0
  %4833 = vdwg.mxu0
  %4834 = vmatprep.subr.bf16.mxu0 %v4732
  %4835 = vmatpush1.bf16.msra.mxu0 %v4731
  %4836 = vmatprep.subr.bf16.mxu0 %v4736
  %4837 = vmatpush1.bf16.msra.mxu0 %v4735
  %4838 = vmatprep.subr.bf16.mxu0 %v4740
  %4839 = vmatpush1.bf16.msra.mxu0 %v4739
  %4840 = vmatprep.subr.bf16.mxu0 %v4744
  %4841 = vmatpush1.bf16.msra.mxu0 %v4743
  %4842 = vmatprep.subr.bf16.mxu0 %v4748
  %4843 = vmatpush1.bf16.msra.mxu0 %v4747
  %4844 = vmatprep.subr.bf16.mxu0 %v4752
  %4845 = vmatpush1.bf16.msra.mxu0 %v4751
  %4846 = vmatprep.subr.bf16.mxu0 %v4756
  %4847 = vmatpush1.bf16.msra.mxu0 %v4755
  %4848 = vmatprep.subr.bf16.mxu0 %v4760
  %4849 = vmatpush1.bf16.msra.mxu0 %v4759
  %4850 = vmatprep.subr.bf16.mxu0 0
  %4851 = vmatpush1.bf16.msra.mxu0 0
  %4852 = vmatprep.subr.bf16.mxu0 0
  %4853 = vmatpush1.bf16.msra.mxu0 0
  %4854 = vmatprep.subr.bf16.mxu0 0
  %4855 = vmatpush1.bf16.msra.mxu0 0
  %4856 = vmatprep.subr.bf16.mxu0 0
  %4857 = vmatpush1.bf16.msra.mxu0 0
  %4858 = vmatprep.subr.bf16.mxu0 0
  %4859 = vmatpush1.bf16.msra.mxu0 0
  %4860 = vmatprep.subr.bf16.mxu0 0
  %4861 = vmatpush1.bf16.msra.mxu0 0
  %4862 = vmatprep.subr.bf16.mxu0 0
  %4863 = vmatpush1.bf16.msra.mxu0 0
  %4864 = vmatprep.subr.bf16.mxu0 0
  %4865 = vmatpush1.bf16.msra.mxu0 0
  %4866 = vmatprep.mubr.bf16.mxu0 0
  %4867 = vmatmul.mubr.bf16.gmra.mrb[0].mxu0 %v4325
  %v4868 = vpop.f32.mrb[0].mxu0
  %v4869 = vadd.f32 %v4627, %v4868
  %v4870 = vpop.f32.mrb[0].mxu0
  %v4871 = vadd.f32 %v4629, %v4870
  %v4872 = vpop.f32.mrb[0].mxu0
  %v4873 = vpop.f32.mrb[0].mxu0
  %4874 = vdwg.mxu0
  %v4875 = vadd.f32 %v4828, %v1311
  %v4876 = vadd.f32 %v4830, %v1315
  %v4877 = vadd.f32 %v4869, %v1319
  %v4878 = vadd.f32 %v4871, %v1323
  %v4879 = vxor.u32 %v4875, 2147483648
  %v4880 = vmul.f32 %v4879, 1.442695
  %v4881 = vpow.pop %v4880
  %v4882 = vadd.f32 %v4881, 1.0
  %v4883 = vrcp.pop %v4882
  %v4884 = vmul.f32 1.0, %v4883
  %v4885 = vxor.u32 %v4876, 2147483648
  %v4886 = vmul.f32 %v4885, 1.442695
  %v4887 = vpow.pop %v4886
  %v4888 = vadd.f32 %v4887, 1.0
  %v4889 = vrcp.pop %v4888
  %v4890 = vmul.f32 1.0, %v4889
  %v4891 = vtanh.pop %v4877
  %v4892 = vxor.u32 %v4878, 2147483648
  %v4893 = vmul.f32 %v4892, 1.442695
  %v4894 = vpow.pop %v4893
  %v4895 = vadd.f32 %v4894, 1.0
  %v4896 = vrcp.pop %v4895
  %v4897 = vmul.f32 1.0, %v4896
  %v4898 = vmul.f32 %v4890, %v4013
  %v4899 = vmul.f32 %v4884, %v4891
  %v4900 = vadd.f32 %v4898, %v4899
  %v4901 = vtanh.pop %v4900
  %v4902 = vmul.f32 %v4897, %v4901
  %s4903 = scalar_lea.vmem %s7, 32
  %4904 = vst [vmem:[%s4903] sm:$0xff] %v4902
  %s4905 = scalar_lea.vmem [#allocation2], 160
  %v4906 = vld [vmem:[%s4905] sm:$0xff]
  %v4907 = vld [vmem:[%s4905 + $0x8] sm:$0xff]
  %v4908 = vld [vmem:[%s4905 + $0x10] sm:$0xff]
  %v4909 = vld [vmem:[%s4905 + $0x18] sm:$0xff]
  %v4910 = vld [vmem:[%s2] sm:$0xff]
  %v4911 = vld [vmem:[%s2 + $0x8] sm:$0xff]
  %v4912 = vld [vmem:[%s2 + $0x10] sm:$0xff]
  %v4913 = vld [vmem:[%s2 + $0x18] sm:$0xff]
  %v4914 = vld [vmem:[%s2 + $0x20] sm:$0xff]
  %v4915 = vld [vmem:[%s2 + $0x28] sm:$0xff]
  %v4916 = vld [vmem:[%s2 + $0x30] sm:$0xff]
  %v4917 = vld [vmem:[%s2 + $0x38] sm:$0xff]
  %v4918 = vld [vmem:[%s2 + $0x40] sm:$0xff]
  %v4919 = vld [vmem:[%s2 + $0x48] sm:$0xff]
  %v4920 = vld [vmem:[%s2 + $0x50] sm:$0xff]
  %v4921 = vld [vmem:[%s2 + $0x58] sm:$0xff]
  %v4922 = vld [vmem:[%s2 + $0x60] sm:$0xff]
  %v4923 = vld [vmem:[%s2 + $0x68] sm:$0xff]
  %v4924 = vld [vmem:[%s2 + $0x70] sm:$0xff]
  %v4925 = vld [vmem:[%s2 + $0x78] sm:$0xff]
  %v4926 = vld [vmem:[%s2 + $0x80] sm:$0xff]
  %v4927 = vld [vmem:[%s2 + $0x88] sm:$0xff]
  %v4928 = vld [vmem:[%s2 + $0x90] sm:$0xff]
  %v4929 = vld [vmem:[%s2 + $0x98] sm:$0xff]
  %v4930 = vld [vmem:[%s2 + $0xa0] sm:$0xff]
  %v4931 = vld [vmem:[%s2 + $0xa8] sm:$0xff]
  %v4932 = vld [vmem:[%s2 + $0xb0] sm:$0xff]
  %v4933 = vld [vmem:[%s2 + $0xb8] sm:$0xff]
  %v4934 = vld [vmem:[%s2 + $0xc0] sm:$0xff]
  %v4935 = vld [vmem:[%s2 + $0xc8] sm:$0xff]
  %v4936 = vld [vmem:[%s2 + $0xd0] sm:$0xff]
  %v4937 = vld [vmem:[%s2 + $0xd8] sm:$0xff]
  %v4938 = vld [vmem:[%s2 + $0xe0] sm:$0xff]
  %v4939 = vld [vmem:[%s2 + $0xe8] sm:$0xff]
  %v4940 = vld [vmem:[%s2 + $0xf0] sm:$0xff]
  %v4941 = vld [vmem:[%s2 + $0xf8] sm:$0xff]
  %v4974 = vunpack.c.l.b16 %v4910
  %v4975 = vunpack.c.h.b16 %v4910
  %v4976 = vunpack.c.l.b16 %v4911
  %v4977 = vunpack.c.h.b16 %v4911
  %v4978 = vunpack.c.l.b16 %v4912
  %v4979 = vunpack.c.h.b16 %v4912
  %v4980 = vunpack.c.l.b16 %v4913
  %v4981 = vunpack.c.h.b16 %v4913
  %v4982 = vunpack.c.l.b16 %v4914
  %v4983 = vunpack.c.h.b16 %v4914
  %v4984 = vunpack.c.l.b16 %v4915
  %v4985 = vunpack.c.h.b16 %v4915
  %v4986 = vunpack.c.l.b16 %v4916
  %v4987 = vunpack.c.h.b16 %v4916
  %v4988 = vunpack.c.l.b16 %v4917
  %v4989 = vunpack.c.h.b16 %v4917
  %v4990 = vunpack.c.l.b16 %v4918
  %v4991 = vunpack.c.h.b16 %v4918
  %v4992 = vunpack.c.l.b16 %v4919
  %v4993 = vunpack.c.h.b16 %v4919
  %v4994 = vunpack.c.l.b16 %v4920
  %v4995 = vunpack.c.h.b16 %v4920
  %v4996 = vunpack.c.l.b16 %v4921
  %v4997 = vunpack.c.h.b16 %v4921
  %v4998 = vunpack.c.l.b16 %v4922
  %v4999 = vunpack.c.h.b16 %v4922
  %v5000 = vunpack.c.l.b16 %v4923
  %v5001 = vunpack.c.h.b16 %v4923
  %v5002 = vunpack.c.l.b16 %v4924
  %v5003 = vunpack.c.h.b16 %v4924
  %v5004 = vunpack.c.l.b16 %v4925
  %v5005 = vunpack.c.h.b16 %v4925
  %v5006 = vunpack.c.l.b16 %v4926
  %v5007 = vunpack.c.h.b16 %v4926
  %v5008 = vunpack.c.l.b16 %v4927
  %v5009 = vunpack.c.h.b16 %v4927
  %v5010 = vunpack.c.l.b16 %v4928
  %v5011 = vunpack.c.h.b16 %v4928
  %v5012 = vunpack.c.l.b16 %v4929
  %v5013 = vunpack.c.h.b16 %v4929
  %v5014 = vunpack.c.l.b16 %v4930
  %v5015 = vunpack.c.h.b16 %v4930
  %v5016 = vunpack.c.l.b16 %v4931
  %v5017 = vunpack.c.h.b16 %v4931
  %v5018 = vunpack.c.l.b16 %v4932
  %v5019 = vunpack.c.h.b16 %v4932
  %v5020 = vunpack.c.l.b16 %v4933
  %v5021 = vunpack.c.h.b16 %v4933
  %v5022 = vunpack.c.l.b16 %v4934
  %v5023 = vunpack.c.h.b16 %v4934
  %v5024 = vunpack.c.l.b16 %v4935
  %v5025 = vunpack.c.h.b16 %v4935
  %v5026 = vunpack.c.l.b16 %v4936
  %v5027 = vunpack.c.h.b16 %v4936
  %v5028 = vunpack.c.l.b16 %v4937
  %v5029 = vunpack.c.h.b16 %v4937
  %v5030 = vunpack.c.l.b16 %v4938
  %v5031 = vunpack.c.h.b16 %v4938
  %v5032 = vunpack.c.l.b16 %v4939
  %v5033 = vunpack.c.h.b16 %v4939
  %v5034 = vunpack.c.l.b16 %v4940
  %v5035 = vunpack.c.h.b16 %v4940
  %v5036 = vunpack.c.l.b16 %v4941
  %v5037 = vunpack.c.h.b16 %v4941
  %v5038 = vpack.c.b16 %v4978, %v4974
  %v5039 = vpack.c.b16 %v4979, %v4975
  %v5040 = vpack.c.b16 %v4980, %v4976
  %v5041 = vpack.c.b16 %v4981, %v4977
  %v5042 = vpack.c.b16 %v4986, %v4982
  %v5043 = vpack.c.b16 %v4987, %v4983
  %v5044 = vpack.c.b16 %v4988, %v4984
  %v5045 = vpack.c.b16 %v4989, %v4985
  %v5046 = vpack.c.b16 %v4994, %v4990
  %v5047 = vpack.c.b16 %v4995, %v4991
  %v5048 = vpack.c.b16 %v4996, %v4992
  %v5049 = vpack.c.b16 %v4997, %v4993
  %v5050 = vpack.c.b16 %v5002, %v4998
  %v5051 = vpack.c.b16 %v5003, %v4999
  %v5052 = vpack.c.b16 %v5004, %v5000
  %v5053 = vpack.c.b16 %v5005, %v5001
  %v5054 = vpack.c.b16 %v5010, %v5006
  %v5055 = vpack.c.b16 %v5011, %v5007
  %v5056 = vpack.c.b16 %v5012, %v5008
  %v5057 = vpack.c.b16 %v5013, %v5009
  %v5058 = vpack.c.b16 %v5018, %v5014
  %v5059 = vpack.c.b16 %v5019, %v5015
  %v5060 = vpack.c.b16 %v5020, %v5016
  %v5061 = vpack.c.b16 %v5021, %v5017
  %v5062 = vpack.c.b16 %v5026, %v5022
  %v5063 = vpack.c.b16 %v5027, %v5023
  %v5064 = vpack.c.b16 %v5028, %v5024
  %v5065 = vpack.c.b16 %v5029, %v5025
  %v5066 = vpack.c.b16 %v5034, %v5030
  %v5067 = vpack.c.b16 %v5035, %v5031
  %v5068 = vpack.c.b16 %v5036, %v5032
  %v5069 = vpack.c.b16 %v5037, %v5033
  %5102 = vmatprep.subr.bf16.mxu0 %v5039
  %5103 = vmatpush1.bf16.msra.mxu0 %v5038
  %5104 = vmatprep.subr.bf16.mxu0 %v5043
  %5105 = vmatpush1.bf16.msra.mxu0 %v5042
  %5106 = vmatprep.subr.bf16.mxu0 %v5047
  %5107 = vmatpush1.bf16.msra.mxu0 %v5046
  %5108 = vmatprep.subr.bf16.mxu0 %v5051
  %5109 = vmatpush1.bf16.msra.mxu0 %v5050
  %5110 = vmatprep.subr.bf16.mxu0 %v5055
  %5111 = vmatpush1.bf16.msra.mxu0 %v5054
  %5112 = vmatprep.subr.bf16.mxu0 %v5059
  %5113 = vmatpush1.bf16.msra.mxu0 %v5058
  %5114 = vmatprep.subr.bf16.mxu0 %v5063
  %5115 = vmatpush1.bf16.msra.mxu0 %v5062
  %5116 = vmatprep.subr.bf16.mxu0 %v5067
  %5117 = vmatpush1.bf16.msra.mxu0 %v5066
  %5118 = vmatprep.subr.bf16.mxu0 0
  %5119 = vmatpush1.bf16.msra.mxu0 0
  %5120 = vmatprep.subr.bf16.mxu0 0
  %5121 = vmatpush1.bf16.msra.mxu0 0
  %5122 = vmatprep.subr.bf16.mxu0 0
  %5123 = vmatpush1.bf16.msra.mxu0 0
  %5124 = vmatprep.subr.bf16.mxu0 0
  %5125 = vmatpush1.bf16.msra.mxu0 0
  %5126 = vmatprep.subr.bf16.mxu0 0
  %5127 = vmatpush1.bf16.msra.mxu0 0
  %5128 = vmatprep.subr.bf16.mxu0 0
  %5129 = vmatpush1.bf16.msra.mxu0 0
  %5130 = vmatprep.subr.bf16.mxu0 0
  %5131 = vmatpush1.bf16.msra.mxu0 0
  %5132 = vmatprep.subr.bf16.mxu0 0
  %5133 = vmatpush1.bf16.msra.mxu0 0
  %5134 = vmatprep.mubr.bf16.mxu0 0
  %5135 = vmatmul.mubr.bf16.gmra.mrb[0].mxu0 %v4325
  %v5136 = vpop.f32.mrb[0].mxu0
  %v5137 = vadd.f32 0.0, %v5136
  %v5138 = vpop.f32.mrb[0].mxu0
  %v5139 = vadd.f32 0.0, %v5138
  %v5140 = vpop.f32.mrb[0].mxu0
  %v5141 = vpop.f32.mrb[0].mxu0
  %5142 = vdwg.mxu0
  %5143 = vmatprep.subr.bf16.mxu0 %v5041
  %5144 = vmatpush1.bf16.msra.mxu0 %v5040
  %5145 = vmatprep.subr.bf16.mxu0 %v5045
  %5146 = vmatpush1.bf16.msra.mxu0 %v5044
  %5147 = vmatprep.subr.bf16.mxu0 %v5049
  %5148 = vmatpush1.bf16.msra.mxu0 %v5048
  %5149 = vmatprep.subr.bf16.mxu0 %v5053
  %5150 = vmatpush1.bf16.msra.mxu0 %v5052
  %5151 = vmatprep.subr.bf16.mxu0 %v5057
  %5152 = vmatpush1.bf16.msra.mxu0 %v5056
  %5153 = vmatprep.subr.bf16.mxu0 %v5061
  %5154 = vmatpush1.bf16.msra.mxu0 %v5060
  %5155 = vmatprep.subr.bf16.mxu0 %v5065
  %5156 = vmatpush1.bf16.msra.mxu0 %v5064
  %5157 = vmatprep.subr.bf16.mxu0 %v5069
  %5158 = vmatpush1.bf16.msra.mxu0 %v5068
  %5159 = vmatprep.subr.bf16.mxu0 0
  %5160 = vmatpush1.bf16.msra.mxu0 0
  %5161 = vmatprep.subr.bf16.mxu0 0
  %5162 = vmatpush1.bf16.msra.mxu0 0
  %5163 = vmatprep.subr.bf16.mxu0 0
  %5164 = vmatpush1.bf16.msra.mxu0 0
  %5165 = vmatprep.subr.bf16.mxu0 0
  %5166 = vmatpush1.bf16.msra.mxu0 0
  %5167 = vmatprep.subr.bf16.mxu0 0
  %5168 = vmatpush1.bf16.msra.mxu0 0
  %5169 = vmatprep.subr.bf16.mxu0 0
  %5170 = vmatpush1.bf16.msra.mxu0 0
  %5171 = vmatprep.subr.bf16.mxu0 0
  %5172 = vmatpush1.bf16.msra.mxu0 0
  %5173 = vmatprep.subr.bf16.mxu0 0
  %5174 = vmatpush1.bf16.msra.mxu0 0
  %5175 = vmatprep.mubr.bf16.mxu0 0
  %5176 = vmatmul.mubr.bf16.gmra.mrb[0].mxu0 %v4325
  %v5177 = vpop.f32.mrb[0].mxu0
  %v5178 = vadd.f32 0.0, %v5177
  %v5179 = vpop.f32.mrb[0].mxu0
  %v5180 = vadd.f32 0.0, %v5179
  %v5181 = vpop.f32.mrb[0].mxu0
  %v5182 = vpop.f32.mrb[0].mxu0
  %5183 = vdwg.mxu0
  %v5184 = vadd.f32 %v4906, %v5137
  %v5185 = vadd.f32 %v4907, %v5139
  %v5186 = vadd.f32 %v4908, %v5178
  %v5187 = vadd.f32 %v4909, %v5180
  %v5188 = vxor.u32 %v5184, 2147483648
  %v5189 = vmul.f32 %v5188, 1.442695
  %v5190 = vpow.pop %v5189
  %v5191 = vadd.f32 %v5190, 1.0
  %v5192 = vrcp.pop %v5191
  %v5193 = vmul.f32 1.0, %v5192
  %v5194 = vxor.u32 %v5185, 2147483648
  %v5195 = vmul.f32 %v5194, 1.442695
  %v5196 = vpow.pop %v5195
  %v5197 = vadd.f32 %v5196, 1.0
  %v5198 = vrcp.pop %v5197
  %v5199 = vmul.f32 1.0, %v5198
  %v5200 = vtanh.pop %v5186
  %v5201 = vxor.u32 %v5187, 2147483648
  %v5202 = vmul.f32 %v5201, 1.442695
  %v5203 = vpow.pop %v5202
  %v5204 = vadd.f32 %v5203, 1.0
  %v5205 = vrcp.pop %v5204
  %v5206 = vmul.f32 1.0, %v5205
  %v5207 = vmul.f32 %v5199, %v4322
  %v5208 = vmul.f32 %v5193, %v5200
  %v5209 = vadd.f32 %v5207, %v5208
  %v5210 = vtanh.pop %v5209
  %v5211 = vmul.f32 %v5206, %v5210
  %v5212 = vpack.c.bf16 %v5211, %v5211
  %v5213 = vld [vmem:[%s4] sm:$0xff]
  %v5214 = vld [vmem:[%s4 + $0x8] sm:$0xff]
  %v5215 = vld [vmem:[%s4 + $0x10] sm:$0xff]
  %v5216 = vld [vmem:[%s4 + $0x18] sm:$0xff]
  %v5217 = vld [vmem:[%s4 + $0x20] sm:$0xff]
  %v5218 = vld [vmem:[%s4 + $0x28] sm:$0xff]
  %v5219 = vld [vmem:[%s4 + $0x30] sm:$0xff]
  %v5220 = vld [vmem:[%s4 + $0x38] sm:$0xff]
  %v5221 = vld [vmem:[%s4 + $0x40] sm:$0xff]
  %v5222 = vld [vmem:[%s4 + $0x48] sm:$0xff]
  %v5223 = vld [vmem:[%s4 + $0x50] sm:$0xff]
  %v5224 = vld [vmem:[%s4 + $0x58] sm:$0xff]
  %v5225 = vld [vmem:[%s4 + $0x60] sm:$0xff]
  %v5226 = vld [vmem:[%s4 + $0x68] sm:$0xff]
  %v5227 = vld [vmem:[%s4 + $0x70] sm:$0xff]
  %v5228 = vld [vmem:[%s4 + $0x78] sm:$0xff]
  %v5229 = vld [vmem:[%s4 + $0x80] sm:$0xff]
  %v5230 = vld [vmem:[%s4 + $0x88] sm:$0xff]
  %v5231 = vld [vmem:[%s4 + $0x90] sm:$0xff]
  %v5232 = vld [vmem:[%s4 + $0x98] sm:$0xff]
  %v5233 = vld [vmem:[%s4 + $0xa0] sm:$0xff]
  %v5234 = vld [vmem:[%s4 + $0xa8] sm:$0xff]
  %v5235 = vld [vmem:[%s4 + $0xb0] sm:$0xff]
  %v5236 = vld [vmem:[%s4 + $0xb8] sm:$0xff]
  %v5237 = vld [vmem:[%s4 + $0xc0] sm:$0xff]
  %v5238 = vld [vmem:[%s4 + $0xc8] sm:$0xff]
  %v5239 = vld [vmem:[%s4 + $0xd0] sm:$0xff]
  %v5240 = vld [vmem:[%s4 + $0xd8] sm:$0xff]
  %v5241 = vld [vmem:[%s4 + $0xe0] sm:$0xff]
  %v5242 = vld [vmem:[%s4 + $0xe8] sm:$0xff]
  %v5243 = vld [vmem:[%s4 + $0xf0] sm:$0xff]
  %v5244 = vld [vmem:[%s4 + $0xf8] sm:$0xff]
  %v5245 = vpack.c.bf16 %v4902, %v4902
  %v5246 = vld [vmem:[%s5] sm:$0xff]
  %v5247 = vld [vmem:[%s5 + $0x8] sm:$0xff]
  %v5248 = vld [vmem:[%s5 + $0x10] sm:$0xff]
  %v5249 = vld [vmem:[%s5 + $0x18] sm:$0xff]
  %v5250 = vld [vmem:[%s5 + $0x20] sm:$0xff]
  %v5251 = vld [vmem:[%s5 + $0x28] sm:$0xff]
  %v5252 = vld [vmem:[%s5 + $0x30] sm:$0xff]
  %v5253 = vld [vmem:[%s5 + $0x38] sm:$0xff]
  %v5254 = vld [vmem:[%s5 + $0x40] sm:$0xff]
  %v5255 = vld [vmem:[%s5 + $0x48] sm:$0xff]
  %v5256 = vld [vmem:[%s5 + $0x50] sm:$0xff]
  %v5257 = vld [vmem:[%s5 + $0x58] sm:$0xff]
  %v5258 = vld [vmem:[%s5 + $0x60] sm:$0xff]
  %v5259 = vld [vmem:[%s5 + $0x68] sm:$0xff]
  %v5260 = vld [vmem:[%s5 + $0x70] sm:$0xff]
  %v5261 = vld [vmem:[%s5 + $0x78] sm:$0xff]
  %v5262 = vld [vmem:[%s5 + $0x80] sm:$0xff]
  %v5263 = vld [vmem:[%s5 + $0x88] sm:$0xff]
  %v5264 = vld [vmem:[%s5 + $0x90] sm:$0xff]
  %v5265 = vld [vmem:[%s5 + $0x98] sm:$0xff]
  %v5266 = vld [vmem:[%s5 + $0xa0] sm:$0xff]
  %v5267 = vld [vmem:[%s5 + $0xa8] sm:$0xff]
  %v5268 = vld [vmem:[%s5 + $0xb0] sm:$0xff]
  %v5269 = vld [vmem:[%s5 + $0xb8] sm:$0xff]
  %v5270 = vld [vmem:[%s5 + $0xc0] sm:$0xff]
  %v5271 = vld [vmem:[%s5 + $0xc8] sm:$0xff]
  %v5272 = vld [vmem:[%s5 + $0xd0] sm:$0xff]
  %v5273 = vld [vmem:[%s5 + $0xd8] sm:$0xff]
  %v5274 = vld [vmem:[%s5 + $0xe0] sm:$0xff]
  %v5275 = vld [vmem:[%s5 + $0xe8] sm:$0xff]
  %v5276 = vld [vmem:[%s5 + $0xf0] sm:$0xff]
  %v5277 = vld [vmem:[%s5 + $0xf8] sm:$0xff]
  %v5310 = vunpack.c.l.b16 %v5246
  %v5311 = vunpack.c.h.b16 %v5246
  %v5312 = vunpack.c.l.b16 %v5247
  %v5313 = vunpack.c.h.b16 %v5247
  %v5314 = vunpack.c.l.b16 %v5248
  %v5315 = vunpack.c.h.b16 %v5248
  %v5316 = vunpack.c.l.b16 %v5249
  %v5317 = vunpack.c.h.b16 %v5249
  %v5318 = vunpack.c.l.b16 %v5250
  %v5319 = vunpack.c.h.b16 %v5250
  %v5320 = vunpack.c.l.b16 %v5251
  %v5321 = vunpack.c.h.b16 %v5251
  %v5322 = vunpack.c.l.b16 %v5252
  %v5323 = vunpack.c.h.b16 %v5252
  %v5324 = vunpack.c.l.b16 %v5253
  %v5325 = vunpack.c.h.b16 %v5253
  %v5326 = vunpack.c.l.b16 %v5254
  %v5327 = vunpack.c.h.b16 %v5254
  %v5328 = vunpack.c.l.b16 %v5255
  %v5329 = vunpack.c.h.b16 %v5255
  %v5330 = vunpack.c.l.b16 %v5256
  %v5331 = vunpack.c.h.b16 %v5256
  %v5332 = vunpack.c.l.b16 %v5257
  %v5333 = vunpack.c.h.b16 %v5257
  %v5334 = vunpack.c.l.b16 %v5258
  %v5335 = vunpack.c.h.b16 %v5258
  %v5336 = vunpack.c.l.b16 %v5259
  %v5337 = vunpack.c.h.b16 %v5259
  %v5338 = vunpack.c.l.b16 %v5260
  %v5339 = vunpack.c.h.b16 %v5260
  %v5340 = vunpack.c.l.b16 %v5261
  %v5341 = vunpack.c.h.b16 %v5261
  %v5342 = vunpack.c.l.b16 %v5262
  %v5343 = vunpack.c.h.b16 %v5262
  %v5344 = vunpack.c.l.b16 %v5263
  %v5345 = vunpack.c.h.b16 %v5263
  %v5346 = vunpack.c.l.b16 %v5264
  %v5347 = vunpack.c.h.b16 %v5264
  %v5348 = vunpack.c.l.b16 %v5265
  %v5349 = vunpack.c.h.b16 %v5265
  %v5350 = vunpack.c.l.b16 %v5266
  %v5351 = vunpack.c.h.b16 %v5266
  %v5352 = vunpack.c.l.b16 %v5267
  %v5353 = vunpack.c.h.b16 %v5267
  %v5354 = vunpack.c.l.b16 %v5268
  %v5355 = vunpack.c.h.b16 %v5268
  %v5356 = vunpack.c.l.b16 %v5269
  %v5357 = vunpack.c.h.b16 %v5269
  %v5358 = vunpack.c.l.b16 %v5270
  %v5359 = vunpack.c.h.b16 %v5270
  %v5360 = vunpack.c.l.b16 %v5271
  %v5361 = vunpack.c.h.b16 %v5271
  %v5362 = vunpack.c.l.b16 %v5272
  %v5363 = vunpack.c.h.b16 %v5272
  %v5364 = vunpack.c.l.b16 %v5273
  %v5365 = vunpack.c.h.b16 %v5273
  %v5366 = vunpack.c.l.b16 %v5274
  %v5367 = vunpack.c.h.b16 %v5274
  %v5368 = vunpack.c.l.b16 %v5275
  %v5369 = vunpack.c.h.b16 %v5275
  %v5370 = vunpack.c.l.b16 %v5276
  %v5371 = vunpack.c.h.b16 %v5276
  %v5372 = vunpack.c.l.b16 %v5277
  %v5373 = vunpack.c.h.b16 %v5277
  %v5374 = vpack.c.b16 %v5314, %v5310
  %v5375 = vpack.c.b16 %v5315, %v5311
  %v5376 = vpack.c.b16 %v5316, %v5312
  %v5377 = vpack.c.b16 %v5317, %v5313
  %v5378 = vpack.c.b16 %v5322, %v5318
  %v5379 = vpack.c.b16 %v5323, %v5319
  %v5380 = vpack.c.b16 %v5324, %v5320
  %v5381 = vpack.c.b16 %v5325, %v5321
  %v5382 = vpack.c.b16 %v5330, %v5326
  %v5383 = vpack.c.b16 %v5331, %v5327
  %v5384 = vpack.c.b16 %v5332, %v5328
  %v5385 = vpack.c.b16 %v5333, %v5329
  %v5386 = vpack.c.b16 %v5338, %v5334
  %v5387 = vpack.c.b16 %v5339, %v5335
  %v5388 = vpack.c.b16 %v5340, %v5336
  %v5389 = vpack.c.b16 %v5341, %v5337
  %v5390 = vpack.c.b16 %v5346, %v5342
  %v5391 = vpack.c.b16 %v5347, %v5343
  %v5392 = vpack.c.b16 %v5348, %v5344
  %v5393 = vpack.c.b16 %v5349, %v5345
  %v5394 = vpack.c.b16 %v5354, %v5350
  %v5395 = vpack.c.b16 %v5355, %v5351
  %v5396 = vpack.c.b16 %v5356, %v5352
  %v5397 = vpack.c.b16 %v5357, %v5353
  %v5398 = vpack.c.b16 %v5362, %v5358
  %v5399 = vpack.c.b16 %v5363, %v5359
  %v5400 = vpack.c.b16 %v5364, %v5360
  %v5401 = vpack.c.b16 %v5365, %v5361
  %v5402 = vpack.c.b16 %v5370, %v5366
  %v5403 = vpack.c.b16 %v5371, %v5367
  %v5404 = vpack.c.b16 %v5372, %v5368
  %v5405 = vpack.c.b16 %v5373, %v5369
  %5438 = vmatprep.subr.bf16.mxu0 %v5375
  %5439 = vmatpush1.bf16.msra.mxu0 %v5374
  %5440 = vmatprep.subr.bf16.mxu0 %v5379
  %5441 = vmatpush1.bf16.msra.mxu0 %v5378
  %5442 = vmatprep.subr.bf16.mxu0 %v5383
  %5443 = vmatpush1.bf16.msra.mxu0 %v5382
  %5444 = vmatprep.subr.bf16.mxu0 %v5387
  %5445 = vmatpush1.bf16.msra.mxu0 %v5386
  %5446 = vmatprep.subr.bf16.mxu0 %v5391
  %5447 = vmatpush1.bf16.msra.mxu0 %v5390
  %5448 = vmatprep.subr.bf16.mxu0 %v5395
  %5449 = vmatpush1.bf16.msra.mxu0 %v5394
  %5450 = vmatprep.subr.bf16.mxu0 %v5399
  %5451 = vmatpush1.bf16.msra.mxu0 %v5398
  %5452 = vmatprep.subr.bf16.mxu0 %v5403
  %5453 = vmatpush1.bf16.msra.mxu0 %v5402
  %5454 = vmatprep.subr.bf16.mxu0 0
  %5455 = vmatpush1.bf16.msra.mxu0 0
  %5456 = vmatprep.subr.bf16.mxu0 0
  %5457 = vmatpush1.bf16.msra.mxu0 0
  %5458 = vmatprep.subr.bf16.mxu0 0
  %5459 = vmatpush1.bf16.msra.mxu0 0
  %5460 = vmatprep.subr.bf16.mxu0 0
  %5461 = vmatpush1.bf16.msra.mxu0 0
  %5462 = vmatprep.subr.bf16.mxu0 0
  %5463 = vmatpush1.bf16.msra.mxu0 0
  %5464 = vmatprep.subr.bf16.mxu0 0
  %5465 = vmatpush1.bf16.msra.mxu0 0
  %5466 = vmatprep.subr.bf16.mxu0 0
  %5467 = vmatpush1.bf16.msra.mxu0 0
  %5468 = vmatprep.subr.bf16.mxu0 0
  %5469 = vmatpush1.bf16.msra.mxu0 0
  %5470 = vmatprep.mubr.bf16.mxu0 0
  %5471 = vmatmul.mubr.bf16.gmra.mrb[0].mxu0 %v5245
  %v5472 = vpop.f32.mrb[0].mxu0
  %v5473 = vadd.f32 0.0, %v5472
  %v5474 = vpop.f32.mrb[0].mxu0
  %v5475 = vadd.f32 0.0, %v5474
  %v5476 = vpop.f32.mrb[0].mxu0
  %v5477 = vpop.f32.mrb[0].mxu0
  %5478 = vdwg.mxu0
  %5479 = vmatprep.subr.bf16.mxu0 %v5377
  %5480 = vmatpush1.bf16.msra.mxu0 %v5376
  %5481 = vmatprep.subr.bf16.mxu0 %v5381
  %5482 = vmatpush1.bf16.msra.mxu0 %v5380
  %5483 = vmatprep.subr.bf16.mxu0 %v5385
  %5484 = vmatpush1.bf16.msra.mxu0 %v5384
  %5485 = vmatprep.subr.bf16.mxu0 %v5389
  %5486 = vmatpush1.bf16.msra.mxu0 %v5388
  %5487 = vmatprep.subr.bf16.mxu0 %v5393
  %5488 = vmatpush1.bf16.msra.mxu0 %v5392
  %5489 = vmatprep.subr.bf16.mxu0 %v5397
  %5490 = vmatpush1.bf16.msra.mxu0 %v5396
  %5491 = vmatprep.subr.bf16.mxu0 %v5401
  %5492 = vmatpush1.bf16.msra.mxu0 %v5400
  %5493 = vmatprep.subr.bf16.mxu0 %v5405
  %5494 = vmatpush1.bf16.msra.mxu0 %v5404
  %5495 = vmatprep.subr.bf16.mxu0 0
  %5496 = vmatpush1.bf16.msra.mxu0 0
  %5497 = vmatprep.subr.bf16.mxu0 0
  %5498 = vmatpush1.bf16.msra.mxu0 0
  %5499 = vmatprep.subr.bf16.mxu0 0
  %5500 = vmatpush1.bf16.msra.mxu0 0
  %5501 = vmatprep.subr.bf16.mxu0 0
  %5502 = vmatpush1.bf16.msra.mxu0 0
  %5503 = vmatprep.subr.bf16.mxu0 0
  %5504 = vmatpush1.bf16.msra.mxu0 0
  %5505 = vmatprep.subr.bf16.mxu0 0
  %5506 = vmatpush1.bf16.msra.mxu0 0
  %5507 = vmatprep.subr.bf16.mxu0 0
  %5508 = vmatpush1.bf16.msra.mxu0 0
  %5509 = vmatprep.subr.bf16.mxu0 0
  %5510 = vmatpush1.bf16.msra.mxu0 0
  %5511 = vmatprep.mubr.bf16.mxu0 0
  %5512 = vmatmul.mubr.bf16.gmra.mrb[0].mxu0 %v5245
  %v5513 = vpop.f32.mrb[0].mxu0
  %v5514 = vadd.f32 0.0, %v5513
  %v5515 = vpop.f32.mrb[0].mxu0
  %v5516 = vadd.f32 0.0, %v5515
  %v5517 = vpop.f32.mrb[0].mxu0
  %v5518 = vpop.f32.mrb[0].mxu0
  %5519 = vdwg.mxu0
  %v5552 = vunpack.c.l.b16 %v5213
  %v5553 = vunpack.c.h.b16 %v5213
  %v5554 = vunpack.c.l.b16 %v5214
  %v5555 = vunpack.c.h.b16 %v5214
  %v5556 = vunpack.c.l.b16 %v5215
  %v5557 = vunpack.c.h.b16 %v5215
  %v5558 = vunpack.c.l.b16 %v5216
  %v5559 = vunpack.c.h.b16 %v5216
  %v5560 = vunpack.c.l.b16 %v5217
  %v5561 = vunpack.c.h.b16 %v5217
  %v5562 = vunpack.c.l.b16 %v5218
  %v5563 = vunpack.c.h.b16 %v5218
  %v5564 = vunpack.c.l.b16 %v5219
  %v5565 = vunpack.c.h.b16 %v5219
  %v5566 = vunpack.c.l.b16 %v5220
  %v5567 = vunpack.c.h.b16 %v5220
  %v5568 = vunpack.c.l.b16 %v5221
  %v5569 = vunpack.c.h.b16 %v5221
  %v5570 = vunpack.c.l.b16 %v5222
  %v5571 = vunpack.c.h.b16 %v5222
  %v5572 = vunpack.c.l.b16 %v5223
  %v5573 = vunpack.c.h.b16 %v5223
  %v5574 = vunpack.c.l.b16 %v5224
  %v5575 = vunpack.c.h.b16 %v5224
  %v5576 = vunpack.c.l.b16 %v5225
  %v5577 = vunpack.c.h.b16 %v5225
  %v5578 = vunpack.c.l.b16 %v5226
  %v5579 = vunpack.c.h.b16 %v5226
  %v5580 = vunpack.c.l.b16 %v5227
  %v5581 = vunpack.c.h.b16 %v5227
  %v5582 = vunpack.c.l.b16 %v5228
  %v5583 = vunpack.c.h.b16 %v5228
  %v5584 = vunpack.c.l.b16 %v5229
  %v5585 = vunpack.c.h.b16 %v5229
  %v5586 = vunpack.c.l.b16 %v5230
  %v5587 = vunpack.c.h.b16 %v5230
  %v5588 = vunpack.c.l.b16 %v5231
  %v5589 = vunpack.c.h.b16 %v5231
  %v5590 = vunpack.c.l.b16 %v5232
  %v5591 = vunpack.c.h.b16 %v5232
  %v5592 = vunpack.c.l.b16 %v5233
  %v5593 = vunpack.c.h.b16 %v5233
  %v5594 = vunpack.c.l.b16 %v5234
  %v5595 = vunpack.c.h.b16 %v5234
  %v5596 = vunpack.c.l.b16 %v5235
  %v5597 = vunpack.c.h.b16 %v5235
  %v5598 = vunpack.c.l.b16 %v5236
  %v5599 = vunpack.c.h.b16 %v5236
  %v5600 = vunpack.c.l.b16 %v5237
  %v5601 = vunpack.c.h.b16 %v5237
  %v5602 = vunpack.c.l.b16 %v5238
  %v5603 = vunpack.c.h.b16 %v5238
  %v5604 = vunpack.c.l.b16 %v5239
  %v5605 = vunpack.c.h.b16 %v5239
  %v5606 = vunpack.c.l.b16 %v5240
  %v5607 = vunpack.c.h.b16 %v5240
  %v5608 = vunpack.c.l.b16 %v5241
  %v5609 = vunpack.c.h.b16 %v5241
  %v5610 = vunpack.c.l.b16 %v5242
  %v5611 = vunpack.c.h.b16 %v5242
  %v5612 = vunpack.c.l.b16 %v5243
  %v5613 = vunpack.c.h.b16 %v5243
  %v5614 = vunpack.c.l.b16 %v5244
  %v5615 = vunpack.c.h.b16 %v5244
  %v5616 = vpack.c.b16 %v5556, %v5552
  %v5617 = vpack.c.b16 %v5557, %v5553
  %v5618 = vpack.c.b16 %v5558, %v5554
  %v5619 = vpack.c.b16 %v5559, %v5555
  %v5620 = vpack.c.b16 %v5564, %v5560
  %v5621 = vpack.c.b16 %v5565, %v5561
  %v5622 = vpack.c.b16 %v5566, %v5562
  %v5623 = vpack.c.b16 %v5567, %v5563
  %v5624 = vpack.c.b16 %v5572, %v5568
  %v5625 = vpack.c.b16 %v5573, %v5569
  %v5626 = vpack.c.b16 %v5574, %v5570
  %v5627 = vpack.c.b16 %v5575, %v5571
  %v5628 = vpack.c.b16 %v5580, %v5576
  %v5629 = vpack.c.b16 %v5581, %v5577
  %v5630 = vpack.c.b16 %v5582, %v5578
  %v5631 = vpack.c.b16 %v5583, %v5579
  %v5632 = vpack.c.b16 %v5588, %v5584
  %v5633 = vpack.c.b16 %v5589, %v5585
  %v5634 = vpack.c.b16 %v5590, %v5586
  %v5635 = vpack.c.b16 %v5591, %v5587
  %v5636 = vpack.c.b16 %v5596, %v5592
  %v5637 = vpack.c.b16 %v5597, %v5593
  %v5638 = vpack.c.b16 %v5598, %v5594
  %v5639 = vpack.c.b16 %v5599, %v5595
  %v5640 = vpack.c.b16 %v5604, %v5600
  %v5641 = vpack.c.b16 %v5605, %v5601
  %v5642 = vpack.c.b16 %v5606, %v5602
  %v5643 = vpack.c.b16 %v5607, %v5603
  %v5644 = vpack.c.b16 %v5612, %v5608
  %v5645 = vpack.c.b16 %v5613, %v5609
  %v5646 = vpack.c.b16 %v5614, %v5610
  %v5647 = vpack.c.b16 %v5615, %v5611
  %5680 = vmatprep.subr.bf16.mxu0 %v5617
  %5681 = vmatpush1.bf16.msra.mxu0 %v5616
  %5682 = vmatprep.subr.bf16.mxu0 %v5621
  %5683 = vmatpush1.bf16.msra.mxu0 %v5620
  %5684 = vmatprep.subr.bf16.mxu0 %v5625
  %5685 = vmatpush1.bf16.msra.mxu0 %v5624
  %5686 = vmatprep.subr.bf16.mxu0 %v5629
  %5687 = vmatpush1.bf16.msra.mxu0 %v5628
  %5688 = vmatprep.subr.bf16.mxu0 %v5633
  %5689 = vmatpush1.bf16.msra.mxu0 %v5632
  %5690 = vmatprep.subr.bf16.mxu0 %v5637
  %5691 = vmatpush1.bf16.msra.mxu0 %v5636
  %5692 = vmatprep.subr.bf16.mxu0 %v5641
  %5693 = vmatpush1.bf16.msra.mxu0 %v5640
  %5694 = vmatprep.subr.bf16.mxu0 %v5645
  %5695 = vmatpush1.bf16.msra.mxu0 %v5644
  %5696 = vmatprep.subr.bf16.mxu0 0
  %5697 = vmatpush1.bf16.msra.mxu0 0
  %5698 = vmatprep.subr.bf16.mxu0 0
  %5699 = vmatpush1.bf16.msra.mxu0 0
  %5700 = vmatprep.subr.bf16.mxu0 0
  %5701 = vmatpush1.bf16.msra.mxu0 0
  %5702 = vmatprep.subr.bf16.mxu0 0
  %5703 = vmatpush1.bf16.msra.mxu0 0
  %5704 = vmatprep.subr.bf16.mxu0 0
  %5705 = vmatpush1.bf16.msra.mxu0 0
  %5706 = vmatprep.subr.bf16.mxu0 0
  %5707 = vmatpush1.bf16.msra.mxu0 0
  %5708 = vmatprep.subr.bf16.mxu0 0
  %5709 = vmatpush1.bf16.msra.mxu0 0
  %5710 = vmatprep.subr.bf16.mxu0 0
  %5711 = vmatpush1.bf16.msra.mxu0 0
  %5712 = vmatprep.mubr.bf16.mxu0 0
  %5713 = vmatmul.mubr.bf16.gmra.mrb[0].mxu0 %v5212
  %v5714 = vpop.f32.mrb[0].mxu0
  %v5715 = vadd.f32 %v5473, %v5714
  %v5716 = vpop.f32.mrb[0].mxu0
  %v5717 = vadd.f32 %v5475, %v5716
  %v5718 = vpop.f32.mrb[0].mxu0
  %v5719 = vpop.f32.mrb[0].mxu0
  %5720 = vdwg.mxu0
  %5721 = vmatprep.subr.bf16.mxu0 %v5619
  %5722 = vmatpush1.bf16.msra.mxu0 %v5618
  %5723 = vmatprep.subr.bf16.mxu0 %v5623
  %5724 = vmatpush1.bf16.msra.mxu0 %v5622
  %5725 = vmatprep.subr.bf16.mxu0 %v5627
  %5726 = vmatpush1.bf16.msra.mxu0 %v5626
  %5727 = vmatprep.subr.bf16.mxu0 %v5631
  %5728 = vmatpush1.bf16.msra.mxu0 %v5630
  %5729 = vmatprep.subr.bf16.mxu0 %v5635
  %5730 = vmatpush1.bf16.msra.mxu0 %v5634
  %5731 = vmatprep.subr.bf16.mxu0 %v5639
  %5732 = vmatpush1.bf16.msra.mxu0 %v5638
  %5733 = vmatprep.subr.bf16.mxu0 %v5643
  %5734 = vmatpush1.bf16.msra.mxu0 %v5642
  %5735 = vmatprep.subr.bf16.mxu0 %v5647
  %5736 = vmatpush1.bf16.msra.mxu0 %v5646
  %5737 = vmatprep.subr.bf16.mxu0 0
  %5738 = vmatpush1.bf16.msra.mxu0 0
  %5739 = vmatprep.subr.bf16.mxu0 0
  %5740 = vmatpush1.bf16.msra.mxu0 0
  %5741 = vmatprep.subr.bf16.mxu0 0
  %5742 = vmatpush1.bf16.msra.mxu0 0
  %5743 = vmatprep.subr.bf16.mxu0 0
  %5744 = vmatpush1.bf16.msra.mxu0 0
  %5745 = vmatprep.subr.bf16.mxu0 0
  %5746 = vmatpush1.bf16.msra.mxu0 0
  %5747 = vmatprep.subr.bf16.mxu0 0
  %5748 = vmatpush1.bf16.msra.mxu0 0
  %5749 = vmatprep.subr.bf16.mxu0 0
  %5750 = vmatpush1.bf16.msra.mxu0 0
  %5751 = vmatprep.subr.bf16.mxu0 0
  %5752 = vmatpush1.bf16.msra.mxu0 0
  %5753 = vmatprep.mubr.bf16.mxu0 0
  %5754 = vmatmul.mubr.bf16.gmra.mrb[0].mxu0 %v5212
  %v5755 = vpop.f32.mrb[0].mxu0
  %v5756 = vadd.f32 %v5514, %v5755
  %v5757 = vpop.f32.mrb[0].mxu0
  %v5758 = vadd.f32 %v5516, %v5757
  %v5759 = vpop.f32.mrb[0].mxu0
  %v5760 = vpop.f32.mrb[0].mxu0
  %5761 = vdwg.mxu0
  %v5762 = vadd.f32 %v5715, %v1311
  %v5763 = vadd.f32 %v5717, %v1315
  %v5764 = vadd.f32 %v5756, %v1319
  %v5765 = vadd.f32 %v5758, %v1323
  %v5766 = vxor.u32 %v5762, 2147483648
  %v5767 = vmul.f32 %v5766, 1.442695
  %v5768 = vpow.pop %v5767
  %v5769 = vadd.f32 %v5768, 1.0
  %v5770 = vrcp.pop %v5769
  %v5771 = vmul.f32 1.0, %v5770
  %v5772 = vxor.u32 %v5763, 2147483648
  %v5773 = vmul.f32 %v5772, 1.442695
  %v5774 = vpow.pop %v5773
  %v5775 = vadd.f32 %v5774, 1.0
  %v5776 = vrcp.pop %v5775
  %v5777 = vmul.f32 1.0, %v5776
  %v5778 = vtanh.pop %v5764
  %v5779 = vxor.u32 %v5765, 2147483648
  %v5780 = vmul.f32 %v5779, 1.442695
  %v5781 = vpow.pop %v5780
  %v5782 = vadd.f32 %v5781, 1.0
  %v5783 = vrcp.pop %v5782
  %v5784 = vmul.f32 1.0, %v5783
  %v5785 = vmul.f32 %v5777, %v4900
  %v5786 = vmul.f32 %v5771, %v5778
  %v5787 = vadd.f32 %v5785, %v5786
  %v5788 = vtanh.pop %v5787
  %v5789 = vmul.f32 %v5784, %v5788
  %s5790 = scalar_lea.vmem %s7, 40
  %5791 = vst [vmem:[%s5790] sm:$0xff] %v5789
  %s5792 = scalar_lea.vmem [#allocation2], 192
  %v5793 = vld [vmem:[%s5792] sm:$0xff]
  %v5794 = vld [vmem:[%s5792 + $0x8] sm:$0xff]
  %v5795 = vld [vmem:[%s5792 + $0x10] sm:$0xff]
  %v5796 = vld [vmem:[%s5792 + $0x18] sm:$0xff]
  %v5797 = vld [vmem:[%s2] sm:$0xff]
  %v5798 = vld [vmem:[%s2 + $0x8] sm:$0xff]
  %v5799 = vld [vmem:[%s2 + $0x10] sm:$0xff]
  %v5800 = vld [vmem:[%s2 + $0x18] sm:$0xff]
  %v5801 = vld [vmem:[%s2 + $0x20] sm:$0xff]
  %v5802 = vld [vmem:[%s2 + $0x28] sm:$0xff]
  %v5803 = vld [vmem:[%s2 + $0x30] sm:$0xff]
  %v5804 = vld [vmem:[%s2 + $0x38] sm:$0xff]
  %v5805 = vld [vmem:[%s2 + $0x40] sm:$0xff]
  %v5806 = vld [vmem:[%s2 + $0x48] sm:$0xff]
  %v5807 = vld [vmem:[%s2 + $0x50] sm:$0xff]
  %v5808 = vld [vmem:[%s2 + $0x58] sm:$0xff]
  %v5809 = vld [vmem:[%s2 + $0x60] sm:$0xff]
  %v5810 = vld [vmem:[%s2 + $0x68] sm:$0xff]
  %v5811 = vld [vmem:[%s2 + $0x70] sm:$0xff]
  %v5812 = vld [vmem:[%s2 + $0x78] sm:$0xff]
  %v5813 = vld [vmem:[%s2 + $0x80] sm:$0xff]
  %v5814 = vld [vmem:[%s2 + $0x88] sm:$0xff]
  %v5815 = vld [vmem:[%s2 + $0x90] sm:$0xff]
  %v5816 = vld [vmem:[%s2 + $0x98] sm:$0xff]
  %v5817 = vld [vmem:[%s2 + $0xa0] sm:$0xff]
  %v5818 = vld [vmem:[%s2 + $0xa8] sm:$0xff]
  %v5819 = vld [vmem:[%s2 + $0xb0] sm:$0xff]
  %v5820 = vld [vmem:[%s2 + $0xb8] sm:$0xff]
  %v5821 = vld [vmem:[%s2 + $0xc0] sm:$0xff]
  %v5822 = vld [vmem:[%s2 + $0xc8] sm:$0xff]
  %v5823 = vld [vmem:[%s2 + $0xd0] sm:$0xff]
  %v5824 = vld [vmem:[%s2 + $0xd8] sm:$0xff]
  %v5825 = vld [vmem:[%s2 + $0xe0] sm:$0xff]
  %v5826 = vld [vmem:[%s2 + $0xe8] sm:$0xff]
  %v5827 = vld [vmem:[%s2 + $0xf0] sm:$0xff]
  %v5828 = vld [vmem:[%s2 + $0xf8] sm:$0xff]
  %v5861 = vunpack.c.l.b16 %v5797
  %v5862 = vunpack.c.h.b16 %v5797
  %v5863 = vunpack.c.l.b16 %v5798
  %v5864 = vunpack.c.h.b16 %v5798
  %v5865 = vunpack.c.l.b16 %v5799
  %v5866 = vunpack.c.h.b16 %v5799
  %v5867 = vunpack.c.l.b16 %v5800
  %v5868 = vunpack.c.h.b16 %v5800
  %v5869 = vunpack.c.l.b16 %v5801
  %v5870 = vunpack.c.h.b16 %v5801
  %v5871 = vunpack.c.l.b16 %v5802
  %v5872 = vunpack.c.h.b16 %v5802
  %v5873 = vunpack.c.l.b16 %v5803
  %v5874 = vunpack.c.h.b16 %v5803
  %v5875 = vunpack.c.l.b16 %v5804
  %v5876 = vunpack.c.h.b16 %v5804
  %v5877 = vunpack.c.l.b16 %v5805
  %v5878 = vunpack.c.h.b16 %v5805
  %v5879 = vunpack.c.l.b16 %v5806
  %v5880 = vunpack.c.h.b16 %v5806
  %v5881 = vunpack.c.l.b16 %v5807
  %v5882 = vunpack.c.h.b16 %v5807
  %v5883 = vunpack.c.l.b16 %v5808
  %v5884 = vunpack.c.h.b16 %v5808
  %v5885 = vunpack.c.l.b16 %v5809
  %v5886 = vunpack.c.h.b16 %v5809
  %v5887 = vunpack.c.l.b16 %v5810
  %v5888 = vunpack.c.h.b16 %v5810
  %v5889 = vunpack.c.l.b16 %v5811
  %v5890 = vunpack.c.h.b16 %v5811
  %v5891 = vunpack.c.l.b16 %v5812
  %v5892 = vunpack.c.h.b16 %v5812
  %v5893 = vunpack.c.l.b16 %v5813
  %v5894 = vunpack.c.h.b16 %v5813
  %v5895 = vunpack.c.l.b16 %v5814
  %v5896 = vunpack.c.h.b16 %v5814
  %v5897 = vunpack.c.l.b16 %v5815
  %v5898 = vunpack.c.h.b16 %v5815
  %v5899 = vunpack.c.l.b16 %v5816
  %v5900 = vunpack.c.h.b16 %v5816
  %v5901 = vunpack.c.l.b16 %v5817
  %v5902 = vunpack.c.h.b16 %v5817
  %v5903 = vunpack.c.l.b16 %v5818
  %v5904 = vunpack.c.h.b16 %v5818
  %v5905 = vunpack.c.l.b16 %v5819
  %v5906 = vunpack.c.h.b16 %v5819
  %v5907 = vunpack.c.l.b16 %v5820
  %v5908 = vunpack.c.h.b16 %v5820
  %v5909 = vunpack.c.l.b16 %v5821
  %v5910 = vunpack.c.h.b16 %v5821
  %v5911 = vunpack.c.l.b16 %v5822
  %v5912 = vunpack.c.h.b16 %v5822
  %v5913 = vunpack.c.l.b16 %v5823
  %v5914 = vunpack.c.h.b16 %v5823
  %v5915 = vunpack.c.l.b16 %v5824
  %v5916 = vunpack.c.h.b16 %v5824
  %v5917 = vunpack.c.l.b16 %v5825
  %v5918 = vunpack.c.h.b16 %v5825
  %v5919 = vunpack.c.l.b16 %v5826
  %v5920 = vunpack.c.h.b16 %v5826
  %v5921 = vunpack.c.l.b16 %v5827
  %v5922 = vunpack.c.h.b16 %v5827
  %v5923 = vunpack.c.l.b16 %v5828
  %v5924 = vunpack.c.h.b16 %v5828
  %v5925 = vpack.c.b16 %v5865, %v5861
  %v5926 = vpack.c.b16 %v5866, %v5862
  %v5927 = vpack.c.b16 %v5867, %v5863
  %v5928 = vpack.c.b16 %v5868, %v5864
  %v5929 = vpack.c.b16 %v5873, %v5869
  %v5930 = vpack.c.b16 %v5874, %v5870
  %v5931 = vpack.c.b16 %v5875, %v5871
  %v5932 = vpack.c.b16 %v5876, %v5872
  %v5933 = vpack.c.b16 %v5881, %v5877
  %v5934 = vpack.c.b16 %v5882, %v5878
  %v5935 = vpack.c.b16 %v5883, %v5879
  %v5936 = vpack.c.b16 %v5884, %v5880
  %v5937 = vpack.c.b16 %v5889, %v5885
  %v5938 = vpack.c.b16 %v5890, %v5886
  %v5939 = vpack.c.b16 %v5891, %v5887
  %v5940 = vpack.c.b16 %v5892, %v5888
  %v5941 = vpack.c.b16 %v5897, %v5893
  %v5942 = vpack.c.b16 %v5898, %v5894
  %v5943 = vpack.c.b16 %v5899, %v5895
  %v5944 = vpack.c.b16 %v5900, %v5896
  %v5945 = vpack.c.b16 %v5905, %v5901
  %v5946 = vpack.c.b16 %v5906, %v5902
  %v5947 = vpack.c.b16 %v5907, %v5903
  %v5948 = vpack.c.b16 %v5908, %v5904
  %v5949 = vpack.c.b16 %v5913, %v5909
  %v5950 = vpack.c.b16 %v5914, %v5910
  %v5951 = vpack.c.b16 %v5915, %v5911
  %v5952 = vpack.c.b16 %v5916, %v5912
  %v5953 = vpack.c.b16 %v5921, %v5917
  %v5954 = vpack.c.b16 %v5922, %v5918
  %v5955 = vpack.c.b16 %v5923, %v5919
  %v5956 = vpack.c.b16 %v5924, %v5920
  %5989 = vmatprep.subr.bf16.mxu0 %v5926
  %5990 = vmatpush1.bf16.msra.mxu0 %v5925
  %5991 = vmatprep.subr.bf16.mxu0 %v5930
  %5992 = vmatpush1.bf16.msra.mxu0 %v5929
  %5993 = vmatprep.subr.bf16.mxu0 %v5934
  %5994 = vmatpush1.bf16.msra.mxu0 %v5933
  %5995 = vmatprep.subr.bf16.mxu0 %v5938
  %5996 = vmatpush1.bf16.msra.mxu0 %v5937
  %5997 = vmatprep.subr.bf16.mxu0 %v5942
  %5998 = vmatpush1.bf16.msra.mxu0 %v5941
  %5999 = vmatprep.subr.bf16.mxu0 %v5946
  %6000 = vmatpush1.bf16.msra.mxu0 %v5945
  %6001 = vmatprep.subr.bf16.mxu0 %v5950
  %6002 = vmatpush1.bf16.msra.mxu0 %v5949
  %6003 = vmatprep.subr.bf16.mxu0 %v5954
  %6004 = vmatpush1.bf16.msra.mxu0 %v5953
  %6005 = vmatprep.subr.bf16.mxu0 0
  %6006 = vmatpush1.bf16.msra.mxu0 0
  %6007 = vmatprep.subr.bf16.mxu0 0
  %6008 = vmatpush1.bf16.msra.mxu0 0
  %6009 = vmatprep.subr.bf16.mxu0 0
  %6010 = vmatpush1.bf16.msra.mxu0 0
  %6011 = vmatprep.subr.bf16.mxu0 0
  %6012 = vmatpush1.bf16.msra.mxu0 0
  %6013 = vmatprep.subr.bf16.mxu0 0
  %6014 = vmatpush1.bf16.msra.mxu0 0
  %6015 = vmatprep.subr.bf16.mxu0 0
  %6016 = vmatpush1.bf16.msra.mxu0 0
  %6017 = vmatprep.subr.bf16.mxu0 0
  %6018 = vmatpush1.bf16.msra.mxu0 0
  %6019 = vmatprep.subr.bf16.mxu0 0
  %6020 = vmatpush1.bf16.msra.mxu0 0
  %6021 = vmatprep.mubr.bf16.mxu0 0
  %6022 = vmatmul.mubr.bf16.gmra.mrb[0].mxu0 %v5212
  %v6023 = vpop.f32.mrb[0].mxu0
  %v6024 = vadd.f32 0.0, %v6023
  %v6025 = vpop.f32.mrb[0].mxu0
  %v6026 = vadd.f32 0.0, %v6025
  %v6027 = vpop.f32.mrb[0].mxu0
  %v6028 = vpop.f32.mrb[0].mxu0
  %6029 = vdwg.mxu0
  %6030 = vmatprep.subr.bf16.mxu0 %v5928
  %6031 = vmatpush1.bf16.msra.mxu0 %v5927
  %6032 = vmatprep.subr.bf16.mxu0 %v5932
  %6033 = vmatpush1.bf16.msra.mxu0 %v5931
  %6034 = vmatprep.subr.bf16.mxu0 %v5936
  %6035 = vmatpush1.bf16.msra.mxu0 %v5935
  %6036 = vmatprep.subr.bf16.mxu0 %v5940
  %6037 = vmatpush1.bf16.msra.mxu0 %v5939
  %6038 = vmatprep.subr.bf16.mxu0 %v5944
  %6039 = vmatpush1.bf16.msra.mxu0 %v5943
  %6040 = vmatprep.subr.bf16.mxu0 %v5948
  %6041 = vmatpush1.bf16.msra.mxu0 %v5947
  %6042 = vmatprep.subr.bf16.mxu0 %v5952
  %6043 = vmatpush1.bf16.msra.mxu0 %v5951
  %6044 = vmatprep.subr.bf16.mxu0 %v5956
  %6045 = vmatpush1.bf16.msra.mxu0 %v5955
  %6046 = vmatprep.subr.bf16.mxu0 0
  %6047 = vmatpush1.bf16.msra.mxu0 0
  %6048 = vmatprep.subr.bf16.mxu0 0
  %6049 = vmatpush1.bf16.msra.mxu0 0
  %6050 = vmatprep.subr.bf16.mxu0 0
  %6051 = vmatpush1.bf16.msra.mxu0 0
  %6052 = vmatprep.subr.bf16.mxu0 0
  %6053 = vmatpush1.bf16.msra.mxu0 0
  %6054 = vmatprep.subr.bf16.mxu0 0
  %6055 = vmatpush1.bf16.msra.mxu0 0
  %6056 = vmatprep.subr.bf16.mxu0 0
  %6057 = vmatpush1.bf16.msra.mxu0 0
  %6058 = vmatprep.subr.bf16.mxu0 0
  %6059 = vmatpush1.bf16.msra.mxu0 0
  %6060 = vmatprep.subr.bf16.mxu0 0
  %6061 = vmatpush1.bf16.msra.mxu0 0
  %6062 = vmatprep.mubr.bf16.mxu0 0
  %6063 = vmatmul.mubr.bf16.gmra.mrb[0].mxu0 %v5212
  %v6064 = vpop.f32.mrb[0].mxu0
  %v6065 = vadd.f32 0.0, %v6064
  %v6066 = vpop.f32.mrb[0].mxu0
  %v6067 = vadd.f32 0.0, %v6066
  %v6068 = vpop.f32.mrb[0].mxu0
  %v6069 = vpop.f32.mrb[0].mxu0
  %6070 = vdwg.mxu0
  %v6071 = vadd.f32 %v5793, %v6024
  %v6072 = vadd.f32 %v5794, %v6026
  %v6073 = vadd.f32 %v5795, %v6065
  %v6074 = vadd.f32 %v5796, %v6067
  %v6075 = vxor.u32 %v6071, 2147483648
  %v6076 = vmul.f32 %v6075, 1.442695
  %v6077 = vpow.pop %v6076
  %v6078 = vadd.f32 %v6077, 1.0
  %v6079 = vrcp.pop %v6078
  %v6080 = vmul.f32 1.0, %v6079
  %v6081 = vxor.u32 %v6072, 2147483648
  %v6082 = vmul.f32 %v6081, 1.442695
  %v6083 = vpow.pop %v6082
  %v6084 = vadd.f32 %v6083, 1.0
  %v6085 = vrcp.pop %v6084
  %v6086 = vmul.f32 1.0, %v6085
  %v6087 = vtanh.pop %v6073
  %v6088 = vxor.u32 %v6074, 2147483648
  %v6089 = vmul.f32 %v6088, 1.442695
  %v6090 = vpow.pop %v6089
  %v6091 = vadd.f32 %v6090, 1.0
  %v6092 = vrcp.pop %v6091
  %v6093 = vmul.f32 1.0, %v6092
  %v6094 = vmul.f32 %v6086, %v5209
  %v6095 = vmul.f32 %v6080, %v6087
  %v6096 = vadd.f32 %v6094, %v6095
  %v6097 = vtanh.pop %v6096
  %v6098 = vmul.f32 %v6093, %v6097
  %v6099 = vpack.c.bf16 %v6098, %v6098
  %v6100 = vld [vmem:[%s4] sm:$0xff]
  %v6101 = vld [vmem:[%s4 + $0x8] sm:$0xff]
  %v6102 = vld [vmem:[%s4 + $0x10] sm:$0xff]
  %v6103 = vld [vmem:[%s4 + $0x18] sm:$0xff]
  %v6104 = vld [vmem:[%s4 + $0x20] sm:$0xff]
  %v6105 = vld [vmem:[%s4 + $0x28] sm:$0xff]
  %v6106 = vld [vmem:[%s4 + $0x30] sm:$0xff]
  %v6107 = vld [vmem:[%s4 + $0x38] sm:$0xff]
  %v6108 = vld [vmem:[%s4 + $0x40] sm:$0xff]
  %v6109 = vld [vmem:[%s4 + $0x48] sm:$0xff]
  %v6110 = vld [vmem:[%s4 + $0x50] sm:$0xff]
  %v6111 = vld [vmem:[%s4 + $0x58] sm:$0xff]
  %v6112 = vld [vmem:[%s4 + $0x60] sm:$0xff]
  %v6113 = vld [vmem:[%s4 + $0x68] sm:$0xff]
  %v6114 = vld [vmem:[%s4 + $0x70] sm:$0xff]
  %v6115 = vld [vmem:[%s4 + $0x78] sm:$0xff]
  %v6116 = vld [vmem:[%s4 + $0x80] sm:$0xff]
  %v6117 = vld [vmem:[%s4 + $0x88] sm:$0xff]
  %v6118 = vld [vmem:[%s4 + $0x90] sm:$0xff]
  %v6119 = vld [vmem:[%s4 + $0x98] sm:$0xff]
  %v6120 = vld [vmem:[%s4 + $0xa0] sm:$0xff]
  %v6121 = vld [vmem:[%s4 + $0xa8] sm:$0xff]
  %v6122 = vld [vmem:[%s4 + $0xb0] sm:$0xff]
  %v6123 = vld [vmem:[%s4 + $0xb8] sm:$0xff]
  %v6124 = vld [vmem:[%s4 + $0xc0] sm:$0xff]
  %v6125 = vld [vmem:[%s4 + $0xc8] sm:$0xff]
  %v6126 = vld [vmem:[%s4 + $0xd0] sm:$0xff]
  %v6127 = vld [vmem:[%s4 + $0xd8] sm:$0xff]
  %v6128 = vld [vmem:[%s4 + $0xe0] sm:$0xff]
  %v6129 = vld [vmem:[%s4 + $0xe8] sm:$0xff]
  %v6130 = vld [vmem:[%s4 + $0xf0] sm:$0xff]
  %v6131 = vld [vmem:[%s4 + $0xf8] sm:$0xff]
  %v6132 = vpack.c.bf16 %v5789, %v5789
  %v6133 = vld [vmem:[%s5] sm:$0xff]
  %v6134 = vld [vmem:[%s5 + $0x8] sm:$0xff]
  %v6135 = vld [vmem:[%s5 + $0x10] sm:$0xff]
  %v6136 = vld [vmem:[%s5 + $0x18] sm:$0xff]
  %v6137 = vld [vmem:[%s5 + $0x20] sm:$0xff]
  %v6138 = vld [vmem:[%s5 + $0x28] sm:$0xff]
  %v6139 = vld [vmem:[%s5 + $0x30] sm:$0xff]
  %v6140 = vld [vmem:[%s5 + $0x38] sm:$0xff]
  %v6141 = vld [vmem:[%s5 + $0x40] sm:$0xff]
  %v6142 = vld [vmem:[%s5 + $0x48] sm:$0xff]
  %v6143 = vld [vmem:[%s5 + $0x50] sm:$0xff]
  %v6144 = vld [vmem:[%s5 + $0x58] sm:$0xff]
  %v6145 = vld [vmem:[%s5 + $0x60] sm:$0xff]
  %v6146 = vld [vmem:[%s5 + $0x68] sm:$0xff]
  %v6147 = vld [vmem:[%s5 + $0x70] sm:$0xff]
  %v6148 = vld [vmem:[%s5 + $0x78] sm:$0xff]
  %v6149 = vld [vmem:[%s5 + $0x80] sm:$0xff]
  %v6150 = vld [vmem:[%s5 + $0x88] sm:$0xff]
  %v6151 = vld [vmem:[%s5 + $0x90] sm:$0xff]
  %v6152 = vld [vmem:[%s5 + $0x98] sm:$0xff]
  %v6153 = vld [vmem:[%s5 + $0xa0] sm:$0xff]
  %v6154 = vld [vmem:[%s5 + $0xa8] sm:$0xff]
  %v6155 = vld [vmem:[%s5 + $0xb0] sm:$0xff]
  %v6156 = vld [vmem:[%s5 + $0xb8] sm:$0xff]
  %v6157 = vld [vmem:[%s5 + $0xc0] sm:$0xff]
  %v6158 = vld [vmem:[%s5 + $0xc8] sm:$0xff]
  %v6159 = vld [vmem:[%s5 + $0xd0] sm:$0xff]
  %v6160 = vld [vmem:[%s5 + $0xd8] sm:$0xff]
  %v6161 = vld [vmem:[%s5 + $0xe0] sm:$0xff]
  %v6162 = vld [vmem:[%s5 + $0xe8] sm:$0xff]
  %v6163 = vld [vmem:[%s5 + $0xf0] sm:$0xff]
  %v6164 = vld [vmem:[%s5 + $0xf8] sm:$0xff]
  %v6197 = vunpack.c.l.b16 %v6133
  %v6198 = vunpack.c.h.b16 %v6133
  %v6199 = vunpack.c.l.b16 %v6134
  %v6200 = vunpack.c.h.b16 %v6134
  %v6201 = vunpack.c.l.b16 %v6135
  %v6202 = vunpack.c.h.b16 %v6135
  %v6203 = vunpack.c.l.b16 %v6136
  %v6204 = vunpack.c.h.b16 %v6136
  %v6205 = vunpack.c.l.b16 %v6137
  %v6206 = vunpack.c.h.b16 %v6137
  %v6207 = vunpack.c.l.b16 %v6138
  %v6208 = vunpack.c.h.b16 %v6138
  %v6209 = vunpack.c.l.b16 %v6139
  %v6210 = vunpack.c.h.b16 %v6139
  %v6211 = vunpack.c.l.b16 %v6140
  %v6212 = vunpack.c.h.b16 %v6140
  %v6213 = vunpack.c.l.b16 %v6141
  %v6214 = vunpack.c.h.b16 %v6141
  %v6215 = vunpack.c.l.b16 %v6142
  %v6216 = vunpack.c.h.b16 %v6142
  %v6217 = vunpack.c.l.b16 %v6143
  %v6218 = vunpack.c.h.b16 %v6143
  %v6219 = vunpack.c.l.b16 %v6144
  %v6220 = vunpack.c.h.b16 %v6144
  %v6221 = vunpack.c.l.b16 %v6145
  %v6222 = vunpack.c.h.b16 %v6145
  %v6223 = vunpack.c.l.b16 %v6146
  %v6224 = vunpack.c.h.b16 %v6146
  %v6225 = vunpack.c.l.b16 %v6147
  %v6226 = vunpack.c.h.b16 %v6147
  %v6227 = vunpack.c.l.b16 %v6148
  %v6228 = vunpack.c.h.b16 %v6148
  %v6229 = vunpack.c.l.b16 %v6149
  %v6230 = vunpack.c.h.b16 %v6149
  %v6231 = vunpack.c.l.b16 %v6150
  %v6232 = vunpack.c.h.b16 %v6150
  %v6233 = vunpack.c.l.b16 %v6151
  %v6234 = vunpack.c.h.b16 %v6151
  %v6235 = vunpack.c.l.b16 %v6152
  %v6236 = vunpack.c.h.b16 %v6152
  %v6237 = vunpack.c.l.b16 %v6153
  %v6238 = vunpack.c.h.b16 %v6153
  %v6239 = vunpack.c.l.b16 %v6154
  %v6240 = vunpack.c.h.b16 %v6154
  %v6241 = vunpack.c.l.b16 %v6155
  %v6242 = vunpack.c.h.b16 %v6155
  %v6243 = vunpack.c.l.b16 %v6156
  %v6244 = vunpack.c.h.b16 %v6156
  %v6245 = vunpack.c.l.b16 %v6157
  %v6246 = vunpack.c.h.b16 %v6157
  %v6247 = vunpack.c.l.b16 %v6158
  %v6248 = vunpack.c.h.b16 %v6158
  %v6249 = vunpack.c.l.b16 %v6159
  %v6250 = vunpack.c.h.b16 %v6159
  %v6251 = vunpack.c.l.b16 %v6160
  %v6252 = vunpack.c.h.b16 %v6160
  %v6253 = vunpack.c.l.b16 %v6161
  %v6254 = vunpack.c.h.b16 %v6161
  %v6255 = vunpack.c.l.b16 %v6162
  %v6256 = vunpack.c.h.b16 %v6162
  %v6257 = vunpack.c.l.b16 %v6163
  %v6258 = vunpack.c.h.b16 %v6163
  %v6259 = vunpack.c.l.b16 %v6164
  %v6260 = vunpack.c.h.b16 %v6164
  %v6261 = vpack.c.b16 %v6201, %v6197
  %v6262 = vpack.c.b16 %v6202, %v6198
  %v6263 = vpack.c.b16 %v6203, %v6199
  %v6264 = vpack.c.b16 %v6204, %v6200
  %v6265 = vpack.c.b16 %v6209, %v6205
  %v6266 = vpack.c.b16 %v6210, %v6206
  %v6267 = vpack.c.b16 %v6211, %v6207
  %v6268 = vpack.c.b16 %v6212, %v6208
  %v6269 = vpack.c.b16 %v6217, %v6213
  %v6270 = vpack.c.b16 %v6218, %v6214
  %v6271 = vpack.c.b16 %v6219, %v6215
  %v6272 = vpack.c.b16 %v6220, %v6216
  %v6273 = vpack.c.b16 %v6225, %v6221
  %v6274 = vpack.c.b16 %v6226, %v6222
  %v6275 = vpack.c.b16 %v6227, %v6223
  %v6276 = vpack.c.b16 %v6228, %v6224
  %v6277 = vpack.c.b16 %v6233, %v6229
  %v6278 = vpack.c.b16 %v6234, %v6230
  %v6279 = vpack.c.b16 %v6235, %v6231
  %v6280 = vpack.c.b16 %v6236, %v6232
  %v6281 = vpack.c.b16 %v6241, %v6237
  %v6282 = vpack.c.b16 %v6242, %v6238
  %v6283 = vpack.c.b16 %v6243, %v6239
  %v6284 = vpack.c.b16 %v6244, %v6240
  %v6285 = vpack.c.b16 %v6249, %v6245
  %v6286 = vpack.c.b16 %v6250, %v6246
  %v6287 = vpack.c.b16 %v6251, %v6247
  %v6288 = vpack.c.b16 %v6252, %v6248
  %v6289 = vpack.c.b16 %v6257, %v6253
  %v6290 = vpack.c.b16 %v6258, %v6254
  %v6291 = vpack.c.b16 %v6259, %v6255
  %v6292 = vpack.c.b16 %v6260, %v6256
  %6325 = vmatprep.subr.bf16.mxu0 %v6262
  %6326 = vmatpush1.bf16.msra.mxu0 %v6261
  %6327 = vmatprep.subr.bf16.mxu0 %v6266
  %6328 = vmatpush1.bf16.msra.mxu0 %v6265
  %6329 = vmatprep.subr.bf16.mxu0 %v6270
  %6330 = vmatpush1.bf16.msra.mxu0 %v6269
  %6331 = vmatprep.subr.bf16.mxu0 %v6274
  %6332 = vmatpush1.bf16.msra.mxu0 %v6273
  %6333 = vmatprep.subr.bf16.mxu0 %v6278
  %6334 = vmatpush1.bf16.msra.mxu0 %v6277
  %6335 = vmatprep.subr.bf16.mxu0 %v6282
  %6336 = vmatpush1.bf16.msra.mxu0 %v6281
  %6337 = vmatprep.subr.bf16.mxu0 %v6286
  %6338 = vmatpush1.bf16.msra.mxu0 %v6285
  %6339 = vmatprep.subr.bf16.mxu0 %v6290
  %6340 = vmatpush1.bf16.msra.mxu0 %v6289
  %6341 = vmatprep.subr.bf16.mxu0 0
  %6342 = vmatpush1.bf16.msra.mxu0 0
  %6343 = vmatprep.subr.bf16.mxu0 0
  %6344 = vmatpush1.bf16.msra.mxu0 0
  %6345 = vmatprep.subr.bf16.mxu0 0
  %6346 = vmatpush1.bf16.msra.mxu0 0
  %6347 = vmatprep.subr.bf16.mxu0 0
  %6348 = vmatpush1.bf16.msra.mxu0 0
  %6349 = vmatprep.subr.bf16.mxu0 0
  %6350 = vmatpush1.bf16.msra.mxu0 0
  %6351 = vmatprep.subr.bf16.mxu0 0
  %6352 = vmatpush1.bf16.msra.mxu0 0
  %6353 = vmatprep.subr.bf16.mxu0 0
  %6354 = vmatpush1.bf16.msra.mxu0 0
  %6355 = vmatprep.subr.bf16.mxu0 0
  %6356 = vmatpush1.bf16.msra.mxu0 0
  %6357 = vmatprep.mubr.bf16.mxu0 0
  %6358 = vmatmul.mubr.bf16.gmra.mrb[0].mxu0 %v6132
  %v6359 = vpop.f32.mrb[0].mxu0
  %v6360 = vadd.f32 0.0, %v6359
  %v6361 = vpop.f32.mrb[0].mxu0
  %v6362 = vadd.f32 0.0, %v6361
  %v6363 = vpop.f32.mrb[0].mxu0
  %v6364 = vpop.f32.mrb[0].mxu0
  %6365 = vdwg.mxu0
  %6366 = vmatprep.subr.bf16.mxu0 %v6264
  %6367 = vmatpush1.bf16.msra.mxu0 %v6263
  %6368 = vmatprep.subr.bf16.mxu0 %v6268
  %6369 = vmatpush1.bf16.msra.mxu0 %v6267
  %6370 = vmatprep.subr.bf16.mxu0 %v6272
  %6371 = vmatpush1.bf16.msra.mxu0 %v6271
  %6372 = vmatprep.subr.bf16.mxu0 %v6276
  %6373 = vmatpush1.bf16.msra.mxu0 %v6275
  %6374 = vmatprep.subr.bf16.mxu0 %v6280
  %6375 = vmatpush1.bf16.msra.mxu0 %v6279
  %6376 = vmatprep.subr.bf16.mxu0 %v6284
  %6377 = vmatpush1.bf16.msra.mxu0 %v6283
  %6378 = vmatprep.subr.bf16.mxu0 %v6288
  %6379 = vmatpush1.bf16.msra.mxu0 %v6287
  %6380 = vmatprep.subr.bf16.mxu0 %v6292
  %6381 = vmatpush1.bf16.msra.mxu0 %v6291
  %6382 = vmatprep.subr.bf16.mxu0 0
  %6383 = vmatpush1.bf16.msra.mxu0 0
  %6384 = vmatprep.subr.bf16.mxu0 0
  %6385 = vmatpush1.bf16.msra.mxu0 0
  %6386 = vmatprep.subr.bf16.mxu0 0
  %6387 = vmatpush1.bf16.msra.mxu0 0
  %6388 = vmatprep.subr.bf16.mxu0 0
  %6389 = vmatpush1.bf16.msra.mxu0 0
  %6390 = vmatprep.subr.bf16.mxu0 0
  %6391 = vmatpush1.bf16.msra.mxu0 0
  %6392 = vmatprep.subr.bf16.mxu0 0
  %6393 = vmatpush1.bf16.msra.mxu0 0
  %6394 = vmatprep.subr.bf16.mxu0 0
  %6395 = vmatpush1.bf16.msra.mxu0 0
  %6396 = vmatprep.subr.bf16.mxu0 0
  %6397 = vmatpush1.bf16.msra.mxu0 0
  %6398 = vmatprep.mubr.bf16.mxu0 0
  %6399 = vmatmul.mubr.bf16.gmra.mrb[0].mxu0 %v6132
  %v6400 = vpop.f32.mrb[0].mxu0
  %v6401 = vadd.f32 0.0, %v6400
  %v6402 = vpop.f32.mrb[0].mxu0
  %v6403 = vadd.f32 0.0, %v6402
  %v6404 = vpop.f32.mrb[0].mxu0
  %v6405 = vpop.f32.mrb[0].mxu0
  %6406 = vdwg.mxu0
  %v6439 = vunpack.c.l.b16 %v6100
  %v6440 = vunpack.c.h.b16 %v6100
  %v6441 = vunpack.c.l.b16 %v6101
  %v6442 = vunpack.c.h.b16 %v6101
  %v6443 = vunpack.c.l.b16 %v6102
  %v6444 = vunpack.c.h.b16 %v6102
  %v6445 = vunpack.c.l.b16 %v6103
  %v6446 = vunpack.c.h.b16 %v6103
  %v6447 = vunpack.c.l.b16 %v6104
  %v6448 = vunpack.c.h.b16 %v6104
  %v6449 = vunpack.c.l.b16 %v6105
  %v6450 = vunpack.c.h.b16 %v6105
  %v6451 = vunpack.c.l.b16 %v6106
  %v6452 = vunpack.c.h.b16 %v6106
  %v6453 = vunpack.c.l.b16 %v6107
  %v6454 = vunpack.c.h.b16 %v6107
  %v6455 = vunpack.c.l.b16 %v6108
  %v6456 = vunpack.c.h.b16 %v6108
  %v6457 = vunpack.c.l.b16 %v6109
  %v6458 = vunpack.c.h.b16 %v6109
  %v6459 = vunpack.c.l.b16 %v6110
  %v6460 = vunpack.c.h.b16 %v6110
  %v6461 = vunpack.c.l.b16 %v6111
  %v6462 = vunpack.c.h.b16 %v6111
  %v6463 = vunpack.c.l.b16 %v6112
  %v6464 = vunpack.c.h.b16 %v6112
  %v6465 = vunpack.c.l.b16 %v6113
  %v6466 = vunpack.c.h.b16 %v6113
  %v6467 = vunpack.c.l.b16 %v6114
  %v6468 = vunpack.c.h.b16 %v6114
  %v6469 = vunpack.c.l.b16 %v6115
  %v6470 = vunpack.c.h.b16 %v6115
  %v6471 = vunpack.c.l.b16 %v6116
  %v6472 = vunpack.c.h.b16 %v6116
  %v6473 = vunpack.c.l.b16 %v6117
  %v6474 = vunpack.c.h.b16 %v6117
  %v6475 = vunpack.c.l.b16 %v6118
  %v6476 = vunpack.c.h.b16 %v6118
  %v6477 = vunpack.c.l.b16 %v6119
  %v6478 = vunpack.c.h.b16 %v6119
  %v6479 = vunpack.c.l.b16 %v6120
  %v6480 = vunpack.c.h.b16 %v6120
  %v6481 = vunpack.c.l.b16 %v6121
  %v6482 = vunpack.c.h.b16 %v6121
  %v6483 = vunpack.c.l.b16 %v6122
  %v6484 = vunpack.c.h.b16 %v6122
  %v6485 = vunpack.c.l.b16 %v6123
  %v6486 = vunpack.c.h.b16 %v6123
  %v6487 = vunpack.c.l.b16 %v6124
  %v6488 = vunpack.c.h.b16 %v6124
  %v6489 = vunpack.c.l.b16 %v6125
  %v6490 = vunpack.c.h.b16 %v6125
  %v6491 = vunpack.c.l.b16 %v6126
  %v6492 = vunpack.c.h.b16 %v6126
  %v6493 = vunpack.c.l.b16 %v6127
  %v6494 = vunpack.c.h.b16 %v6127
  %v6495 = vunpack.c.l.b16 %v6128
  %v6496 = vunpack.c.h.b16 %v6128
  %v6497 = vunpack.c.l.b16 %v6129
  %v6498 = vunpack.c.h.b16 %v6129
  %v6499 = vunpack.c.l.b16 %v6130
  %v6500 = vunpack.c.h.b16 %v6130
  %v6501 = vunpack.c.l.b16 %v6131
  %v6502 = vunpack.c.h.b16 %v6131
  %v6503 = vpack.c.b16 %v6443, %v6439
  %v6504 = vpack.c.b16 %v6444, %v6440
  %v6505 = vpack.c.b16 %v6445, %v6441
  %v6506 = vpack.c.b16 %v6446, %v6442
  %v6507 = vpack.c.b16 %v6451, %v6447
  %v6508 = vpack.c.b16 %v6452, %v6448
  %v6509 = vpack.c.b16 %v6453, %v6449
  %v6510 = vpack.c.b16 %v6454, %v6450
  %v6511 = vpack.c.b16 %v6459, %v6455
  %v6512 = vpack.c.b16 %v6460, %v6456
  %v6513 = vpack.c.b16 %v6461, %v6457
  %v6514 = vpack.c.b16 %v6462, %v6458
  %v6515 = vpack.c.b16 %v6467, %v6463
  %v6516 = vpack.c.b16 %v6468, %v6464
  %v6517 = vpack.c.b16 %v6469, %v6465
  %v6518 = vpack.c.b16 %v6470, %v6466
  %v6519 = vpack.c.b16 %v6475, %v6471
  %v6520 = vpack.c.b16 %v6476, %v6472
  %v6521 = vpack.c.b16 %v6477, %v6473
  %v6522 = vpack.c.b16 %v6478, %v6474
  %v6523 = vpack.c.b16 %v6483, %v6479
  %v6524 = vpack.c.b16 %v6484, %v6480
  %v6525 = vpack.c.b16 %v6485, %v6481
  %v6526 = vpack.c.b16 %v6486, %v6482
  %v6527 = vpack.c.b16 %v6491, %v6487
  %v6528 = vpack.c.b16 %v6492, %v6488
  %v6529 = vpack.c.b16 %v6493, %v6489
  %v6530 = vpack.c.b16 %v6494, %v6490
  %v6531 = vpack.c.b16 %v6499, %v6495
  %v6532 = vpack.c.b16 %v6500, %v6496
  %v6533 = vpack.c.b16 %v6501, %v6497
  %v6534 = vpack.c.b16 %v6502, %v6498
  %6567 = vmatprep.subr.bf16.mxu0 %v6504
  %6568 = vmatpush1.bf16.msra.mxu0 %v6503
  %6569 = vmatprep.subr.bf16.mxu0 %v6508
  %6570 = vmatpush1.bf16.msra.mxu0 %v6507
  %6571 = vmatprep.subr.bf16.mxu0 %v6512
  %6572 = vmatpush1.bf16.msra.mxu0 %v6511
  %6573 = vmatprep.subr.bf16.mxu0 %v6516
  %6574 = vmatpush1.bf16.msra.mxu0 %v6515
  %6575 = vmatprep.subr.bf16.mxu0 %v6520
  %6576 = vmatpush1.bf16.msra.mxu0 %v6519
  %6577 = vmatprep.subr.bf16.mxu0 %v6524
  %6578 = vmatpush1.bf16.msra.mxu0 %v6523
  %6579 = vmatprep.subr.bf16.mxu0 %v6528
  %6580 = vmatpush1.bf16.msra.mxu0 %v6527
  %6581 = vmatprep.subr.bf16.mxu0 %v6532
  %6582 = vmatpush1.bf16.msra.mxu0 %v6531
  %6583 = vmatprep.subr.bf16.mxu0 0
  %6584 = vmatpush1.bf16.msra.mxu0 0
  %6585 = vmatprep.subr.bf16.mxu0 0
  %6586 = vmatpush1.bf16.msra.mxu0 0
  %6587 = vmatprep.subr.bf16.mxu0 0
  %6588 = vmatpush1.bf16.msra.mxu0 0
  %6589 = vmatprep.subr.bf16.mxu0 0
  %6590 = vmatpush1.bf16.msra.mxu0 0
  %6591 = vmatprep.subr.bf16.mxu0 0
  %6592 = vmatpush1.bf16.msra.mxu0 0
  %6593 = vmatprep.subr.bf16.mxu0 0
  %6594 = vmatpush1.bf16.msra.mxu0 0
  %6595 = vmatprep.subr.bf16.mxu0 0
  %6596 = vmatpush1.bf16.msra.mxu0 0
  %6597 = vmatprep.subr.bf16.mxu0 0
  %6598 = vmatpush1.bf16.msra.mxu0 0
  %6599 = vmatprep.mubr.bf16.mxu0 0
  %6600 = vmatmul.mubr.bf16.gmra.mrb[0].mxu0 %v6099
  %v6601 = vpop.f32.mrb[0].mxu0
  %v6602 = vadd.f32 %v6360, %v6601
  %v6603 = vpop.f32.mrb[0].mxu0
  %v6604 = vadd.f32 %v6362, %v6603
  %v6605 = vpop.f32.mrb[0].mxu0
  %v6606 = vpop.f32.mrb[0].mxu0
  %6607 = vdwg.mxu0
  %6608 = vmatprep.subr.bf16.mxu0 %v6506
  %6609 = vmatpush1.bf16.msra.mxu0 %v6505
  %6610 = vmatprep.subr.bf16.mxu0 %v6510
  %6611 = vmatpush1.bf16.msra.mxu0 %v6509
  %6612 = vmatprep.subr.bf16.mxu0 %v6514
  %6613 = vmatpush1.bf16.msra.mxu0 %v6513
  %6614 = vmatprep.subr.bf16.mxu0 %v6518
  %6615 = vmatpush1.bf16.msra.mxu0 %v6517
  %6616 = vmatprep.subr.bf16.mxu0 %v6522
  %6617 = vmatpush1.bf16.msra.mxu0 %v6521
  %6618 = vmatprep.subr.bf16.mxu0 %v6526
  %6619 = vmatpush1.bf16.msra.mxu0 %v6525
  %6620 = vmatprep.subr.bf16.mxu0 %v6530
  %6621 = vmatpush1.bf16.msra.mxu0 %v6529
  %6622 = vmatprep.subr.bf16.mxu0 %v6534
  %6623 = vmatpush1.bf16.msra.mxu0 %v6533
  %6624 = vmatprep.subr.bf16.mxu0 0
  %6625 = vmatpush1.bf16.msra.mxu0 0
  %6626 = vmatprep.subr.bf16.mxu0 0
  %6627 = vmatpush1.bf16.msra.mxu0 0
  %6628 = vmatprep.subr.bf16.mxu0 0
  %6629 = vmatpush1.bf16.msra.mxu0 0
  %6630 = vmatprep.subr.bf16.mxu0 0
  %6631 = vmatpush1.bf16.msra.mxu0 0
  %6632 = vmatprep.subr.bf16.mxu0 0
  %6633 = vmatpush1.bf16.msra.mxu0 0
  %6634 = vmatprep.subr.bf16.mxu0 0
  %6635 = vmatpush1.bf16.msra.mxu0 0
  %6636 = vmatprep.subr.bf16.mxu0 0
  %6637 = vmatpush1.bf16.msra.mxu0 0
  %6638 = vmatprep.subr.bf16.mxu0 0
  %6639 = vmatpush1.bf16.msra.mxu0 0
  %6640 = vmatprep.mubr.bf16.mxu0 0
  %6641 = vmatmul.mubr.bf16.gmra.mrb[0].mxu0 %v6099
  %v6642 = vpop.f32.mrb[0].mxu0
  %v6643 = vadd.f32 %v6401, %v6642
  %v6644 = vpop.f32.mrb[0].mxu0
  %v6645 = vadd.f32 %v6403, %v6644
  %v6646 = vpop.f32.mrb[0].mxu0
  %v6647 = vpop.f32.mrb[0].mxu0
  %6648 = vdwg.mxu0
  %v6649 = vadd.f32 %v6602, %v1311
  %v6650 = vadd.f32 %v6604, %v1315
  %v6651 = vadd.f32 %v6643, %v1319
  %v6652 = vadd.f32 %v6645, %v1323
  %v6653 = vxor.u32 %v6649, 2147483648
  %v6654 = vmul.f32 %v6653, 1.442695
  %v6655 = vpow.pop %v6654
  %v6656 = vadd.f32 %v6655, 1.0
  %v6657 = vrcp.pop %v6656
  %v6658 = vmul.f32 1.0, %v6657
  %v6659 = vxor.u32 %v6650, 2147483648
  %v6660 = vmul.f32 %v6659, 1.442695
  %v6661 = vpow.pop %v6660
  %v6662 = vadd.f32 %v6661, 1.0
  %v6663 = vrcp.pop %v6662
  %v6664 = vmul.f32 1.0, %v6663
  %v6665 = vtanh.pop %v6651
  %v6666 = vxor.u32 %v6652, 2147483648
  %v6667 = vmul.f32 %v6666, 1.442695
  %v6668 = vpow.pop %v6667
  %v6669 = vadd.f32 %v6668, 1.0
  %v6670 = vrcp.pop %v6669
  %v6671 = vmul.f32 1.0, %v6670
  %v6672 = vmul.f32 %v6664, %v5787
  %v6673 = vmul.f32 %v6658, %v6665
  %v6674 = vadd.f32 %v6672, %v6673
  %v6675 = vtanh.pop %v6674
  %v6676 = vmul.f32 %v6671, %v6675
  %s6677 = scalar_lea.vmem %s7, 48
  %6678 = vst [vmem:[%s6677] sm:$0xff] %v6676
  %s6679 = scalar_lea.vmem [#allocation2], 224
  %v6680 = vld [vmem:[%s6679] sm:$0xff]
  %v6681 = vld [vmem:[%s6679 + $0x8] sm:$0xff]
  %v6682 = vld [vmem:[%s6679 + $0x10] sm:$0xff]
  %v6683 = vld [vmem:[%s6679 + $0x18] sm:$0xff]
  %v6684 = vld [vmem:[%s2] sm:$0xff]
  %v6685 = vld [vmem:[%s2 + $0x8] sm:$0xff]
  %v6686 = vld [vmem:[%s2 + $0x10] sm:$0xff]
  %v6687 = vld [vmem:[%s2 + $0x18] sm:$0xff]
  %v6688 = vld [vmem:[%s2 + $0x20] sm:$0xff]
  %v6689 = vld [vmem:[%s2 + $0x28] sm:$0xff]
  %v6690 = vld [vmem:[%s2 + $0x30] sm:$0xff]
  %v6691 = vld [vmem:[%s2 + $0x38] sm:$0xff]
  %v6692 = vld [vmem:[%s2 + $0x40] sm:$0xff]
  %v6693 = vld [vmem:[%s2 + $0x48] sm:$0xff]
  %v6694 = vld [vmem:[%s2 + $0x50] sm:$0xff]
  %v6695 = vld [vmem:[%s2 + $0x58] sm:$0xff]
  %v6696 = vld [vmem:[%s2 + $0x60] sm:$0xff]
  %v6697 = vld [vmem:[%s2 + $0x68] sm:$0xff]
  %v6698 = vld [vmem:[%s2 + $0x70] sm:$0xff]
  %v6699 = vld [vmem:[%s2 + $0x78] sm:$0xff]
  %v6700 = vld [vmem:[%s2 + $0x80] sm:$0xff]
  %v6701 = vld [vmem:[%s2 + $0x88] sm:$0xff]
  %v6702 = vld [vmem:[%s2 + $0x90] sm:$0xff]
  %v6703 = vld [vmem:[%s2 + $0x98] sm:$0xff]
  %v6704 = vld [vmem:[%s2 + $0xa0] sm:$0xff]
  %v6705 = vld [vmem:[%s2 + $0xa8] sm:$0xff]
  %v6706 = vld [vmem:[%s2 + $0xb0] sm:$0xff]
  %v6707 = vld [vmem:[%s2 + $0xb8] sm:$0xff]
  %v6708 = vld [vmem:[%s2 + $0xc0] sm:$0xff]
  %v6709 = vld [vmem:[%s2 + $0xc8] sm:$0xff]
  %v6710 = vld [vmem:[%s2 + $0xd0] sm:$0xff]
  %v6711 = vld [vmem:[%s2 + $0xd8] sm:$0xff]
  %v6712 = vld [vmem:[%s2 + $0xe0] sm:$0xff]
  %v6713 = vld [vmem:[%s2 + $0xe8] sm:$0xff]
  %v6714 = vld [vmem:[%s2 + $0xf0] sm:$0xff]
  %v6715 = vld [vmem:[%s2 + $0xf8] sm:$0xff]
  %v6748 = vunpack.c.l.b16 %v6684
  %v6749 = vunpack.c.h.b16 %v6684
  %v6750 = vunpack.c.l.b16 %v6685
  %v6751 = vunpack.c.h.b16 %v6685
  %v6752 = vunpack.c.l.b16 %v6686
  %v6753 = vunpack.c.h.b16 %v6686
  %v6754 = vunpack.c.l.b16 %v6687
  %v6755 = vunpack.c.h.b16 %v6687
  %v6756 = vunpack.c.l.b16 %v6688
  %v6757 = vunpack.c.h.b16 %v6688
  %v6758 = vunpack.c.l.b16 %v6689
  %v6759 = vunpack.c.h.b16 %v6689
  %v6760 = vunpack.c.l.b16 %v6690
  %v6761 = vunpack.c.h.b16 %v6690
  %v6762 = vunpack.c.l.b16 %v6691
  %v6763 = vunpack.c.h.b16 %v6691
  %v6764 = vunpack.c.l.b16 %v6692
  %v6765 = vunpack.c.h.b16 %v6692
  %v6766 = vunpack.c.l.b16 %v6693
  %v6767 = vunpack.c.h.b16 %v6693
  %v6768 = vunpack.c.l.b16 %v6694
  %v6769 = vunpack.c.h.b16 %v6694
  %v6770 = vunpack.c.l.b16 %v6695
  %v6771 = vunpack.c.h.b16 %v6695
  %v6772 = vunpack.c.l.b16 %v6696
  %v6773 = vunpack.c.h.b16 %v6696
  %v6774 = vunpack.c.l.b16 %v6697
  %v6775 = vunpack.c.h.b16 %v6697
  %v6776 = vunpack.c.l.b16 %v6698
  %v6777 = vunpack.c.h.b16 %v6698
  %v6778 = vunpack.c.l.b16 %v6699
  %v6779 = vunpack.c.h.b16 %v6699
  %v6780 = vunpack.c.l.b16 %v6700
  %v6781 = vunpack.c.h.b16 %v6700
  %v6782 = vunpack.c.l.b16 %v6701
  %v6783 = vunpack.c.h.b16 %v6701
  %v6784 = vunpack.c.l.b16 %v6702
  %v6785 = vunpack.c.h.b16 %v6702
  %v6786 = vunpack.c.l.b16 %v6703
  %v6787 = vunpack.c.h.b16 %v6703
  %v6788 = vunpack.c.l.b16 %v6704
  %v6789 = vunpack.c.h.b16 %v6704
  %v6790 = vunpack.c.l.b16 %v6705
  %v6791 = vunpack.c.h.b16 %v6705
  %v6792 = vunpack.c.l.b16 %v6706
  %v6793 = vunpack.c.h.b16 %v6706
  %v6794 = vunpack.c.l.b16 %v6707
  %v6795 = vunpack.c.h.b16 %v6707
  %v6796 = vunpack.c.l.b16 %v6708
  %v6797 = vunpack.c.h.b16 %v6708
  %v6798 = vunpack.c.l.b16 %v6709
  %v6799 = vunpack.c.h.b16 %v6709
  %v6800 = vunpack.c.l.b16 %v6710
  %v6801 = vunpack.c.h.b16 %v6710
  %v6802 = vunpack.c.l.b16 %v6711
  %v6803 = vunpack.c.h.b16 %v6711
  %v6804 = vunpack.c.l.b16 %v6712
  %v6805 = vunpack.c.h.b16 %v6712
  %v6806 = vunpack.c.l.b16 %v6713
  %v6807 = vunpack.c.h.b16 %v6713
  %v6808 = vunpack.c.l.b16 %v6714
  %v6809 = vunpack.c.h.b16 %v6714
  %v6810 = vunpack.c.l.b16 %v6715
  %v6811 = vunpack.c.h.b16 %v6715
  %v6812 = vpack.c.b16 %v6752, %v6748
  %v6813 = vpack.c.b16 %v6753, %v6749
  %v6814 = vpack.c.b16 %v6754, %v6750
  %v6815 = vpack.c.b16 %v6755, %v6751
  %v6816 = vpack.c.b16 %v6760, %v6756
  %v6817 = vpack.c.b16 %v6761, %v6757
  %v6818 = vpack.c.b16 %v6762, %v6758
  %v6819 = vpack.c.b16 %v6763, %v6759
  %v6820 = vpack.c.b16 %v6768, %v6764
  %v6821 = vpack.c.b16 %v6769, %v6765
  %v6822 = vpack.c.b16 %v6770, %v6766
  %v6823 = vpack.c.b16 %v6771, %v6767
  %v6824 = vpack.c.b16 %v6776, %v6772
  %v6825 = vpack.c.b16 %v6777, %v6773
  %v6826 = vpack.c.b16 %v6778, %v6774
  %v6827 = vpack.c.b16 %v6779, %v6775
  %v6828 = vpack.c.b16 %v6784, %v6780
  %v6829 = vpack.c.b16 %v6785, %v6781
  %v6830 = vpack.c.b16 %v6786, %v6782
  %v6831 = vpack.c.b16 %v6787, %v6783
  %v6832 = vpack.c.b16 %v6792, %v6788
  %v6833 = vpack.c.b16 %v6793, %v6789
  %v6834 = vpack.c.b16 %v6794, %v6790
  %v6835 = vpack.c.b16 %v6795, %v6791
  %v6836 = vpack.c.b16 %v6800, %v6796
  %v6837 = vpack.c.b16 %v6801, %v6797
  %v6838 = vpack.c.b16 %v6802, %v6798
  %v6839 = vpack.c.b16 %v6803, %v6799
  %v6840 = vpack.c.b16 %v6808, %v6804
  %v6841 = vpack.c.b16 %v6809, %v6805
  %v6842 = vpack.c.b16 %v6810, %v6806
  %v6843 = vpack.c.b16 %v6811, %v6807
  %6876 = vmatprep.subr.bf16.mxu0 %v6813
  %6877 = vmatpush1.bf16.msra.mxu0 %v6812
  %6878 = vmatprep.subr.bf16.mxu0 %v6817
  %6879 = vmatpush1.bf16.msra.mxu0 %v6816
  %6880 = vmatprep.subr.bf16.mxu0 %v6821
  %6881 = vmatpush1.bf16.msra.mxu0 %v6820
  %6882 = vmatprep.subr.bf16.mxu0 %v6825
  %6883 = vmatpush1.bf16.msra.mxu0 %v6824
  %6884 = vmatprep.subr.bf16.mxu0 %v6829
  %6885 = vmatpush1.bf16.msra.mxu0 %v6828
  %6886 = vmatprep.subr.bf16.mxu0 %v6833
  %6887 = vmatpush1.bf16.msra.mxu0 %v6832
  %6888 = vmatprep.subr.bf16.mxu0 %v6837
  %6889 = vmatpush1.bf16.msra.mxu0 %v6836
  %6890 = vmatprep.subr.bf16.mxu0 %v6841
  %6891 = vmatpush1.bf16.msra.mxu0 %v6840
  %6892 = vmatprep.subr.bf16.mxu0 0
  %6893 = vmatpush1.bf16.msra.mxu0 0
  %6894 = vmatprep.subr.bf16.mxu0 0
  %6895 = vmatpush1.bf16.msra.mxu0 0
  %6896 = vmatprep.subr.bf16.mxu0 0
  %6897 = vmatpush1.bf16.msra.mxu0 0
  %6898 = vmatprep.subr.bf16.mxu0 0
  %6899 = vmatpush1.bf16.msra.mxu0 0
  %6900 = vmatprep.subr.bf16.mxu0 0
  %6901 = vmatpush1.bf16.msra.mxu0 0
  %6902 = vmatprep.subr.bf16.mxu0 0
  %6903 = vmatpush1.bf16.msra.mxu0 0
  %6904 = vmatprep.subr.bf16.mxu0 0
  %6905 = vmatpush1.bf16.msra.mxu0 0
  %6906 = vmatprep.subr.bf16.mxu0 0
  %6907 = vmatpush1.bf16.msra.mxu0 0
  %6908 = vmatprep.mubr.bf16.mxu0 0
  %6909 = vmatmul.mubr.bf16.gmra.mrb[0].mxu0 %v6099
  %v6910 = vpop.f32.mrb[0].mxu0
  %v6911 = vadd.f32 0.0, %v6910
  %v6912 = vpop.f32.mrb[0].mxu0
  %v6913 = vadd.f32 0.0, %v6912
  %v6914 = vpop.f32.mrb[0].mxu0
  %v6915 = vpop.f32.mrb[0].mxu0
  %6916 = vdwg.mxu0
  %6917 = vmatprep.subr.bf16.mxu0 %v6815
  %6918 = vmatpush1.bf16.msra.mxu0 %v6814
  %6919 = vmatprep.subr.bf16.mxu0 %v6819
  %6920 = vmatpush1.bf16.msra.mxu0 %v6818
  %6921 = vmatprep.subr.bf16.mxu0 %v6823
  %6922 = vmatpush1.bf16.msra.mxu0 %v6822
  %6923 = vmatprep.subr.bf16.mxu0 %v6827
  %6924 = vmatpush1.bf16.msra.mxu0 %v6826
  %6925 = vmatprep.subr.bf16.mxu0 %v6831
  %6926 = vmatpush1.bf16.msra.mxu0 %v6830
  %6927 = vmatprep.subr.bf16.mxu0 %v6835
  %6928 = vmatpush1.bf16.msra.mxu0 %v6834
  %6929 = vmatprep.subr.bf16.mxu0 %v6839
  %6930 = vmatpush1.bf16.msra.mxu0 %v6838
  %6931 = vmatprep.subr.bf16.mxu0 %v6843
  %6932 = vmatpush1.bf16.msra.mxu0 %v6842
  %6933 = vmatprep.subr.bf16.mxu0 0
  %6934 = vmatpush1.bf16.msra.mxu0 0
  %6935 = vmatprep.subr.bf16.mxu0 0
  %6936 = vmatpush1.bf16.msra.mxu0 0
  %6937 = vmatprep.subr.bf16.mxu0 0
  %6938 = vmatpush1.bf16.msra.mxu0 0
  %6939 = vmatprep.subr.bf16.mxu0 0
  %6940 = vmatpush1.bf16.msra.mxu0 0
  %6941 = vmatprep.subr.bf16.mxu0 0
  %6942 = vmatpush1.bf16.msra.mxu0 0
  %6943 = vmatprep.subr.bf16.mxu0 0
  %6944 = vmatpush1.bf16.msra.mxu0 0
  %6945 = vmatprep.subr.bf16.mxu0 0
  %6946 = vmatpush1.bf16.msra.mxu0 0
  %6947 = vmatprep.subr.bf16.mxu0 0
  %6948 = vmatpush1.bf16.msra.mxu0 0
  %6949 = vmatprep.mubr.bf16.mxu0 0
  %6950 = vmatmul.mubr.bf16.gmra.mrb[0].mxu0 %v6099
  %v6951 = vpop.f32.mrb[0].mxu0
  %v6952 = vadd.f32 0.0, %v6951
  %v6953 = vpop.f32.mrb[0].mxu0
  %v6954 = vadd.f32 0.0, %v6953
  %v6955 = vpop.f32.mrb[0].mxu0
  %v6956 = vpop.f32.mrb[0].mxu0
  %6957 = vdwg.mxu0
  %v6958 = vadd.f32 %v6680, %v6911
  %v6959 = vadd.f32 %v6681, %v6913
  %v6960 = vadd.f32 %v6682, %v6952
  %v6961 = vadd.f32 %v6683, %v6954
  %v6962 = vxor.u32 %v6958, 2147483648
  %v6963 = vmul.f32 %v6962, 1.442695
  %v6964 = vpow.pop %v6963
  %v6965 = vadd.f32 %v6964, 1.0
  %v6966 = vrcp.pop %v6965
  %v6967 = vmul.f32 1.0, %v6966
  %v6968 = vxor.u32 %v6959, 2147483648
  %v6969 = vmul.f32 %v6968, 1.442695
  %v6970 = vpow.pop %v6969
  %v6971 = vadd.f32 %v6970, 1.0
  %v6972 = vrcp.pop %v6971
  %v6973 = vmul.f32 1.0, %v6972
  %v6974 = vtanh.pop %v6960
  %v6975 = vxor.u32 %v6961, 2147483648
  %v6976 = vmul.f32 %v6975, 1.442695
  %v6977 = vpow.pop %v6976
  %v6978 = vadd.f32 %v6977, 1.0
  %v6979 = vrcp.pop %v6978
  %v6980 = vmul.f32 1.0, %v6979
  %v6981 = vmul.f32 %v6973, %v6096
  %v6982 = vmul.f32 %v6967, %v6974
  %v6983 = vadd.f32 %v6981, %v6982
  %v6984 = vtanh.pop %v6983
  %v6985 = vmul.f32 %v6980, %v6984
  %v6986 = vpack.c.bf16 %v6985, %v6985
  %v6987 = vld [vmem:[%s4] sm:$0xff]
  %v6988 = vld [vmem:[%s4 + $0x8] sm:$0xff]
  %v6989 = vld [vmem:[%s4 + $0x10] sm:$0xff]
  %v6990 = vld [vmem:[%s4 + $0x18] sm:$0xff]
  %v6991 = vld [vmem:[%s4 + $0x20] sm:$0xff]
  %v6992 = vld [vmem:[%s4 + $0x28] sm:$0xff]
  %v6993 = vld [vmem:[%s4 + $0x30] sm:$0xff]
  %v6994 = vld [vmem:[%s4 + $0x38] sm:$0xff]
  %v6995 = vld [vmem:[%s4 + $0x40] sm:$0xff]
  %v6996 = vld [vmem:[%s4 + $0x48] sm:$0xff]
  %v6997 = vld [vmem:[%s4 + $0x50] sm:$0xff]
  %v6998 = vld [vmem:[%s4 + $0x58] sm:$0xff]
  %v6999 = vld [vmem:[%s4 + $0x60] sm:$0xff]
  %v7000 = vld [vmem:[%s4 + $0x68] sm:$0xff]
  %v7001 = vld [vmem:[%s4 + $0x70] sm:$0xff]
  %v7002 = vld [vmem:[%s4 + $0x78] sm:$0xff]
  %v7003 = vld [vmem:[%s4 + $0x80] sm:$0xff]
  %v7004 = vld [vmem:[%s4 + $0x88] sm:$0xff]
  %v7005 = vld [vmem:[%s4 + $0x90] sm:$0xff]
  %v7006 = vld [vmem:[%s4 + $0x98] sm:$0xff]
  %v7007 = vld [vmem:[%s4 + $0xa0] sm:$0xff]
  %v7008 = vld [vmem:[%s4 + $0xa8] sm:$0xff]
  %v7009 = vld [vmem:[%s4 + $0xb0] sm:$0xff]
  %v7010 = vld [vmem:[%s4 + $0xb8] sm:$0xff]
  %v7011 = vld [vmem:[%s4 + $0xc0] sm:$0xff]
  %v7012 = vld [vmem:[%s4 + $0xc8] sm:$0xff]
  %v7013 = vld [vmem:[%s4 + $0xd0] sm:$0xff]
  %v7014 = vld [vmem:[%s4 + $0xd8] sm:$0xff]
  %v7015 = vld [vmem:[%s4 + $0xe0] sm:$0xff]
  %v7016 = vld [vmem:[%s4 + $0xe8] sm:$0xff]
  %v7017 = vld [vmem:[%s4 + $0xf0] sm:$0xff]
  %v7018 = vld [vmem:[%s4 + $0xf8] sm:$0xff]
  %v7019 = vpack.c.bf16 %v6676, %v6676
  %v7020 = vld [vmem:[%s5] sm:$0xff]
  %v7021 = vld [vmem:[%s5 + $0x8] sm:$0xff]
  %v7022 = vld [vmem:[%s5 + $0x10] sm:$0xff]
  %v7023 = vld [vmem:[%s5 + $0x18] sm:$0xff]
  %v7024 = vld [vmem:[%s5 + $0x20] sm:$0xff]
  %v7025 = vld [vmem:[%s5 + $0x28] sm:$0xff]
  %v7026 = vld [vmem:[%s5 + $0x30] sm:$0xff]
  %v7027 = vld [vmem:[%s5 + $0x38] sm:$0xff]
  %v7028 = vld [vmem:[%s5 + $0x40] sm:$0xff]
  %v7029 = vld [vmem:[%s5 + $0x48] sm:$0xff]
  %v7030 = vld [vmem:[%s5 + $0x50] sm:$0xff]
  %v7031 = vld [vmem:[%s5 + $0x58] sm:$0xff]
  %v7032 = vld [vmem:[%s5 + $0x60] sm:$0xff]
  %v7033 = vld [vmem:[%s5 + $0x68] sm:$0xff]
  %v7034 = vld [vmem:[%s5 + $0x70] sm:$0xff]
  %v7035 = vld [vmem:[%s5 + $0x78] sm:$0xff]
  %v7036 = vld [vmem:[%s5 + $0x80] sm:$0xff]
  %v7037 = vld [vmem:[%s5 + $0x88] sm:$0xff]
  %v7038 = vld [vmem:[%s5 + $0x90] sm:$0xff]
  %v7039 = vld [vmem:[%s5 + $0x98] sm:$0xff]
  %v7040 = vld [vmem:[%s5 + $0xa0] sm:$0xff]
  %v7041 = vld [vmem:[%s5 + $0xa8] sm:$0xff]
  %v7042 = vld [vmem:[%s5 + $0xb0] sm:$0xff]
  %v7043 = vld [vmem:[%s5 + $0xb8] sm:$0xff]
  %v7044 = vld [vmem:[%s5 + $0xc0] sm:$0xff]
  %v7045 = vld [vmem:[%s5 + $0xc8] sm:$0xff]
  %v7046 = vld [vmem:[%s5 + $0xd0] sm:$0xff]
  %v7047 = vld [vmem:[%s5 + $0xd8] sm:$0xff]
  %v7048 = vld [vmem:[%s5 + $0xe0] sm:$0xff]
  %v7049 = vld [vmem:[%s5 + $0xe8] sm:$0xff]
  %v7050 = vld [vmem:[%s5 + $0xf0] sm:$0xff]
  %v7051 = vld [vmem:[%s5 + $0xf8] sm:$0xff]
  %v7084 = vunpack.c.l.b16 %v7020
  %v7085 = vunpack.c.h.b16 %v7020
  %v7086 = vunpack.c.l.b16 %v7021
  %v7087 = vunpack.c.h.b16 %v7021
  %v7088 = vunpack.c.l.b16 %v7022
  %v7089 = vunpack.c.h.b16 %v7022
  %v7090 = vunpack.c.l.b16 %v7023
  %v7091 = vunpack.c.h.b16 %v7023
  %v7092 = vunpack.c.l.b16 %v7024
  %v7093 = vunpack.c.h.b16 %v7024
  %v7094 = vunpack.c.l.b16 %v7025
  %v7095 = vunpack.c.h.b16 %v7025
  %v7096 = vunpack.c.l.b16 %v7026
  %v7097 = vunpack.c.h.b16 %v7026
  %v7098 = vunpack.c.l.b16 %v7027
  %v7099 = vunpack.c.h.b16 %v7027
  %v7100 = vunpack.c.l.b16 %v7028
  %v7101 = vunpack.c.h.b16 %v7028
  %v7102 = vunpack.c.l.b16 %v7029
  %v7103 = vunpack.c.h.b16 %v7029
  %v7104 = vunpack.c.l.b16 %v7030
  %v7105 = vunpack.c.h.b16 %v7030
  %v7106 = vunpack.c.l.b16 %v7031
  %v7107 = vunpack.c.h.b16 %v7031
  %v7108 = vunpack.c.l.b16 %v7032
  %v7109 = vunpack.c.h.b16 %v7032
  %v7110 = vunpack.c.l.b16 %v7033
  %v7111 = vunpack.c.h.b16 %v7033
  %v7112 = vunpack.c.l.b16 %v7034
  %v7113 = vunpack.c.h.b16 %v7034
  %v7114 = vunpack.c.l.b16 %v7035
  %v7115 = vunpack.c.h.b16 %v7035
  %v7116 = vunpack.c.l.b16 %v7036
  %v7117 = vunpack.c.h.b16 %v7036
  %v7118 = vunpack.c.l.b16 %v7037
  %v7119 = vunpack.c.h.b16 %v7037
  %v7120 = vunpack.c.l.b16 %v7038
  %v7121 = vunpack.c.h.b16 %v7038
  %v7122 = vunpack.c.l.b16 %v7039
  %v7123 = vunpack.c.h.b16 %v7039
  %v7124 = vunpack.c.l.b16 %v7040
  %v7125 = vunpack.c.h.b16 %v7040
  %v7126 = vunpack.c.l.b16 %v7041
  %v7127 = vunpack.c.h.b16 %v7041
  %v7128 = vunpack.c.l.b16 %v7042
  %v7129 = vunpack.c.h.b16 %v7042
  %v7130 = vunpack.c.l.b16 %v7043
  %v7131 = vunpack.c.h.b16 %v7043
  %v7132 = vunpack.c.l.b16 %v7044
  %v7133 = vunpack.c.h.b16 %v7044
  %v7134 = vunpack.c.l.b16 %v7045
  %v7135 = vunpack.c.h.b16 %v7045
  %v7136 = vunpack.c.l.b16 %v7046
  %v7137 = vunpack.c.h.b16 %v7046
  %v7138 = vunpack.c.l.b16 %v7047
  %v7139 = vunpack.c.h.b16 %v7047
  %v7140 = vunpack.c.l.b16 %v7048
  %v7141 = vunpack.c.h.b16 %v7048
  %v7142 = vunpack.c.l.b16 %v7049
  %v7143 = vunpack.c.h.b16 %v7049
  %v7144 = vunpack.c.l.b16 %v7050
  %v7145 = vunpack.c.h.b16 %v7050
  %v7146 = vunpack.c.l.b16 %v7051
  %v7147 = vunpack.c.h.b16 %v7051
  %v7148 = vpack.c.b16 %v7088, %v7084
  %v7149 = vpack.c.b16 %v7089, %v7085
  %v7150 = vpack.c.b16 %v7090, %v7086
  %v7151 = vpack.c.b16 %v7091, %v7087
  %v7152 = vpack.c.b16 %v7096, %v7092
  %v7153 = vpack.c.b16 %v7097, %v7093
  %v7154 = vpack.c.b16 %v7098, %v7094
  %v7155 = vpack.c.b16 %v7099, %v7095
  %v7156 = vpack.c.b16 %v7104, %v7100
  %v7157 = vpack.c.b16 %v7105, %v7101
  %v7158 = vpack.c.b16 %v7106, %v7102
  %v7159 = vpack.c.b16 %v7107, %v7103
  %v7160 = vpack.c.b16 %v7112, %v7108
  %v7161 = vpack.c.b16 %v7113, %v7109
  %v7162 = vpack.c.b16 %v7114, %v7110
  %v7163 = vpack.c.b16 %v7115, %v7111
  %v7164 = vpack.c.b16 %v7120, %v7116
  %v7165 = vpack.c.b16 %v7121, %v7117
  %v7166 = vpack.c.b16 %v7122, %v7118
  %v7167 = vpack.c.b16 %v7123, %v7119
  %v7168 = vpack.c.b16 %v7128, %v7124
  %v7169 = vpack.c.b16 %v7129, %v7125
  %v7170 = vpack.c.b16 %v7130, %v7126
  %v7171 = vpack.c.b16 %v7131, %v7127
  %v7172 = vpack.c.b16 %v7136, %v7132
  %v7173 = vpack.c.b16 %v7137, %v7133
  %v7174 = vpack.c.b16 %v7138, %v7134
  %v7175 = vpack.c.b16 %v7139, %v7135
  %v7176 = vpack.c.b16 %v7144, %v7140
  %v7177 = vpack.c.b16 %v7145, %v7141
  %v7178 = vpack.c.b16 %v7146, %v7142
  %v7179 = vpack.c.b16 %v7147, %v7143
  %7212 = vmatprep.subr.bf16.mxu0 %v7149
  %7213 = vmatpush1.bf16.msra.mxu0 %v7148
  %7214 = vmatprep.subr.bf16.mxu0 %v7153
  %7215 = vmatpush1.bf16.msra.mxu0 %v7152
  %7216 = vmatprep.subr.bf16.mxu0 %v7157
  %7217 = vmatpush1.bf16.msra.mxu0 %v7156
  %7218 = vmatprep.subr.bf16.mxu0 %v7161
  %7219 = vmatpush1.bf16.msra.mxu0 %v7160
  %7220 = vmatprep.subr.bf16.mxu0 %v7165
  %7221 = vmatpush1.bf16.msra.mxu0 %v7164
  %7222 = vmatprep.subr.bf16.mxu0 %v7169
  %7223 = vmatpush1.bf16.msra.mxu0 %v7168
  %7224 = vmatprep.subr.bf16.mxu0 %v7173
  %7225 = vmatpush1.bf16.msra.mxu0 %v7172
  %7226 = vmatprep.subr.bf16.mxu0 %v7177
  %7227 = vmatpush1.bf16.msra.mxu0 %v7176
  %7228 = vmatprep.subr.bf16.mxu0 0
  %7229 = vmatpush1.bf16.msra.mxu0 0
  %7230 = vmatprep.subr.bf16.mxu0 0
  %7231 = vmatpush1.bf16.msra.mxu0 0
  %7232 = vmatprep.subr.bf16.mxu0 0
  %7233 = vmatpush1.bf16.msra.mxu0 0
  %7234 = vmatprep.subr.bf16.mxu0 0
  %7235 = vmatpush1.bf16.msra.mxu0 0
  %7236 = vmatprep.subr.bf16.mxu0 0
  %7237 = vmatpush1.bf16.msra.mxu0 0
  %7238 = vmatprep.subr.bf16.mxu0 0
  %7239 = vmatpush1.bf16.msra.mxu0 0
  %7240 = vmatprep.subr.bf16.mxu0 0
  %7241 = vmatpush1.bf16.msra.mxu0 0
  %7242 = vmatprep.subr.bf16.mxu0 0
  %7243 = vmatpush1.bf16.msra.mxu0 0
  %7244 = vmatprep.mubr.bf16.mxu0 0
  %7245 = vmatmul.mubr.bf16.gmra.mrb[0].mxu0 %v7019
  %v7246 = vpop.f32.mrb[0].mxu0
  %v7247 = vadd.f32 0.0, %v7246
  %v7248 = vpop.f32.mrb[0].mxu0
  %v7249 = vadd.f32 0.0, %v7248
  %v7250 = vpop.f32.mrb[0].mxu0
  %v7251 = vpop.f32.mrb[0].mxu0
  %7252 = vdwg.mxu0
  %7253 = vmatprep.subr.bf16.mxu0 %v7151
  %7254 = vmatpush1.bf16.msra.mxu0 %v7150
  %7255 = vmatprep.subr.bf16.mxu0 %v7155
  %7256 = vmatpush1.bf16.msra.mxu0 %v7154
  %7257 = vmatprep.subr.bf16.mxu0 %v7159
  %7258 = vmatpush1.bf16.msra.mxu0 %v7158
  %7259 = vmatprep.subr.bf16.mxu0 %v7163
  %7260 = vmatpush1.bf16.msra.mxu0 %v7162
  %7261 = vmatprep.subr.bf16.mxu0 %v7167
  %7262 = vmatpush1.bf16.msra.mxu0 %v7166
  %7263 = vmatprep.subr.bf16.mxu0 %v7171
  %7264 = vmatpush1.bf16.msra.mxu0 %v7170
  %7265 = vmatprep.subr.bf16.mxu0 %v7175
  %7266 = vmatpush1.bf16.msra.mxu0 %v7174
  %7267 = vmatprep.subr.bf16.mxu0 %v7179
  %7268 = vmatpush1.bf16.msra.mxu0 %v7178
  %7269 = vmatprep.subr.bf16.mxu0 0
  %7270 = vmatpush1.bf16.msra.mxu0 0
  %7271 = vmatprep.subr.bf16.mxu0 0
  %7272 = vmatpush1.bf16.msra.mxu0 0
  %7273 = vmatprep.subr.bf16.mxu0 0
  %7274 = vmatpush1.bf16.msra.mxu0 0
  %7275 = vmatprep.subr.bf16.mxu0 0
  %7276 = vmatpush1.bf16.msra.mxu0 0
  %7277 = vmatprep.subr.bf16.mxu0 0
  %7278 = vmatpush1.bf16.msra.mxu0 0
  %7279 = vmatprep.subr.bf16.mxu0 0
  %7280 = vmatpush1.bf16.msra.mxu0 0
  %7281 = vmatprep.subr.bf16.mxu0 0
  %7282 = vmatpush1.bf16.msra.mxu0 0
  %7283 = vmatprep.subr.bf16.mxu0 0
  %7284 = vmatpush1.bf16.msra.mxu0 0
  %7285 = vmatprep.mubr.bf16.mxu0 0
  %7286 = vmatmul.mubr.bf16.gmra.mrb[0].mxu0 %v7019
  %v7287 = vpop.f32.mrb[0].mxu0
  %v7288 = vadd.f32 0.0, %v7287
  %v7289 = vpop.f32.mrb[0].mxu0
  %v7290 = vadd.f32 0.0, %v7289
  %v7291 = vpop.f32.mrb[0].mxu0
  %v7292 = vpop.f32.mrb[0].mxu0
  %7293 = vdwg.mxu0
  %v7326 = vunpack.c.l.b16 %v6987
  %v7327 = vunpack.c.h.b16 %v6987
  %v7328 = vunpack.c.l.b16 %v6988
  %v7329 = vunpack.c.h.b16 %v6988
  %v7330 = vunpack.c.l.b16 %v6989
  %v7331 = vunpack.c.h.b16 %v6989
  %v7332 = vunpack.c.l.b16 %v6990
  %v7333 = vunpack.c.h.b16 %v6990
  %v7334 = vunpack.c.l.b16 %v6991
  %v7335 = vunpack.c.h.b16 %v6991
  %v7336 = vunpack.c.l.b16 %v6992
  %v7337 = vunpack.c.h.b16 %v6992
  %v7338 = vunpack.c.l.b16 %v6993
  %v7339 = vunpack.c.h.b16 %v6993
  %v7340 = vunpack.c.l.b16 %v6994
  %v7341 = vunpack.c.h.b16 %v6994
  %v7342 = vunpack.c.l.b16 %v6995
  %v7343 = vunpack.c.h.b16 %v6995
  %v7344 = vunpack.c.l.b16 %v6996
  %v7345 = vunpack.c.h.b16 %v6996
  %v7346 = vunpack.c.l.b16 %v6997
  %v7347 = vunpack.c.h.b16 %v6997
  %v7348 = vunpack.c.l.b16 %v6998
  %v7349 = vunpack.c.h.b16 %v6998
  %v7350 = vunpack.c.l.b16 %v6999
  %v7351 = vunpack.c.h.b16 %v6999
  %v7352 = vunpack.c.l.b16 %v7000
  %v7353 = vunpack.c.h.b16 %v7000
  %v7354 = vunpack.c.l.b16 %v7001
  %v7355 = vunpack.c.h.b16 %v7001
  %v7356 = vunpack.c.l.b16 %v7002
  %v7357 = vunpack.c.h.b16 %v7002
  %v7358 = vunpack.c.l.b16 %v7003
  %v7359 = vunpack.c.h.b16 %v7003
  %v7360 = vunpack.c.l.b16 %v7004
  %v7361 = vunpack.c.h.b16 %v7004
  %v7362 = vunpack.c.l.b16 %v7005
  %v7363 = vunpack.c.h.b16 %v7005
  %v7364 = vunpack.c.l.b16 %v7006
  %v7365 = vunpack.c.h.b16 %v7006
  %v7366 = vunpack.c.l.b16 %v7007
  %v7367 = vunpack.c.h.b16 %v7007
  %v7368 = vunpack.c.l.b16 %v7008
  %v7369 = vunpack.c.h.b16 %v7008
  %v7370 = vunpack.c.l.b16 %v7009
  %v7371 = vunpack.c.h.b16 %v7009
  %v7372 = vunpack.c.l.b16 %v7010
  %v7373 = vunpack.c.h.b16 %v7010
  %v7374 = vunpack.c.l.b16 %v7011
  %v7375 = vunpack.c.h.b16 %v7011
  %v7376 = vunpack.c.l.b16 %v7012
  %v7377 = vunpack.c.h.b16 %v7012
  %v7378 = vunpack.c.l.b16 %v7013
  %v7379 = vunpack.c.h.b16 %v7013
  %v7380 = vunpack.c.l.b16 %v7014
  %v7381 = vunpack.c.h.b16 %v7014
  %v7382 = vunpack.c.l.b16 %v7015
  %v7383 = vunpack.c.h.b16 %v7015
  %v7384 = vunpack.c.l.b16 %v7016
  %v7385 = vunpack.c.h.b16 %v7016
  %v7386 = vunpack.c.l.b16 %v7017
  %v7387 = vunpack.c.h.b16 %v7017
  %v7388 = vunpack.c.l.b16 %v7018
  %v7389 = vunpack.c.h.b16 %v7018
  %v7390 = vpack.c.b16 %v7330, %v7326
  %v7391 = vpack.c.b16 %v7331, %v7327
  %v7392 = vpack.c.b16 %v7332, %v7328
  %v7393 = vpack.c.b16 %v7333, %v7329
  %v7394 = vpack.c.b16 %v7338, %v7334
  %v7395 = vpack.c.b16 %v7339, %v7335
  %v7396 = vpack.c.b16 %v7340, %v7336
  %v7397 = vpack.c.b16 %v7341, %v7337
  %v7398 = vpack.c.b16 %v7346, %v7342
  %v7399 = vpack.c.b16 %v7347, %v7343
  %v7400 = vpack.c.b16 %v7348, %v7344
  %v7401 = vpack.c.b16 %v7349, %v7345
  %v7402 = vpack.c.b16 %v7354, %v7350
  %v7403 = vpack.c.b16 %v7355, %v7351
  %v7404 = vpack.c.b16 %v7356, %v7352
  %v7405 = vpack.c.b16 %v7357, %v7353
  %v7406 = vpack.c.b16 %v7362, %v7358
  %v7407 = vpack.c.b16 %v7363, %v7359
  %v7408 = vpack.c.b16 %v7364, %v7360
  %v7409 = vpack.c.b16 %v7365, %v7361
  %v7410 = vpack.c.b16 %v7370, %v7366
  %v7411 = vpack.c.b16 %v7371, %v7367
  %v7412 = vpack.c.b16 %v7372, %v7368
  %v7413 = vpack.c.b16 %v7373, %v7369
  %v7414 = vpack.c.b16 %v7378, %v7374
  %v7415 = vpack.c.b16 %v7379, %v7375
  %v7416 = vpack.c.b16 %v7380, %v7376
  %v7417 = vpack.c.b16 %v7381, %v7377
  %v7418 = vpack.c.b16 %v7386, %v7382
  %v7419 = vpack.c.b16 %v7387, %v7383
  %v7420 = vpack.c.b16 %v7388, %v7384
  %v7421 = vpack.c.b16 %v7389, %v7385
  %7454 = vmatprep.subr.bf16.mxu0 %v7391
  %7455 = vmatpush1.bf16.msra.mxu0 %v7390
  %7456 = vmatprep.subr.bf16.mxu0 %v7395
  %7457 = vmatpush1.bf16.msra.mxu0 %v7394
  %7458 = vmatprep.subr.bf16.mxu0 %v7399
  %7459 = vmatpush1.bf16.msra.mxu0 %v7398
  %7460 = vmatprep.subr.bf16.mxu0 %v7403
  %7461 = vmatpush1.bf16.msra.mxu0 %v7402
  %7462 = vmatprep.subr.bf16.mxu0 %v7407
  %7463 = vmatpush1.bf16.msra.mxu0 %v7406
  %7464 = vmatprep.subr.bf16.mxu0 %v7411
  %7465 = vmatpush1.bf16.msra.mxu0 %v7410
  %7466 = vmatprep.subr.bf16.mxu0 %v7415
  %7467 = vmatpush1.bf16.msra.mxu0 %v7414
  %7468 = vmatprep.subr.bf16.mxu0 %v7419
  %7469 = vmatpush1.bf16.msra.mxu0 %v7418
  %7470 = vmatprep.subr.bf16.mxu0 0
  %7471 = vmatpush1.bf16.msra.mxu0 0
  %7472 = vmatprep.subr.bf16.mxu0 0
  %7473 = vmatpush1.bf16.msra.mxu0 0
  %7474 = vmatprep.subr.bf16.mxu0 0
  %7475 = vmatpush1.bf16.msra.mxu0 0
  %7476 = vmatprep.subr.bf16.mxu0 0
  %7477 = vmatpush1.bf16.msra.mxu0 0
  %7478 = vmatprep.subr.bf16.mxu0 0
  %7479 = vmatpush1.bf16.msra.mxu0 0
  %7480 = vmatprep.subr.bf16.mxu0 0
  %7481 = vmatpush1.bf16.msra.mxu0 0
  %7482 = vmatprep.subr.bf16.mxu0 0
  %7483 = vmatpush1.bf16.msra.mxu0 0
  %7484 = vmatprep.subr.bf16.mxu0 0
  %7485 = vmatpush1.bf16.msra.mxu0 0
  %7486 = vmatprep.mubr.bf16.mxu0 0
  %7487 = vmatmul.mubr.bf16.gmra.mrb[0].mxu0 %v6986
  %v7488 = vpop.f32.mrb[0].mxu0
  %v7489 = vadd.f32 %v7247, %v7488
  %v7490 = vpop.f32.mrb[0].mxu0
  %v7491 = vadd.f32 %v7249, %v7490
  %v7492 = vpop.f32.mrb[0].mxu0
  %v7493 = vpop.f32.mrb[0].mxu0
  %7494 = vdwg.mxu0
  %7495 = vmatprep.subr.bf16.mxu0 %v7393
  %7496 = vmatpush1.bf16.msra.mxu0 %v7392
  %7497 = vmatprep.subr.bf16.mxu0 %v7397
  %7498 = vmatpush1.bf16.msra.mxu0 %v7396
  %7499 = vmatprep.subr.bf16.mxu0 %v7401
  %7500 = vmatpush1.bf16.msra.mxu0 %v7400
  %7501 = vmatprep.subr.bf16.mxu0 %v7405
  %7502 = vmatpush1.bf16.msra.mxu0 %v7404
  %7503 = vmatprep.subr.bf16.mxu0 %v7409
  %7504 = vmatpush1.bf16.msra.mxu0 %v7408
  %7505 = vmatprep.subr.bf16.mxu0 %v7413
  %7506 = vmatpush1.bf16.msra.mxu0 %v7412
  %7507 = vmatprep.subr.bf16.mxu0 %v7417
  %7508 = vmatpush1.bf16.msra.mxu0 %v7416
  %7509 = vmatprep.subr.bf16.mxu0 %v7421
  %7510 = vmatpush1.bf16.msra.mxu0 %v7420
  %7511 = vmatprep.subr.bf16.mxu0 0
  %7512 = vmatpush1.bf16.msra.mxu0 0
  %7513 = vmatprep.subr.bf16.mxu0 0
  %7514 = vmatpush1.bf16.msra.mxu0 0
  %7515 = vmatprep.subr.bf16.mxu0 0
  %7516 = vmatpush1.bf16.msra.mxu0 0
  %7517 = vmatprep.subr.bf16.mxu0 0
  %7518 = vmatpush1.bf16.msra.mxu0 0
  %7519 = vmatprep.subr.bf16.mxu0 0
  %7520 = vmatpush1.bf16.msra.mxu0 0
  %7521 = vmatprep.subr.bf16.mxu0 0
  %7522 = vmatpush1.bf16.msra.mxu0 0
  %7523 = vmatprep.subr.bf16.mxu0 0
  %7524 = vmatpush1.bf16.msra.mxu0 0
  %7525 = vmatprep.subr.bf16.mxu0 0
  %7526 = vmatpush1.bf16.msra.mxu0 0
  %7527 = vmatprep.mubr.bf16.mxu0 0
  %7528 = vmatmul.mubr.bf16.gmra.mrb[0].mxu0 %v6986
  %v7529 = vpop.f32.mrb[0].mxu0
  %v7530 = vadd.f32 %v7288, %v7529
  %v7531 = vpop.f32.mrb[0].mxu0
  %v7532 = vadd.f32 %v7290, %v7531
  %v7533 = vpop.f32.mrb[0].mxu0
  %v7534 = vpop.f32.mrb[0].mxu0
  %7535 = vdwg.mxu0
  %v7536 = vadd.f32 %v7489, %v1311
  %v7537 = vadd.f32 %v7491, %v1315
  %v7538 = vadd.f32 %v7530, %v1319
  %v7539 = vadd.f32 %v7532, %v1323
  %v7540 = vxor.u32 %v7536, 2147483648
  %v7541 = vmul.f32 %v7540, 1.442695
  %v7542 = vpow.pop %v7541
  %v7543 = vadd.f32 %v7542, 1.0
  %v7544 = vrcp.pop %v7543
  %v7545 = vmul.f32 1.0, %v7544
  %v7546 = vxor.u32 %v7537, 2147483648
  %v7547 = vmul.f32 %v7546, 1.442695
  %v7548 = vpow.pop %v7547
  %v7549 = vadd.f32 %v7548, 1.0
  %v7550 = vrcp.pop %v7549
  %v7551 = vmul.f32 1.0, %v7550
  %v7552 = vtanh.pop %v7538
  %v7553 = vxor.u32 %v7539, 2147483648
  %v7554 = vmul.f32 %v7553, 1.442695
  %v7555 = vpow.pop %v7554
  %v7556 = vadd.f32 %v7555, 1.0
  %v7557 = vrcp.pop %v7556
  %v7558 = vmul.f32 1.0, %v7557
  %v7559 = vmul.f32 %v7551, %v6674
  %v7560 = vmul.f32 %v7545, %v7552
  %v7561 = vadd.f32 %v7559, %v7560
  %v7562 = vtanh.pop %v7561
  %v7563 = vmul.f32 %v7558, %v7562
  %s7564 = scalar_lea.vmem %s7, 56
  %7565 = vst [vmem:[%s7564] sm:$0xff] %v7563
  // Predicated region
  $region30: #{lstm_autoencoder_forward.1} parent=0 // pred_check
    _
  $region31: #{lstm_autoencoder_forward.1} parent=0 // pred_check_branch
    %7567 = sbr.rel (0) target = $region33
  $region32: #{lstm_autoencoder_forward.1} parent=0 // pred_region
    _
  $region33: #{lstm_autoencoder_forward.1} parent=0 // pred_fallthru
    _
  // Predicated region
  $region34: #{lstm_autoencoder_forward.1} parent=0 // pred_check
    _
  $region35: #{lstm_autoencoder_forward.1} parent=0 // pred_check_branch
    %7569 = sbr.rel (0) target = $region37
  $region36: #{lstm_autoencoder_forward.1} parent=0 // pred_region
    _
  $region37: #{lstm_autoencoder_forward.1} parent=0 // pred_fallthru
    _

</llo_original>
